<compile_context>
chip_gen: v7x
topology: tpu7x:2x2x1
jax: 0.10.0
libtpu: 0.0.40
codegen_flags: <defaults>
</compile_context>

<pallas_src>
import jax
import jax.numpy as jnp
import numpy as np
from jax import lax
from jax.experimental import pallas as pl
from jax.experimental.pallas import tpu as pltpu

# Channel widths fixed by the module definition.
_C_B1_0, _C_B1_1, _C_B1_2 = 64, 96, 96      # branch1: 1x1 -> 3x3 -> 3x3
_C_B2_0, _C_B2_1 = 48, 64                   # branch2: 1x1 -> 3x3
_C_B4 = 64                                  # branch4: 1x1


# ----------------------------------------------------------------------------
# Kernel helpers
# ----------------------------------------------------------------------------
def _init_halo_ring(pad_ref, h, w, value):
    """Write only the 1-pixel halo ring of a (h+2, w+2, c) scratch.

    The interior is fully overwritten every step, so the ring is the only part
    that must carry the pad value (0 for convs, -inf for maxpool)."""
    c = pad_ref.shape[-1]
    dt = pad_ref.dtype
    row = jnp.full((1, w + 2, c), value, dt)
    col = jnp.full((h + 2, 1, c), value, dt)
    pad_ref[0:1, :, :] = row
    pad_ref[h + 1:h + 2, :, :] = row
    pad_ref[:, 0:1, :] = col
    pad_ref[:, w + 1:w + 2, :] = col


def _conv3x3_kwfused(pad_ref, w_ref, h, w, cout):
    """'Same' 3x3 conv read from a zero-padded (h+2, w+2, cin) bf16 scratch.

    w_ref: (3, 3*cin, cout) bf16; for row kh, input-row block kw*cin+i holds
    tap (kh, kw).  The three kw taps are fused into one matmul -> 3 MXU
    matmuls with contraction depth K = 3*cin.  Returns (h*w, cout) float32.
    """
    cin = pad_ref.shape[-1]
    acc = jnp.zeros((h * w, cout), jnp.float32)
    for kh in range(3):
        xs = jnp.concatenate(
            [pad_ref[kh:kh + h, 0:w, :],
             pad_ref[kh:kh + h, 1:w + 1, :],
             pad_ref[kh:kh + h, 2:w + 2, :]], axis=-1)       # (h, w, 3*cin) bf16
        acc = acc + jnp.dot(xs.reshape(h * w, 3 * cin), w_ref[kh],
                            preferred_element_type=jnp.float32)
    return acc


# ----------------------------------------------------------------------------
# Kernel
# ----------------------------------------------------------------------------
def _inception_kernel(x_ref, w1x1_ref, w1a_ref, w1b_ref, w2_ref, w3_ref,
                      o_ref, pad1a, pad1b, pad2, padp):
    h, w, cin = x_ref.shape
    out_mp = w3_ref.shape[1]

    # Halo rings only (interior fully overwritten below).  Re-written every
    # step so it stays correct when the parallel batch axis is split across
    # TensorCores with private scratch.
    _init_halo_ring(pad1a, h, w, 0.0)
    _init_halo_ring(pad1b, h, w, 0.0)
    _init_halo_ring(pad2, h, w, 0.0)
    _init_halo_ring(padp, h, w, -jnp.inf)

    x = x_ref[...]                                           # (h, w, cin) bf16
    x_flat = x.reshape(h * w, cin)

    # --- three shared-input 1x1 convs as ONE bf16 MXU matmul -----------------
    y = jnp.dot(x_flat, w1x1_ref[...],
                preferred_element_type=jnp.float32)          # (h*w, 64+48+64)
    t1 = y[:, 0:_C_B1_0]                                     # branch1 input
    t2 = y[:, _C_B1_0:_C_B1_0 + _C_B2_0]                     # branch2 input
    r4 = y[:, _C_B1_0 + _C_B2_0:]                            # branch4 output

    # --- branch2: 1x1 -> 3x3 --------------------------------------------------
    pad2[1:h + 1, 1:w + 1, :] = t2.reshape(h, w, _C_B2_0).astype(jnp.bfloat16)
    r2 = _conv3x3_kwfused(pad2, w2_ref, h, w, _C_B2_1)       # (h*w, 64) f32

    # Store the [r2 | r4] slab as soon as it is ready (128 lanes at offset
    # 96+out_mp -> 128-aligned when out_mp == 32).
    off2 = _C_B1_2 + out_mp
    right = jnp.concatenate([r2, r4], axis=-1).astype(o_ref.dtype)
    o_ref[:, :, off2:off2 + _C_B2_1 + _C_B4] = right.reshape(
        h, w, _C_B2_1 + _C_B4)

    # --- branch3: maxpool(3x3, s=1, p=1) fused with its 1x1 conv --------------
    padp[1:h + 1, 1:w + 1, :] = x
    # Separable max: column (sublane-shift) maxes, then row (address) maxes.
    cmax = jnp.maximum(jnp.maximum(padp[:, 0:w, :], padp[:, 1:w + 1, :]),
                       padp[:, 2:w + 2, :])                  # (h+2, w, cin)
    mp = jnp.maximum(jnp.maximum(cmax[0:h], cmax[1:h + 1]), cmax[2:h + 2])
    r3 = jnp.dot(mp.reshape(h * w, cin), w3_ref[...],
                 preferred_element_type=jnp.float32)         # (h*w, out_mp)

    # --- branch1: 1x1 -> 3x3 -> 3x3 (intermediates stay in VMEM) --------------
    pad1a[1:h + 1, 1:w + 1, :] = t1.reshape(h, w, _C_B1_0).astype(jnp.bfloat16)
    m1 = _conv3x3_kwfused(pad1a, w1a_ref, h, w, _C_B1_1)     # (h*w, 96)
    pad1b[1:h + 1, 1:w + 1, :] = m1.reshape(h, w, _C_B1_1).astype(jnp.bfloat16)
    r1 = _conv3x3_kwfused(pad1b, w1b_ref, h, w, _C_B1_2)     # (h*w, 96)

    # Store the [r1 | r3] slab (96+out_mp lanes at offset 0).
    left = jnp.concatenate([r1, r3], axis=-1).astype(o_ref.dtype)
    o_ref[:, :, 0:_C_B1_2 + out_mp] = left.reshape(h, w, _C_B1_2 + out_mp)


# ----------------------------------------------------------------------------
# Wrapper
# ----------------------------------------------------------------------------
def _as_1x1(w_oihw):
    """Torch (O, I, 1, 1) -> (I, O)."""
    return jnp.transpose(w_oihw[:, :, 0, 0], (1, 0))


def _as_3x3_kwfused(w_oihw):
    """Torch (O, I, 3, 3) -> (3, 3*I, O); row kh, input-row index kw*I + i."""
    o, i = w_oihw.shape[0], w_oihw.shape[1]
    return jnp.transpose(w_oihw, (2, 3, 1, 0)).reshape(3, 3 * i, o)


def _vmem_limit_bytes(h, w, cin, out_mp):
    ctot = _C_B1_2 + _C_B2_1 + out_mp + _C_B4
    blk_in = h * w * cin * 2                       # bf16 input block
    blk_out = h * w * ctot * 2                     # bf16 output block
    wts = 2 * (cin * (_C_B1_0 + _C_B2_0 + _C_B4) + cin * out_mp
               + 9 * (_C_B1_0 * _C_B1_1 + _C_B1_1 * _C_B1_2
                      + _C_B2_0 * _C_B2_1))
    scratch = (h + 2) * (w + 2) * (_C_B1_0 + _C_B1_1 + _C_B2_0 + cin) * 2
    live = 8 * h * w * ctot * 4                    # f32 acc / patch headroom
    est = 2 * (blk_in + blk_out + wts) + scratch + live

    # Per-chip cap with headroom: use most of the 128 MiB on v5e/v6e, leave
    # ~12 MiB free on v7x (64 MiB/TC).  Conservative fallback if unknown.
    cap_bytes = None
    try:
        info = pltpu.get_tpu_info()
        cap_bytes = getattr(info, "vmem_capacity_bytes", None)
    except Exception:
        cap_bytes = None
    if cap_bytes is None:
        cap_bytes = 64 * 1024 * 1024
    cap = max(32 * 1024 * 1024, cap_bytes - 12 * 1024 * 1024)
    return int(min(max(est, 32 * 1024 * 1024), cap))


@jax.jit
def inception_block_v1(x_nchw, params):
    # bf16 activations: halves the wrapper transpose and kernel DMA bytes.
    x = jnp.transpose(x_nchw.astype(jnp.bfloat16), (0, 2, 3, 1))   # NHWC bf16
    n, h, w, cin = x.shape

    w1x1 = jnp.concatenate([_as_1x1(params["b1"][0]),
                            _as_1x1(params["b2"][0]),
                            _as_1x1(params["b4"][0])],
                           axis=1).astype(jnp.bfloat16)            # (cin, 176)
    w1a = _as_3x3_kwfused(params["b1"][1]).astype(jnp.bfloat16)    # (3, 192, 96)
    w1b = _as_3x3_kwfused(params["b1"][2]).astype(jnp.bfloat16)    # (3, 288, 96)
    w2 = _as_3x3_kwfused(params["b2"][1]).astype(jnp.bfloat16)     # (3, 144, 64)
    w3 = _as_1x1(params["b3"][0]).astype(jnp.bfloat16)             # (cin, out_mp)
    out_mp = w3.shape[1]
    ctot = _C_B1_2 + _C_B2_1 + out_mp + _C_B4

    grid_spec = pltpu.PrefetchScalarGridSpec(
        num_scalar_prefetch=0,
        grid=(n,),
        in_specs=[
            pl.BlockSpec((None, h, w, cin), lambda i: (i, 0, 0, 0)),
            # Weights: constant index_map -> fetched once, stay VMEM resident.
            pl.BlockSpec(w1x1.shape, lambda i: (0, 0)),
            pl.BlockSpec(w1a.shape, lambda i: (0, 0, 0)),
            pl.BlockSpec(w1b.shape, lambda i: (0, 0, 0)),
            pl.BlockSpec(w2.shape, lambda i: (0, 0, 0)),
            pl.BlockSpec(w3.shape, lambda i: (0, 0)),
        ],
        out_specs=pl.BlockSpec((None, h, w, ctot), lambda i: (i, 0, 0, 0)),
        scratch_shapes=[
            pltpu.VMEM((h + 2, w + 2, _C_B1_0), jnp.bfloat16),   # branch1 mid a
            pltpu.VMEM((h + 2, w + 2, _C_B1_1), jnp.bfloat16),   # branch1 mid b
            pltpu.VMEM((h + 2, w + 2, _C_B2_0), jnp.bfloat16),   # branch2 mid
            pltpu.VMEM((h + 2, w + 2, cin), jnp.bfloat16),       # maxpool pad
        ],
    )
    out = pl.pallas_call(
        _inception_kernel,
        out_shape=jax.ShapeDtypeStruct((n, h, w, ctot), jnp.bfloat16),
        grid_spec=grid_spec,
        compiler_params=pltpu.CompilerParams(
            dimension_semantics=("parallel",),
            vmem_limit_bytes=_vmem_limit_bytes(h, w, cin, out_mp)),
    )(x, w1x1, w1a, w1b, w2, w3)

    # Kernel emits channels as [r1 | r3 | r2 | r4] for lane-aligned stores;
    # undo the permutation here (fuses into the NCHW transpose copy).
    s0 = _C_B1_2
    s1 = _C_B1_2 + out_mp
    s2 = _C_B1_2 + out_mp + _C_B2_1
    out = jnp.concatenate([out[..., :s0], out[..., s1:s2],
                           out[..., s0:s1], out[..., s2:]], axis=-1)
    return jnp.transpose(out, (0, 3, 1, 2)).astype(jnp.float32)    # NCHW f32


# ----------------------------------------------------------------------------
# Parameters (torch OIHW layout) and pure-JAX reference for validation
# ----------------------------------------------------------------------------
def init_params(key, in_ch, out_maxpool):
    ks = jax.random.split(key, 7)

    def w(k, o, i, kh, kw):
        fan_in = i * kh * kw
        return jax.random.normal(k, (o, i, kh, kw), jnp.float32) / np.sqrt(fan_in)

    return {
        "b1": [w(ks[0], _C_B1_0, in_ch, 1, 1),
               w(ks[1], _C_B1_1, _C_B1_0, 3, 3),
               w(ks[2], _C_B1_2, _C_B1_1, 3, 3)],
        "b2": [w(ks[3], _C_B2_0, in_ch, 1, 1),
               w(ks[4], _C_B2_1, _C_B2_0, 3, 3)],
        "b3": [w(ks[5], out_maxpool, in_ch, 1, 1)],
        "b4": [w(ks[6], _C_B4, in_ch, 1, 1)],
    }


def _conv_ref(x, w, pad):
    return lax.conv_general_dilated(
        x, w, (1, 1), ((pad, pad), (pad, pad)),
        dimension_numbers=("NCHW", "OIHW", "NCHW"))


def reference(x, params):
    b1 = params["b1"]
    o1 = _conv_ref(_conv_ref(_conv_ref(x, b1[0], 0), b1[1], 1), b1[2], 1)
    b2 = params["b2"]
    o2 = _conv_ref(_conv_ref(x, b2[0], 0), b2[1], 1)
    mp = lax.reduce_window(x, -jnp.inf, lax.max, (1, 1, 3, 3), (1, 1, 1, 1),
                           ((0, 0), (0, 0), (1, 1), (1, 1)))
    o3 = _conv_ref(mp, params["b3"][0], 0)
    o4 = _conv_ref(x, params["b4"][0], 0)
    return jnp.concatenate([o1, o2, o3, o4], axis=1)


if __name__ == "__main__":
    key = jax.random.PRNGKey(0)
    kx, kp = jax.random.split(key)

    n, in_ch, hh, ww = 2, 8, 16, 16
    out_maxpool = 32
    x = jax.random.normal(kx, (n, in_ch, hh, ww), jnp.float32)
    params = init_params(kp, in_ch, out_maxpool)

    y = jax.block_until_ready(inception_block_v1(x, params))
    y_ref = jax.block_until_ready(reference(x, params))

    c_total = _C_B1_2 + _C_B2_1 + out_maxpool + _C_B4
    assert y.shape == (n, c_total, hh, ww), y.shape
    # bf16 activations/weights/output with f32 MXU accumulation vs f32 ref.
    np.testing.assert_allclose(np.asarray(y), np.asarray(y_ref),
                               rtol=5e-2, atol=5e-2)
    print("KERNEL_OK")
</pallas_src>

<mosaic_0001>
module attributes {stable_mosaic.version = 11 : i64} {
  func.func @_inception_kernel(%arg0: i32, %arg1: memref<1x16x16x8xbf16, #tpu.memory_space<vmem>>, %arg2: memref<8x176xbf16, #tpu.memory_space<vmem>>, %arg3: memref<3x192x96xbf16, #tpu.memory_space<vmem>>, %arg4: memref<3x288x96xbf16, #tpu.memory_space<vmem>>, %arg5: memref<3x144x64xbf16, #tpu.memory_space<vmem>>, %arg6: memref<8x32xbf16, #tpu.memory_space<vmem>>, %arg7: memref<1x16x16x256xbf16, #tpu.memory_space<vmem>>, %arg8: memref<18x18x64xbf16, #tpu.memory_space<vmem>>, %arg9: memref<18x18x96xbf16, #tpu.memory_space<vmem>>, %arg10: memref<18x18x48xbf16, #tpu.memory_space<vmem>>, %arg11: memref<18x18x8xbf16, #tpu.memory_space<vmem>>) attributes {dimension_semantics = [#tpu.dimension_semantics<parallel>], iteration_bounds = array<i64: 2>, scalar_prefetch = 0 : i64, scratch_operands = 4 : i64, tpu.core_type = #tpu.core_type<tc>, window_params = [{transform_indices = @transform_0, window_bounds = array<i64: 1, 16, 16, 8>}, {pipeline_mode = #tpu.pipeline_mode<synchronous>, transform_indices = @transform_1, window_bounds = array<i64: 8, 176>}, {pipeline_mode = #tpu.pipeline_mode<synchronous>, transform_indices = @transform_2, window_bounds = array<i64: 3, 192, 96>}, {pipeline_mode = #tpu.pipeline_mode<synchronous>, transform_indices = @transform_3, window_bounds = array<i64: 3, 288, 96>}, {pipeline_mode = #tpu.pipeline_mode<synchronous>, transform_indices = @transform_4, window_bounds = array<i64: 3, 144, 64>}, {pipeline_mode = #tpu.pipeline_mode<synchronous>, transform_indices = @transform_5, window_bounds = array<i64: 8, 32>}, {transform_indices = @transform_6, window_bounds = array<i64: 1, 16, 16, 256>}]} {
    %cst = arith.constant 0.000000e+00 : bf16
    %0 = vector.broadcast %cst : bf16 to vector<1x18x64xbf16>
    %cst_0 = arith.constant 0.000000e+00 : bf16
    %1 = vector.broadcast %cst_0 : bf16 to vector<18x1x64xbf16>
    %c0 = arith.constant 0 : index
    %c0_1 = arith.constant 0 : index
    %c0_2 = arith.constant 0 : index
    %2 = vector.load %arg8[%c0, %c0_1, %c0_2] : memref<18x18x64xbf16, #tpu.memory_space<vmem>>, vector<1x18x64xbf16>
    tpu.vector_store %arg8[%c0, %c0_1, %c0_2], %0 {strides = array<i32>} : memref<18x18x64xbf16, #tpu.memory_space<vmem>>, vector<1x18x64xbf16>,
    %c17 = arith.constant 17 : index
    %c0_3 = arith.constant 0 : index
    %c0_4 = arith.constant 0 : index
    %3 = vector.load %arg8[%c17, %c0_3, %c0_4] : memref<18x18x64xbf16, #tpu.memory_space<vmem>>, vector<1x18x64xbf16>
    tpu.vector_store %arg8[%c17, %c0_3, %c0_4], %0 {strides = array<i32>} : memref<18x18x64xbf16, #tpu.memory_space<vmem>>, vector<1x18x64xbf16>,
    %c0_5 = arith.constant 0 : index
    %c0_6 = arith.constant 0 : index
    %c0_7 = arith.constant 0 : index
    %4 = vector.load %arg8[%c0_5, %c0_6, %c0_7] : memref<18x18x64xbf16, #tpu.memory_space<vmem>>, vector<18x1x64xbf16>
    tpu.vector_store %arg8[%c0_5, %c0_6, %c0_7], %1 {strides = array<i32>} : memref<18x18x64xbf16, #tpu.memory_space<vmem>>, vector<18x1x64xbf16>,
    %c0_8 = arith.constant 0 : index
    %c17_9 = arith.constant 17 : index
    %c0_10 = arith.constant 0 : index
    %5 = vector.load %arg8[%c0_8, %c17_9, %c0_10] : memref<18x18x64xbf16, #tpu.memory_space<vmem>>, vector<18x1x64xbf16>
    tpu.vector_store %arg8[%c0_8, %c17_9, %c0_10], %1 {strides = array<i32>} : memref<18x18x64xbf16, #tpu.memory_space<vmem>>, vector<18x1x64xbf16>,
    %cst_11 = arith.constant 0.000000e+00 : bf16
    %6 = vector.broadcast %cst_11 : bf16 to vector<1x18x96xbf16>
    %cst_12 = arith.constant 0.000000e+00 : bf16
    %7 = vector.broadcast %cst_12 : bf16 to vector<18x1x96xbf16>
    %c0_13 = arith.constant 0 : index
    %c0_14 = arith.constant 0 : index
    %c0_15 = arith.constant 0 : index
    %8 = vector.load %arg9[%c0_13, %c0_14, %c0_15] : memref<18x18x96xbf16, #tpu.memory_space<vmem>>, vector<1x18x96xbf16>
    tpu.vector_store %arg9[%c0_13, %c0_14, %c0_15], %6 {strides = array<i32>} : memref<18x18x96xbf16, #tpu.memory_space<vmem>>, vector<1x18x96xbf16>,
    %c17_16 = arith.constant 17 : index
    %c0_17 = arith.constant 0 : index
    %c0_18 = arith.constant 0 : index
    %9 = vector.load %arg9[%c17_16, %c0_17, %c0_18] : memref<18x18x96xbf16, #tpu.memory_space<vmem>>, vector<1x18x96xbf16>
    tpu.vector_store %arg9[%c17_16, %c0_17, %c0_18], %6 {strides = array<i32>} : memref<18x18x96xbf16, #tpu.memory_space<vmem>>, vector<1x18x96xbf16>,
    %c0_19 = arith.constant 0 : index
    %c0_20 = arith.constant 0 : index
    %c0_21 = arith.constant 0 : index
    %10 = vector.load %arg9[%c0_19, %c0_20, %c0_21] : memref<18x18x96xbf16, #tpu.memory_space<vmem>>, vector<18x1x96xbf16>
    tpu.vector_store %arg9[%c0_19, %c0_20, %c0_21], %7 {strides = array<i32>} : memref<18x18x96xbf16, #tpu.memory_space<vmem>>, vector<18x1x96xbf16>,
    %c0_22 = arith.constant 0 : index
    %c17_23 = arith.constant 17 : index
    %c0_24 = arith.constant 0 : index
    %11 = vector.load %arg9[%c0_22, %c17_23, %c0_24] : memref<18x18x96xbf16, #tpu.memory_space<vmem>>, vector<18x1x96xbf16>
    tpu.vector_store %arg9[%c0_22, %c17_23, %c0_24], %7 {strides = array<i32>} : memref<18x18x96xbf16, #tpu.memory_space<vmem>>, vector<18x1x96xbf16>,
    %cst_25 = arith.constant 0.000000e+00 : bf16
    %12 = vector.broadcast %cst_25 : bf16 to vector<1x18x48xbf16>
    %cst_26 = arith.constant 0.000000e+00 : bf16
    %13 = vector.broadcast %cst_26 : bf16 to vector<18x1x48xbf16>
    %c0_27 = arith.constant 0 : index
    %c0_28 = arith.constant 0 : index
    %c0_29 = arith.constant 0 : index
    %14 = vector.load %arg10[%c0_27, %c0_28, %c0_29] : memref<18x18x48xbf16, #tpu.memory_space<vmem>>, vector<1x18x48xbf16>
    tpu.vector_store %arg10[%c0_27, %c0_28, %c0_29], %12 {strides = array<i32>} : memref<18x18x48xbf16, #tpu.memory_space<vmem>>, vector<1x18x48xbf16>,
    %c17_30 = arith.constant 17 : index
    %c0_31 = arith.constant 0 : index
    %c0_32 = arith.constant 0 : index
    %15 = vector.load %arg10[%c17_30, %c0_31, %c0_32] : memref<18x18x48xbf16, #tpu.memory_space<vmem>>, vector<1x18x48xbf16>
    tpu.vector_store %arg10[%c17_30, %c0_31, %c0_32], %12 {strides = array<i32>} : memref<18x18x48xbf16, #tpu.memory_space<vmem>>, vector<1x18x48xbf16>,
    %c0_33 = arith.constant 0 : index
    %c0_34 = arith.constant 0 : index
    %c0_35 = arith.constant 0 : index
    %16 = vector.load %arg10[%c0_33, %c0_34, %c0_35] : memref<18x18x48xbf16, #tpu.memory_space<vmem>>, vector<18x1x48xbf16>
    tpu.vector_store %arg10[%c0_33, %c0_34, %c0_35], %13 {strides = array<i32>} : memref<18x18x48xbf16, #tpu.memory_space<vmem>>, vector<18x1x48xbf16>,
    %c0_36 = arith.constant 0 : index
    %c17_37 = arith.constant 17 : index
    %c0_38 = arith.constant 0 : index
    %17 = vector.load %arg10[%c0_36, %c17_37, %c0_38] : memref<18x18x48xbf16, #tpu.memory_space<vmem>>, vector<18x1x48xbf16>
    tpu.vector_store %arg10[%c0_36, %c17_37, %c0_38], %13 {strides = array<i32>} : memref<18x18x48xbf16, #tpu.memory_space<vmem>>, vector<18x1x48xbf16>,
    %cst_39 = arith.constant 0xFF80 : bf16
    %18 = vector.broadcast %cst_39 : bf16 to vector<1x18x8xbf16>
    %cst_40 = arith.constant 0xFF80 : bf16
    %19 = vector.broadcast %cst_40 : bf16 to vector<18x1x8xbf16>
    %c0_41 = arith.constant 0 : index
    %c0_42 = arith.constant 0 : index
    %c0_43 = arith.constant 0 : index
    %20 = vector.load %arg11[%c0_41, %c0_42, %c0_43] : memref<18x18x8xbf16, #tpu.memory_space<vmem>>, vector<1x18x8xbf16>
    tpu.vector_store %arg11[%c0_41, %c0_42, %c0_43], %18 {strides = array<i32>} : memref<18x18x8xbf16, #tpu.memory_space<vmem>>, vector<1x18x8xbf16>,
    %c17_44 = arith.constant 17 : index
    %c0_45 = arith.constant 0 : index
    %c0_46 = arith.constant 0 : index
    %21 = vector.load %arg11[%c17_44, %c0_45, %c0_46] : memref<18x18x8xbf16, #tpu.memory_space<vmem>>, vector<1x18x8xbf16>
    tpu.vector_store %arg11[%c17_44, %c0_45, %c0_46], %18 {strides = array<i32>} : memref<18x18x8xbf16, #tpu.memory_space<vmem>>, vector<1x18x8xbf16>,
    %c0_47 = arith.constant 0 : index
    %c0_48 = arith.constant 0 : index
    %c0_49 = arith.constant 0 : index
    %22 = vector.load %arg11[%c0_47, %c0_48, %c0_49] : memref<18x18x8xbf16, #tpu.memory_space<vmem>>, vector<18x1x8xbf16>
    tpu.vector_store %arg11[%c0_47, %c0_48, %c0_49], %19 {strides = array<i32>} : memref<18x18x8xbf16, #tpu.memory_space<vmem>>, vector<18x1x8xbf16>,
    %c0_50 = arith.constant 0 : index
    %c17_51 = arith.constant 17 : index
    %c0_52 = arith.constant 0 : index
    %23 = vector.load %arg11[%c0_50, %c17_51, %c0_52] : memref<18x18x8xbf16, #tpu.memory_space<vmem>>, vector<18x1x8xbf16>
    tpu.vector_store %arg11[%c0_50, %c17_51, %c0_52], %19 {strides = array<i32>} : memref<18x18x8xbf16, #tpu.memory_space<vmem>>, vector<18x1x8xbf16>,
    %c0_53 = arith.constant 0 : index
    %c0_54 = arith.constant 0 : index
    %c0_55 = arith.constant 0 : index
    %c0_56 = arith.constant 0 : index
    %24 = vector.load %arg1[%c0_53, %c0_54, %c0_55, %c0_56] : memref<1x16x16x8xbf16, #tpu.memory_space<vmem>>, vector<1x16x16x8xbf16>
    %25 = vector.shape_cast %24 : vector<1x16x16x8xbf16> to vector<16x16x8xbf16>
    %26 = vector.shape_cast %25 : vector<16x16x8xbf16> to vector<256x8xbf16>
    %c0_57 = arith.constant 0 : index
    %c0_58 = arith.constant 0 : index
    %27 = vector.load %arg2[%c0_57, %c0_58] : memref<8x176xbf16, #tpu.memory_space<vmem>>, vector<8x176xbf16>
    %cst_59 = arith.constant dense<0.000000e+00> : vector<256x176xf32>
    %28 = tpu.matmul %26, %27, %cst_59 {dimension_numbers = #tpu.dot_dimension_numbers<[1], [0], [0], [1], [0, 0, 1, 1], [], []>} : vector<256x8xbf16>, vector<8x176xbf16>, vector<256x176xf32> -> vector<256x176xf32>
    %29 = vector.extract_strided_slice %28 {offsets = [0, 0], sizes = [256, 64], strides = [1, 1]} : vector<256x176xf32> to vector<256x64xf32>
    %30 = vector.extract_strided_slice %28 {offsets = [0, 64], sizes = [256, 48], strides = [1, 1]} : vector<256x176xf32> to vector<256x48xf32>
    %31 = vector.extract_strided_slice %28 {offsets = [0, 112], sizes = [256, 64], strides = [1, 1]} : vector<256x176xf32> to vector<256x64xf32>
    %32 = vector.shape_cast %30 : vector<256x48xf32> to vector<16x16x48xf32>
    %33 = arith.truncf %32 : vector<16x16x48xf32> to vector<16x16x48xbf16>
    %c1 = arith.constant 1 : index
    %c1_60 = arith.constant 1 : index
    %c0_61 = arith.constant 0 : index
    %34 = vector.load %arg10[%c1, %c1_60, %c0_61] : memref<18x18x48xbf16, #tpu.memory_space<vmem>>, vector<16x16x48xbf16>
    tpu.vector_store %arg10[%c1, %c1_60, %c0_61], %33 {strides = array<i32>} : memref<18x18x48xbf16, #tpu.memory_space<vmem>>, vector<16x16x48xbf16>,
    %cst_62 = arith.constant 0.000000e+00 : f32
    %35 = vector.broadcast %cst_62 : f32 to vector<256x64xf32>
    %c0_63 = arith.constant 0 : index
    %c0_64 = arith.constant 0 : index
    %c0_65 = arith.constant 0 : index
    %36 = vector.load %arg10[%c0_63, %c0_64, %c0_65] : memref<18x18x48xbf16, #tpu.memory_space<vmem>>, vector<16x16x48xbf16>
    %c0_66 = arith.constant 0 : index
    %c1_67 = arith.constant 1 : index
    %c0_68 = arith.constant 0 : index
    %37 = vector.load %arg10[%c0_66, %c1_67, %c0_68] : memref<18x18x48xbf16, #tpu.memory_space<vmem>>, vector<16x16x48xbf16>
    %c0_69 = arith.constant 0 : index
    %c2 = arith.constant 2 : index
    %c0_70 = arith.constant 0 : index
    %38 = vector.load %arg10[%c0_69, %c2, %c0_70] : memref<18x18x48xbf16, #tpu.memory_space<vmem>>, vector<16x16x48xbf16>
    %39 = tpu.concatenate %36, %37, %38 in 2 : vector<16x16x48xbf16>, vector<16x16x48xbf16>, vector<16x16x48xbf16> -> vector<16x16x144xbf16>
    %40 = vector.shape_cast %39 : vector<16x16x144xbf16> to vector<256x144xbf16>
    %c0_71 = arith.constant 0 : index
    %c0_72 = arith.constant 0 : index
    %c0_73 = arith.constant 0 : index
    %41 = vector.load %arg5[%c0_71, %c0_72, %c0_73] : memref<3x144x64xbf16, #tpu.memory_space<vmem>>, vector<1x144x64xbf16>
    %42 = vector.shape_cast %41 : vector<1x144x64xbf16> to vector<144x64xbf16>
    %cst_74 = arith.constant dense<0.000000e+00> : vector<256x64xf32>
    %43 = tpu.matmul %40, %42, %cst_74 {dimension_numbers = #tpu.dot_dimension_numbers<[1], [0], [0], [1], [0, 0, 1, 1], [], []>} : vector<256x144xbf16>, vector<144x64xbf16>, vector<256x64xf32> -> vector<256x64xf32>
    %44 = arith.addf %35, %43 : vector<256x64xf32>
    %c1_75 = arith.constant 1 : index
    %c0_76 = arith.constant 0 : index
    %c0_77 = arith.constant 0 : index
    %45 = vector.load %arg10[%c1_75, %c0_76, %c0_77] : memref<18x18x48xbf16, #tpu.memory_space<vmem>>, vector<16x16x48xbf16>
    %c1_78 = arith.constant 1 : index
    %c1_79 = arith.constant 1 : index
    %c0_80 = arith.constant 0 : index
    %46 = vector.load %arg10[%c1_78, %c1_79, %c0_80] : memref<18x18x48xbf16, #tpu.memory_space<vmem>>, vector<16x16x48xbf16>
    %c1_81 = arith.constant 1 : index
    %c2_82 = arith.constant 2 : index
    %c0_83 = arith.constant 0 : index
    %47 = vector.load %arg10[%c1_81, %c2_82, %c0_83] : memref<18x18x48xbf16, #tpu.memory_space<vmem>>, vector<16x16x48xbf16>
    %48 = tpu.concatenate %45, %46, %47 in 2 : vector<16x16x48xbf16>, vector<16x16x48xbf16>, vector<16x16x48xbf16> -> vector<16x16x144xbf16>
    %49 = vector.shape_cast %48 : vector<16x16x144xbf16> to vector<256x144xbf16>
    %c1_84 = arith.constant 1 : index
    %c0_85 = arith.constant 0 : index
    %c0_86 = arith.constant 0 : index
    %50 = vector.load %arg5[%c1_84, %c0_85, %c0_86] : memref<3x144x64xbf16, #tpu.memory_space<vmem>>, vector<1x144x64xbf16>
    %51 = vector.shape_cast %50 : vector<1x144x64xbf16> to vector<144x64xbf16>
    %cst_87 = arith.constant dense<0.000000e+00> : vector<256x64xf32>
    %52 = tpu.matmul %49, %51, %cst_87 {dimension_numbers = #tpu.dot_dimension_numbers<[1], [0], [0], [1], [0, 0, 1, 1], [], []>} : vector<256x144xbf16>, vector<144x64xbf16>, vector<256x64xf32> -> vector<256x64xf32>
    %53 = arith.addf %44, %52 : vector<256x64xf32>
    %c2_88 = arith.constant 2 : index
    %c0_89 = arith.constant 0 : index
    %c0_90 = arith.constant 0 : index
    %54 = vector.load %arg10[%c2_88, %c0_89, %c0_90] : memref<18x18x48xbf16, #tpu.memory_space<vmem>>, vector<16x16x48xbf16>
    %c2_91 = arith.constant 2 : index
    %c1_92 = arith.constant 1 : index
    %c0_93 = arith.constant 0 : index
    %55 = vector.load %arg10[%c2_91, %c1_92, %c0_93] : memref<18x18x48xbf16, #tpu.memory_space<vmem>>, vector<16x16x48xbf16>
    %c2_94 = arith.constant 2 : index
    %c2_95 = arith.constant 2 : index
    %c0_96 = arith.constant 0 : index
    %56 = vector.load %arg10[%c2_94, %c2_95, %c0_96] : memref<18x18x48xbf16, #tpu.memory_space<vmem>>, vector<16x16x48xbf16>
    %57 = tpu.concatenate %54, %55, %56 in 2 : vector<16x16x48xbf16>, vector<16x16x48xbf16>, vector<16x16x48xbf16> -> vector<16x16x144xbf16>
    %58 = vector.shape_cast %57 : vector<16x16x144xbf16> to vector<256x144xbf16>
    %c2_97 = arith.constant 2 : index
    %c0_98 = arith.constant 0 : index
    %c0_99 = arith.constant 0 : index
    %59 = vector.load %arg5[%c2_97, %c0_98, %c0_99] : memref<3x144x64xbf16, #tpu.memory_space<vmem>>, vector<1x144x64xbf16>
    %60 = vector.shape_cast %59 : vector<1x144x64xbf16> to vector<144x64xbf16>
    %cst_100 = arith.constant dense<0.000000e+00> : vector<256x64xf32>
    %61 = tpu.matmul %58, %60, %cst_100 {dimension_numbers = #tpu.dot_dimension_numbers<[1], [0], [0], [1], [0, 0, 1, 1], [], []>} : vector<256x144xbf16>, vector<144x64xbf16>, vector<256x64xf32> -> vector<256x64xf32>
    %62 = arith.addf %53, %61 : vector<256x64xf32>
    %63 = tpu.concatenate %62, %31 in 1 : vector<256x64xf32>, vector<256x64xf32> -> vector<256x128xf32>
    %64 = arith.truncf %63 : vector<256x128xf32> to vector<256x128xbf16>
    %65 = vector.shape_cast %64 : vector<256x128xbf16> to vector<16x16x128xbf16>
    %c0_101 = arith.constant 0 : index
    %c0_102 = arith.constant 0 : index
    %c0_103 = arith.constant 0 : index
    %c128 = arith.constant 128 : index
    %66 = vector.load %arg7[%c0_101, %c0_102, %c0_103, %c128] : memref<1x16x16x256xbf16, #tpu.memory_space<vmem>>, vector<1x16x16x128xbf16>
    %67 = vector.shape_cast %66 : vector<1x16x16x128xbf16> to vector<16x16x128xbf16>
    %68 = vector.shape_cast %65 : vector<16x16x128xbf16> to vector<1x16x16x128xbf16>
    tpu.vector_store %arg7[%c0_101, %c0_102, %c0_103, %c128], %68 {strides = array<i32>} : memref<1x16x16x256xbf16, #tpu.memory_space<vmem>>, vector<1x16x16x128xbf16>,
    %c1_104 = arith.constant 1 : index
    %c1_105 = arith.constant 1 : index
    %c0_106 = arith.constant 0 : index
    %69 = vector.load %arg11[%c1_104, %c1_105, %c0_106] : memref<18x18x8xbf16, #tpu.memory_space<vmem>>, vector<16x16x8xbf16>
    tpu.vector_store %arg11[%c1_104, %c1_105, %c0_106], %25 {strides = array<i32>} : memref<18x18x8xbf16, #tpu.memory_space<vmem>>, vector<16x16x8xbf16>,
    %c0_107 = arith.constant 0 : index
    %c0_108 = arith.constant 0 : index
    %c0_109 = arith.constant 0 : index
    %70 = vector.load %arg11[%c0_107, %c0_108, %c0_109] : memref<18x18x8xbf16, #tpu.memory_space<vmem>>, vector<18x16x8xbf16>
    %c0_110 = arith.constant 0 : index
    %c1_111 = arith.constant 1 : index
    %c0_112 = arith.constant 0 : index
    %71 = vector.load %arg11[%c0_110, %c1_111, %c0_112] : memref<18x18x8xbf16, #tpu.memory_space<vmem>>, vector<18x16x8xbf16>
    %72 = arith.maximumf %70, %71 : vector<18x16x8xbf16>
    %c0_113 = arith.constant 0 : index
    %c2_114 = arith.constant 2 : index
    %c0_115 = arith.constant 0 : index
    %73 = vector.load %arg11[%c0_113, %c2_114, %c0_115] : memref<18x18x8xbf16, #tpu.memory_space<vmem>>, vector<18x16x8xbf16>
    %74 = arith.maximumf %72, %73 : vector<18x16x8xbf16>
    %75 = vector.extract_strided_slice %74 {offsets = [0, 0, 0], sizes = [16, 16, 8], strides = [1, 1, 1]} : vector<18x16x8xbf16> to vector<16x16x8xbf16>
    %76 = vector.extract_strided_slice %74 {offsets = [1, 0, 0], sizes = [16, 16, 8], strides = [1, 1, 1]} : vector<18x16x8xbf16> to vector<16x16x8xbf16>
    %77 = arith.maximumf %75, %76 : vector<16x16x8xbf16>
    %78 = vector.extract_strided_slice %74 {offsets = [2, 0, 0], sizes = [16, 16, 8], strides = [1, 1, 1]} : vector<18x16x8xbf16> to vector<16x16x8xbf16>
    %79 = arith.maximumf %77, %78 : vector<16x16x8xbf16>
    %80 = vector.shape_cast %79 : vector<16x16x8xbf16> to vector<256x8xbf16>
    %c0_116 = arith.constant 0 : index
    %c0_117 = arith.constant 0 : index
    %81 = vector.load %arg6[%c0_116, %c0_117] : memref<8x32xbf16, #tpu.memory_space<vmem>>, vector<8x32xbf16>
    %cst_118 = arith.constant dense<0.000000e+00> : vector<256x32xf32>
    %82 = tpu.matmul %80, %81, %cst_118 {dimension_numbers = #tpu.dot_dimension_numbers<[1], [0], [0], [1], [0, 0, 1, 1], [], []>} : vector<256x8xbf16>, vector<8x32xbf16>, vector<256x32xf32> -> vector<256x32xf32>
    %83 = vector.shape_cast %29 : vector<256x64xf32> to vector<16x16x64xf32>
    %84 = arith.truncf %83 : vector<16x16x64xf32> to vector<16x16x64xbf16>
    %c1_119 = arith.constant 1 : index
    %c1_120 = arith.constant 1 : index
    %c0_121 = arith.constant 0 : index
    %85 = vector.load %arg8[%c1_119, %c1_120, %c0_121] : memref<18x18x64xbf16, #tpu.memory_space<vmem>>, vector<16x16x64xbf16>
    tpu.vector_store %arg8[%c1_119, %c1_120, %c0_121], %84 {strides = array<i32>} : memref<18x18x64xbf16, #tpu.memory_space<vmem>>, vector<16x16x64xbf16>,
    %cst_122 = arith.constant 0.000000e+00 : f32
    %86 = vector.broadcast %cst_122 : f32 to vector<256x96xf32>
    %c0_123 = arith.constant 0 : index
    %c0_124 = arith.constant 0 : index
    %c0_125 = arith.constant 0 : index
    %87 = vector.load %arg8[%c0_123, %c0_124, %c0_125] : memref<18x18x64xbf16, #tpu.memory_space<vmem>>, vector<16x16x64xbf16>
    %c0_126 = arith.constant 0 : index
    %c1_127 = arith.constant 1 : index
    %c0_128 = arith.constant 0 : index
    %88 = vector.load %arg8[%c0_126, %c1_127, %c0_128] : memref<18x18x64xbf16, #tpu.memory_space<vmem>>, vector<16x16x64xbf16>
    %c0_129 = arith.constant 0 : index
    %c2_130 = arith.constant 2 : index
    %c0_131 = arith.constant 0 : index
    %89 = vector.load %arg8[%c0_129, %c2_130, %c0_131] : memref<18x18x64xbf16, #tpu.memory_space<vmem>>, vector<16x16x64xbf16>
    %90 = tpu.concatenate %87, %88, %89 in 2 : vector<16x16x64xbf16>, vector<16x16x64xbf16>, vector<16x16x64xbf16> -> vector<16x16x192xbf16>
    %91 = vector.shape_cast %90 : vector<16x16x192xbf16> to vector<256x192xbf16>
    %c0_132 = arith.constant 0 : index
    %c0_133 = arith.constant 0 : index
    %c0_134 = arith.constant 0 : index
    %92 = vector.load %arg3[%c0_132, %c0_133, %c0_134] : memref<3x192x96xbf16, #tpu.memory_space<vmem>>, vector<1x192x96xbf16>
    %93 = vector.shape_cast %92 : vector<1x192x96xbf16> to vector<192x96xbf16>
    %cst_135 = arith.constant dense<0.000000e+00> : vector<256x96xf32>
    %94 = tpu.matmul %91, %93, %cst_135 {dimension_numbers = #tpu.dot_dimension_numbers<[1], [0], [0], [1], [0, 0, 1, 1], [], []>} : vector<256x192xbf16>, vector<192x96xbf16>, vector<256x96xf32> -> vector<256x96xf32>
    %95 = arith.addf %86, %94 : vector<256x96xf32>
    %c1_136 = arith.constant 1 : index
    %c0_137 = arith.constant 0 : index
    %c0_138 = arith.constant 0 : index
    %96 = vector.load %arg8[%c1_136, %c0_137, %c0_138] : memref<18x18x64xbf16, #tpu.memory_space<vmem>>, vector<16x16x64xbf16>
    %c1_139 = arith.constant 1 : index
    %c1_140 = arith.constant 1 : index
    %c0_141 = arith.constant 0 : index
    %97 = vector.load %arg8[%c1_139, %c1_140, %c0_141] : memref<18x18x64xbf16, #tpu.memory_space<vmem>>, vector<16x16x64xbf16>
    %c1_142 = arith.constant 1 : index
    %c2_143 = arith.constant 2 : index
    %c0_144 = arith.constant 0 : index
    %98 = vector.load %arg8[%c1_142, %c2_143, %c0_144] : memref<18x18x64xbf16, #tpu.memory_space<vmem>>, vector<16x16x64xbf16>
    %99 = tpu.concatenate %96, %97, %98 in 2 : vector<16x16x64xbf16>, vector<16x16x64xbf16>, vector<16x16x64xbf16> -> vector<16x16x192xbf16>
    %100 = vector.shape_cast %99 : vector<16x16x192xbf16> to vector<256x192xbf16>
    %c1_145 = arith.constant 1 : index
    %c0_146 = arith.constant 0 : index
    %c0_147 = arith.constant 0 : index
    %101 = vector.load %arg3[%c1_145, %c0_146, %c0_147] : memref<3x192x96xbf16, #tpu.memory_space<vmem>>, vector<1x192x96xbf16>
    %102 = vector.shape_cast %101 : vector<1x192x96xbf16> to vector<192x96xbf16>
    %cst_148 = arith.constant dense<0.000000e+00> : vector<256x96xf32>
    %103 = tpu.matmul %100, %102, %cst_148 {dimension_numbers = #tpu.dot_dimension_numbers<[1], [0], [0], [1], [0, 0, 1, 1], [], []>} : vector<256x192xbf16>, vector<192x96xbf16>, vector<256x96xf32> -> vector<256x96xf32>
    %104 = arith.addf %95, %103 : vector<256x96xf32>
    %c2_149 = arith.constant 2 : index
    %c0_150 = arith.constant 0 : index
    %c0_151 = arith.constant 0 : index
    %105 = vector.load %arg8[%c2_149, %c0_150, %c0_151] : memref<18x18x64xbf16, #tpu.memory_space<vmem>>, vector<16x16x64xbf16>
    %c2_152 = arith.constant 2 : index
    %c1_153 = arith.constant 1 : index
    %c0_154 = arith.constant 0 : index
    %106 = vector.load %arg8[%c2_152, %c1_153, %c0_154] : memref<18x18x64xbf16, #tpu.memory_space<vmem>>, vector<16x16x64xbf16>
    %c2_155 = arith.constant 2 : index
    %c2_156 = arith.constant 2 : index
    %c0_157 = arith.constant 0 : index
    %107 = vector.load %arg8[%c2_155, %c2_156, %c0_157] : memref<18x18x64xbf16, #tpu.memory_space<vmem>>, vector<16x16x64xbf16>
    %108 = tpu.concatenate %105, %106, %107 in 2 : vector<16x16x64xbf16>, vector<16x16x64xbf16>, vector<16x16x64xbf16> -> vector<16x16x192xbf16>
    %109 = vector.shape_cast %108 : vector<16x16x192xbf16> to vector<256x192xbf16>
    %c2_158 = arith.constant 2 : index
    %c0_159 = arith.constant 0 : index
    %c0_160 = arith.constant 0 : index
    %110 = vector.load %arg3[%c2_158, %c0_159, %c0_160] : memref<3x192x96xbf16, #tpu.memory_space<vmem>>, vector<1x192x96xbf16>
    %111 = vector.shape_cast %110 : vector<1x192x96xbf16> to vector<192x96xbf16>
    %cst_161 = arith.constant dense<0.000000e+00> : vector<256x96xf32>
    %112 = tpu.matmul %109, %111, %cst_161 {dimension_numbers = #tpu.dot_dimension_numbers<[1], [0], [0], [1], [0, 0, 1, 1], [], []>} : vector<256x192xbf16>, vector<192x96xbf16>, vector<256x96xf32> -> vector<256x96xf32>
    %113 = arith.addf %104, %112 : vector<256x96xf32>
    %114 = vector.shape_cast %113 : vector<256x96xf32> to vector<16x16x96xf32>
    %115 = arith.truncf %114 : vector<16x16x96xf32> to vector<16x16x96xbf16>
    %c1_162 = arith.constant 1 : index
    %c1_163 = arith.constant 1 : index
    %c0_164 = arith.constant 0 : index
    %116 = vector.load %arg9[%c1_162, %c1_163, %c0_164] : memref<18x18x96xbf16, #tpu.memory_space<vmem>>, vector<16x16x96xbf16>
    tpu.vector_store %arg9[%c1_162, %c1_163, %c0_164], %115 {strides = array<i32>} : memref<18x18x96xbf16, #tpu.memory_space<vmem>>, vector<16x16x96xbf16>,
    %cst_165 = arith.constant 0.000000e+00 : f32
    %117 = vector.broadcast %cst_165 : f32 to vector<256x96xf32>
    %c0_166 = arith.constant 0 : index
    %c0_167 = arith.constant 0 : index
    %c0_168 = arith.constant 0 : index
    %118 = vector.load %arg9[%c0_166, %c0_167, %c0_168] : memref<18x18x96xbf16, #tpu.memory_space<vmem>>, vector<16x16x96xbf16>
    %c0_169 = arith.constant 0 : index
    %c1_170 = arith.constant 1 : index
    %c0_171 = arith.constant 0 : index
    %119 = vector.load %arg9[%c0_169, %c1_170, %c0_171] : memref<18x18x96xbf16, #tpu.memory_space<vmem>>, vector<16x16x96xbf16>
    %c0_172 = arith.constant 0 : index
    %c2_173 = arith.constant 2 : index
    %c0_174 = arith.constant 0 : index
    %120 = vector.load %arg9[%c0_172, %c2_173, %c0_174] : memref<18x18x96xbf16, #tpu.memory_space<vmem>>, vector<16x16x96xbf16>
    %121 = tpu.concatenate %118, %119, %120 in 2 : vector<16x16x96xbf16>, vector<16x16x96xbf16>, vector<16x16x96xbf16> -> vector<16x16x288xbf16>
    %122 = vector.shape_cast %121 : vector<16x16x288xbf16> to vector<256x288xbf16>
    %c0_175 = arith.constant 0 : index
    %c0_176 = arith.constant 0 : index
    %c0_177 = arith.constant 0 : index
    %123 = vector.load %arg4[%c0_175, %c0_176, %c0_177] : memref<3x288x96xbf16, #tpu.memory_space<vmem>>, vector<1x288x96xbf16>
    %124 = vector.shape_cast %123 : vector<1x288x96xbf16> to vector<288x96xbf16>
    %cst_178 = arith.constant dense<0.000000e+00> : vector<256x96xf32>
    %125 = tpu.matmul %122, %124, %cst_178 {dimension_numbers = #tpu.dot_dimension_numbers<[1], [0], [0], [1], [0, 0, 1, 1], [], []>} : vector<256x288xbf16>, vector<288x96xbf16>, vector<256x96xf32> -> vector<256x96xf32>
    %126 = arith.addf %117, %125 : vector<256x96xf32>
    %c1_179 = arith.constant 1 : index
    %c0_180 = arith.constant 0 : index
    %c0_181 = arith.constant 0 : index
    %127 = vector.load %arg9[%c1_179, %c0_180, %c0_181] : memref<18x18x96xbf16, #tpu.memory_space<vmem>>, vector<16x16x96xbf16>
    %c1_182 = arith.constant 1 : index
    %c1_183 = arith.constant 1 : index
    %c0_184 = arith.constant 0 : index
    %128 = vector.load %arg9[%c1_182, %c1_183, %c0_184] : memref<18x18x96xbf16, #tpu.memory_space<vmem>>, vector<16x16x96xbf16>
    %c1_185 = arith.constant 1 : index
    %c2_186 = arith.constant 2 : index
    %c0_187 = arith.constant 0 : index
    %129 = vector.load %arg9[%c1_185, %c2_186, %c0_187] : memref<18x18x96xbf16, #tpu.memory_space<vmem>>, vector<16x16x96xbf16>
    %130 = tpu.concatenate %127, %128, %129 in 2 : vector<16x16x96xbf16>, vector<16x16x96xbf16>, vector<16x16x96xbf16> -> vector<16x16x288xbf16>
    %131 = vector.shape_cast %130 : vector<16x16x288xbf16> to vector<256x288xbf16>
    %c1_188 = arith.constant 1 : index
    %c0_189 = arith.constant 0 : index
    %c0_190 = arith.constant 0 : index
    %132 = vector.load %arg4[%c1_188, %c0_189, %c0_190] : memref<3x288x96xbf16, #tpu.memory_space<vmem>>, vector<1x288x96xbf16>
    %133 = vector.shape_cast %132 : vector<1x288x96xbf16> to vector<288x96xbf16>
    %cst_191 = arith.constant dense<0.000000e+00> : vector<256x96xf32>
    %134 = tpu.matmul %131, %133, %cst_191 {dimension_numbers = #tpu.dot_dimension_numbers<[1], [0], [0], [1], [0, 0, 1, 1], [], []>} : vector<256x288xbf16>, vector<288x96xbf16>, vector<256x96xf32> -> vector<256x96xf32>
    %135 = arith.addf %126, %134 : vector<256x96xf32>
    %c2_192 = arith.constant 2 : index
    %c0_193 = arith.constant 0 : index
    %c0_194 = arith.constant 0 : index
    %136 = vector.load %arg9[%c2_192, %c0_193, %c0_194] : memref<18x18x96xbf16, #tpu.memory_space<vmem>>, vector<16x16x96xbf16>
    %c2_195 = arith.constant 2 : index
    %c1_196 = arith.constant 1 : index
    %c0_197 = arith.constant 0 : index
    %137 = vector.load %arg9[%c2_195, %c1_196, %c0_197] : memref<18x18x96xbf16, #tpu.memory_space<vmem>>, vector<16x16x96xbf16>
    %c2_198 = arith.constant 2 : index
    %c2_199 = arith.constant 2 : index
    %c0_200 = arith.constant 0 : index
    %138 = vector.load %arg9[%c2_198, %c2_199, %c0_200] : memref<18x18x96xbf16, #tpu.memory_space<vmem>>, vector<16x16x96xbf16>
    %139 = tpu.concatenate %136, %137, %138 in 2 : vector<16x16x96xbf16>, vector<16x16x96xbf16>, vector<16x16x96xbf16> -> vector<16x16x288xbf16>
    %140 = vector.shape_cast %139 : vector<16x16x288xbf16> to vector<256x288xbf16>
    %c2_201 = arith.constant 2 : index
    %c0_202 = arith.constant 0 : index
    %c0_203 = arith.constant 0 : index
    %141 = vector.load %arg4[%c2_201, %c0_202, %c0_203] : memref<3x288x96xbf16, #tpu.memory_space<vmem>>, vector<1x288x96xbf16>
    %142 = vector.shape_cast %141 : vector<1x288x96xbf16> to vector<288x96xbf16>
    %cst_204 = arith.constant dense<0.000000e+00> : vector<256x96xf32>
    %143 = tpu.matmul %140, %142, %cst_204 {dimension_numbers = #tpu.dot_dimension_numbers<[1], [0], [0], [1], [0, 0, 1, 1], [], []>} : vector<256x288xbf16>, vector<288x96xbf16>, vector<256x96xf32> -> vector<256x96xf32>
    %144 = arith.addf %135, %143 : vector<256x96xf32>
    %145 = tpu.concatenate %144, %82 in 1 : vector<256x96xf32>, vector<256x32xf32> -> vector<256x128xf32>
    %146 = arith.truncf %145 : vector<256x128xf32> to vector<256x128xbf16>
    %147 = vector.shape_cast %146 : vector<256x128xbf16> to vector<16x16x128xbf16>
    %c0_205 = arith.constant 0 : index
    %c0_206 = arith.constant 0 : index
    %c0_207 = arith.constant 0 : index
    %c0_208 = arith.constant 0 : index
    %148 = vector.load %arg7[%c0_205, %c0_206, %c0_207, %c0_208] : memref<1x16x16x256xbf16, #tpu.memory_space<vmem>>, vector<1x16x16x128xbf16>
    %149 = vector.shape_cast %148 : vector<1x16x16x128xbf16> to vector<16x16x128xbf16>
    %150 = vector.shape_cast %147 : vector<16x16x128xbf16> to vector<1x16x16x128xbf16>
    tpu.vector_store %arg7[%c0_205, %c0_206, %c0_207, %c0_208], %150 {strides = array<i32>} : memref<1x16x16x256xbf16, #tpu.memory_space<vmem>>, vector<1x16x16x128xbf16>,
    return
  }
  func.func @transform_0(%arg0: i32) -> (i32, i32, i32, i32) {
    %c0_i32 = arith.constant 0 : i32
    %c0_i32_0 = arith.constant 0 : i32
    %c0_i32_1 = arith.constant 0 : i32
    %c0_i32_2 = arith.constant 0 : i32
    return %arg0, %c0_i32, %c0_i32_0, %c0_i32_1 : i32, i32, i32, i32
  }
  func.func @transform_1(%arg0: i32) -> (i32, i32) {
    %c0_i32 = arith.constant 0 : i32
    %c0_i32_0 = arith.constant 0 : i32
    %c0_i32_1 = arith.constant 0 : i32
    return %c0_i32, %c0_i32_0 : i32, i32
  }
  func.func @transform_2(%arg0: i32) -> (i32, i32, i32) {
    %c0_i32 = arith.constant 0 : i32
    %c0_i32_0 = arith.constant 0 : i32
    %c0_i32_1 = arith.constant 0 : i32
    %c0_i32_2 = arith.constant 0 : i32
    return %c0_i32, %c0_i32_0, %c0_i32_1 : i32, i32, i32
  }
  func.func @transform_3(%arg0: i32) -> (i32, i32, i32) {
    %c0_i32 = arith.constant 0 : i32
    %c0_i32_0 = arith.constant 0 : i32
    %c0_i32_1 = arith.constant 0 : i32
    %c0_i32_2 = arith.constant 0 : i32
    return %c0_i32, %c0_i32_0, %c0_i32_1 : i32, i32, i32
  }
  func.func @transform_4(%arg0: i32) -> (i32, i32, i32) {
    %c0_i32 = arith.constant 0 : i32
    %c0_i32_0 = arith.constant 0 : i32
    %c0_i32_1 = arith.constant 0 : i32
    %c0_i32_2 = arith.constant 0 : i32
    return %c0_i32, %c0_i32_0, %c0_i32_1 : i32, i32, i32
  }
  func.func @transform_5(%arg0: i32) -> (i32, i32) {
    %c0_i32 = arith.constant 0 : i32
    %c0_i32_0 = arith.constant 0 : i32
    %c0_i32_1 = arith.constant 0 : i32
    return %c0_i32, %c0_i32_0 : i32, i32
  }
  func.func @transform_6(%arg0: i32) -> (i32, i32, i32, i32) {
    %c0_i32 = arith.constant 0 : i32
    %c0_i32_0 = arith.constant 0 : i32
    %c0_i32_1 = arith.constant 0 : i32
    %c0_i32_2 = arith.constant 0 : i32
    return %arg0, %c0_i32, %c0_i32_0, %c0_i32_1 : i32, i32, i32, i32
  }
}

</mosaic_0001>

<llo_original>
// kernel: inception_block_v1.1
$region0: #{inception_block_v1.1}
  #allocation0 [shape = 'u32[]', space=smem, size = 0x4, offset = 0x4, fixed_abs, tag = 'smem constant byte address 0x4 - core index']
  #allocation1 [shape = 'u32[144,128]{1,0:T(1,128)}', space=vmem, size = 0x12000, scoped, tag = 'internal scratch']
  #allocation2 [shape = 'bf16[18,18,64]{2,1,0:T(8,128)(2,1)}', space=vmem, size = 0x1b000, scoped, tag = 'scratch operand']
  #allocation3 [shape = 'bf16[18,18,96]{2,1,0:T(8,128)(2,1)}', space=vmem, size = 0x1b000, scoped, tag = 'scratch operand']
  #allocation4 [shape = 'bf16[18,18,48]{2,1,0:T(8,128)(2,1)}', space=vmem, size = 0x1b000, scoped, tag = 'scratch operand']
  #allocation5 [shape = 'bf16[18,18,8]{2,1,0:T(8,128)(2,1)}', space=vmem, size = 0x1b000, scoped, tag = 'scratch operand']
  %s0 = inlined_call_operand.vmem [shape: bf16[2,16,16,8], index: 0, kind: input, shape index: {}]
  %s1 = inlined_call_operand.vmem [shape: bf16[8,176], index: 1, kind: input, shape index: {}]
  %s2 = inlined_call_operand.vmem [shape: bf16[3,192,96], index: 2, kind: input, shape index: {}]
  %s3 = inlined_call_operand.vmem [shape: bf16[3,288,96], index: 3, kind: input, shape index: {}]
  %s4 = inlined_call_operand.vmem [shape: bf16[3,144,64], index: 4, kind: input, shape index: {}]
  %s5 = inlined_call_operand.vmem [shape: bf16[8,32], index: 5, kind: input, shape index: {}]
  %s6 = inlined_call_operand.vmem [shape: bf16[2,16,16,256], index: 6, kind: output, shape index: {}]
  %s7 = sld [smem:[#allocation0]]
  $region57: #{inception_block_v1.1} parent=0
    _
  %s9 = ssub.s32 1, %s7
  %s10 = scalar_select 0, %s9, %s7
  loop: start=0, step=1, limit=4
  $region2: #{inception_block_v1.1} parent=0 // loop_pre_header
    _
  $region3: #{inception_block_v1.1} parent=0 // loop_header
    %s12 = sphi 0, %s16
    %p13 = scmp.ge.s32.totalorder %s12, 4
    %s22 = sphi 0, %s24
    %s25 = sphi 0, %s22
    %s26 = sphi 0, %s25
    %s42 = sphi 0, %s26
    %s46 = sphi 0, %s46
    %s48 = sphi 0, %s46
    %s49 = sphi 0, %s48
    %s63 = sphi 0, %s49
    %s67 = sphi 0, %s67
    %s69 = sphi 0, %s67
    %s70 = sphi 0, %s69
    %s84 = sphi 0, %s70
    %s88 = sphi 0, %s88
    %s90 = sphi 0, %s88
    %s91 = sphi 0, %s90
    %s105 = sphi 0, %s91
    %s109 = sphi 0, %s109
    %s111 = sphi 0, %s109
    %s112 = sphi 0, %s111
    %s126 = sphi 0, %s112
    %s130 = sphi 0, %s130
    %s132 = sphi 0, %s130
    %s133 = sphi 0, %s132
    %s147 = sphi 0, %s133
    %s153 = sphi 0, %s155
    %s156 = sphi 0, %s153
    %s157 = sphi 0, %s156
    %s173 = sphi 0, %s157
  $region4: #{inception_block_v1.1} parent=0 // loop_header_branch
    %15 = sbr.rel (%p13) target = $region8
  $region5: #{inception_block_v1.1} parent=0 // loop_body
    %s17 = ssub.s32 %s12, 1
    %s18 = ssub.s32 %s12, 2
    %s19 = sadd.s32 %s12, 1
    %s20 = ssub.s32 %s12, %s19
    %p21 = scmp.eq.s32.totalorder %s20, 0
    %s23 = sadd.s32 %s22, 1
    %s24 = scalar_select %p21, %s22, %s23
    %p27 = pneg %p21
    %p28 = scmp.eq.s32.totalorder %s12, 1
    %p29 = por %p27, %p28
    %p30 = scmp.ne.s32.totalorder %s22, %s25
    %p31 = scmp.eq.s32.totalorder %s12, 0
    %p32 = por %p30, %p31
    %p33 = scmp.ne.s32.totalorder %s22, %s25
    %p34 = scmp.eq.s32.totalorder %s17, 1
    %p35 = por %p33, %p34
    %p36 = scmp.ne.s32.totalorder %s25, %s26
    %p37 = scmp.eq.s32.totalorder %s17, 0
    %p38 = por %p36, %p37
    %p39 = scmp.ne.s32.totalorder %s25, %s26
    %p40 = scmp.eq.s32.totalorder %s18, 1
    %p41 = por %p39, %p40
    %p43 = scmp.ne.s32.totalorder %s26, %s42
    %p44 = scmp.eq.s32.totalorder %s18, 0
    %p45 = por %p43, %p44
    %s47 = sadd.s32 %s46, 1
    %p50 = scmp.eq.s32.totalorder %s12, 1
    %p51 = scmp.ne.s32.totalorder %s46, %s48
    %p52 = scmp.eq.s32.totalorder %s12, 0
    %p53 = por %p51, %p52
    %p54 = scmp.ne.s32.totalorder %s46, %s48
    %p55 = scmp.eq.s32.totalorder %s17, 1
    %p56 = por %p54, %p55
    %p57 = scmp.ne.s32.totalorder %s48, %s49
    %p58 = scmp.eq.s32.totalorder %s17, 0
    %p59 = por %p57, %p58
    %p60 = scmp.ne.s32.totalorder %s48, %s49
    %p61 = scmp.eq.s32.totalorder %s18, 1
    %p62 = por %p60, %p61
    %p64 = scmp.ne.s32.totalorder %s49, %s63
    %p65 = scmp.eq.s32.totalorder %s18, 0
    %p66 = por %p64, %p65
    %s68 = sadd.s32 %s67, 1
    %p71 = scmp.eq.s32.totalorder %s12, 1
    %p72 = scmp.ne.s32.totalorder %s67, %s69
    %p73 = scmp.eq.s32.totalorder %s12, 0
    %p74 = por %p72, %p73
    %p75 = scmp.ne.s32.totalorder %s67, %s69
    %p76 = scmp.eq.s32.totalorder %s17, 1
    %p77 = por %p75, %p76
    %p78 = scmp.ne.s32.totalorder %s69, %s70
    %p79 = scmp.eq.s32.totalorder %s17, 0
    %p80 = por %p78, %p79
    %p81 = scmp.ne.s32.totalorder %s69, %s70
    %p82 = scmp.eq.s32.totalorder %s18, 1
    %p83 = por %p81, %p82
    %p85 = scmp.ne.s32.totalorder %s70, %s84
    %p86 = scmp.eq.s32.totalorder %s18, 0
    %p87 = por %p85, %p86
    %s89 = sadd.s32 %s88, 1
    %p92 = scmp.eq.s32.totalorder %s12, 1
    %p93 = scmp.ne.s32.totalorder %s88, %s90
    %p94 = scmp.eq.s32.totalorder %s12, 0
    %p95 = por %p93, %p94
    %p96 = scmp.ne.s32.totalorder %s88, %s90
    %p97 = scmp.eq.s32.totalorder %s17, 1
    %p98 = por %p96, %p97
    %p99 = scmp.ne.s32.totalorder %s90, %s91
    %p100 = scmp.eq.s32.totalorder %s17, 0
    %p101 = por %p99, %p100
    %p102 = scmp.ne.s32.totalorder %s90, %s91
    %p103 = scmp.eq.s32.totalorder %s18, 1
    %p104 = por %p102, %p103
    %p106 = scmp.ne.s32.totalorder %s91, %s105
    %p107 = scmp.eq.s32.totalorder %s18, 0
    %p108 = por %p106, %p107
    %s110 = sadd.s32 %s109, 1
    %p113 = scmp.eq.s32.totalorder %s12, 1
    %p114 = scmp.ne.s32.totalorder %s109, %s111
    %p115 = scmp.eq.s32.totalorder %s12, 0
    %p116 = por %p114, %p115
    %p117 = scmp.ne.s32.totalorder %s109, %s111
    %p118 = scmp.eq.s32.totalorder %s17, 1
    %p119 = por %p117, %p118
    %p120 = scmp.ne.s32.totalorder %s111, %s112
    %p121 = scmp.eq.s32.totalorder %s17, 0
    %p122 = por %p120, %p121
    %p123 = scmp.ne.s32.totalorder %s111, %s112
    %p124 = scmp.eq.s32.totalorder %s18, 1
    %p125 = por %p123, %p124
    %p127 = scmp.ne.s32.totalorder %s112, %s126
    %p128 = scmp.eq.s32.totalorder %s18, 0
    %p129 = por %p127, %p128
    %s131 = sadd.s32 %s130, 1
    %p134 = scmp.eq.s32.totalorder %s12, 1
    %p135 = scmp.ne.s32.totalorder %s130, %s132
    %p136 = scmp.eq.s32.totalorder %s12, 0
    %p137 = por %p135, %p136
    %p138 = scmp.ne.s32.totalorder %s130, %s132
    %p139 = scmp.eq.s32.totalorder %s17, 1
    %p140 = por %p138, %p139
    %p141 = scmp.ne.s32.totalorder %s132, %s133
    %p142 = scmp.eq.s32.totalorder %s17, 0
    %p143 = por %p141, %p142
    %p144 = scmp.ne.s32.totalorder %s132, %s133
    %p145 = scmp.eq.s32.totalorder %s18, 1
    %p146 = por %p144, %p145
    %p148 = scmp.ne.s32.totalorder %s133, %s147
    %p149 = scmp.eq.s32.totalorder %s18, 0
    %p150 = por %p148, %p149
    %s151 = ssub.s32 %s12, %s19
    %p152 = scmp.eq.s32.totalorder %s151, 0
    %s154 = sadd.s32 %s153, 1
    %s155 = scalar_select %p152, %s153, %s154
    %p158 = pneg %p152
    %p159 = scmp.eq.s32.totalorder %s12, 1
    %p160 = por %p158, %p159
    %p161 = scmp.ne.s32.totalorder %s153, %s156
    %p162 = scmp.eq.s32.totalorder %s12, 0
    %p163 = por %p161, %p162
    %p164 = scmp.ne.s32.totalorder %s153, %s156
    %p165 = scmp.eq.s32.totalorder %s17, 1
    %p166 = por %p164, %p165
    %p167 = scmp.ne.s32.totalorder %s156, %s157
    %p168 = scmp.eq.s32.totalorder %s17, 0
    %p169 = por %p167, %p168
    %p170 = scmp.ne.s32.totalorder %s156, %s157
    %p171 = scmp.eq.s32.totalorder %s18, 1
    %p172 = por %p170, %p171
    %p174 = scmp.ne.s32.totalorder %s157, %s173
    %p175 = scmp.eq.s32.totalorder %s18, 0
    %p176 = por %p174, %p175
    %p177 = scmp.le.s32.totalorder 1, %s12
    %p178 = scmp.lt.s32.totalorder %s12, 3
    %p179 = pnand %p177, %p178
    %p180 = pneg %p179
    // Predicated region
    $region9: #{inception_block_v1.1} parent=5 // pred_check
      _
    $region10: #{inception_block_v1.1} parent=5 // pred_check_branch
      %182 = sbr.rel (%p179) target = $region12
    $region11: #{inception_block_v1.1} parent=5 // pred_region
      %s183 = ssub.s32 %s12, 1
      // Predicated region
      $region13: #{inception_block_v1.1} parent=11 // pred_check
        %p184 = pneg %p59
      $region14: #{inception_block_v1.1} parent=11 // pred_check_branch
        %186 = sbr.rel (%p184) target = $region16
      $region15: #{inception_block_v1.1} parent=11 // pred_region
        _
      $region16: #{inception_block_v1.1} parent=11 // pred_fallthru
        _
      // Predicated region
      $region17: #{inception_block_v1.1} parent=11 // pred_check
        %p187 = pneg %p80
      $region18: #{inception_block_v1.1} parent=11 // pred_check_branch
        %189 = sbr.rel (%p187) target = $region20
      $region19: #{inception_block_v1.1} parent=11 // pred_region
        _
      $region20: #{inception_block_v1.1} parent=11 // pred_fallthru
        _
      // Predicated region
      $region21: #{inception_block_v1.1} parent=11 // pred_check
        %p190 = pneg %p101
      $region22: #{inception_block_v1.1} parent=11 // pred_check_branch
        %192 = sbr.rel (%p190) target = $region24
      $region23: #{inception_block_v1.1} parent=11 // pred_region
        _
      $region24: #{inception_block_v1.1} parent=11 // pred_fallthru
        _
      // Predicated region
      $region25: #{inception_block_v1.1} parent=11 // pred_check
        %p193 = pneg %p122
      $region26: #{inception_block_v1.1} parent=11 // pred_check_branch
        %195 = sbr.rel (%p193) target = $region28
      $region27: #{inception_block_v1.1} parent=11 // pred_region
        _
      $region28: #{inception_block_v1.1} parent=11 // pred_fallthru
        _
      // Predicated region
      $region29: #{inception_block_v1.1} parent=11 // pred_check
        %p196 = pneg %p143
      $region30: #{inception_block_v1.1} parent=11 // pred_check_branch
        %198 = sbr.rel (%p196) target = $region32
      $region31: #{inception_block_v1.1} parent=11 // pred_region
        _
      $region32: #{inception_block_v1.1} parent=11 // pred_fallthru
        _
    $region12: #{inception_block_v1.1} parent=5 // pred_fallthru
      _
    %p199 = scmp.lt.s32.totalorder %s12, 2
    // Predicated region
    $region33: #{inception_block_v1.1} parent=5 // pred_check
      %p200 = pneg %p199
    $region34: #{inception_block_v1.1} parent=5 // pred_check_branch
      %202 = sbr.rel (%p200) target = $region36
    $region35: #{inception_block_v1.1} parent=5 // pred_region
      // Predicated region
      $region37: #{inception_block_v1.1} parent=35 // pred_check
        %p203 = pneg %p32
      $region38: #{inception_block_v1.1} parent=35 // pred_check_branch
        %205 = sbr.rel (%p203) target = $region40
      $region39: #{inception_block_v1.1} parent=35 // pred_region
        %p206 = scmp.lt.s32.totalorder %s12, 1
        %s207 = scalar_select %p206, %s12, 1
        %s208 = smul.addr %s207, 32
        %s209 = smul.addr %s208, 4
        %s210 = scalar_lea.vmem %s0, %s209
      $region40: #{inception_block_v1.1} parent=35 // pred_fallthru
        _
    $region36: #{inception_block_v1.1} parent=5 // pred_fallthru
      _
    %p211 = scmp.le.s32.totalorder 1, %s12
    %p212 = scmp.lt.s32.totalorder %s12, 3
    %p213 = pnand %p211, %p212
    %p214 = pneg %p213
    // Predicated region
    $region41: #{inception_block_v1.1} parent=5 // pred_check
      _
    $region42: #{inception_block_v1.1} parent=5 // pred_check_branch
      %216 = sbr.rel (%p213) target = $region44
    $region43: #{inception_block_v1.1} parent=5 // pred_region
      %s217 = ssub.s32 %s12, 1
      %p218 = scmp.lt.s32.totalorder %s17, 1
      %s219 = scalar_select %p218, %s17, 1
      %s220 = smul.addr %s219, 32
      %s221 = smul.addr %s220, 4
      %s222 = scalar_lea.vmem %s0, %s221
      %p223 = pneg %p38
      %p224 = pneg %p35
      %p225 = pneg %p59
      %p226 = pneg %p56
      %p227 = pneg %p80
      %p228 = pneg %p77
      %p229 = pneg %p101
      %p230 = pneg %p98
      %p231 = pneg %p122
      %p232 = pneg %p119
      %p233 = pneg %p143
      %p234 = pneg %p140
      %p235 = pneg %p169
      %p236 = pneg %p166
      %p237 = scmp.lt.s32.totalorder %s17, 1
      %s238 = scalar_select %p237, %s17, 1
      %s239 = smul.addr %s238, 64
      %s240 = smul.addr %s239, 4
      %s241 = scalar_lea.vmem %s6, %s240
      %p242 = scmp.lt.s32.totalorder %s17, 1
      %s243 = scalar_select %p242, %s17, 1
      %s244 = smul.addr %s243, 32
      %s245 = smul.addr %s244, 4
      %s246 = scalar_lea.vmem %s0, %s245
      %p247 = scmp.lt.s32.totalorder %s17, 1
      %s248 = scalar_select %p247, %s17, 1
      %s249 = smul.addr %s248, 64
      %s250 = smul.addr %s249, 4
      %s251 = scalar_lea.vmem %s6, %s250
      %vm254 = vcmask 519168
      %255 = vst.msk [vmem:[#allocation2] sm:$0xf] %vm254, 0
      %256 = vst.msk [vmem:[#allocation2 + $0x4] sm:$0xf] %vm254, 0
      %vm257 = vcmask 516096
      %258 = vst.msk [vmem:[#allocation2 + $0x8] sm:$0x1] %vm257, 0
      %s259 = scalar_lea.vmem [#allocation2], 204
      %260 = vst.msk [vmem:[%s259] sm:$0xf] %vm254, 0
      %261 = vst.msk [vmem:[%s259 + $0x4] sm:$0xf] %vm254, 0
      %262 = vst.msk [vmem:[%s259 + $0x8] sm:$0x1] %vm257, 0
      %vm263 = vcmask 516096
      %vm264 = vsmask.f32 256
      %vm265 = vmand %vm263, %vm264
      %v266 = vld [vmem:[#allocation2] sm:$0x1]
      %v267 = vsel %vm265, 0, %v266
      %268 = vst [vmem:[#allocation2] sm:$0x1] %v267
      %v269 = vld [vmem:[#allocation2 + $0xc] sm:$0x1]
      %v270 = vsel %vm265, 0, %v269
      %271 = vst [vmem:[#allocation2 + $0xc] sm:$0x1] %v270
      %v272 = vld [vmem:[#allocation2 + $0x18] sm:$0x1]
      %v273 = vsel %vm265, 0, %v272
      %274 = vst [vmem:[#allocation2 + $0x18] sm:$0x1] %v273
      %v275 = vld [vmem:[#allocation2 + $0x24] sm:$0x1]
      %v276 = vsel %vm265, 0, %v275
      %277 = vst [vmem:[#allocation2 + $0x24] sm:$0x1] %v276
      %v278 = vld [vmem:[#allocation2 + $0x30] sm:$0x1]
      %v279 = vsel %vm265, 0, %v278
      %280 = vst [vmem:[#allocation2 + $0x30] sm:$0x1] %v279
      %v281 = vld [vmem:[#allocation2 + $0x3c] sm:$0x1]
      %v282 = vsel %vm265, 0, %v281
      %283 = vst [vmem:[#allocation2 + $0x3c] sm:$0x1] %v282
      %v284 = vld [vmem:[#allocation2 + $0x48] sm:$0x1]
      %v285 = vsel %vm265, 0, %v284
      %286 = vst [vmem:[#allocation2 + $0x48] sm:$0x1] %v285
      %v287 = vld [vmem:[#allocation2 + $0x54] sm:$0x1]
      %v288 = vsel %vm265, 0, %v287
      %289 = vst [vmem:[#allocation2 + $0x54] sm:$0x1] %v288
      %v290 = vld [vmem:[#allocation2 + $0x60] sm:$0x1]
      %v291 = vsel %vm265, 0, %v290
      %292 = vst [vmem:[#allocation2 + $0x60] sm:$0x1] %v291
      %v293 = vld [vmem:[#allocation2 + $0x6c] sm:$0x1]
      %v294 = vsel %vm265, 0, %v293
      %295 = vst [vmem:[#allocation2 + $0x6c] sm:$0x1] %v294
      %v296 = vld [vmem:[#allocation2 + $0x78] sm:$0x1]
      %v297 = vsel %vm265, 0, %v296
      %298 = vst [vmem:[#allocation2 + $0x78] sm:$0x1] %v297
      %v299 = vld [vmem:[#allocation2 + $0x84] sm:$0x1]
      %v300 = vsel %vm265, 0, %v299
      %301 = vst [vmem:[#allocation2 + $0x84] sm:$0x1] %v300
      %v302 = vld [vmem:[#allocation2 + $0x90] sm:$0x1]
      %v303 = vsel %vm265, 0, %v302
      %304 = vst [vmem:[#allocation2 + $0x90] sm:$0x1] %v303
      %v305 = vld [vmem:[#allocation2 + $0x9c] sm:$0x1]
      %v306 = vsel %vm265, 0, %v305
      %307 = vst [vmem:[#allocation2 + $0x9c] sm:$0x1] %v306
      %v308 = vld [vmem:[#allocation2 + $0xa8] sm:$0x1]
      %v309 = vsel %vm265, 0, %v308
      %310 = vst [vmem:[#allocation2 + $0xa8] sm:$0x1] %v309
      %v311 = vld [vmem:[#allocation2 + $0xb4] sm:$0x1]
      %v312 = vsel %vm265, 0, %v311
      %313 = vst [vmem:[#allocation2 + $0xb4] sm:$0x1] %v312
      %v314 = vld [vmem:[#allocation2 + $0xc0] sm:$0x1]
      %v315 = vsel %vm265, 0, %v314
      %316 = vst [vmem:[#allocation2 + $0xc0] sm:$0x1] %v315
      %v317 = vld [vmem:[#allocation2 + $0xcc] sm:$0x1]
      %v318 = vsel %vm265, 0, %v317
      %319 = vst [vmem:[#allocation2 + $0xcc] sm:$0x1] %v318
      %vm320 = vsmask.f32 7938
      %vm321 = vmand %vm263, %vm320
      %v322 = vld [vmem:[#allocation2 + $0x8] sm:$0x1]
      %v323 = vsel %vm321, 0, %v322
      %324 = vst [vmem:[#allocation2 + $0x8] sm:$0x1] %v323
      %v325 = vld [vmem:[#allocation2 + $0x14] sm:$0x1]
      %v326 = vsel %vm321, 0, %v325
      %327 = vst [vmem:[#allocation2 + $0x14] sm:$0x1] %v326
      %v328 = vld [vmem:[#allocation2 + $0x20] sm:$0x1]
      %v329 = vsel %vm321, 0, %v328
      %330 = vst [vmem:[#allocation2 + $0x20] sm:$0x1] %v329
      %v331 = vld [vmem:[#allocation2 + $0x2c] sm:$0x1]
      %v332 = vsel %vm321, 0, %v331
      %333 = vst [vmem:[#allocation2 + $0x2c] sm:$0x1] %v332
      %v334 = vld [vmem:[#allocation2 + $0x38] sm:$0x1]
      %v335 = vsel %vm321, 0, %v334
      %336 = vst [vmem:[#allocation2 + $0x38] sm:$0x1] %v335
      %v337 = vld [vmem:[#allocation2 + $0x44] sm:$0x1]
      %v338 = vsel %vm321, 0, %v337
      %339 = vst [vmem:[#allocation2 + $0x44] sm:$0x1] %v338
      %v340 = vld [vmem:[#allocation2 + $0x50] sm:$0x1]
      %v341 = vsel %vm321, 0, %v340
      %342 = vst [vmem:[#allocation2 + $0x50] sm:$0x1] %v341
      %v343 = vld [vmem:[#allocation2 + $0x5c] sm:$0x1]
      %v344 = vsel %vm321, 0, %v343
      %345 = vst [vmem:[#allocation2 + $0x5c] sm:$0x1] %v344
      %v346 = vld [vmem:[#allocation2 + $0x68] sm:$0x1]
      %v347 = vsel %vm321, 0, %v346
      %348 = vst [vmem:[#allocation2 + $0x68] sm:$0x1] %v347
      %v349 = vld [vmem:[#allocation2 + $0x74] sm:$0x1]
      %v350 = vsel %vm321, 0, %v349
      %351 = vst [vmem:[#allocation2 + $0x74] sm:$0x1] %v350
      %v352 = vld [vmem:[#allocation2 + $0x80] sm:$0x1]
      %v353 = vsel %vm321, 0, %v352
      %354 = vst [vmem:[#allocation2 + $0x80] sm:$0x1] %v353
      %v355 = vld [vmem:[#allocation2 + $0x8c] sm:$0x1]
      %v356 = vsel %vm321, 0, %v355
      %357 = vst [vmem:[#allocation2 + $0x8c] sm:$0x1] %v356
      %v358 = vld [vmem:[#allocation2 + $0x98] sm:$0x1]
      %v359 = vsel %vm321, 0, %v358
      %360 = vst [vmem:[#allocation2 + $0x98] sm:$0x1] %v359
      %v361 = vld [vmem:[#allocation2 + $0xa4] sm:$0x1]
      %v362 = vsel %vm321, 0, %v361
      %363 = vst [vmem:[#allocation2 + $0xa4] sm:$0x1] %v362
      %v364 = vld [vmem:[#allocation2 + $0xb0] sm:$0x1]
      %v365 = vsel %vm321, 0, %v364
      %366 = vst [vmem:[#allocation2 + $0xb0] sm:$0x1] %v365
      %v367 = vld [vmem:[#allocation2 + $0xbc] sm:$0x1]
      %v368 = vsel %vm321, 0, %v367
      %369 = vst [vmem:[#allocation2 + $0xbc] sm:$0x1] %v368
      %v370 = vld [vmem:[#allocation2 + $0xc8] sm:$0x1]
      %v371 = vsel %vm321, 0, %v370
      %372 = vst [vmem:[#allocation2 + $0xc8] sm:$0x1] %v371
      %v373 = vld [vmem:[#allocation2 + $0xd4] sm:$0x1]
      %v374 = vsel %vm321, 0, %v373
      %375 = vst [vmem:[#allocation2 + $0xd4] sm:$0x1] %v374
      %vm376 = vcmask 781312
      %377 = vst.msk [vmem:[#allocation3] sm:$0xf] %vm376, 0
      %378 = vst.msk [vmem:[#allocation3 + $0x4] sm:$0xf] %vm376, 0
      %vm379 = vcmask 778240
      %380 = vst.msk [vmem:[#allocation3 + $0x8] sm:$0x1] %vm379, 0
      %s381 = scalar_lea.vmem [#allocation3], 204
      %382 = vst.msk [vmem:[%s381] sm:$0xf] %vm376, 0
      %383 = vst.msk [vmem:[%s381 + $0x4] sm:$0xf] %vm376, 0
      %384 = vst.msk [vmem:[%s381 + $0x8] sm:$0x1] %vm379, 0
      %vm385 = vcmask 778240
      %vm386 = vmand %vm385, %vm264
      %v387 = vld [vmem:[#allocation3] sm:$0x1]
      %v388 = vsel %vm386, 0, %v387
      %389 = vst [vmem:[#allocation3] sm:$0x1] %v388
      %v390 = vld [vmem:[#allocation3 + $0xc] sm:$0x1]
      %v391 = vsel %vm386, 0, %v390
      %392 = vst [vmem:[#allocation3 + $0xc] sm:$0x1] %v391
      %v393 = vld [vmem:[#allocation3 + $0x18] sm:$0x1]
      %v394 = vsel %vm386, 0, %v393
      %395 = vst [vmem:[#allocation3 + $0x18] sm:$0x1] %v394
      %v396 = vld [vmem:[#allocation3 + $0x24] sm:$0x1]
      %v397 = vsel %vm386, 0, %v396
      %398 = vst [vmem:[#allocation3 + $0x24] sm:$0x1] %v397
      %v399 = vld [vmem:[#allocation3 + $0x30] sm:$0x1]
      %v400 = vsel %vm386, 0, %v399
      %401 = vst [vmem:[#allocation3 + $0x30] sm:$0x1] %v400
      %v402 = vld [vmem:[#allocation3 + $0x3c] sm:$0x1]
      %v403 = vsel %vm386, 0, %v402
      %404 = vst [vmem:[#allocation3 + $0x3c] sm:$0x1] %v403
      %v405 = vld [vmem:[#allocation3 + $0x48] sm:$0x1]
      %v406 = vsel %vm386, 0, %v405
      %407 = vst [vmem:[#allocation3 + $0x48] sm:$0x1] %v406
      %v408 = vld [vmem:[#allocation3 + $0x54] sm:$0x1]
      %v409 = vsel %vm386, 0, %v408
      %410 = vst [vmem:[#allocation3 + $0x54] sm:$0x1] %v409
      %v411 = vld [vmem:[#allocation3 + $0x60] sm:$0x1]
      %v412 = vsel %vm386, 0, %v411
      %413 = vst [vmem:[#allocation3 + $0x60] sm:$0x1] %v412
      %v414 = vld [vmem:[#allocation3 + $0x6c] sm:$0x1]
      %v415 = vsel %vm386, 0, %v414
      %416 = vst [vmem:[#allocation3 + $0x6c] sm:$0x1] %v415
      %v417 = vld [vmem:[#allocation3 + $0x78] sm:$0x1]
      %v418 = vsel %vm386, 0, %v417
      %419 = vst [vmem:[#allocation3 + $0x78] sm:$0x1] %v418
      %v420 = vld [vmem:[#allocation3 + $0x84] sm:$0x1]
      %v421 = vsel %vm386, 0, %v420
      %422 = vst [vmem:[#allocation3 + $0x84] sm:$0x1] %v421
      %v423 = vld [vmem:[#allocation3 + $0x90] sm:$0x1]
      %v424 = vsel %vm386, 0, %v423
      %425 = vst [vmem:[#allocation3 + $0x90] sm:$0x1] %v424
      %v426 = vld [vmem:[#allocation3 + $0x9c] sm:$0x1]
      %v427 = vsel %vm386, 0, %v426
      %428 = vst [vmem:[#allocation3 + $0x9c] sm:$0x1] %v427
      %v429 = vld [vmem:[#allocation3 + $0xa8] sm:$0x1]
      %v430 = vsel %vm386, 0, %v429
      %431 = vst [vmem:[#allocation3 + $0xa8] sm:$0x1] %v430
      %v432 = vld [vmem:[#allocation3 + $0xb4] sm:$0x1]
      %v433 = vsel %vm386, 0, %v432
      %434 = vst [vmem:[#allocation3 + $0xb4] sm:$0x1] %v433
      %v435 = vld [vmem:[#allocation3 + $0xc0] sm:$0x1]
      %v436 = vsel %vm386, 0, %v435
      %437 = vst [vmem:[#allocation3 + $0xc0] sm:$0x1] %v436
      %v438 = vld [vmem:[#allocation3 + $0xcc] sm:$0x1]
      %v439 = vsel %vm386, 0, %v438
      %440 = vst [vmem:[#allocation3 + $0xcc] sm:$0x1] %v439
      %vm441 = vmand %vm385, %vm320
      %v442 = vld [vmem:[#allocation3 + $0x8] sm:$0x1]
      %v443 = vsel %vm441, 0, %v442
      %444 = vst [vmem:[#allocation3 + $0x8] sm:$0x1] %v443
      %v445 = vld [vmem:[#allocation3 + $0x14] sm:$0x1]
      %v446 = vsel %vm441, 0, %v445
      %447 = vst [vmem:[#allocation3 + $0x14] sm:$0x1] %v446
      %v448 = vld [vmem:[#allocation3 + $0x20] sm:$0x1]
      %v449 = vsel %vm441, 0, %v448
      %450 = vst [vmem:[#allocation3 + $0x20] sm:$0x1] %v449
      %v451 = vld [vmem:[#allocation3 + $0x2c] sm:$0x1]
      %v452 = vsel %vm441, 0, %v451
      %453 = vst [vmem:[#allocation3 + $0x2c] sm:$0x1] %v452
      %v454 = vld [vmem:[#allocation3 + $0x38] sm:$0x1]
      %v455 = vsel %vm441, 0, %v454
      %456 = vst [vmem:[#allocation3 + $0x38] sm:$0x1] %v455
      %v457 = vld [vmem:[#allocation3 + $0x44] sm:$0x1]
      %v458 = vsel %vm441, 0, %v457
      %459 = vst [vmem:[#allocation3 + $0x44] sm:$0x1] %v458
      %v460 = vld [vmem:[#allocation3 + $0x50] sm:$0x1]
      %v461 = vsel %vm441, 0, %v460
      %462 = vst [vmem:[#allocation3 + $0x50] sm:$0x1] %v461
      %v463 = vld [vmem:[#allocation3 + $0x5c] sm:$0x1]
      %v464 = vsel %vm441, 0, %v463
      %465 = vst [vmem:[#allocation3 + $0x5c] sm:$0x1] %v464
      %v466 = vld [vmem:[#allocation3 + $0x68] sm:$0x1]
      %v467 = vsel %vm441, 0, %v466
      %468 = vst [vmem:[#allocation3 + $0x68] sm:$0x1] %v467
      %v469 = vld [vmem:[#allocation3 + $0x74] sm:$0x1]
      %v470 = vsel %vm441, 0, %v469
      %471 = vst [vmem:[#allocation3 + $0x74] sm:$0x1] %v470
      %v472 = vld [vmem:[#allocation3 + $0x80] sm:$0x1]
      %v473 = vsel %vm441, 0, %v472
      %474 = vst [vmem:[#allocation3 + $0x80] sm:$0x1] %v473
      %v475 = vld [vmem:[#allocation3 + $0x8c] sm:$0x1]
      %v476 = vsel %vm441, 0, %v475
      %477 = vst [vmem:[#allocation3 + $0x8c] sm:$0x1] %v476
      %v478 = vld [vmem:[#allocation3 + $0x98] sm:$0x1]
      %v479 = vsel %vm441, 0, %v478
      %480 = vst [vmem:[#allocation3 + $0x98] sm:$0x1] %v479
      %v481 = vld [vmem:[#allocation3 + $0xa4] sm:$0x1]
      %v482 = vsel %vm441, 0, %v481
      %483 = vst [vmem:[#allocation3 + $0xa4] sm:$0x1] %v482
      %v484 = vld [vmem:[#allocation3 + $0xb0] sm:$0x1]
      %v485 = vsel %vm441, 0, %v484
      %486 = vst [vmem:[#allocation3 + $0xb0] sm:$0x1] %v485
      %v487 = vld [vmem:[#allocation3 + $0xbc] sm:$0x1]
      %v488 = vsel %vm441, 0, %v487
      %489 = vst [vmem:[#allocation3 + $0xbc] sm:$0x1] %v488
      %v490 = vld [vmem:[#allocation3 + $0xc8] sm:$0x1]
      %v491 = vsel %vm441, 0, %v490
      %492 = vst [vmem:[#allocation3 + $0xc8] sm:$0x1] %v491
      %v493 = vld [vmem:[#allocation3 + $0xd4] sm:$0x1]
      %v494 = vsel %vm441, 0, %v493
      %495 = vst [vmem:[#allocation3 + $0xd4] sm:$0x1] %v494
      %vm496 = vcmask 388096
      %497 = vst.msk [vmem:[#allocation4] sm:$0xf] %vm496, 0
      %498 = vst.msk [vmem:[#allocation4 + $0x4] sm:$0xf] %vm496, 0
      %vm499 = vcmask 385024
      %500 = vst.msk [vmem:[#allocation4 + $0x8] sm:$0x1] %vm499, 0
      %s501 = scalar_lea.vmem [#allocation4], 204
      %502 = vst.msk [vmem:[%s501] sm:$0xf] %vm496, 0
      %503 = vst.msk [vmem:[%s501 + $0x4] sm:$0xf] %vm496, 0
      %504 = vst.msk [vmem:[%s501 + $0x8] sm:$0x1] %vm499, 0
      %vm505 = vcmask 385024
      %vm506 = vmand %vm505, %vm264
      %v507 = vld [vmem:[#allocation4] sm:$0x1]
      %v508 = vsel %vm506, 0, %v507
      %509 = vst [vmem:[#allocation4] sm:$0x1] %v508
      %v510 = vld [vmem:[#allocation4 + $0xc] sm:$0x1]
      %v511 = vsel %vm506, 0, %v510
      %512 = vst [vmem:[#allocation4 + $0xc] sm:$0x1] %v511
      %v513 = vld [vmem:[#allocation4 + $0x18] sm:$0x1]
      %v514 = vsel %vm506, 0, %v513
      %515 = vst [vmem:[#allocation4 + $0x18] sm:$0x1] %v514
      %v516 = vld [vmem:[#allocation4 + $0x24] sm:$0x1]
      %v517 = vsel %vm506, 0, %v516
      %518 = vst [vmem:[#allocation4 + $0x24] sm:$0x1] %v517
      %v519 = vld [vmem:[#allocation4 + $0x30] sm:$0x1]
      %v520 = vsel %vm506, 0, %v519
      %521 = vst [vmem:[#allocation4 + $0x30] sm:$0x1] %v520
      %v522 = vld [vmem:[#allocation4 + $0x3c] sm:$0x1]
      %v523 = vsel %vm506, 0, %v522
      %524 = vst [vmem:[#allocation4 + $0x3c] sm:$0x1] %v523
      %v525 = vld [vmem:[#allocation4 + $0x48] sm:$0x1]
      %v526 = vsel %vm506, 0, %v525
      %527 = vst [vmem:[#allocation4 + $0x48] sm:$0x1] %v526
      %v528 = vld [vmem:[#allocation4 + $0x54] sm:$0x1]
      %v529 = vsel %vm506, 0, %v528
      %530 = vst [vmem:[#allocation4 + $0x54] sm:$0x1] %v529
      %v531 = vld [vmem:[#allocation4 + $0x60] sm:$0x1]
      %v532 = vsel %vm506, 0, %v531
      %533 = vst [vmem:[#allocation4 + $0x60] sm:$0x1] %v532
      %v534 = vld [vmem:[#allocation4 + $0x6c] sm:$0x1]
      %v535 = vsel %vm506, 0, %v534
      %536 = vst [vmem:[#allocation4 + $0x6c] sm:$0x1] %v535
      %v537 = vld [vmem:[#allocation4 + $0x78] sm:$0x1]
      %v538 = vsel %vm506, 0, %v537
      %539 = vst [vmem:[#allocation4 + $0x78] sm:$0x1] %v538
      %v540 = vld [vmem:[#allocation4 + $0x84] sm:$0x1]
      %v541 = vsel %vm506, 0, %v540
      %542 = vst [vmem:[#allocation4 + $0x84] sm:$0x1] %v541
      %v543 = vld [vmem:[#allocation4 + $0x90] sm:$0x1]
      %v544 = vsel %vm506, 0, %v543
      %545 = vst [vmem:[#allocation4 + $0x90] sm:$0x1] %v544
      %v546 = vld [vmem:[#allocation4 + $0x9c] sm:$0x1]
      %v547 = vsel %vm506, 0, %v546
      %548 = vst [vmem:[#allocation4 + $0x9c] sm:$0x1] %v547
      %v549 = vld [vmem:[#allocation4 + $0xa8] sm:$0x1]
      %v550 = vsel %vm506, 0, %v549
      %551 = vst [vmem:[#allocation4 + $0xa8] sm:$0x1] %v550
      %v552 = vld [vmem:[#allocation4 + $0xb4] sm:$0x1]
      %v553 = vsel %vm506, 0, %v552
      %554 = vst [vmem:[#allocation4 + $0xb4] sm:$0x1] %v553
      %v555 = vld [vmem:[#allocation4 + $0xc0] sm:$0x1]
      %v556 = vsel %vm506, 0, %v555
      %557 = vst [vmem:[#allocation4 + $0xc0] sm:$0x1] %v556
      %v558 = vld [vmem:[#allocation4 + $0xcc] sm:$0x1]
      %v559 = vsel %vm506, 0, %v558
      %560 = vst [vmem:[#allocation4 + $0xcc] sm:$0x1] %v559
      %vm561 = vmand %vm505, %vm320
      %v562 = vld [vmem:[#allocation4 + $0x8] sm:$0x1]
      %v563 = vsel %vm561, 0, %v562
      %564 = vst [vmem:[#allocation4 + $0x8] sm:$0x1] %v563
      %v565 = vld [vmem:[#allocation4 + $0x14] sm:$0x1]
      %v566 = vsel %vm561, 0, %v565
      %567 = vst [vmem:[#allocation4 + $0x14] sm:$0x1] %v566
      %v568 = vld [vmem:[#allocation4 + $0x20] sm:$0x1]
      %v569 = vsel %vm561, 0, %v568
      %570 = vst [vmem:[#allocation4 + $0x20] sm:$0x1] %v569
      %v571 = vld [vmem:[#allocation4 + $0x2c] sm:$0x1]
      %v572 = vsel %vm561, 0, %v571
      %573 = vst [vmem:[#allocation4 + $0x2c] sm:$0x1] %v572
      %v574 = vld [vmem:[#allocation4 + $0x38] sm:$0x1]
      %v575 = vsel %vm561, 0, %v574
      %576 = vst [vmem:[#allocation4 + $0x38] sm:$0x1] %v575
      %v577 = vld [vmem:[#allocation4 + $0x44] sm:$0x1]
      %v578 = vsel %vm561, 0, %v577
      %579 = vst [vmem:[#allocation4 + $0x44] sm:$0x1] %v578
      %v580 = vld [vmem:[#allocation4 + $0x50] sm:$0x1]
      %v581 = vsel %vm561, 0, %v580
      %582 = vst [vmem:[#allocation4 + $0x50] sm:$0x1] %v581
      %v583 = vld [vmem:[#allocation4 + $0x5c] sm:$0x1]
      %v584 = vsel %vm561, 0, %v583
      %585 = vst [vmem:[#allocation4 + $0x5c] sm:$0x1] %v584
      %v586 = vld [vmem:[#allocation4 + $0x68] sm:$0x1]
      %v587 = vsel %vm561, 0, %v586
      %588 = vst [vmem:[#allocation4 + $0x68] sm:$0x1] %v587
      %v589 = vld [vmem:[#allocation4 + $0x74] sm:$0x1]
      %v590 = vsel %vm561, 0, %v589
      %591 = vst [vmem:[#allocation4 + $0x74] sm:$0x1] %v590
      %v592 = vld [vmem:[#allocation4 + $0x80] sm:$0x1]
      %v593 = vsel %vm561, 0, %v592
      %594 = vst [vmem:[#allocation4 + $0x80] sm:$0x1] %v593
      %v595 = vld [vmem:[#allocation4 + $0x8c] sm:$0x1]
      %v596 = vsel %vm561, 0, %v595
      %597 = vst [vmem:[#allocation4 + $0x8c] sm:$0x1] %v596
      %v598 = vld [vmem:[#allocation4 + $0x98] sm:$0x1]
      %v599 = vsel %vm561, 0, %v598
      %600 = vst [vmem:[#allocation4 + $0x98] sm:$0x1] %v599
      %v601 = vld [vmem:[#allocation4 + $0xa4] sm:$0x1]
      %v602 = vsel %vm561, 0, %v601
      %603 = vst [vmem:[#allocation4 + $0xa4] sm:$0x1] %v602
      %v604 = vld [vmem:[#allocation4 + $0xb0] sm:$0x1]
      %v605 = vsel %vm561, 0, %v604
      %606 = vst [vmem:[#allocation4 + $0xb0] sm:$0x1] %v605
      %v607 = vld [vmem:[#allocation4 + $0xbc] sm:$0x1]
      %v608 = vsel %vm561, 0, %v607
      %609 = vst [vmem:[#allocation4 + $0xbc] sm:$0x1] %v608
      %v610 = vld [vmem:[#allocation4 + $0xc8] sm:$0x1]
      %v611 = vsel %vm561, 0, %v610
      %612 = vst [vmem:[#allocation4 + $0xc8] sm:$0x1] %v611
      %v613 = vld [vmem:[#allocation4 + $0xd4] sm:$0x1]
      %v614 = vsel %vm561, 0, %v613
      %615 = vst [vmem:[#allocation4 + $0xd4] sm:$0x1] %v614
      %vm616 = vcmask 60416
      %617 = vst.msk [vmem:[#allocation5] sm:$0xf] %vm616, 4286644096
      %618 = vst.msk [vmem:[#allocation5 + $0x4] sm:$0xf] %vm616, 4286644096
      %vm619 = vcmask 57344
      %620 = vst.msk [vmem:[#allocation5 + $0x8] sm:$0x1] %vm619, 4286644096
      %s621 = scalar_lea.vmem [#allocation5], 204
      %622 = vst.msk [vmem:[%s621] sm:$0xf] %vm616, 4286644096
      %623 = vst.msk [vmem:[%s621 + $0x4] sm:$0xf] %vm616, 4286644096
      %624 = vst.msk [vmem:[%s621 + $0x8] sm:$0x1] %vm619, 4286644096
      %vm625 = vcmask 57344
      %vm626 = vmand %vm625, %vm264
      %v627 = vld [vmem:[#allocation5] sm:$0x1]
      %v628 = vsel %vm626, 4286644096, %v627
      %629 = vst [vmem:[#allocation5] sm:$0x1] %v628
      %v630 = vld [vmem:[#allocation5 + $0xc] sm:$0x1]
      %v631 = vsel %vm626, 4286644096, %v630
      %632 = vst [vmem:[#allocation5 + $0xc] sm:$0x1] %v631
      %v633 = vld [vmem:[#allocation5 + $0x18] sm:$0x1]
      %v634 = vsel %vm626, 4286644096, %v633
      %635 = vst [vmem:[#allocation5 + $0x18] sm:$0x1] %v634
      %v636 = vld [vmem:[#allocation5 + $0x24] sm:$0x1]
      %v637 = vsel %vm626, 4286644096, %v636
      %638 = vst [vmem:[#allocation5 + $0x24] sm:$0x1] %v637
      %v639 = vld [vmem:[#allocation5 + $0x30] sm:$0x1]
      %v640 = vsel %vm626, 4286644096, %v639
      %641 = vst [vmem:[#allocation5 + $0x30] sm:$0x1] %v640
      %v642 = vld [vmem:[#allocation5 + $0x3c] sm:$0x1]
      %v643 = vsel %vm626, 4286644096, %v642
      %644 = vst [vmem:[#allocation5 + $0x3c] sm:$0x1] %v643
      %v645 = vld [vmem:[#allocation5 + $0x48] sm:$0x1]
      %v646 = vsel %vm626, 4286644096, %v645
      %647 = vst [vmem:[#allocation5 + $0x48] sm:$0x1] %v646
      %v648 = vld [vmem:[#allocation5 + $0x54] sm:$0x1]
      %v649 = vsel %vm626, 4286644096, %v648
      %650 = vst [vmem:[#allocation5 + $0x54] sm:$0x1] %v649
      %v651 = vld [vmem:[#allocation5 + $0x60] sm:$0x1]
      %v652 = vsel %vm626, 4286644096, %v651
      %653 = vst [vmem:[#allocation5 + $0x60] sm:$0x1] %v652
      %v654 = vld [vmem:[#allocation5 + $0x6c] sm:$0x1]
      %v655 = vsel %vm626, 4286644096, %v654
      %656 = vst [vmem:[#allocation5 + $0x6c] sm:$0x1] %v655
      %v657 = vld [vmem:[#allocation5 + $0x78] sm:$0x1]
      %v658 = vsel %vm626, 4286644096, %v657
      %659 = vst [vmem:[#allocation5 + $0x78] sm:$0x1] %v658
      %v660 = vld [vmem:[#allocation5 + $0x84] sm:$0x1]
      %v661 = vsel %vm626, 4286644096, %v660
      %662 = vst [vmem:[#allocation5 + $0x84] sm:$0x1] %v661
      %v663 = vld [vmem:[#allocation5 + $0x90] sm:$0x1]
      %v664 = vsel %vm626, 4286644096, %v663
      %665 = vst [vmem:[#allocation5 + $0x90] sm:$0x1] %v664
      %v666 = vld [vmem:[#allocation5 + $0x9c] sm:$0x1]
      %v667 = vsel %vm626, 4286644096, %v666
      %668 = vst [vmem:[#allocation5 + $0x9c] sm:$0x1] %v667
      %v669 = vld [vmem:[#allocation5 + $0xa8] sm:$0x1]
      %v670 = vsel %vm626, 4286644096, %v669
      %671 = vst [vmem:[#allocation5 + $0xa8] sm:$0x1] %v670
      %v672 = vld [vmem:[#allocation5 + $0xb4] sm:$0x1]
      %v673 = vsel %vm626, 4286644096, %v672
      %674 = vst [vmem:[#allocation5 + $0xb4] sm:$0x1] %v673
      %v675 = vld [vmem:[#allocation5 + $0xc0] sm:$0x1]
      %v676 = vsel %vm626, 4286644096, %v675
      %677 = vst [vmem:[#allocation5 + $0xc0] sm:$0x1] %v676
      %v678 = vld [vmem:[#allocation5 + $0xcc] sm:$0x1]
      %v679 = vsel %vm626, 4286644096, %v678
      %680 = vst [vmem:[#allocation5 + $0xcc] sm:$0x1] %v679
      %vm681 = vmand %vm625, %vm320
      %v682 = vld [vmem:[#allocation5 + $0x8] sm:$0x1]
      %v683 = vsel %vm681, 4286644096, %v682
      %684 = vst [vmem:[#allocation5 + $0x8] sm:$0x1] %v683
      %v685 = vld [vmem:[#allocation5 + $0x14] sm:$0x1]
      %v686 = vsel %vm681, 4286644096, %v685
      %687 = vst [vmem:[#allocation5 + $0x14] sm:$0x1] %v686
      %v688 = vld [vmem:[#allocation5 + $0x20] sm:$0x1]
      %v689 = vsel %vm681, 4286644096, %v688
      %690 = vst [vmem:[#allocation5 + $0x20] sm:$0x1] %v689
      %v691 = vld [vmem:[#allocation5 + $0x2c] sm:$0x1]
      %v692 = vsel %vm681, 4286644096, %v691
      %693 = vst [vmem:[#allocation5 + $0x2c] sm:$0x1] %v692
      %v694 = vld [vmem:[#allocation5 + $0x38] sm:$0x1]
      %v695 = vsel %vm681, 4286644096, %v694
      %696 = vst [vmem:[#allocation5 + $0x38] sm:$0x1] %v695
      %v697 = vld [vmem:[#allocation5 + $0x44] sm:$0x1]
      %v698 = vsel %vm681, 4286644096, %v697
      %699 = vst [vmem:[#allocation5 + $0x44] sm:$0x1] %v698
      %v700 = vld [vmem:[#allocation5 + $0x50] sm:$0x1]
      %v701 = vsel %vm681, 4286644096, %v700
      %702 = vst [vmem:[#allocation5 + $0x50] sm:$0x1] %v701
      %v703 = vld [vmem:[#allocation5 + $0x5c] sm:$0x1]
      %v704 = vsel %vm681, 4286644096, %v703
      %705 = vst [vmem:[#allocation5 + $0x5c] sm:$0x1] %v704
      %v706 = vld [vmem:[#allocation5 + $0x68] sm:$0x1]
      %v707 = vsel %vm681, 4286644096, %v706
      %708 = vst [vmem:[#allocation5 + $0x68] sm:$0x1] %v707
      %v709 = vld [vmem:[#allocation5 + $0x74] sm:$0x1]
      %v710 = vsel %vm681, 4286644096, %v709
      %711 = vst [vmem:[#allocation5 + $0x74] sm:$0x1] %v710
      %v712 = vld [vmem:[#allocation5 + $0x80] sm:$0x1]
      %v713 = vsel %vm681, 4286644096, %v712
      %714 = vst [vmem:[#allocation5 + $0x80] sm:$0x1] %v713
      %v715 = vld [vmem:[#allocation5 + $0x8c] sm:$0x1]
      %v716 = vsel %vm681, 4286644096, %v715
      %717 = vst [vmem:[#allocation5 + $0x8c] sm:$0x1] %v716
      %v718 = vld [vmem:[#allocation5 + $0x98] sm:$0x1]
      %v719 = vsel %vm681, 4286644096, %v718
      %720 = vst [vmem:[#allocation5 + $0x98] sm:$0x1] %v719
      %v721 = vld [vmem:[#allocation5 + $0xa4] sm:$0x1]
      %v722 = vsel %vm681, 4286644096, %v721
      %723 = vst [vmem:[#allocation5 + $0xa4] sm:$0x1] %v722
      %v724 = vld [vmem:[#allocation5 + $0xb0] sm:$0x1]
      %v725 = vsel %vm681, 4286644096, %v724
      %726 = vst [vmem:[#allocation5 + $0xb0] sm:$0x1] %v725
      %v727 = vld [vmem:[#allocation5 + $0xbc] sm:$0x1]
      %v728 = vsel %vm681, 4286644096, %v727
      %729 = vst [vmem:[#allocation5 + $0xbc] sm:$0x1] %v728
      %v730 = vld [vmem:[#allocation5 + $0xc8] sm:$0x1]
      %v731 = vsel %vm681, 4286644096, %v730
      %732 = vst [vmem:[#allocation5 + $0xc8] sm:$0x1] %v731
      %v733 = vld [vmem:[#allocation5 + $0xd4] sm:$0x1]
      %v734 = vsel %vm681, 4286644096, %v733
      %735 = vst [vmem:[#allocation5 + $0xd4] sm:$0x1] %v734
      %v736 = vld [vmem:[%s246] sm:$0xf]
      %v737 = vld [vmem:[%s246 + $0x4] sm:$0xf]
      %v738 = vld [vmem:[%s246 + $0x8] sm:$0xf]
      %v739 = vld [vmem:[%s246 + $0xc] sm:$0xf]
      %v740 = vld [vmem:[%s246 + $0x10] sm:$0xf]
      %v741 = vld [vmem:[%s246 + $0x14] sm:$0xf]
      %v742 = vld [vmem:[%s246 + $0x18] sm:$0xf]
      %v743 = vld [vmem:[%s246 + $0x1c] sm:$0xf]
      %v744 = vld [vmem:[%s246 + $0x20] sm:$0xf]
      %v745 = vld [vmem:[%s246 + $0x24] sm:$0xf]
      %v746 = vld [vmem:[%s246 + $0x28] sm:$0xf]
      %v747 = vld [vmem:[%s246 + $0x2c] sm:$0xf]
      %v748 = vld [vmem:[%s246 + $0x30] sm:$0xf]
      %v749 = vld [vmem:[%s246 + $0x34] sm:$0xf]
      %v750 = vld [vmem:[%s246 + $0x38] sm:$0xf]
      %v751 = vld [vmem:[%s246 + $0x3c] sm:$0xf]
      %v752 = vld [vmem:[%s246 + $0x40] sm:$0xf]
      %v753 = vld [vmem:[%s246 + $0x44] sm:$0xf]
      %v754 = vld [vmem:[%s246 + $0x48] sm:$0xf]
      %v755 = vld [vmem:[%s246 + $0x4c] sm:$0xf]
      %v756 = vld [vmem:[%s246 + $0x50] sm:$0xf]
      %v757 = vld [vmem:[%s246 + $0x54] sm:$0xf]
      %v758 = vld [vmem:[%s246 + $0x58] sm:$0xf]
      %v759 = vld [vmem:[%s246 + $0x5c] sm:$0xf]
      %v760 = vld [vmem:[%s246 + $0x60] sm:$0xf]
      %v761 = vld [vmem:[%s246 + $0x64] sm:$0xf]
      %v762 = vld [vmem:[%s246 + $0x68] sm:$0xf]
      %v763 = vld [vmem:[%s246 + $0x6c] sm:$0xf]
      %v764 = vld [vmem:[%s246 + $0x70] sm:$0xf]
      %v765 = vld [vmem:[%s246 + $0x74] sm:$0xf]
      %v766 = vld [vmem:[%s246 + $0x78] sm:$0xf]
      %v767 = vld [vmem:[%s246 + $0x7c] sm:$0xf]
      %v768 = vld [vmem:[%s1] sm:$0xff]
      %v801 = vunpack.c.l.b16 %v736
      %v802 = vunpack.c.l.b16 %v737
      %v803 = vunpack.c.l.b16 %v738
      %v804 = vunpack.c.l.b16 %v739
      %v805 = vunpack.c.l.b16 %v740
      %v806 = vunpack.c.l.b16 %v741
      %v807 = vunpack.c.l.b16 %v742
      %v808 = vunpack.c.l.b16 %v743
      %v809 = vunpack.c.l.b16 %v744
      %v810 = vunpack.c.l.b16 %v745
      %v811 = vunpack.c.l.b16 %v746
      %v812 = vunpack.c.l.b16 %v747
      %v813 = vunpack.c.l.b16 %v748
      %v814 = vunpack.c.l.b16 %v749
      %v815 = vunpack.c.l.b16 %v750
      %v816 = vunpack.c.l.b16 %v751
      %v817 = vunpack.c.l.b16 %v752
      %v818 = vunpack.c.l.b16 %v753
      %v819 = vunpack.c.l.b16 %v754
      %v820 = vunpack.c.l.b16 %v755
      %v821 = vunpack.c.l.b16 %v756
      %v822 = vunpack.c.l.b16 %v757
      %v823 = vunpack.c.l.b16 %v758
      %v824 = vunpack.c.l.b16 %v759
      %v825 = vunpack.c.l.b16 %v760
      %v826 = vunpack.c.l.b16 %v761
      %v827 = vunpack.c.l.b16 %v762
      %v828 = vunpack.c.l.b16 %v763
      %v829 = vunpack.c.l.b16 %v764
      %v830 = vunpack.c.l.b16 %v765
      %v831 = vunpack.c.l.b16 %v766
      %v832 = vunpack.c.l.b16 %v767
      %v833 = vpack.c.b16 %v802, %v801
      %v834 = vpack.c.b16 %v804, %v803
      %v835 = vpack.c.b16 %v806, %v805
      %v836 = vpack.c.b16 %v808, %v807
      %v837 = vpack.c.b16 %v810, %v809
      %v838 = vpack.c.b16 %v812, %v811
      %v839 = vpack.c.b16 %v814, %v813
      %v840 = vpack.c.b16 %v816, %v815
      %v841 = vpack.c.b16 %v818, %v817
      %v842 = vpack.c.b16 %v820, %v819
      %v843 = vpack.c.b16 %v822, %v821
      %v844 = vpack.c.b16 %v824, %v823
      %v845 = vpack.c.b16 %v826, %v825
      %v846 = vpack.c.b16 %v828, %v827
      %v847 = vpack.c.b16 %v830, %v829
      %v848 = vpack.c.b16 %v832, %v831
      %v850 = vunpack.c.l.b16 %v768
      %v851 = vunpack.c.h.b16 %v768
      %v852 = vpack.c.b16 %v850, %v850
      %v853 = vpack.c.b16 %v851, %v851
      %vm854 = vcmask 64512
      %v856 = vsel %vm854, %v833, 0
      %v859 = vsel %vm854, %v834, 0
      %v862 = vsel %vm854, %v835, 0
      %v865 = vsel %vm854, %v836, 0
      %v868 = vsel %vm854, %v837, 0
      %v871 = vsel %vm854, %v838, 0
      %v874 = vsel %vm854, %v839, 0
      %v877 = vsel %vm854, %v840, 0
      %v880 = vsel %vm854, %v841, 0
      %v883 = vsel %vm854, %v842, 0
      %v886 = vsel %vm854, %v843, 0
      %v889 = vsel %vm854, %v844, 0
      %v892 = vsel %vm854, %v845, 0
      %v895 = vsel %vm854, %v846, 0
      %v898 = vsel %vm854, %v847, 0
      %v901 = vsel %vm854, %v848, 0
      %vm903 = vcmask 1043456
      %v905 = vsel %vm903, %v852, 0
      %v908 = vsel %vm903, %v853, 0
      %910 = vmatprep.subr.bf16.mxu0 %v908
      %911 = vmatpush1.bf16.msra.mxu0 %v905
      %912 = vmatprep.subr.bf16.mxu0 0
      %913 = vmatpush1.bf16.msra.mxu0 0
      %914 = vmatprep.subr.bf16.mxu0 0
      %915 = vmatpush1.bf16.msra.mxu0 0
      %916 = vmatprep.subr.bf16.mxu0 0
      %917 = vmatpush1.bf16.msra.mxu0 0
      %918 = vmatprep.subr.bf16.mxu0 0
      %919 = vmatpush1.bf16.msra.mxu0 0
      %920 = vmatprep.subr.bf16.mxu0 0
      %921 = vmatpush1.bf16.msra.mxu0 0
      %922 = vmatprep.subr.bf16.mxu0 0
      %923 = vmatpush1.bf16.msra.mxu0 0
      %924 = vmatprep.subr.bf16.mxu0 0
      %925 = vmatpush1.bf16.msra.mxu0 0
      %926 = vmatprep.subr.bf16.mxu0 0
      %927 = vmatpush1.bf16.msra.mxu0 0
      %928 = vmatprep.subr.bf16.mxu0 0
      %929 = vmatpush1.bf16.msra.mxu0 0
      %930 = vmatprep.subr.bf16.mxu0 0
      %931 = vmatpush1.bf16.msra.mxu0 0
      %932 = vmatprep.subr.bf16.mxu0 0
      %933 = vmatpush1.bf16.msra.mxu0 0
      %934 = vmatprep.subr.bf16.mxu0 0
      %935 = vmatpush1.bf16.msra.mxu0 0
      %936 = vmatprep.subr.bf16.mxu0 0
      %937 = vmatpush1.bf16.msra.mxu0 0
      %938 = vmatprep.subr.bf16.mxu0 0
      %939 = vmatpush1.bf16.msra.mxu0 0
      %940 = vmatprep.subr.bf16.mxu0 0
      %941 = vmatpush1.bf16.msra.mxu0 0
      %942 = vmatprep.mubr.bf16.mxu0 0
      %943 = vmatmul.mubr.bf16.gmra.mrb[0].mxu0 %v856
      %v944 = vpop.f32.mrb[0].mxu0
      %v945 = vadd.f32 0.0, %v944
      %v946 = vpop.f32.mrb[0].mxu0
      %v947 = vadd.f32 0.0, %v946
      %v948 = vpop.f32.mrb[0].mxu0
      %v949 = vadd.f32 0.0, %v948
      %v950 = vpop.f32.mrb[0].mxu0
      %v951 = vadd.f32 0.0, %v950
      %952 = vmatprep.mubr.bf16.mxu0 0
      %953 = vmatmul.mubr.bf16.gmra.mrb[0].mxu0 %v859
      %v954 = vpop.f32.mrb[0].mxu0
      %v955 = vadd.f32 0.0, %v954
      %v956 = vpop.f32.mrb[0].mxu0
      %v957 = vadd.f32 0.0, %v956
      %v958 = vpop.f32.mrb[0].mxu0
      %v959 = vadd.f32 0.0, %v958
      %v960 = vpop.f32.mrb[0].mxu0
      %v961 = vadd.f32 0.0, %v960
      %962 = vmatprep.mubr.bf16.mxu0 0
      %963 = vmatmul.mubr.bf16.gmra.mrb[0].mxu0 %v862
      %v964 = vpop.f32.mrb[0].mxu0
      %v965 = vadd.f32 0.0, %v964
      %v966 = vpop.f32.mrb[0].mxu0
      %v967 = vadd.f32 0.0, %v966
      %v968 = vpop.f32.mrb[0].mxu0
      %v969 = vadd.f32 0.0, %v968
      %v970 = vpop.f32.mrb[0].mxu0
      %v971 = vadd.f32 0.0, %v970
      %972 = vmatprep.mubr.bf16.mxu0 0
      %973 = vmatmul.mubr.bf16.gmra.mrb[0].mxu0 %v865
      %v974 = vpop.f32.mrb[0].mxu0
      %v975 = vadd.f32 0.0, %v974
      %v976 = vpop.f32.mrb[0].mxu0
      %v977 = vadd.f32 0.0, %v976
      %v978 = vpop.f32.mrb[0].mxu0
      %v979 = vadd.f32 0.0, %v978
      %v980 = vpop.f32.mrb[0].mxu0
      %v981 = vadd.f32 0.0, %v980
      %982 = vmatprep.mubr.bf16.mxu0 0
      %983 = vmatmul.mubr.bf16.gmra.mrb[0].mxu0 %v868
      %v984 = vpop.f32.mrb[0].mxu0
      %v985 = vadd.f32 0.0, %v984
      %v986 = vpop.f32.mrb[0].mxu0
      %v987 = vadd.f32 0.0, %v986
      %v988 = vpop.f32.mrb[0].mxu0
      %v989 = vadd.f32 0.0, %v988
      %v990 = vpop.f32.mrb[0].mxu0
      %v991 = vadd.f32 0.0, %v990
      %992 = vmatprep.mubr.bf16.mxu0 0
      %993 = vmatmul.mubr.bf16.gmra.mrb[0].mxu0 %v871
      %v994 = vpop.f32.mrb[0].mxu0
      %v995 = vadd.f32 0.0, %v994
      %v996 = vpop.f32.mrb[0].mxu0
      %v997 = vadd.f32 0.0, %v996
      %v998 = vpop.f32.mrb[0].mxu0
      %v999 = vadd.f32 0.0, %v998
      %v1000 = vpop.f32.mrb[0].mxu0
      %v1001 = vadd.f32 0.0, %v1000
      %1002 = vmatprep.mubr.bf16.mxu0 0
      %1003 = vmatmul.mubr.bf16.gmra.mrb[0].mxu0 %v874
      %v1004 = vpop.f32.mrb[0].mxu0
      %v1005 = vadd.f32 0.0, %v1004
      %v1006 = vpop.f32.mrb[0].mxu0
      %v1007 = vadd.f32 0.0, %v1006
      %v1008 = vpop.f32.mrb[0].mxu0
      %v1009 = vadd.f32 0.0, %v1008
      %v1010 = vpop.f32.mrb[0].mxu0
      %v1011 = vadd.f32 0.0, %v1010
      %1012 = vmatprep.mubr.bf16.mxu0 0
      %1013 = vmatmul.mubr.bf16.gmra.mrb[0].mxu0 %v877
      %v1014 = vpop.f32.mrb[0].mxu0
      %v1015 = vadd.f32 0.0, %v1014
      %v1016 = vpop.f32.mrb[0].mxu0
      %v1017 = vadd.f32 0.0, %v1016
      %v1018 = vpop.f32.mrb[0].mxu0
      %v1019 = vadd.f32 0.0, %v1018
      %v1020 = vpop.f32.mrb[0].mxu0
      %v1021 = vadd.f32 0.0, %v1020
      %1022 = vmatprep.mubr.bf16.mxu0 0
      %1023 = vmatmul.mubr.bf16.gmra.mrb[0].mxu0 %v880
      %v1024 = vpop.f32.mrb[0].mxu0
      %v1025 = vadd.f32 0.0, %v1024
      %v1026 = vpop.f32.mrb[0].mxu0
      %v1027 = vadd.f32 0.0, %v1026
      %v1028 = vpop.f32.mrb[0].mxu0
      %v1029 = vadd.f32 0.0, %v1028
      %v1030 = vpop.f32.mrb[0].mxu0
      %v1031 = vadd.f32 0.0, %v1030
      %1032 = vmatprep.mubr.bf16.mxu0 0
      %1033 = vmatmul.mubr.bf16.gmra.mrb[0].mxu0 %v883
      %v1034 = vpop.f32.mrb[0].mxu0
      %v1035 = vadd.f32 0.0, %v1034
      %v1036 = vpop.f32.mrb[0].mxu0
      %v1037 = vadd.f32 0.0, %v1036
      %v1038 = vpop.f32.mrb[0].mxu0
      %v1039 = vadd.f32 0.0, %v1038
      %v1040 = vpop.f32.mrb[0].mxu0
      %v1041 = vadd.f32 0.0, %v1040
      %1042 = vmatprep.mubr.bf16.mxu0 0
      %1043 = vmatmul.mubr.bf16.gmra.mrb[0].mxu0 %v886
      %v1044 = vpop.f32.mrb[0].mxu0
      %v1045 = vadd.f32 0.0, %v1044
      %v1046 = vpop.f32.mrb[0].mxu0
      %v1047 = vadd.f32 0.0, %v1046
      %v1048 = vpop.f32.mrb[0].mxu0
      %v1049 = vadd.f32 0.0, %v1048
      %v1050 = vpop.f32.mrb[0].mxu0
      %v1051 = vadd.f32 0.0, %v1050
      %1052 = vmatprep.mubr.bf16.mxu0 0
      %1053 = vmatmul.mubr.bf16.gmra.mrb[0].mxu0 %v889
      %v1054 = vpop.f32.mrb[0].mxu0
      %v1055 = vadd.f32 0.0, %v1054
      %v1056 = vpop.f32.mrb[0].mxu0
      %v1057 = vadd.f32 0.0, %v1056
      %v1058 = vpop.f32.mrb[0].mxu0
      %v1059 = vadd.f32 0.0, %v1058
      %v1060 = vpop.f32.mrb[0].mxu0
      %v1061 = vadd.f32 0.0, %v1060
      %1062 = vmatprep.mubr.bf16.mxu0 0
      %1063 = vmatmul.mubr.bf16.gmra.mrb[0].mxu0 %v892
      %v1064 = vpop.f32.mrb[0].mxu0
      %v1065 = vadd.f32 0.0, %v1064
      %v1066 = vpop.f32.mrb[0].mxu0
      %v1067 = vadd.f32 0.0, %v1066
      %v1068 = vpop.f32.mrb[0].mxu0
      %v1069 = vadd.f32 0.0, %v1068
      %v1070 = vpop.f32.mrb[0].mxu0
      %v1071 = vadd.f32 0.0, %v1070
      %1072 = vmatprep.mubr.bf16.mxu0 0
      %1073 = vmatmul.mubr.bf16.gmra.mrb[0].mxu0 %v895
      %v1074 = vpop.f32.mrb[0].mxu0
      %v1075 = vadd.f32 0.0, %v1074
      %v1076 = vpop.f32.mrb[0].mxu0
      %v1077 = vadd.f32 0.0, %v1076
      %v1078 = vpop.f32.mrb[0].mxu0
      %v1079 = vadd.f32 0.0, %v1078
      %v1080 = vpop.f32.mrb[0].mxu0
      %v1081 = vadd.f32 0.0, %v1080
      %1082 = vmatprep.mubr.bf16.mxu0 0
      %1083 = vmatmul.mubr.bf16.gmra.mrb[0].mxu0 %v898
      %v1084 = vpop.f32.mrb[0].mxu0
      %v1085 = vadd.f32 0.0, %v1084
      %v1086 = vpop.f32.mrb[0].mxu0
      %v1087 = vadd.f32 0.0, %v1086
      %v1088 = vpop.f32.mrb[0].mxu0
      %v1089 = vadd.f32 0.0, %v1088
      %v1090 = vpop.f32.mrb[0].mxu0
      %v1091 = vadd.f32 0.0, %v1090
      %1092 = vmatprep.mubr.bf16.mxu0 0
      %1093 = vmatmul.mubr.bf16.gmra.mrb[0].mxu0 %v901
      %v1094 = vpop.f32.mrb[0].mxu0
      %v1095 = vadd.f32 0.0, %v1094
      %v1096 = vpop.f32.mrb[0].mxu0
      %v1097 = vadd.f32 0.0, %v1096
      %v1098 = vpop.f32.mrb[0].mxu0
      %v1099 = vadd.f32 0.0, %v1098
      %v1100 = vpop.f32.mrb[0].mxu0
      %v1101 = vadd.f32 0.0, %v1100
      %1102 = vdwg.mxu0
      %v1103 = vpack.c.bf16 %v949, %v945
      %v1104 = vpack.c.bf16 %v959, %v955
      %v1105 = vpack.c.bf16 %v969, %v965
      %v1106 = vpack.c.bf16 %v979, %v975
      %v1107 = vpack.c.bf16 %v989, %v985
      %v1108 = vpack.c.bf16 %v999, %v995
      %v1109 = vpack.c.bf16 %v1009, %v1005
      %v1110 = vpack.c.bf16 %v1019, %v1015
      %v1111 = vpack.c.bf16 %v1029, %v1025
      %v1112 = vpack.c.bf16 %v1039, %v1035
      %v1113 = vpack.c.bf16 %v1049, %v1045
      %v1114 = vpack.c.bf16 %v1059, %v1055
      %v1115 = vpack.c.bf16 %v1069, %v1065
      %v1116 = vpack.c.bf16 %v1079, %v1075
      %v1117 = vpack.c.bf16 %v1089, %v1085
      %v1118 = vpack.c.bf16 %v1099, %v1095
      %v1135 = vunpack.c.l.b16 %v1103
      %v1136 = vunpack.c.h.b16 %v1103
      %v1137 = vunpack.c.l.b16 %v1104
      %v1138 = vunpack.c.h.b16 %v1104
      %v1139 = vunpack.c.l.b16 %v1105
      %v1140 = vunpack.c.h.b16 %v1105
      %v1141 = vunpack.c.l.b16 %v1106
      %v1142 = vunpack.c.h.b16 %v1106
      %v1143 = vunpack.c.l.b16 %v1107
      %v1144 = vunpack.c.h.b16 %v1107
      %v1145 = vunpack.c.l.b16 %v1108
      %v1146 = vunpack.c.h.b16 %v1108
      %v1147 = vunpack.c.l.b16 %v1109
      %v1148 = vunpack.c.h.b16 %v1109
      %v1149 = vunpack.c.l.b16 %v1110
      %v1150 = vunpack.c.h.b16 %v1110
      %v1151 = vunpack.c.l.b16 %v1111
      %v1152 = vunpack.c.h.b16 %v1111
      %v1153 = vunpack.c.l.b16 %v1112
      %v1154 = vunpack.c.h.b16 %v1112
      %v1155 = vunpack.c.l.b16 %v1113
      %v1156 = vunpack.c.h.b16 %v1113
      %v1157 = vunpack.c.l.b16 %v1114
      %v1158 = vunpack.c.h.b16 %v1114
      %v1159 = vunpack.c.l.b16 %v1115
      %v1160 = vunpack.c.h.b16 %v1115
      %v1161 = vunpack.c.l.b16 %v1116
      %v1162 = vunpack.c.h.b16 %v1116
      %v1163 = vunpack.c.l.b16 %v1117
      %v1164 = vunpack.c.h.b16 %v1117
      %v1165 = vunpack.c.l.b16 %v1118
      %v1166 = vunpack.c.h.b16 %v1118
      %v1167 = vpack.c.b16 %v1135, %v1135
      %v1168 = vpack.c.b16 %v1136, %v1136
      %v1169 = vpack.c.b16 %v1137, %v1137
      %v1170 = vpack.c.b16 %v1138, %v1138
      %v1171 = vpack.c.b16 %v1139, %v1139
      %v1172 = vpack.c.b16 %v1140, %v1140
      %v1173 = vpack.c.b16 %v1141, %v1141
      %v1174 = vpack.c.b16 %v1142, %v1142
      %v1175 = vpack.c.b16 %v1143, %v1143
      %v1176 = vpack.c.b16 %v1144, %v1144
      %v1177 = vpack.c.b16 %v1145, %v1145
      %v1178 = vpack.c.b16 %v1146, %v1146
      %v1179 = vpack.c.b16 %v1147, %v1147
      %v1180 = vpack.c.b16 %v1148, %v1148
      %v1181 = vpack.c.b16 %v1149, %v1149
      %v1182 = vpack.c.b16 %v1150, %v1150
      %v1183 = vpack.c.b16 %v1151, %v1151
      %v1184 = vpack.c.b16 %v1152, %v1152
      %v1185 = vpack.c.b16 %v1153, %v1153
      %v1186 = vpack.c.b16 %v1154, %v1154
      %v1187 = vpack.c.b16 %v1155, %v1155
      %v1188 = vpack.c.b16 %v1156, %v1156
      %v1189 = vpack.c.b16 %v1157, %v1157
      %v1190 = vpack.c.b16 %v1158, %v1158
      %v1191 = vpack.c.b16 %v1159, %v1159
      %v1192 = vpack.c.b16 %v1160, %v1160
      %v1193 = vpack.c.b16 %v1161, %v1161
      %v1194 = vpack.c.b16 %v1162, %v1162
      %v1195 = vpack.c.b16 %v1163, %v1163
      %v1196 = vpack.c.b16 %v1164, %v1164
      %v1197 = vpack.c.b16 %v1165, %v1165
      %v1198 = vpack.c.b16 %v1166, %v1166
      %vm1199 = vsmask.f32 4368
      %vm1200 = vmor %vm264, %vm1199
      %v1202 = vshrl.u32 %v1167, 16
      %v1204 = vrot.slane %v1202, 7
      %v1205 = vshll.u32 %v1167, 16
      %v1207 = vor.u32 %v1204, %v1205
      %v1208 = vrot.slane %v1204, 4
      %v1210 = vshrl.u32 %v1168, 16
      %v1212 = vrot.slane %v1210, 7
      %v1213 = vshll.u32 %v1168, 16
      %v1215 = vor.u32 %v1212, %v1213
      %v1216 = vsel %vm1200, %v1208, %v1215
      %v1217 = vrot.slane %v1212, 4
      %v1219 = vshrl.u32 %v1169, 16
      %v1221 = vrot.slane %v1219, 7
      %v1222 = vshll.u32 %v1169, 16
      %v1224 = vor.u32 %v1221, %v1222
      %v1225 = vrot.slane %v1221, 4
      %v1227 = vshrl.u32 %v1170, 16
      %v1229 = vrot.slane %v1227, 7
      %v1230 = vshll.u32 %v1170, 16
      %v1232 = vor.u32 %v1229, %v1230
      %v1233 = vsel %vm1200, %v1225, %v1232
      %v1234 = vrot.slane %v1229, 4
      %v1236 = vshrl.u32 %v1171, 16
      %v1238 = vrot.slane %v1236, 7
      %v1239 = vshll.u32 %v1171, 16
      %v1241 = vor.u32 %v1238, %v1239
      %v1242 = vrot.slane %v1238, 4
      %v1244 = vshrl.u32 %v1172, 16
      %v1246 = vrot.slane %v1244, 7
      %v1247 = vshll.u32 %v1172, 16
      %v1249 = vor.u32 %v1246, %v1247
      %v1250 = vsel %vm1200, %v1242, %v1249
      %v1251 = vrot.slane %v1246, 4
      %v1253 = vshrl.u32 %v1173, 16
      %v1255 = vrot.slane %v1253, 7
      %v1256 = vshll.u32 %v1173, 16
      %v1258 = vor.u32 %v1255, %v1256
      %v1259 = vrot.slane %v1255, 4
      %v1261 = vshrl.u32 %v1174, 16
      %v1263 = vrot.slane %v1261, 7
      %v1264 = vshll.u32 %v1174, 16
      %v1266 = vor.u32 %v1263, %v1264
      %v1267 = vsel %vm1200, %v1259, %v1266
      %v1268 = vrot.slane %v1263, 4
      %v1270 = vshrl.u32 %v1175, 16
      %v1272 = vrot.slane %v1270, 7
      %v1273 = vshll.u32 %v1175, 16
      %v1275 = vor.u32 %v1272, %v1273
      %v1276 = vrot.slane %v1272, 4
      %v1278 = vshrl.u32 %v1176, 16
      %v1280 = vrot.slane %v1278, 7
      %v1281 = vshll.u32 %v1176, 16
      %v1283 = vor.u32 %v1280, %v1281
      %v1284 = vsel %vm1200, %v1276, %v1283
      %v1285 = vrot.slane %v1280, 4
      %v1287 = vshrl.u32 %v1177, 16
      %v1289 = vrot.slane %v1287, 7
      %v1290 = vshll.u32 %v1177, 16
      %v1292 = vor.u32 %v1289, %v1290
      %v1293 = vrot.slane %v1289, 4
      %v1295 = vshrl.u32 %v1178, 16
      %v1297 = vrot.slane %v1295, 7
      %v1298 = vshll.u32 %v1178, 16
      %v1300 = vor.u32 %v1297, %v1298
      %v1301 = vsel %vm1200, %v1293, %v1300
      %v1302 = vrot.slane %v1297, 4
      %v1304 = vshrl.u32 %v1179, 16
      %v1306 = vrot.slane %v1304, 7
      %v1307 = vshll.u32 %v1179, 16
      %v1309 = vor.u32 %v1306, %v1307
      %v1310 = vrot.slane %v1306, 4
      %v1312 = vshrl.u32 %v1180, 16
      %v1314 = vrot.slane %v1312, 7
      %v1315 = vshll.u32 %v1180, 16
      %v1317 = vor.u32 %v1314, %v1315
      %v1318 = vsel %vm1200, %v1310, %v1317
      %v1319 = vrot.slane %v1314, 4
      %v1321 = vshrl.u32 %v1181, 16
      %v1323 = vrot.slane %v1321, 7
      %v1324 = vshll.u32 %v1181, 16
      %v1326 = vor.u32 %v1323, %v1324
      %v1327 = vrot.slane %v1323, 4
      %v1329 = vshrl.u32 %v1182, 16
      %v1331 = vrot.slane %v1329, 7
      %v1332 = vshll.u32 %v1182, 16
      %v1334 = vor.u32 %v1331, %v1332
      %v1335 = vsel %vm1200, %v1327, %v1334
      %v1336 = vrot.slane %v1331, 4
      %v1338 = vshrl.u32 %v1183, 16
      %v1340 = vrot.slane %v1338, 7
      %v1341 = vshll.u32 %v1183, 16
      %v1343 = vor.u32 %v1340, %v1341
      %v1344 = vrot.slane %v1340, 4
      %v1346 = vshrl.u32 %v1184, 16
      %v1348 = vrot.slane %v1346, 7
      %v1349 = vshll.u32 %v1184, 16
      %v1351 = vor.u32 %v1348, %v1349
      %v1352 = vsel %vm1200, %v1344, %v1351
      %v1353 = vrot.slane %v1348, 4
      %v1355 = vshrl.u32 %v1185, 16
      %v1357 = vrot.slane %v1355, 7
      %v1358 = vshll.u32 %v1185, 16
      %v1360 = vor.u32 %v1357, %v1358
      %v1361 = vrot.slane %v1357, 4
      %v1363 = vshrl.u32 %v1186, 16
      %v1365 = vrot.slane %v1363, 7
      %v1366 = vshll.u32 %v1186, 16
      %v1368 = vor.u32 %v1365, %v1366
      %v1369 = vsel %vm1200, %v1361, %v1368
      %v1370 = vrot.slane %v1365, 4
      %v1372 = vshrl.u32 %v1187, 16
      %v1374 = vrot.slane %v1372, 7
      %v1375 = vshll.u32 %v1187, 16
      %v1377 = vor.u32 %v1374, %v1375
      %v1378 = vrot.slane %v1374, 4
      %v1380 = vshrl.u32 %v1188, 16
      %v1382 = vrot.slane %v1380, 7
      %v1383 = vshll.u32 %v1188, 16
      %v1385 = vor.u32 %v1382, %v1383
      %v1386 = vsel %vm1200, %v1378, %v1385
      %v1387 = vrot.slane %v1382, 4
      %v1389 = vshrl.u32 %v1189, 16
      %v1391 = vrot.slane %v1389, 7
      %v1392 = vshll.u32 %v1189, 16
      %v1394 = vor.u32 %v1391, %v1392
      %v1395 = vrot.slane %v1391, 4
      %v1397 = vshrl.u32 %v1190, 16
      %v1399 = vrot.slane %v1397, 7
      %v1400 = vshll.u32 %v1190, 16
      %v1402 = vor.u32 %v1399, %v1400
      %v1403 = vsel %vm1200, %v1395, %v1402
      %v1404 = vrot.slane %v1399, 4
      %v1406 = vshrl.u32 %v1191, 16
      %v1408 = vrot.slane %v1406, 7
      %v1409 = vshll.u32 %v1191, 16
      %v1411 = vor.u32 %v1408, %v1409
      %v1412 = vrot.slane %v1408, 4
      %v1414 = vshrl.u32 %v1192, 16
      %v1416 = vrot.slane %v1414, 7
      %v1417 = vshll.u32 %v1192, 16
      %v1419 = vor.u32 %v1416, %v1417
      %v1420 = vsel %vm1200, %v1412, %v1419
      %v1421 = vrot.slane %v1416, 4
      %v1423 = vshrl.u32 %v1193, 16
      %v1425 = vrot.slane %v1423, 7
      %v1426 = vshll.u32 %v1193, 16
      %v1428 = vor.u32 %v1425, %v1426
      %v1429 = vrot.slane %v1425, 4
      %v1431 = vshrl.u32 %v1194, 16
      %v1433 = vrot.slane %v1431, 7
      %v1434 = vshll.u32 %v1194, 16
      %v1436 = vor.u32 %v1433, %v1434
      %v1437 = vsel %vm1200, %v1429, %v1436
      %v1438 = vrot.slane %v1433, 4
      %v1440 = vshrl.u32 %v1195, 16
      %v1442 = vrot.slane %v1440, 7
      %v1443 = vshll.u32 %v1195, 16
      %v1445 = vor.u32 %v1442, %v1443
      %v1446 = vrot.slane %v1442, 4
      %v1448 = vshrl.u32 %v1196, 16
      %v1450 = vrot.slane %v1448, 7
      %v1451 = vshll.u32 %v1196, 16
      %v1453 = vor.u32 %v1450, %v1451
      %v1454 = vsel %vm1200, %v1446, %v1453
      %v1455 = vrot.slane %v1450, 4
      %v1457 = vshrl.u32 %v1197, 16
      %v1459 = vrot.slane %v1457, 7
      %v1460 = vshll.u32 %v1197, 16
      %v1462 = vor.u32 %v1459, %v1460
      %v1463 = vrot.slane %v1459, 4
      %v1465 = vshrl.u32 %v1198, 16
      %v1467 = vrot.slane %v1465, 7
      %v1468 = vshll.u32 %v1198, 16
      %v1470 = vor.u32 %v1467, %v1468
      %v1471 = vsel %vm1200, %v1463, %v1470
      %v1472 = vrot.slane %v1467, 4
      %1473 = vrot.lane.b32.xlu0 %v1207, 64
      %v1474 = vpop.permute.xlu0 %1473
      %1475 = vrot.lane.b32.xlu0 %v1216, 64
      %v1476 = vpop.permute.xlu0 %1475
      %1477 = vrot.lane.b32.xlu0 %v1217, 64
      %v1478 = vpop.permute.xlu0 %1477
      %1479 = vrot.lane.b32.xlu0 %v1224, 64
      %v1480 = vpop.permute.xlu0 %1479
      %1481 = vrot.lane.b32.xlu0 %v1233, 64
      %v1482 = vpop.permute.xlu0 %1481
      %1483 = vrot.lane.b32.xlu0 %v1234, 64
      %v1484 = vpop.permute.xlu0 %1483
      %1485 = vrot.lane.b32.xlu0 %v1241, 64
      %v1486 = vpop.permute.xlu0 %1485
      %1487 = vrot.lane.b32.xlu0 %v1250, 64
      %v1488 = vpop.permute.xlu0 %1487
      %1489 = vrot.lane.b32.xlu0 %v1251, 64
      %v1490 = vpop.permute.xlu0 %1489
      %1491 = vrot.lane.b32.xlu0 %v1258, 64
      %v1492 = vpop.permute.xlu0 %1491
      %1493 = vrot.lane.b32.xlu0 %v1267, 64
      %v1494 = vpop.permute.xlu0 %1493
      %1495 = vrot.lane.b32.xlu0 %v1268, 64
      %v1496 = vpop.permute.xlu0 %1495
      %1497 = vrot.lane.b32.xlu0 %v1275, 64
      %v1498 = vpop.permute.xlu0 %1497
      %1499 = vrot.lane.b32.xlu0 %v1284, 64
      %v1500 = vpop.permute.xlu0 %1499
      %1501 = vrot.lane.b32.xlu0 %v1285, 64
      %v1502 = vpop.permute.xlu0 %1501
      %1503 = vrot.lane.b32.xlu0 %v1292, 64
      %v1504 = vpop.permute.xlu0 %1503
      %1505 = vrot.lane.b32.xlu0 %v1301, 64
      %v1506 = vpop.permute.xlu0 %1505
      %1507 = vrot.lane.b32.xlu0 %v1302, 64
      %v1508 = vpop.permute.xlu0 %1507
      %1509 = vrot.lane.b32.xlu0 %v1309, 64
      %v1510 = vpop.permute.xlu0 %1509
      %1511 = vrot.lane.b32.xlu0 %v1318, 64
      %v1512 = vpop.permute.xlu0 %1511
      %1513 = vrot.lane.b32.xlu0 %v1319, 64
      %v1514 = vpop.permute.xlu0 %1513
      %1515 = vrot.lane.b32.xlu0 %v1326, 64
      %v1516 = vpop.permute.xlu0 %1515
      %1517 = vrot.lane.b32.xlu0 %v1335, 64
      %v1518 = vpop.permute.xlu0 %1517
      %1519 = vrot.lane.b32.xlu0 %v1336, 64
      %v1520 = vpop.permute.xlu0 %1519
      %1521 = vrot.lane.b32.xlu0 %v1343, 64
      %v1522 = vpop.permute.xlu0 %1521
      %1523 = vrot.lane.b32.xlu0 %v1352, 64
      %v1524 = vpop.permute.xlu0 %1523
      %1525 = vrot.lane.b32.xlu0 %v1353, 64
      %v1526 = vpop.permute.xlu0 %1525
      %1527 = vrot.lane.b32.xlu0 %v1360, 64
      %v1528 = vpop.permute.xlu0 %1527
      %1529 = vrot.lane.b32.xlu0 %v1369, 64
      %v1530 = vpop.permute.xlu0 %1529
      %1531 = vrot.lane.b32.xlu0 %v1370, 64
      %v1532 = vpop.permute.xlu0 %1531
      %1533 = vrot.lane.b32.xlu0 %v1377, 64
      %v1534 = vpop.permute.xlu0 %1533
      %1535 = vrot.lane.b32.xlu0 %v1386, 64
      %v1536 = vpop.permute.xlu0 %1535
      %1537 = vrot.lane.b32.xlu0 %v1387, 64
      %v1538 = vpop.permute.xlu0 %1537
      %1539 = vrot.lane.b32.xlu0 %v1394, 64
      %v1540 = vpop.permute.xlu0 %1539
      %1541 = vrot.lane.b32.xlu0 %v1403, 64
      %v1542 = vpop.permute.xlu0 %1541
      %1543 = vrot.lane.b32.xlu0 %v1404, 64
      %v1544 = vpop.permute.xlu0 %1543
      %1545 = vrot.lane.b32.xlu0 %v1411, 64
      %v1546 = vpop.permute.xlu0 %1545
      %1547 = vrot.lane.b32.xlu0 %v1420, 64
      %v1548 = vpop.permute.xlu0 %1547
      %1549 = vrot.lane.b32.xlu0 %v1421, 64
      %v1550 = vpop.permute.xlu0 %1549
      %1551 = vrot.lane.b32.xlu0 %v1428, 64
      %v1552 = vpop.permute.xlu0 %1551
      %1553 = vrot.lane.b32.xlu0 %v1437, 64
      %v1554 = vpop.permute.xlu0 %1553
      %1555 = vrot.lane.b32.xlu0 %v1438, 64
      %v1556 = vpop.permute.xlu0 %1555
      %1557 = vrot.lane.b32.xlu0 %v1445, 64
      %v1558 = vpop.permute.xlu0 %1557
      %1559 = vrot.lane.b32.xlu0 %v1454, 64
      %v1560 = vpop.permute.xlu0 %1559
      %1561 = vrot.lane.b32.xlu0 %v1455, 64
      %v1562 = vpop.permute.xlu0 %1561
      %1563 = vrot.lane.b32.xlu0 %v1462, 64
      %v1564 = vpop.permute.xlu0 %1563
      %1565 = vrot.lane.b32.xlu0 %v1471, 64
      %v1566 = vpop.permute.xlu0 %1565
      %1567 = vrot.lane.b32.xlu0 %v1472, 64
      %v1568 = vpop.permute.xlu0 %1567
      %s1617 = scalar_lea.vmem [#allocation4], 12
      %vm1618 = vcmask 388096
      %vm1619 = vmand %vm1618, %vm320
      %v1620 = vld [vmem:[%s1617] sm:$0xf]
      %v1621 = vsel %vm1619, %v1474, %v1620
      %1622 = vst [vmem:[%s1617] sm:$0xf] %v1621
      %1623 = vst.msk [vmem:[%s1617 + $0x4] sm:$0xf] %vm496, %v1476
      %v1624 = vld [vmem:[%s1617 + $0x8] sm:$0x1]
      %v1625 = vsel %vm506, %v1478, %v1624
      %1626 = vst [vmem:[%s1617 + $0x8] sm:$0x1] %v1625
      %v1627 = vld [vmem:[%s1617 + $0xc] sm:$0xf]
      %v1628 = vsel %vm1619, %v1480, %v1627
      %1629 = vst [vmem:[%s1617 + $0xc] sm:$0xf] %v1628
      %1630 = vst.msk [vmem:[%s1617 + $0x10] sm:$0xf] %vm496, %v1482
      %v1631 = vld [vmem:[%s1617 + $0x14] sm:$0x1]
      %v1632 = vsel %vm506, %v1484, %v1631
      %1633 = vst [vmem:[%s1617 + $0x14] sm:$0x1] %v1632
      %v1634 = vld [vmem:[%s1617 + $0x18] sm:$0xf]
      %v1635 = vsel %vm1619, %v1486, %v1634
      %1636 = vst [vmem:[%s1617 + $0x18] sm:$0xf] %v1635
      %1637 = vst.msk [vmem:[%s1617 + $0x1c] sm:$0xf] %vm496, %v1488
      %v1638 = vld [vmem:[%s1617 + $0x20] sm:$0x1]
      %v1639 = vsel %vm506, %v1490, %v1638
      %1640 = vst [vmem:[%s1617 + $0x20] sm:$0x1] %v1639
      %v1641 = vld [vmem:[%s1617 + $0x24] sm:$0xf]
      %v1642 = vsel %vm1619, %v1492, %v1641
      %1643 = vst [vmem:[%s1617 + $0x24] sm:$0xf] %v1642
      %1644 = vst.msk [vmem:[%s1617 + $0x28] sm:$0xf] %vm496, %v1494
      %v1645 = vld [vmem:[%s1617 + $0x2c] sm:$0x1]
      %v1646 = vsel %vm506, %v1496, %v1645
      %1647 = vst [vmem:[%s1617 + $0x2c] sm:$0x1] %v1646
      %v1648 = vld [vmem:[%s1617 + $0x30] sm:$0xf]
      %v1649 = vsel %vm1619, %v1498, %v1648
      %1650 = vst [vmem:[%s1617 + $0x30] sm:$0xf] %v1649
      %1651 = vst.msk [vmem:[%s1617 + $0x34] sm:$0xf] %vm496, %v1500
      %v1652 = vld [vmem:[%s1617 + $0x38] sm:$0x1]
      %v1653 = vsel %vm506, %v1502, %v1652
      %1654 = vst [vmem:[%s1617 + $0x38] sm:$0x1] %v1653
      %v1655 = vld [vmem:[%s1617 + $0x3c] sm:$0xf]
      %v1656 = vsel %vm1619, %v1504, %v1655
      %1657 = vst [vmem:[%s1617 + $0x3c] sm:$0xf] %v1656
      %1658 = vst.msk [vmem:[%s1617 + $0x40] sm:$0xf] %vm496, %v1506
      %v1659 = vld [vmem:[%s1617 + $0x44] sm:$0x1]
      %v1660 = vsel %vm506, %v1508, %v1659
      %1661 = vst [vmem:[%s1617 + $0x44] sm:$0x1] %v1660
      %v1662 = vld [vmem:[%s1617 + $0x48] sm:$0xf]
      %v1663 = vsel %vm1619, %v1510, %v1662
      %1664 = vst [vmem:[%s1617 + $0x48] sm:$0xf] %v1663
      %1665 = vst.msk [vmem:[%s1617 + $0x4c] sm:$0xf] %vm496, %v1512
      %v1666 = vld [vmem:[%s1617 + $0x50] sm:$0x1]
      %v1667 = vsel %vm506, %v1514, %v1666
      %1668 = vst [vmem:[%s1617 + $0x50] sm:$0x1] %v1667
      %v1669 = vld [vmem:[%s1617 + $0x54] sm:$0xf]
      %v1670 = vsel %vm1619, %v1516, %v1669
      %1671 = vst [vmem:[%s1617 + $0x54] sm:$0xf] %v1670
      %1672 = vst.msk [vmem:[%s1617 + $0x58] sm:$0xf] %vm496, %v1518
      %v1673 = vld [vmem:[%s1617 + $0x5c] sm:$0x1]
      %v1674 = vsel %vm506, %v1520, %v1673
      %1675 = vst [vmem:[%s1617 + $0x5c] sm:$0x1] %v1674
      %v1676 = vld [vmem:[%s1617 + $0x60] sm:$0xf]
      %v1677 = vsel %vm1619, %v1522, %v1676
      %1678 = vst [vmem:[%s1617 + $0x60] sm:$0xf] %v1677
      %1679 = vst.msk [vmem:[%s1617 + $0x64] sm:$0xf] %vm496, %v1524
      %v1680 = vld [vmem:[%s1617 + $0x68] sm:$0x1]
      %v1681 = vsel %vm506, %v1526, %v1680
      %1682 = vst [vmem:[%s1617 + $0x68] sm:$0x1] %v1681
      %v1683 = vld [vmem:[%s1617 + $0x6c] sm:$0xf]
      %v1684 = vsel %vm1619, %v1528, %v1683
      %1685 = vst [vmem:[%s1617 + $0x6c] sm:$0xf] %v1684
      %1686 = vst.msk [vmem:[%s1617 + $0x70] sm:$0xf] %vm496, %v1530
      %v1687 = vld [vmem:[%s1617 + $0x74] sm:$0x1]
      %v1688 = vsel %vm506, %v1532, %v1687
      %1689 = vst [vmem:[%s1617 + $0x74] sm:$0x1] %v1688
      %v1690 = vld [vmem:[%s1617 + $0x78] sm:$0xf]
      %v1691 = vsel %vm1619, %v1534, %v1690
      %1692 = vst [vmem:[%s1617 + $0x78] sm:$0xf] %v1691
      %1693 = vst.msk [vmem:[%s1617 + $0x7c] sm:$0xf] %vm496, %v1536
      %v1694 = vld [vmem:[%s1617 + $0x80] sm:$0x1]
      %v1695 = vsel %vm506, %v1538, %v1694
      %1696 = vst [vmem:[%s1617 + $0x80] sm:$0x1] %v1695
      %v1697 = vld [vmem:[%s1617 + $0x84] sm:$0xf]
      %v1698 = vsel %vm1619, %v1540, %v1697
      %1699 = vst [vmem:[%s1617 + $0x84] sm:$0xf] %v1698
      %1700 = vst.msk [vmem:[%s1617 + $0x88] sm:$0xf] %vm496, %v1542
      %v1701 = vld [vmem:[%s1617 + $0x8c] sm:$0x1]
      %v1702 = vsel %vm506, %v1544, %v1701
      %1703 = vst [vmem:[%s1617 + $0x8c] sm:$0x1] %v1702
      %v1704 = vld [vmem:[%s1617 + $0x90] sm:$0xf]
      %v1705 = vsel %vm1619, %v1546, %v1704
      %1706 = vst [vmem:[%s1617 + $0x90] sm:$0xf] %v1705
      %1707 = vst.msk [vmem:[%s1617 + $0x94] sm:$0xf] %vm496, %v1548
      %v1708 = vld [vmem:[%s1617 + $0x98] sm:$0x1]
      %v1709 = vsel %vm506, %v1550, %v1708
      %1710 = vst [vmem:[%s1617 + $0x98] sm:$0x1] %v1709
      %v1711 = vld [vmem:[%s1617 + $0x9c] sm:$0xf]
      %v1712 = vsel %vm1619, %v1552, %v1711
      %1713 = vst [vmem:[%s1617 + $0x9c] sm:$0xf] %v1712
      %1714 = vst.msk [vmem:[%s1617 + $0xa0] sm:$0xf] %vm496, %v1554
      %v1715 = vld [vmem:[%s1617 + $0xa4] sm:$0x1]
      %v1716 = vsel %vm506, %v1556, %v1715
      %1717 = vst [vmem:[%s1617 + $0xa4] sm:$0x1] %v1716
      %v1718 = vld [vmem:[%s1617 + $0xa8] sm:$0xf]
      %v1719 = vsel %vm1619, %v1558, %v1718
      %1720 = vst [vmem:[%s1617 + $0xa8] sm:$0xf] %v1719
      %1721 = vst.msk [vmem:[%s1617 + $0xac] sm:$0xf] %vm496, %v1560
      %v1722 = vld [vmem:[%s1617 + $0xb0] sm:$0x1]
      %v1723 = vsel %vm506, %v1562, %v1722
      %1724 = vst [vmem:[%s1617 + $0xb0] sm:$0x1] %v1723
      %v1725 = vld [vmem:[%s1617 + $0xb4] sm:$0xf]
      %v1726 = vsel %vm1619, %v1564, %v1725
      %1727 = vst [vmem:[%s1617 + $0xb4] sm:$0xf] %v1726
      %1728 = vst.msk [vmem:[%s1617 + $0xb8] sm:$0xf] %vm496, %v1566
      %v1729 = vld [vmem:[%s1617 + $0xbc] sm:$0x1]
      %v1730 = vsel %vm506, %v1568, %v1729
      %1731 = vst [vmem:[%s1617 + $0xbc] sm:$0x1] %v1730
      %v1732 = vld [vmem:[#allocation4] sm:$0xf]
      %v1733 = vld [vmem:[#allocation4 + $0x4] sm:$0xf]
      %v1734 = vld [vmem:[#allocation4 + $0xc] sm:$0xf]
      %v1735 = vld [vmem:[#allocation4 + $0x10] sm:$0xf]
      %v1736 = vld [vmem:[#allocation4 + $0x18] sm:$0xf]
      %v1737 = vld [vmem:[#allocation4 + $0x1c] sm:$0xf]
      %v1738 = vld [vmem:[#allocation4 + $0x24] sm:$0xf]
      %v1739 = vld [vmem:[#allocation4 + $0x28] sm:$0xf]
      %v1740 = vld [vmem:[#allocation4 + $0x30] sm:$0xf]
      %v1741 = vld [vmem:[#allocation4 + $0x34] sm:$0xf]
      %v1742 = vld [vmem:[#allocation4 + $0x3c] sm:$0xf]
      %v1743 = vld [vmem:[#allocation4 + $0x40] sm:$0xf]
      %v1744 = vld [vmem:[#allocation4 + $0x48] sm:$0xf]
      %v1745 = vld [vmem:[#allocation4 + $0x4c] sm:$0xf]
      %v1746 = vld [vmem:[#allocation4 + $0x54] sm:$0xf]
      %v1747 = vld [vmem:[#allocation4 + $0x58] sm:$0xf]
      %v1748 = vld [vmem:[#allocation4 + $0x60] sm:$0xf]
      %v1749 = vld [vmem:[#allocation4 + $0x64] sm:$0xf]
      %v1750 = vld [vmem:[#allocation4 + $0x6c] sm:$0xf]
      %v1751 = vld [vmem:[#allocation4 + $0x70] sm:$0xf]
      %v1752 = vld [vmem:[#allocation4 + $0x78] sm:$0xf]
      %v1753 = vld [vmem:[#allocation4 + $0x7c] sm:$0xf]
      %v1754 = vld [vmem:[#allocation4 + $0x84] sm:$0xf]
      %v1755 = vld [vmem:[#allocation4 + $0x88] sm:$0xf]
      %v1756 = vld [vmem:[#allocation4 + $0x90] sm:$0xf]
      %v1757 = vld [vmem:[#allocation4 + $0x94] sm:$0xf]
      %v1758 = vld [vmem:[#allocation4 + $0x9c] sm:$0xf]
      %v1759 = vld [vmem:[#allocation4 + $0xa0] sm:$0xf]
      %v1760 = vld [vmem:[#allocation4 + $0xa8] sm:$0xf]
      %v1761 = vld [vmem:[#allocation4 + $0xac] sm:$0xf]
      %v1762 = vld [vmem:[#allocation4 + $0xb4] sm:$0xf]
      %v1763 = vld [vmem:[#allocation4 + $0xb8] sm:$0xf]
      %v1764 = vld [vmem:[#allocation4 + $0x8] sm:$0x1]
      %v1765 = vld [vmem:[#allocation4 + $0x14] sm:$0x1]
      %v1766 = vld [vmem:[#allocation4 + $0x20] sm:$0x1]
      %v1767 = vld [vmem:[#allocation4 + $0x2c] sm:$0x1]
      %v1768 = vld [vmem:[#allocation4 + $0x38] sm:$0x1]
      %v1769 = vld [vmem:[#allocation4 + $0x44] sm:$0x1]
      %v1770 = vld [vmem:[#allocation4 + $0x50] sm:$0x1]
      %v1771 = vld [vmem:[#allocation4 + $0x5c] sm:$0x1]
      %v1772 = vld [vmem:[#allocation4 + $0x68] sm:$0x1]
      %v1773 = vld [vmem:[#allocation4 + $0x74] sm:$0x1]
      %v1774 = vld [vmem:[#allocation4 + $0x80] sm:$0x1]
      %v1775 = vld [vmem:[#allocation4 + $0x8c] sm:$0x1]
      %v1776 = vld [vmem:[#allocation4 + $0x98] sm:$0x1]
      %v1777 = vld [vmem:[#allocation4 + $0xa4] sm:$0x1]
      %v1778 = vld [vmem:[#allocation4 + $0xb0] sm:$0x1]
      %v1779 = vld [vmem:[#allocation4 + $0xbc] sm:$0x1]
      %v1780 = vld [vmem:[#allocation4] sm:$0xe]
      %v1781 = vld [vmem:[#allocation4 + $0xc] sm:$0xe]
      %v1782 = vld [vmem:[#allocation4 + $0x18] sm:$0xe]
      %v1783 = vld [vmem:[#allocation4 + $0x24] sm:$0xe]
      %v1784 = vld [vmem:[#allocation4 + $0x30] sm:$0xe]
      %v1785 = vld [vmem:[#allocation4 + $0x3c] sm:$0xe]
      %v1786 = vld [vmem:[#allocation4 + $0x48] sm:$0xe]
      %v1787 = vld [vmem:[#allocation4 + $0x54] sm:$0xe]
      %v1788 = vld [vmem:[#allocation4 + $0x60] sm:$0xe]
      %v1789 = vld [vmem:[#allocation4 + $0x6c] sm:$0xe]
      %v1790 = vld [vmem:[#allocation4 + $0x78] sm:$0xe]
      %v1791 = vld [vmem:[#allocation4 + $0x84] sm:$0xe]
      %v1792 = vld [vmem:[#allocation4 + $0x90] sm:$0xe]
      %v1793 = vld [vmem:[#allocation4 + $0x9c] sm:$0xe]
      %v1794 = vld [vmem:[#allocation4 + $0xa8] sm:$0xe]
      %v1795 = vld [vmem:[#allocation4 + $0xb4] sm:$0xe]
      %v1828 = vunpack.c.l.b16 %v1732
      %v1829 = vunpack.c.l.b16 %v1733
      %v1830 = vunpack.c.l.b16 %v1734
      %v1831 = vunpack.c.l.b16 %v1735
      %v1832 = vunpack.c.l.b16 %v1736
      %v1833 = vunpack.c.l.b16 %v1737
      %v1834 = vunpack.c.l.b16 %v1738
      %v1835 = vunpack.c.l.b16 %v1739
      %v1836 = vunpack.c.l.b16 %v1740
      %v1837 = vunpack.c.l.b16 %v1741
      %v1838 = vunpack.c.l.b16 %v1742
      %v1839 = vunpack.c.l.b16 %v1743
      %v1840 = vunpack.c.l.b16 %v1744
      %v1841 = vunpack.c.l.b16 %v1745
      %v1842 = vunpack.c.l.b16 %v1746
      %v1843 = vunpack.c.l.b16 %v1747
      %v1844 = vunpack.c.l.b16 %v1748
      %v1845 = vunpack.c.l.b16 %v1749
      %v1846 = vunpack.c.l.b16 %v1750
      %v1847 = vunpack.c.l.b16 %v1751
      %v1848 = vunpack.c.l.b16 %v1752
      %v1849 = vunpack.c.l.b16 %v1753
      %v1850 = vunpack.c.l.b16 %v1754
      %v1851 = vunpack.c.l.b16 %v1755
      %v1852 = vunpack.c.l.b16 %v1756
      %v1853 = vunpack.c.l.b16 %v1757
      %v1854 = vunpack.c.l.b16 %v1758
      %v1855 = vunpack.c.l.b16 %v1759
      %v1856 = vunpack.c.l.b16 %v1760
      %v1857 = vunpack.c.l.b16 %v1761
      %v1858 = vunpack.c.l.b16 %v1762
      %v1859 = vunpack.c.l.b16 %v1763
      %v1860 = vpack.c.b16 %v1829, %v1828
      %v1861 = vpack.c.b16 %v1831, %v1830
      %v1862 = vpack.c.b16 %v1833, %v1832
      %v1863 = vpack.c.b16 %v1835, %v1834
      %v1864 = vpack.c.b16 %v1837, %v1836
      %v1865 = vpack.c.b16 %v1839, %v1838
      %v1866 = vpack.c.b16 %v1841, %v1840
      %v1867 = vpack.c.b16 %v1843, %v1842
      %v1868 = vpack.c.b16 %v1845, %v1844
      %v1869 = vpack.c.b16 %v1847, %v1846
      %v1870 = vpack.c.b16 %v1849, %v1848
      %v1871 = vpack.c.b16 %v1851, %v1850
      %v1872 = vpack.c.b16 %v1853, %v1852
      %v1873 = vpack.c.b16 %v1855, %v1854
      %v1874 = vpack.c.b16 %v1857, %v1856
      %v1875 = vpack.c.b16 %v1859, %v1858
      %v1892 = vunpack.c.l.b16 %v1764
      %v1893 = vunpack.c.l.b16 %v1765
      %v1894 = vunpack.c.l.b16 %v1766
      %v1895 = vunpack.c.l.b16 %v1767
      %v1896 = vunpack.c.l.b16 %v1768
      %v1897 = vunpack.c.l.b16 %v1769
      %v1898 = vunpack.c.l.b16 %v1770
      %v1899 = vunpack.c.l.b16 %v1771
      %v1900 = vunpack.c.l.b16 %v1772
      %v1901 = vunpack.c.l.b16 %v1773
      %v1902 = vunpack.c.l.b16 %v1774
      %v1903 = vunpack.c.l.b16 %v1775
      %v1904 = vunpack.c.l.b16 %v1776
      %v1905 = vunpack.c.l.b16 %v1777
      %v1906 = vunpack.c.l.b16 %v1778
      %v1907 = vunpack.c.l.b16 %v1779
      %v1908 = vpack.c.b16 %v1892, %v1892
      %v1909 = vpack.c.b16 %v1893, %v1893
      %v1910 = vpack.c.b16 %v1894, %v1894
      %v1911 = vpack.c.b16 %v1895, %v1895
      %v1912 = vpack.c.b16 %v1896, %v1896
      %v1913 = vpack.c.b16 %v1897, %v1897
      %v1914 = vpack.c.b16 %v1898, %v1898
      %v1915 = vpack.c.b16 %v1899, %v1899
      %v1916 = vpack.c.b16 %v1900, %v1900
      %v1917 = vpack.c.b16 %v1901, %v1901
      %v1918 = vpack.c.b16 %v1902, %v1902
      %v1919 = vpack.c.b16 %v1903, %v1903
      %v1920 = vpack.c.b16 %v1904, %v1904
      %v1921 = vpack.c.b16 %v1905, %v1905
      %v1922 = vpack.c.b16 %v1906, %v1906
      %v1923 = vpack.c.b16 %v1907, %v1907
      %vm1924 = vsmask.f32 7424
      %v1926 = vshrl.u32 %v1860, 16
      %v1928 = vshll.u32 %v1860, 16
      %v1930 = vrot.slane %v1928, 1
      %v1931 = vor.u32 %v1926, %v1930
      %v1933 = vshll.u32 %v1908, 16
      %v1935 = vrot.slane %v1933, 1
      %v1936 = vsel %vm1924, %v1931, %v1935
      %v1938 = vshrl.u32 %v1861, 16
      %v1940 = vshll.u32 %v1861, 16
      %v1942 = vrot.slane %v1940, 1
      %v1943 = vor.u32 %v1938, %v1942
      %v1945 = vshll.u32 %v1909, 16
      %v1947 = vrot.slane %v1945, 1
      %v1948 = vsel %vm1924, %v1943, %v1947
      %v1950 = vshrl.u32 %v1862, 16
      %v1952 = vshll.u32 %v1862, 16
      %v1954 = vrot.slane %v1952, 1
      %v1955 = vor.u32 %v1950, %v1954
      %v1957 = vshll.u32 %v1910, 16
      %v1959 = vrot.slane %v1957, 1
      %v1960 = vsel %vm1924, %v1955, %v1959
      %v1962 = vshrl.u32 %v1863, 16
      %v1964 = vshll.u32 %v1863, 16
      %v1966 = vrot.slane %v1964, 1
      %v1967 = vor.u32 %v1962, %v1966
      %v1969 = vshll.u32 %v1911, 16
      %v1971 = vrot.slane %v1969, 1
      %v1972 = vsel %vm1924, %v1967, %v1971
      %v1974 = vshrl.u32 %v1864, 16
      %v1976 = vshll.u32 %v1864, 16
      %v1978 = vrot.slane %v1976, 1
      %v1979 = vor.u32 %v1974, %v1978
      %v1981 = vshll.u32 %v1912, 16
      %v1983 = vrot.slane %v1981, 1
      %v1984 = vsel %vm1924, %v1979, %v1983
      %v1986 = vshrl.u32 %v1865, 16
      %v1988 = vshll.u32 %v1865, 16
      %v1990 = vrot.slane %v1988, 1
      %v1991 = vor.u32 %v1986, %v1990
      %v1993 = vshll.u32 %v1913, 16
      %v1995 = vrot.slane %v1993, 1
      %v1996 = vsel %vm1924, %v1991, %v1995
      %v1998 = vshrl.u32 %v1866, 16
      %v2000 = vshll.u32 %v1866, 16
      %v2002 = vrot.slane %v2000, 1
      %v2003 = vor.u32 %v1998, %v2002
      %v2005 = vshll.u32 %v1914, 16
      %v2007 = vrot.slane %v2005, 1
      %v2008 = vsel %vm1924, %v2003, %v2007
      %v2010 = vshrl.u32 %v1867, 16
      %v2012 = vshll.u32 %v1867, 16
      %v2014 = vrot.slane %v2012, 1
      %v2015 = vor.u32 %v2010, %v2014
      %v2017 = vshll.u32 %v1915, 16
      %v2019 = vrot.slane %v2017, 1
      %v2020 = vsel %vm1924, %v2015, %v2019
      %v2022 = vshrl.u32 %v1868, 16
      %v2024 = vshll.u32 %v1868, 16
      %v2026 = vrot.slane %v2024, 1
      %v2027 = vor.u32 %v2022, %v2026
      %v2029 = vshll.u32 %v1916, 16
      %v2031 = vrot.slane %v2029, 1
      %v2032 = vsel %vm1924, %v2027, %v2031
      %v2034 = vshrl.u32 %v1869, 16
      %v2036 = vshll.u32 %v1869, 16
      %v2038 = vrot.slane %v2036, 1
      %v2039 = vor.u32 %v2034, %v2038
      %v2041 = vshll.u32 %v1917, 16
      %v2043 = vrot.slane %v2041, 1
      %v2044 = vsel %vm1924, %v2039, %v2043
      %v2046 = vshrl.u32 %v1870, 16
      %v2048 = vshll.u32 %v1870, 16
      %v2050 = vrot.slane %v2048, 1
      %v2051 = vor.u32 %v2046, %v2050
      %v2053 = vshll.u32 %v1918, 16
      %v2055 = vrot.slane %v2053, 1
      %v2056 = vsel %vm1924, %v2051, %v2055
      %v2058 = vshrl.u32 %v1871, 16
      %v2060 = vshll.u32 %v1871, 16
      %v2062 = vrot.slane %v2060, 1
      %v2063 = vor.u32 %v2058, %v2062
      %v2065 = vshll.u32 %v1919, 16
      %v2067 = vrot.slane %v2065, 1
      %v2068 = vsel %vm1924, %v2063, %v2067
      %v2070 = vshrl.u32 %v1872, 16
      %v2072 = vshll.u32 %v1872, 16
      %v2074 = vrot.slane %v2072, 1
      %v2075 = vor.u32 %v2070, %v2074
      %v2077 = vshll.u32 %v1920, 16
      %v2079 = vrot.slane %v2077, 1
      %v2080 = vsel %vm1924, %v2075, %v2079
      %v2082 = vshrl.u32 %v1873, 16
      %v2084 = vshll.u32 %v1873, 16
      %v2086 = vrot.slane %v2084, 1
      %v2087 = vor.u32 %v2082, %v2086
      %v2089 = vshll.u32 %v1921, 16
      %v2091 = vrot.slane %v2089, 1
      %v2092 = vsel %vm1924, %v2087, %v2091
      %v2094 = vshrl.u32 %v1874, 16
      %v2096 = vshll.u32 %v1874, 16
      %v2098 = vrot.slane %v2096, 1
      %v2099 = vor.u32 %v2094, %v2098
      %v2101 = vshll.u32 %v1922, 16
      %v2103 = vrot.slane %v2101, 1
      %v2104 = vsel %vm1924, %v2099, %v2103
      %v2106 = vshrl.u32 %v1875, 16
      %v2108 = vshll.u32 %v1875, 16
      %v2110 = vrot.slane %v2108, 1
      %v2111 = vor.u32 %v2106, %v2110
      %v2113 = vshll.u32 %v1923, 16
      %v2115 = vrot.slane %v2113, 1
      %v2116 = vsel %vm1924, %v2111, %v2115
      %2117 = vrot.lane.b32.xlu0 %v1936, 48
      %v2118 = vpop.permute.xlu0 %2117
      %2119 = vrot.lane.b32.xlu0 %v1948, 48
      %v2120 = vpop.permute.xlu0 %2119
      %2121 = vrot.lane.b32.xlu0 %v1960, 48
      %v2122 = vpop.permute.xlu0 %2121
      %2123 = vrot.lane.b32.xlu0 %v1972, 48
      %v2124 = vpop.permute.xlu0 %2123
      %2125 = vrot.lane.b32.xlu0 %v1984, 48
      %v2126 = vpop.permute.xlu0 %2125
      %2127 = vrot.lane.b32.xlu0 %v1996, 48
      %v2128 = vpop.permute.xlu0 %2127
      %2129 = vrot.lane.b32.xlu0 %v2008, 48
      %v2130 = vpop.permute.xlu0 %2129
      %2131 = vrot.lane.b32.xlu0 %v2020, 48
      %v2132 = vpop.permute.xlu0 %2131
      %2133 = vrot.lane.b32.xlu0 %v2032, 48
      %v2134 = vpop.permute.xlu0 %2133
      %2135 = vrot.lane.b32.xlu0 %v2044, 48
      %v2136 = vpop.permute.xlu0 %2135
      %2137 = vrot.lane.b32.xlu0 %v2056, 48
      %v2138 = vpop.permute.xlu0 %2137
      %2139 = vrot.lane.b32.xlu0 %v2068, 48
      %v2140 = vpop.permute.xlu0 %2139
      %2141 = vrot.lane.b32.xlu0 %v2080, 48
      %v2142 = vpop.permute.xlu0 %2141
      %2143 = vrot.lane.b32.xlu0 %v2092, 48
      %v2144 = vpop.permute.xlu0 %2143
      %2145 = vrot.lane.b32.xlu0 %v2104, 48
      %v2146 = vpop.permute.xlu0 %2145
      %2147 = vrot.lane.b32.xlu0 %v2116, 48
      %v2148 = vpop.permute.xlu0 %2147
      %v2165 = vunpack.c.l.b16 %v1780
      %v2166 = vunpack.c.l.b16 %v1781
      %v2167 = vunpack.c.l.b16 %v1782
      %v2168 = vunpack.c.l.b16 %v1783
      %v2169 = vunpack.c.l.b16 %v1784
      %v2170 = vunpack.c.l.b16 %v1785
      %v2171 = vunpack.c.l.b16 %v1786
      %v2172 = vunpack.c.l.b16 %v1787
      %v2173 = vunpack.c.l.b16 %v1788
      %v2174 = vunpack.c.l.b16 %v1789
      %v2175 = vunpack.c.l.b16 %v1790
      %v2176 = vunpack.c.l.b16 %v1791
      %v2177 = vunpack.c.l.b16 %v1792
      %v2178 = vunpack.c.l.b16 %v1793
      %v2179 = vunpack.c.l.b16 %v1794
      %v2180 = vunpack.c.l.b16 %v1795
      %v2181 = vpack.c.b16 %v1829, %v2165
      %v2182 = vpack.c.b16 %v1831, %v2166
      %v2183 = vpack.c.b16 %v1833, %v2167
      %v2184 = vpack.c.b16 %v1835, %v2168
      %v2185 = vpack.c.b16 %v1837, %v2169
      %v2186 = vpack.c.b16 %v1839, %v2170
      %v2187 = vpack.c.b16 %v1841, %v2171
      %v2188 = vpack.c.b16 %v1843, %v2172
      %v2189 = vpack.c.b16 %v1845, %v2173
      %v2190 = vpack.c.b16 %v1847, %v2174
      %v2191 = vpack.c.b16 %v1849, %v2175
      %v2192 = vpack.c.b16 %v1851, %v2176
      %v2193 = vpack.c.b16 %v1853, %v2177
      %v2194 = vpack.c.b16 %v1855, %v2178
      %v2195 = vpack.c.b16 %v1857, %v2179
      %v2196 = vpack.c.b16 %v1859, %v2180
      %vm2197 = vcmask 1046528
      %v2198 = vrot.slane %v2181, 1
      %v2199 = vrot.slane %v1908, 1
      %v2200 = vsel %vm2197, %v2198, %v2199
      %v2201 = vrot.slane %v2182, 1
      %v2202 = vrot.slane %v1909, 1
      %v2203 = vsel %vm2197, %v2201, %v2202
      %v2204 = vrot.slane %v2183, 1
      %v2205 = vrot.slane %v1910, 1
      %v2206 = vsel %vm2197, %v2204, %v2205
      %v2207 = vrot.slane %v2184, 1
      %v2208 = vrot.slane %v1911, 1
      %v2209 = vsel %vm2197, %v2207, %v2208
      %v2210 = vrot.slane %v2185, 1
      %v2211 = vrot.slane %v1912, 1
      %v2212 = vsel %vm2197, %v2210, %v2211
      %v2213 = vrot.slane %v2186, 1
      %v2214 = vrot.slane %v1913, 1
      %v2215 = vsel %vm2197, %v2213, %v2214
      %v2216 = vrot.slane %v2187, 1
      %v2217 = vrot.slane %v1914, 1
      %v2218 = vsel %vm2197, %v2216, %v2217
      %v2219 = vrot.slane %v2188, 1
      %v2220 = vrot.slane %v1915, 1
      %v2221 = vsel %vm2197, %v2219, %v2220
      %v2222 = vrot.slane %v2189, 1
      %v2223 = vrot.slane %v1916, 1
      %v2224 = vsel %vm2197, %v2222, %v2223
      %v2225 = vrot.slane %v2190, 1
      %v2226 = vrot.slane %v1917, 1
      %v2227 = vsel %vm2197, %v2225, %v2226
      %v2228 = vrot.slane %v2191, 1
      %v2229 = vrot.slane %v1918, 1
      %v2230 = vsel %vm2197, %v2228, %v2229
      %v2231 = vrot.slane %v2192, 1
      %v2232 = vrot.slane %v1919, 1
      %v2233 = vsel %vm2197, %v2231, %v2232
      %v2234 = vrot.slane %v2193, 1
      %v2235 = vrot.slane %v1920, 1
      %v2236 = vsel %vm2197, %v2234, %v2235
      %v2237 = vrot.slane %v2194, 1
      %v2238 = vrot.slane %v1921, 1
      %v2239 = vsel %vm2197, %v2237, %v2238
      %v2240 = vrot.slane %v2195, 1
      %v2241 = vrot.slane %v1922, 1
      %v2242 = vsel %vm2197, %v2240, %v2241
      %v2243 = vrot.slane %v2196, 1
      %v2244 = vrot.slane %v1923, 1
      %v2245 = vsel %vm2197, %v2243, %v2244
      %2246 = vrot.lane.b32.xlu0 %v2200, 96
      %v2247 = vpop.permute.xlu0 %2246
      %2248 = vrot.lane.b32.xlu0 %v2203, 96
      %v2249 = vpop.permute.xlu0 %2248
      %2250 = vrot.lane.b32.xlu0 %v2206, 96
      %v2251 = vpop.permute.xlu0 %2250
      %2252 = vrot.lane.b32.xlu0 %v2209, 96
      %v2253 = vpop.permute.xlu0 %2252
      %2254 = vrot.lane.b32.xlu0 %v2212, 96
      %v2255 = vpop.permute.xlu0 %2254
      %2256 = vrot.lane.b32.xlu0 %v2215, 96
      %v2257 = vpop.permute.xlu0 %2256
      %2258 = vrot.lane.b32.xlu0 %v2218, 96
      %v2259 = vpop.permute.xlu0 %2258
      %2260 = vrot.lane.b32.xlu0 %v2221, 96
      %v2261 = vpop.permute.xlu0 %2260
      %2262 = vrot.lane.b32.xlu0 %v2224, 96
      %v2263 = vpop.permute.xlu0 %2262
      %2264 = vrot.lane.b32.xlu0 %v2227, 96
      %v2265 = vpop.permute.xlu0 %2264
      %2266 = vrot.lane.b32.xlu0 %v2230, 96
      %v2267 = vpop.permute.xlu0 %2266
      %2268 = vrot.lane.b32.xlu0 %v2233, 96
      %v2269 = vpop.permute.xlu0 %2268
      %2270 = vrot.lane.b32.xlu0 %v2236, 96
      %v2271 = vpop.permute.xlu0 %2270
      %2272 = vrot.lane.b32.xlu0 %v2239, 96
      %v2273 = vpop.permute.xlu0 %2272
      %2274 = vrot.lane.b32.xlu0 %v2242, 96
      %v2275 = vpop.permute.xlu0 %2274
      %2276 = vrot.lane.b32.xlu0 %v2245, 96
      %v2277 = vpop.permute.xlu0 %2276
      %vm2278 = vcmask 392192
      %v2280 = vsel %vm2278, %v1860, %v2118
      %v2282 = vsel %vm2278, %v1861, %v2120
      %v2284 = vsel %vm2278, %v1862, %v2122
      %v2286 = vsel %vm2278, %v1863, %v2124
      %v2288 = vsel %vm2278, %v1864, %v2126
      %v2290 = vsel %vm2278, %v1865, %v2128
      %v2292 = vsel %vm2278, %v1866, %v2130
      %v2294 = vsel %vm2278, %v1867, %v2132
      %v2296 = vsel %vm2278, %v1868, %v2134
      %v2298 = vsel %vm2278, %v1869, %v2136
      %v2300 = vsel %vm2278, %v1870, %v2138
      %v2302 = vsel %vm2278, %v1871, %v2140
      %v2304 = vsel %vm2278, %v1872, %v2142
      %v2306 = vsel %vm2278, %v1873, %v2144
      %v2308 = vsel %vm2278, %v1874, %v2146
      %v2310 = vsel %vm2278, %v1875, %v2148
      %vm2311 = vcmask 785408
      %v2313 = vsel %vm2311, %v2280, %v2247
      %v2316 = vsel %vm2311, %v2282, %v2249
      %v2319 = vsel %vm2311, %v2284, %v2251
      %v2322 = vsel %vm2311, %v2286, %v2253
      %v2325 = vsel %vm2311, %v2288, %v2255
      %v2328 = vsel %vm2311, %v2290, %v2257
      %v2331 = vsel %vm2311, %v2292, %v2259
      %v2334 = vsel %vm2311, %v2294, %v2261
      %v2337 = vsel %vm2311, %v2296, %v2263
      %v2340 = vsel %vm2311, %v2298, %v2265
      %v2343 = vsel %vm2311, %v2300, %v2267
      %v2346 = vsel %vm2311, %v2302, %v2269
      %v2349 = vsel %vm2311, %v2304, %v2271
      %v2352 = vsel %vm2311, %v2306, %v2273
      %v2355 = vsel %vm2311, %v2308, %v2275
      %v2358 = vsel %vm2311, %v2310, %v2277
      %v2360 = vld [vmem:[%s4] sm:$0xf]
      %v2361 = vld [vmem:[%s4 + $0x4] sm:$0xf]
      %v2362 = vld [vmem:[%s4 + $0x8] sm:$0xf]
      %v2363 = vld [vmem:[%s4 + $0xc] sm:$0xf]
      %v2364 = vld [vmem:[%s4 + $0x10] sm:$0xf]
      %v2365 = vld [vmem:[%s4 + $0x14] sm:$0xf]
      %v2366 = vld [vmem:[%s4 + $0x18] sm:$0xf]
      %v2367 = vld [vmem:[%s4 + $0x1c] sm:$0xf]
      %v2368 = vld [vmem:[%s4 + $0x20] sm:$0xf]
      %v2369 = vld [vmem:[%s4 + $0x24] sm:$0xf]
      %v2370 = vld [vmem:[%s4 + $0x28] sm:$0xf]
      %v2371 = vld [vmem:[%s4 + $0x2c] sm:$0xf]
      %v2372 = vld [vmem:[%s4 + $0x30] sm:$0xf]
      %v2373 = vld [vmem:[%s4 + $0x34] sm:$0xf]
      %v2374 = vld [vmem:[%s4 + $0x38] sm:$0xf]
      %v2375 = vld [vmem:[%s4 + $0x3c] sm:$0xf]
      %v2376 = vld [vmem:[%s4 + $0x40] sm:$0xf]
      %v2377 = vld [vmem:[%s4 + $0x44] sm:$0xf]
      %v2378 = vld [vmem:[%s1617] sm:$0xf]
      %v2379 = vld [vmem:[%s1617 + $0x4] sm:$0xf]
      %v2380 = vld [vmem:[%s1617 + $0xc] sm:$0xf]
      %v2381 = vld [vmem:[%s1617 + $0x10] sm:$0xf]
      %v2382 = vld [vmem:[%s1617 + $0x18] sm:$0xf]
      %v2383 = vld [vmem:[%s1617 + $0x1c] sm:$0xf]
      %v2384 = vld [vmem:[%s1617 + $0x24] sm:$0xf]
      %v2385 = vld [vmem:[%s1617 + $0x28] sm:$0xf]
      %v2386 = vld [vmem:[%s1617 + $0x30] sm:$0xf]
      %v2387 = vld [vmem:[%s1617 + $0x34] sm:$0xf]
      %v2388 = vld [vmem:[%s1617 + $0x3c] sm:$0xf]
      %v2389 = vld [vmem:[%s1617 + $0x40] sm:$0xf]
      %v2390 = vld [vmem:[%s1617 + $0x48] sm:$0xf]
      %v2391 = vld [vmem:[%s1617 + $0x4c] sm:$0xf]
      %v2392 = vld [vmem:[%s1617 + $0x54] sm:$0xf]
      %v2393 = vld [vmem:[%s1617 + $0x58] sm:$0xf]
      %v2394 = vld [vmem:[%s1617 + $0x60] sm:$0xf]
      %v2395 = vld [vmem:[%s1617 + $0x64] sm:$0xf]
      %v2396 = vld [vmem:[%s1617 + $0x6c] sm:$0xf]
      %v2397 = vld [vmem:[%s1617 + $0x70] sm:$0xf]
      %v2398 = vld [vmem:[%s1617 + $0x78] sm:$0xf]
      %v2399 = vld [vmem:[%s1617 + $0x7c] sm:$0xf]
      %v2400 = vld [vmem:[%s1617 + $0x84] sm:$0xf]
      %v2401 = vld [vmem:[%s1617 + $0x88] sm:$0xf]
      %v2402 = vld [vmem:[%s1617 + $0x90] sm:$0xf]
      %v2403 = vld [vmem:[%s1617 + $0x94] sm:$0xf]
      %v2404 = vld [vmem:[%s1617 + $0x9c] sm:$0xf]
      %v2405 = vld [vmem:[%s1617 + $0xa0] sm:$0xf]
      %v2406 = vld [vmem:[%s1617 + $0xa8] sm:$0xf]
      %v2407 = vld [vmem:[%s1617 + $0xac] sm:$0xf]
      %v2408 = vld [vmem:[%s1617 + $0xb4] sm:$0xf]
      %v2409 = vld [vmem:[%s1617 + $0xb8] sm:$0xf]
      %v2410 = vld [vmem:[%s1617 + $0x8] sm:$0x1]
      %v2411 = vld [vmem:[%s1617 + $0x14] sm:$0x1]
      %v2412 = vld [vmem:[%s1617 + $0x20] sm:$0x1]
      %v2413 = vld [vmem:[%s1617 + $0x2c] sm:$0x1]
      %v2414 = vld [vmem:[%s1617 + $0x38] sm:$0x1]
      %v2415 = vld [vmem:[%s1617 + $0x44] sm:$0x1]
      %v2416 = vld [vmem:[%s1617 + $0x50] sm:$0x1]
      %v2417 = vld [vmem:[%s1617 + $0x5c] sm:$0x1]
      %v2418 = vld [vmem:[%s1617 + $0x68] sm:$0x1]
      %v2419 = vld [vmem:[%s1617 + $0x74] sm:$0x1]
      %v2420 = vld [vmem:[%s1617 + $0x80] sm:$0x1]
      %v2421 = vld [vmem:[%s1617 + $0x8c] sm:$0x1]
      %v2422 = vld [vmem:[%s1617 + $0x98] sm:$0x1]
      %v2423 = vld [vmem:[%s1617 + $0xa4] sm:$0x1]
      %v2424 = vld [vmem:[%s1617 + $0xb0] sm:$0x1]
      %v2425 = vld [vmem:[%s1617 + $0xbc] sm:$0x1]
      %v2426 = vld [vmem:[%s1617] sm:$0xe]
      %v2427 = vld [vmem:[%s1617 + $0xc] sm:$0xe]
      %v2428 = vld [vmem:[%s1617 + $0x18] sm:$0xe]
      %v2429 = vld [vmem:[%s1617 + $0x24] sm:$0xe]
      %v2430 = vld [vmem:[%s1617 + $0x30] sm:$0xe]
      %v2431 = vld [vmem:[%s1617 + $0x3c] sm:$0xe]
      %v2432 = vld [vmem:[%s1617 + $0x48] sm:$0xe]
      %v2433 = vld [vmem:[%s1617 + $0x54] sm:$0xe]
      %v2434 = vld [vmem:[%s1617 + $0x60] sm:$0xe]
      %v2435 = vld [vmem:[%s1617 + $0x6c] sm:$0xe]
      %v2436 = vld [vmem:[%s1617 + $0x78] sm:$0xe]
      %v2437 = vld [vmem:[%s1617 + $0x84] sm:$0xe]
      %v2438 = vld [vmem:[%s1617 + $0x90] sm:$0xe]
      %v2439 = vld [vmem:[%s1617 + $0x9c] sm:$0xe]
      %v2440 = vld [vmem:[%s1617 + $0xa8] sm:$0xe]
      %v2441 = vld [vmem:[%s1617 + $0xb4] sm:$0xe]
      %v2474 = vunpack.c.l.b16 %v2378
      %v2475 = vunpack.c.l.b16 %v2379
      %v2476 = vunpack.c.l.b16 %v2380
      %v2477 = vunpack.c.l.b16 %v2381
      %v2478 = vunpack.c.l.b16 %v2382
      %v2479 = vunpack.c.l.b16 %v2383
      %v2480 = vunpack.c.l.b16 %v2384
      %v2481 = vunpack.c.l.b16 %v2385
      %v2482 = vunpack.c.l.b16 %v2386
      %v2483 = vunpack.c.l.b16 %v2387
      %v2484 = vunpack.c.l.b16 %v2388
      %v2485 = vunpack.c.l.b16 %v2389
      %v2486 = vunpack.c.l.b16 %v2390
      %v2487 = vunpack.c.l.b16 %v2391
      %v2488 = vunpack.c.l.b16 %v2392
      %v2489 = vunpack.c.l.b16 %v2393
      %v2490 = vunpack.c.l.b16 %v2394
      %v2491 = vunpack.c.l.b16 %v2395
      %v2492 = vunpack.c.l.b16 %v2396
      %v2493 = vunpack.c.l.b16 %v2397
      %v2494 = vunpack.c.l.b16 %v2398
      %v2495 = vunpack.c.l.b16 %v2399
      %v2496 = vunpack.c.l.b16 %v2400
      %v2497 = vunpack.c.l.b16 %v2401
      %v2498 = vunpack.c.l.b16 %v2402
      %v2499 = vunpack.c.l.b16 %v2403
      %v2500 = vunpack.c.l.b16 %v2404
      %v2501 = vunpack.c.l.b16 %v2405
      %v2502 = vunpack.c.l.b16 %v2406
      %v2503 = vunpack.c.l.b16 %v2407
      %v2504 = vunpack.c.l.b16 %v2408
      %v2505 = vunpack.c.l.b16 %v2409
      %v2506 = vpack.c.b16 %v2475, %v2474
      %v2507 = vpack.c.b16 %v2477, %v2476
      %v2508 = vpack.c.b16 %v2479, %v2478
      %v2509 = vpack.c.b16 %v2481, %v2480
      %v2510 = vpack.c.b16 %v2483, %v2482
      %v2511 = vpack.c.b16 %v2485, %v2484
      %v2512 = vpack.c.b16 %v2487, %v2486
      %v2513 = vpack.c.b16 %v2489, %v2488
      %v2514 = vpack.c.b16 %v2491, %v2490
      %v2515 = vpack.c.b16 %v2493, %v2492
      %v2516 = vpack.c.b16 %v2495, %v2494
      %v2517 = vpack.c.b16 %v2497, %v2496
      %v2518 = vpack.c.b16 %v2499, %v2498
      %v2519 = vpack.c.b16 %v2501, %v2500
      %v2520 = vpack.c.b16 %v2503, %v2502
      %v2521 = vpack.c.b16 %v2505, %v2504
      %v2538 = vunpack.c.l.b16 %v2410
      %v2539 = vunpack.c.l.b16 %v2411
      %v2540 = vunpack.c.l.b16 %v2412
      %v2541 = vunpack.c.l.b16 %v2413
      %v2542 = vunpack.c.l.b16 %v2414
      %v2543 = vunpack.c.l.b16 %v2415
      %v2544 = vunpack.c.l.b16 %v2416
      %v2545 = vunpack.c.l.b16 %v2417
      %v2546 = vunpack.c.l.b16 %v2418
      %v2547 = vunpack.c.l.b16 %v2419
      %v2548 = vunpack.c.l.b16 %v2420
      %v2549 = vunpack.c.l.b16 %v2421
      %v2550 = vunpack.c.l.b16 %v2422
      %v2551 = vunpack.c.l.b16 %v2423
      %v2552 = vunpack.c.l.b16 %v2424
      %v2553 = vunpack.c.l.b16 %v2425
      %v2554 = vpack.c.b16 %v2538, %v2538
      %v2555 = vpack.c.b16 %v2539, %v2539
      %v2556 = vpack.c.b16 %v2540, %v2540
      %v2557 = vpack.c.b16 %v2541, %v2541
      %v2558 = vpack.c.b16 %v2542, %v2542
      %v2559 = vpack.c.b16 %v2543, %v2543
      %v2560 = vpack.c.b16 %v2544, %v2544
      %v2561 = vpack.c.b16 %v2545, %v2545
      %v2562 = vpack.c.b16 %v2546, %v2546
      %v2563 = vpack.c.b16 %v2547, %v2547
      %v2564 = vpack.c.b16 %v2548, %v2548
      %v2565 = vpack.c.b16 %v2549, %v2549
      %v2566 = vpack.c.b16 %v2550, %v2550
      %v2567 = vpack.c.b16 %v2551, %v2551
      %v2568 = vpack.c.b16 %v2552, %v2552
      %v2569 = vpack.c.b16 %v2553, %v2553
      %v2571 = vshrl.u32 %v2506, 16
      %v2573 = vshll.u32 %v2506, 16
      %v2575 = vrot.slane %v2573, 1
      %v2576 = vor.u32 %v2571, %v2575
      %v2578 = vshll.u32 %v2554, 16
      %v2580 = vrot.slane %v2578, 1
      %v2581 = vsel %vm1924, %v2576, %v2580
      %v2583 = vshrl.u32 %v2507, 16
      %v2585 = vshll.u32 %v2507, 16
      %v2587 = vrot.slane %v2585, 1
      %v2588 = vor.u32 %v2583, %v2587
      %v2590 = vshll.u32 %v2555, 16
      %v2592 = vrot.slane %v2590, 1
      %v2593 = vsel %vm1924, %v2588, %v2592
      %v2595 = vshrl.u32 %v2508, 16
      %v2597 = vshll.u32 %v2508, 16
      %v2599 = vrot.slane %v2597, 1
      %v2600 = vor.u32 %v2595, %v2599
      %v2602 = vshll.u32 %v2556, 16
      %v2604 = vrot.slane %v2602, 1
      %v2605 = vsel %vm1924, %v2600, %v2604
      %v2607 = vshrl.u32 %v2509, 16
      %v2609 = vshll.u32 %v2509, 16
      %v2611 = vrot.slane %v2609, 1
      %v2612 = vor.u32 %v2607, %v2611
      %v2614 = vshll.u32 %v2557, 16
      %v2616 = vrot.slane %v2614, 1
      %v2617 = vsel %vm1924, %v2612, %v2616
      %v2619 = vshrl.u32 %v2510, 16
      %v2621 = vshll.u32 %v2510, 16
      %v2623 = vrot.slane %v2621, 1
      %v2624 = vor.u32 %v2619, %v2623
      %v2626 = vshll.u32 %v2558, 16
      %v2628 = vrot.slane %v2626, 1
      %v2629 = vsel %vm1924, %v2624, %v2628
      %v2631 = vshrl.u32 %v2511, 16
      %v2633 = vshll.u32 %v2511, 16
      %v2635 = vrot.slane %v2633, 1
      %v2636 = vor.u32 %v2631, %v2635
      %v2638 = vshll.u32 %v2559, 16
      %v2640 = vrot.slane %v2638, 1
      %v2641 = vsel %vm1924, %v2636, %v2640
      %v2643 = vshrl.u32 %v2512, 16
      %v2645 = vshll.u32 %v2512, 16
      %v2647 = vrot.slane %v2645, 1
      %v2648 = vor.u32 %v2643, %v2647
      %v2650 = vshll.u32 %v2560, 16
      %v2652 = vrot.slane %v2650, 1
      %v2653 = vsel %vm1924, %v2648, %v2652
      %v2655 = vshrl.u32 %v2513, 16
      %v2657 = vshll.u32 %v2513, 16
      %v2659 = vrot.slane %v2657, 1
      %v2660 = vor.u32 %v2655, %v2659
      %v2662 = vshll.u32 %v2561, 16
      %v2664 = vrot.slane %v2662, 1
      %v2665 = vsel %vm1924, %v2660, %v2664
      %v2667 = vshrl.u32 %v2514, 16
      %v2669 = vshll.u32 %v2514, 16
      %v2671 = vrot.slane %v2669, 1
      %v2672 = vor.u32 %v2667, %v2671
      %v2674 = vshll.u32 %v2562, 16
      %v2676 = vrot.slane %v2674, 1
      %v2677 = vsel %vm1924, %v2672, %v2676
      %v2679 = vshrl.u32 %v2515, 16
      %v2681 = vshll.u32 %v2515, 16
      %v2683 = vrot.slane %v2681, 1
      %v2684 = vor.u32 %v2679, %v2683
      %v2686 = vshll.u32 %v2563, 16
      %v2688 = vrot.slane %v2686, 1
      %v2689 = vsel %vm1924, %v2684, %v2688
      %v2691 = vshrl.u32 %v2516, 16
      %v2693 = vshll.u32 %v2516, 16
      %v2695 = vrot.slane %v2693, 1
      %v2696 = vor.u32 %v2691, %v2695
      %v2698 = vshll.u32 %v2564, 16
      %v2700 = vrot.slane %v2698, 1
      %v2701 = vsel %vm1924, %v2696, %v2700
      %v2703 = vshrl.u32 %v2517, 16
      %v2705 = vshll.u32 %v2517, 16
      %v2707 = vrot.slane %v2705, 1
      %v2708 = vor.u32 %v2703, %v2707
      %v2710 = vshll.u32 %v2565, 16
      %v2712 = vrot.slane %v2710, 1
      %v2713 = vsel %vm1924, %v2708, %v2712
      %v2715 = vshrl.u32 %v2518, 16
      %v2717 = vshll.u32 %v2518, 16
      %v2719 = vrot.slane %v2717, 1
      %v2720 = vor.u32 %v2715, %v2719
      %v2722 = vshll.u32 %v2566, 16
      %v2724 = vrot.slane %v2722, 1
      %v2725 = vsel %vm1924, %v2720, %v2724
      %v2727 = vshrl.u32 %v2519, 16
      %v2729 = vshll.u32 %v2519, 16
      %v2731 = vrot.slane %v2729, 1
      %v2732 = vor.u32 %v2727, %v2731
      %v2734 = vshll.u32 %v2567, 16
      %v2736 = vrot.slane %v2734, 1
      %v2737 = vsel %vm1924, %v2732, %v2736
      %v2739 = vshrl.u32 %v2520, 16
      %v2741 = vshll.u32 %v2520, 16
      %v2743 = vrot.slane %v2741, 1
      %v2744 = vor.u32 %v2739, %v2743
      %v2746 = vshll.u32 %v2568, 16
      %v2748 = vrot.slane %v2746, 1
      %v2749 = vsel %vm1924, %v2744, %v2748
      %v2751 = vshrl.u32 %v2521, 16
      %v2753 = vshll.u32 %v2521, 16
      %v2755 = vrot.slane %v2753, 1
      %v2756 = vor.u32 %v2751, %v2755
      %v2758 = vshll.u32 %v2569, 16
      %v2760 = vrot.slane %v2758, 1
      %v2761 = vsel %vm1924, %v2756, %v2760
      %2762 = vrot.lane.b32.xlu0 %v2581, 48
      %v2763 = vpop.permute.xlu0 %2762
      %2764 = vrot.lane.b32.xlu0 %v2593, 48
      %v2765 = vpop.permute.xlu0 %2764
      %2766 = vrot.lane.b32.xlu0 %v2605, 48
      %v2767 = vpop.permute.xlu0 %2766
      %2768 = vrot.lane.b32.xlu0 %v2617, 48
      %v2769 = vpop.permute.xlu0 %2768
      %2770 = vrot.lane.b32.xlu0 %v2629, 48
      %v2771 = vpop.permute.xlu0 %2770
      %2772 = vrot.lane.b32.xlu0 %v2641, 48
      %v2773 = vpop.permute.xlu0 %2772
      %2774 = vrot.lane.b32.xlu0 %v2653, 48
      %v2775 = vpop.permute.xlu0 %2774
      %2776 = vrot.lane.b32.xlu0 %v2665, 48
      %v2777 = vpop.permute.xlu0 %2776
      %2778 = vrot.lane.b32.xlu0 %v2677, 48
      %v2779 = vpop.permute.xlu0 %2778
      %2780 = vrot.lane.b32.xlu0 %v2689, 48
      %v2781 = vpop.permute.xlu0 %2780
      %2782 = vrot.lane.b32.xlu0 %v2701, 48
      %v2783 = vpop.permute.xlu0 %2782
      %2784 = vrot.lane.b32.xlu0 %v2713, 48
      %v2785 = vpop.permute.xlu0 %2784
      %2786 = vrot.lane.b32.xlu0 %v2725, 48
      %v2787 = vpop.permute.xlu0 %2786
      %2788 = vrot.lane.b32.xlu0 %v2737, 48
      %v2789 = vpop.permute.xlu0 %2788
      %2790 = vrot.lane.b32.xlu0 %v2749, 48
      %v2791 = vpop.permute.xlu0 %2790
      %2792 = vrot.lane.b32.xlu0 %v2761, 48
      %v2793 = vpop.permute.xlu0 %2792
      %v2810 = vunpack.c.l.b16 %v2426
      %v2811 = vunpack.c.l.b16 %v2427
      %v2812 = vunpack.c.l.b16 %v2428
      %v2813 = vunpack.c.l.b16 %v2429
      %v2814 = vunpack.c.l.b16 %v2430
      %v2815 = vunpack.c.l.b16 %v2431
      %v2816 = vunpack.c.l.b16 %v2432
      %v2817 = vunpack.c.l.b16 %v2433
      %v2818 = vunpack.c.l.b16 %v2434
      %v2819 = vunpack.c.l.b16 %v2435
      %v2820 = vunpack.c.l.b16 %v2436
      %v2821 = vunpack.c.l.b16 %v2437
      %v2822 = vunpack.c.l.b16 %v2438
      %v2823 = vunpack.c.l.b16 %v2439
      %v2824 = vunpack.c.l.b16 %v2440
      %v2825 = vunpack.c.l.b16 %v2441
      %v2826 = vpack.c.b16 %v2475, %v2810
      %v2827 = vpack.c.b16 %v2477, %v2811
      %v2828 = vpack.c.b16 %v2479, %v2812
      %v2829 = vpack.c.b16 %v2481, %v2813
      %v2830 = vpack.c.b16 %v2483, %v2814
      %v2831 = vpack.c.b16 %v2485, %v2815
      %v2832 = vpack.c.b16 %v2487, %v2816
      %v2833 = vpack.c.b16 %v2489, %v2817
      %v2834 = vpack.c.b16 %v2491, %v2818
      %v2835 = vpack.c.b16 %v2493, %v2819
      %v2836 = vpack.c.b16 %v2495, %v2820
      %v2837 = vpack.c.b16 %v2497, %v2821
      %v2838 = vpack.c.b16 %v2499, %v2822
      %v2839 = vpack.c.b16 %v2501, %v2823
      %v2840 = vpack.c.b16 %v2503, %v2824
      %v2841 = vpack.c.b16 %v2505, %v2825
      %v2842 = vrot.slane %v2826, 1
      %v2843 = vrot.slane %v2554, 1
      %v2844 = vsel %vm2197, %v2842, %v2843
      %v2845 = vrot.slane %v2827, 1
      %v2846 = vrot.slane %v2555, 1
      %v2847 = vsel %vm2197, %v2845, %v2846
      %v2848 = vrot.slane %v2828, 1
      %v2849 = vrot.slane %v2556, 1
      %v2850 = vsel %vm2197, %v2848, %v2849
      %v2851 = vrot.slane %v2829, 1
      %v2852 = vrot.slane %v2557, 1
      %v2853 = vsel %vm2197, %v2851, %v2852
      %v2854 = vrot.slane %v2830, 1
      %v2855 = vrot.slane %v2558, 1
      %v2856 = vsel %vm2197, %v2854, %v2855
      %v2857 = vrot.slane %v2831, 1
      %v2858 = vrot.slane %v2559, 1
      %v2859 = vsel %vm2197, %v2857, %v2858
      %v2860 = vrot.slane %v2832, 1
      %v2861 = vrot.slane %v2560, 1
      %v2862 = vsel %vm2197, %v2860, %v2861
      %v2863 = vrot.slane %v2833, 1
      %v2864 = vrot.slane %v2561, 1
      %v2865 = vsel %vm2197, %v2863, %v2864
      %v2866 = vrot.slane %v2834, 1
      %v2867 = vrot.slane %v2562, 1
      %v2868 = vsel %vm2197, %v2866, %v2867
      %v2869 = vrot.slane %v2835, 1
      %v2870 = vrot.slane %v2563, 1
      %v2871 = vsel %vm2197, %v2869, %v2870
      %v2872 = vrot.slane %v2836, 1
      %v2873 = vrot.slane %v2564, 1
      %v2874 = vsel %vm2197, %v2872, %v2873
      %v2875 = vrot.slane %v2837, 1
      %v2876 = vrot.slane %v2565, 1
      %v2877 = vsel %vm2197, %v2875, %v2876
      %v2878 = vrot.slane %v2838, 1
      %v2879 = vrot.slane %v2566, 1
      %v2880 = vsel %vm2197, %v2878, %v2879
      %v2881 = vrot.slane %v2839, 1
      %v2882 = vrot.slane %v2567, 1
      %v2883 = vsel %vm2197, %v2881, %v2882
      %v2884 = vrot.slane %v2840, 1
      %v2885 = vrot.slane %v2568, 1
      %v2886 = vsel %vm2197, %v2884, %v2885
      %v2887 = vrot.slane %v2841, 1
      %v2888 = vrot.slane %v2569, 1
      %v2889 = vsel %vm2197, %v2887, %v2888
      %2890 = vrot.lane.b32.xlu0 %v2844, 96
      %v2891 = vpop.permute.xlu0 %2890
      %2892 = vrot.lane.b32.xlu0 %v2847, 96
      %v2893 = vpop.permute.xlu0 %2892
      %2894 = vrot.lane.b32.xlu0 %v2850, 96
      %v2895 = vpop.permute.xlu0 %2894
      %2896 = vrot.lane.b32.xlu0 %v2853, 96
      %v2897 = vpop.permute.xlu0 %2896
      %2898 = vrot.lane.b32.xlu0 %v2856, 96
      %v2899 = vpop.permute.xlu0 %2898
      %2900 = vrot.lane.b32.xlu0 %v2859, 96
      %v2901 = vpop.permute.xlu0 %2900
      %2902 = vrot.lane.b32.xlu0 %v2862, 96
      %v2903 = vpop.permute.xlu0 %2902
      %2904 = vrot.lane.b32.xlu0 %v2865, 96
      %v2905 = vpop.permute.xlu0 %2904
      %2906 = vrot.lane.b32.xlu0 %v2868, 96
      %v2907 = vpop.permute.xlu0 %2906
      %2908 = vrot.lane.b32.xlu0 %v2871, 96
      %v2909 = vpop.permute.xlu0 %2908
      %2910 = vrot.lane.b32.xlu0 %v2874, 96
      %v2911 = vpop.permute.xlu0 %2910
      %2912 = vrot.lane.b32.xlu0 %v2877, 96
      %v2913 = vpop.permute.xlu0 %2912
      %2914 = vrot.lane.b32.xlu0 %v2880, 96
      %v2915 = vpop.permute.xlu0 %2914
      %2916 = vrot.lane.b32.xlu0 %v2883, 96
      %v2917 = vpop.permute.xlu0 %2916
      %2918 = vrot.lane.b32.xlu0 %v2886, 96
      %v2919 = vpop.permute.xlu0 %2918
      %2920 = vrot.lane.b32.xlu0 %v2889, 96
      %v2921 = vpop.permute.xlu0 %2920
      %v2923 = vsel %vm2278, %v2506, %v2763
      %v2925 = vsel %vm2278, %v2507, %v2765
      %v2927 = vsel %vm2278, %v2508, %v2767
      %v2929 = vsel %vm2278, %v2509, %v2769
      %v2931 = vsel %vm2278, %v2510, %v2771
      %v2933 = vsel %vm2278, %v2511, %v2773
      %v2935 = vsel %vm2278, %v2512, %v2775
      %v2937 = vsel %vm2278, %v2513, %v2777
      %v2939 = vsel %vm2278, %v2514, %v2779
      %v2941 = vsel %vm2278, %v2515, %v2781
      %v2943 = vsel %vm2278, %v2516, %v2783
      %v2945 = vsel %vm2278, %v2517, %v2785
      %v2947 = vsel %vm2278, %v2518, %v2787
      %v2949 = vsel %vm2278, %v2519, %v2789
      %v2951 = vsel %vm2278, %v2520, %v2791
      %v2953 = vsel %vm2278, %v2521, %v2793
      %v2955 = vsel %vm2311, %v2923, %v2891
      %v2958 = vsel %vm2311, %v2925, %v2893
      %v2961 = vsel %vm2311, %v2927, %v2895
      %v2964 = vsel %vm2311, %v2929, %v2897
      %v2967 = vsel %vm2311, %v2931, %v2899
      %v2970 = vsel %vm2311, %v2933, %v2901
      %v2973 = vsel %vm2311, %v2935, %v2903
      %v2976 = vsel %vm2311, %v2937, %v2905
      %v2979 = vsel %vm2311, %v2939, %v2907
      %v2982 = vsel %vm2311, %v2941, %v2909
      %v2985 = vsel %vm2311, %v2943, %v2911
      %v2988 = vsel %vm2311, %v2945, %v2913
      %v2991 = vsel %vm2311, %v2947, %v2915
      %v2994 = vsel %vm2311, %v2949, %v2917
      %v2997 = vsel %vm2311, %v2951, %v2919
      %v3000 = vsel %vm2311, %v2953, %v2921
      %s3002 = scalar_lea.vmem %s4, 72
      %v3003 = vld [vmem:[%s3002] sm:$0xf]
      %v3004 = vld [vmem:[%s3002 + $0x4] sm:$0xf]
      %v3005 = vld [vmem:[%s3002 + $0x8] sm:$0xf]
      %v3006 = vld [vmem:[%s3002 + $0xc] sm:$0xf]
      %v3007 = vld [vmem:[%s3002 + $0x10] sm:$0xf]
      %v3008 = vld [vmem:[%s3002 + $0x14] sm:$0xf]
      %v3009 = vld [vmem:[%s3002 + $0x18] sm:$0xf]
      %v3010 = vld [vmem:[%s3002 + $0x1c] sm:$0xf]
      %v3011 = vld [vmem:[%s3002 + $0x20] sm:$0xf]
      %v3012 = vld [vmem:[%s3002 + $0x24] sm:$0xf]
      %v3013 = vld [vmem:[%s3002 + $0x28] sm:$0xf]
      %v3014 = vld [vmem:[%s3002 + $0x2c] sm:$0xf]
      %v3015 = vld [vmem:[%s3002 + $0x30] sm:$0xf]
      %v3016 = vld [vmem:[%s3002 + $0x34] sm:$0xf]
      %v3017 = vld [vmem:[%s3002 + $0x38] sm:$0xf]
      %v3018 = vld [vmem:[%s3002 + $0x3c] sm:$0xf]
      %v3019 = vld [vmem:[%s3002 + $0x40] sm:$0xf]
      %v3020 = vld [vmem:[%s3002 + $0x44] sm:$0xf]
      %v3039 = vunpack.c.l.b16 %v3003
      %v3040 = vunpack.c.l.b16 %v3004
      %v3041 = vunpack.c.l.b16 %v3005
      %v3042 = vunpack.c.l.b16 %v3006
      %v3043 = vunpack.c.l.b16 %v3007
      %v3044 = vunpack.c.l.b16 %v3008
      %v3045 = vunpack.c.l.b16 %v3009
      %v3046 = vunpack.c.l.b16 %v3010
      %v3047 = vunpack.c.l.b16 %v3011
      %v3048 = vunpack.c.l.b16 %v3012
      %v3049 = vunpack.c.l.b16 %v3013
      %v3050 = vunpack.c.l.b16 %v3014
      %v3051 = vunpack.c.l.b16 %v3015
      %v3052 = vunpack.c.l.b16 %v3016
      %v3053 = vunpack.c.l.b16 %v3017
      %v3054 = vunpack.c.l.b16 %v3018
      %v3055 = vunpack.c.l.b16 %v3019
      %v3056 = vunpack.c.l.b16 %v3020
      %v3057 = vpack.c.b16 %v3040, %v3039
      %v3058 = vpack.c.b16 %v3042, %v3041
      %v3059 = vpack.c.b16 %v3044, %v3043
      %v3060 = vpack.c.b16 %v3046, %v3045
      %v3061 = vpack.c.b16 %v3048, %v3047
      %v3062 = vpack.c.b16 %v3050, %v3049
      %v3063 = vpack.c.b16 %v3052, %v3051
      %v3064 = vpack.c.b16 %v3054, %v3053
      %v3065 = vpack.c.b16 %v3056, %v3055
      %vm3075 = vcmask 130048
      %v3076 = vsel %vm3075, %v2891, 0
      %v3078 = vsel %vm3075, %v2893, 0
      %v3080 = vsel %vm3075, %v2895, 0
      %v3082 = vsel %vm3075, %v2897, 0
      %v3084 = vsel %vm3075, %v2899, 0
      %v3086 = vsel %vm3075, %v2901, 0
      %v3088 = vsel %vm3075, %v2903, 0
      %v3090 = vsel %vm3075, %v2905, 0
      %v3092 = vsel %vm3075, %v2907, 0
      %v3094 = vsel %vm3075, %v2909, 0
      %v3096 = vsel %vm3075, %v2911, 0
      %v3098 = vsel %vm3075, %v2913, 0
      %v3100 = vsel %vm3075, %v2915, 0
      %v3102 = vsel %vm3075, %v2917, 0
      %v3104 = vsel %vm3075, %v2919, 0
      %v3106 = vsel %vm3075, %v2921, 0
      %3108 = vmatprep.subr.bf16.mxu0 0
      %3109 = vmatpush1.bf16.msra.mxu0 %v3057
      %3110 = vmatprep.subr.bf16.mxu0 0
      %3111 = vmatpush1.bf16.msra.mxu0 %v3058
      %3112 = vmatprep.subr.bf16.mxu0 0
      %3113 = vmatpush1.bf16.msra.mxu0 %v3059
      %3114 = vmatprep.subr.bf16.mxu0 0
      %3115 = vmatpush1.bf16.msra.mxu0 %v3060
      %3116 = vmatprep.subr.bf16.mxu0 0
      %3117 = vmatpush1.bf16.msra.mxu0 %v3061
      %3118 = vmatprep.subr.bf16.mxu0 0
      %3119 = vmatpush1.bf16.msra.mxu0 %v3062
      %3120 = vmatprep.subr.bf16.mxu0 0
      %3121 = vmatpush1.bf16.msra.mxu0 %v3063
      %3122 = vmatprep.subr.bf16.mxu0 0
      %3123 = vmatpush1.bf16.msra.mxu0 %v3064
      %3124 = vmatprep.subr.bf16.mxu0 0
      %3125 = vmatpush1.bf16.msra.mxu0 %v3065
      %3126 = vmatprep.subr.bf16.mxu0 0
      %3127 = vmatpush1.bf16.msra.mxu0 0
      %3128 = vmatprep.subr.bf16.mxu0 0
      %3129 = vmatpush1.bf16.msra.mxu0 0
      %3130 = vmatprep.subr.bf16.mxu0 0
      %3131 = vmatpush1.bf16.msra.mxu0 0
      %3132 = vmatprep.subr.bf16.mxu0 0
      %3133 = vmatpush1.bf16.msra.mxu0 0
      %3134 = vmatprep.subr.bf16.mxu0 0
      %3135 = vmatpush1.bf16.msra.mxu0 0
      %3136 = vmatprep.subr.bf16.mxu0 0
      %3137 = vmatpush1.bf16.msra.mxu0 0
      %3138 = vmatprep.subr.bf16.mxu0 0
      %3139 = vmatpush1.bf16.msra.mxu0 0
      %3140 = vmatprep.mubr.bf16.mxu0 %v3076
      %3141 = vmatmul.mubr.bf16.gmra.mrb[0].mxu0 %v2955
      %v3142 = vpop.f32.mrb[0].mxu0
      %v3143 = vadd.f32 0.0, %v3142
      %v3144 = vpop.f32.mrb[0].mxu0
      %v3145 = vpop.f32.mrb[0].mxu0
      %v3146 = vadd.f32 0.0, %v3145
      %v3147 = vpop.f32.mrb[0].mxu0
      %3148 = vmatprep.mubr.bf16.mxu0 %v3078
      %3149 = vmatmul.mubr.bf16.gmra.mrb[0].mxu0 %v2958
      %v3150 = vpop.f32.mrb[0].mxu0
      %v3151 = vadd.f32 0.0, %v3150
      %v3152 = vpop.f32.mrb[0].mxu0
      %v3153 = vpop.f32.mrb[0].mxu0
      %v3154 = vadd.f32 0.0, %v3153
      %v3155 = vpop.f32.mrb[0].mxu0
      %3156 = vmatprep.mubr.bf16.mxu0 %v3080
      %3157 = vmatmul.mubr.bf16.gmra.mrb[0].mxu0 %v2961
      %v3158 = vpop.f32.mrb[0].mxu0
      %v3159 = vadd.f32 0.0, %v3158
      %v3160 = vpop.f32.mrb[0].mxu0
      %v3161 = vpop.f32.mrb[0].mxu0
      %v3162 = vadd.f32 0.0, %v3161
      %v3163 = vpop.f32.mrb[0].mxu0
      %3164 = vmatprep.mubr.bf16.mxu0 %v3082
      %3165 = vmatmul.mubr.bf16.gmra.mrb[0].mxu0 %v2964
      %v3166 = vpop.f32.mrb[0].mxu0
      %v3167 = vadd.f32 0.0, %v3166
      %v3168 = vpop.f32.mrb[0].mxu0
      %v3169 = vpop.f32.mrb[0].mxu0
      %v3170 = vadd.f32 0.0, %v3169
      %v3171 = vpop.f32.mrb[0].mxu0
      %3172 = vmatprep.mubr.bf16.mxu0 %v3084
      %3173 = vmatmul.mubr.bf16.gmra.mrb[0].mxu0 %v2967
      %v3174 = vpop.f32.mrb[0].mxu0
      %v3175 = vadd.f32 0.0, %v3174
      %v3176 = vpop.f32.mrb[0].mxu0
      %v3177 = vpop.f32.mrb[0].mxu0
      %v3178 = vadd.f32 0.0, %v3177
      %v3179 = vpop.f32.mrb[0].mxu0
      %3180 = vmatprep.mubr.bf16.mxu0 %v3086
      %3181 = vmatmul.mubr.bf16.gmra.mrb[0].mxu0 %v2970
      %v3182 = vpop.f32.mrb[0].mxu0
      %v3183 = vadd.f32 0.0, %v3182
      %v3184 = vpop.f32.mrb[0].mxu0
      %v3185 = vpop.f32.mrb[0].mxu0
      %v3186 = vadd.f32 0.0, %v3185
      %v3187 = vpop.f32.mrb[0].mxu0
      %3188 = vmatprep.mubr.bf16.mxu0 %v3088
      %3189 = vmatmul.mubr.bf16.gmra.mrb[0].mxu0 %v2973
      %v3190 = vpop.f32.mrb[0].mxu0
      %v3191 = vadd.f32 0.0, %v3190
      %v3192 = vpop.f32.mrb[0].mxu0
      %v3193 = vpop.f32.mrb[0].mxu0
      %v3194 = vadd.f32 0.0, %v3193
      %v3195 = vpop.f32.mrb[0].mxu0
      %3196 = vmatprep.mubr.bf16.mxu0 %v3090
      %3197 = vmatmul.mubr.bf16.gmra.mrb[0].mxu0 %v2976
      %v3198 = vpop.f32.mrb[0].mxu0
      %v3199 = vadd.f32 0.0, %v3198
      %v3200 = vpop.f32.mrb[0].mxu0
      %v3201 = vpop.f32.mrb[0].mxu0
      %v3202 = vadd.f32 0.0, %v3201
      %v3203 = vpop.f32.mrb[0].mxu0
      %3204 = vmatprep.mubr.bf16.mxu0 %v3092
      %3205 = vmatmul.mubr.bf16.gmra.mrb[0].mxu0 %v2979
      %v3206 = vpop.f32.mrb[0].mxu0
      %v3207 = vadd.f32 0.0, %v3206
      %v3208 = vpop.f32.mrb[0].mxu0
      %v3209 = vpop.f32.mrb[0].mxu0
      %v3210 = vadd.f32 0.0, %v3209
      %v3211 = vpop.f32.mrb[0].mxu0
      %3212 = vmatprep.mubr.bf16.mxu0 %v3094
      %3213 = vmatmul.mubr.bf16.gmra.mrb[0].mxu0 %v2982
      %v3214 = vpop.f32.mrb[0].mxu0
      %v3215 = vadd.f32 0.0, %v3214
      %v3216 = vpop.f32.mrb[0].mxu0
      %v3217 = vpop.f32.mrb[0].mxu0
      %v3218 = vadd.f32 0.0, %v3217
      %v3219 = vpop.f32.mrb[0].mxu0
      %3220 = vmatprep.mubr.bf16.mxu0 %v3096
      %3221 = vmatmul.mubr.bf16.gmra.mrb[0].mxu0 %v2985
      %v3222 = vpop.f32.mrb[0].mxu0
      %v3223 = vadd.f32 0.0, %v3222
      %v3224 = vpop.f32.mrb[0].mxu0
      %v3225 = vpop.f32.mrb[0].mxu0
      %v3226 = vadd.f32 0.0, %v3225
      %v3227 = vpop.f32.mrb[0].mxu0
      %3228 = vmatprep.mubr.bf16.mxu0 %v3098
      %3229 = vmatmul.mubr.bf16.gmra.mrb[0].mxu0 %v2988
      %v3230 = vpop.f32.mrb[0].mxu0
      %v3231 = vadd.f32 0.0, %v3230
      %v3232 = vpop.f32.mrb[0].mxu0
      %v3233 = vpop.f32.mrb[0].mxu0
      %v3234 = vadd.f32 0.0, %v3233
      %v3235 = vpop.f32.mrb[0].mxu0
      %3236 = vmatprep.mubr.bf16.mxu0 %v3100
      %3237 = vmatmul.mubr.bf16.gmra.mrb[0].mxu0 %v2991
      %v3238 = vpop.f32.mrb[0].mxu0
      %v3239 = vadd.f32 0.0, %v3238
      %v3240 = vpop.f32.mrb[0].mxu0
      %v3241 = vpop.f32.mrb[0].mxu0
      %v3242 = vadd.f32 0.0, %v3241
      %v3243 = vpop.f32.mrb[0].mxu0
      %3244 = vmatprep.mubr.bf16.mxu0 %v3102
      %3245 = vmatmul.mubr.bf16.gmra.mrb[0].mxu0 %v2994
      %v3246 = vpop.f32.mrb[0].mxu0
      %v3247 = vadd.f32 0.0, %v3246
      %v3248 = vpop.f32.mrb[0].mxu0
      %v3249 = vpop.f32.mrb[0].mxu0
      %v3250 = vadd.f32 0.0, %v3249
      %v3251 = vpop.f32.mrb[0].mxu0
      %3252 = vmatprep.mubr.bf16.mxu0 %v3104
      %3253 = vmatmul.mubr.bf16.gmra.mrb[0].mxu0 %v2997
      %v3254 = vpop.f32.mrb[0].mxu0
      %v3255 = vadd.f32 0.0, %v3254
      %v3256 = vpop.f32.mrb[0].mxu0
      %v3257 = vpop.f32.mrb[0].mxu0
      %v3258 = vadd.f32 0.0, %v3257
      %v3259 = vpop.f32.mrb[0].mxu0
      %3260 = vmatprep.mubr.bf16.mxu0 %v3106
      %3261 = vmatmul.mubr.bf16.gmra.mrb[0].mxu0 %v3000
      %v3262 = vpop.f32.mrb[0].mxu0
      %v3263 = vadd.f32 0.0, %v3262
      %v3264 = vpop.f32.mrb[0].mxu0
      %v3265 = vpop.f32.mrb[0].mxu0
      %v3266 = vadd.f32 0.0, %v3265
      %v3267 = vpop.f32.mrb[0].mxu0
      %3268 = vdwg.mxu0
      %v3287 = vunpack.c.l.b16 %v2360
      %v3288 = vunpack.c.l.b16 %v2361
      %v3289 = vunpack.c.l.b16 %v2362
      %v3290 = vunpack.c.l.b16 %v2363
      %v3291 = vunpack.c.l.b16 %v2364
      %v3292 = vunpack.c.l.b16 %v2365
      %v3293 = vunpack.c.l.b16 %v2366
      %v3294 = vunpack.c.l.b16 %v2367
      %v3295 = vunpack.c.l.b16 %v2368
      %v3296 = vunpack.c.l.b16 %v2369
      %v3297 = vunpack.c.l.b16 %v2370
      %v3298 = vunpack.c.l.b16 %v2371
      %v3299 = vunpack.c.l.b16 %v2372
      %v3300 = vunpack.c.l.b16 %v2373
      %v3301 = vunpack.c.l.b16 %v2374
      %v3302 = vunpack.c.l.b16 %v2375
      %v3303 = vunpack.c.l.b16 %v2376
      %v3304 = vunpack.c.l.b16 %v2377
      %v3305 = vpack.c.b16 %v3288, %v3287
      %v3306 = vpack.c.b16 %v3290, %v3289
      %v3307 = vpack.c.b16 %v3292, %v3291
      %v3308 = vpack.c.b16 %v3294, %v3293
      %v3309 = vpack.c.b16 %v3296, %v3295
      %v3310 = vpack.c.b16 %v3298, %v3297
      %v3311 = vpack.c.b16 %v3300, %v3299
      %v3312 = vpack.c.b16 %v3302, %v3301
      %v3313 = vpack.c.b16 %v3304, %v3303
      %v3323 = vsel %vm3075, %v2247, 0
      %v3325 = vsel %vm3075, %v2249, 0
      %v3327 = vsel %vm3075, %v2251, 0
      %v3329 = vsel %vm3075, %v2253, 0
      %v3331 = vsel %vm3075, %v2255, 0
      %v3333 = vsel %vm3075, %v2257, 0
      %v3335 = vsel %vm3075, %v2259, 0
      %v3337 = vsel %vm3075, %v2261, 0
      %v3339 = vsel %vm3075, %v2263, 0
      %v3341 = vsel %vm3075, %v2265, 0
      %v3343 = vsel %vm3075, %v2267, 0
      %v3345 = vsel %vm3075, %v2269, 0
      %v3347 = vsel %vm3075, %v2271, 0
      %v3349 = vsel %vm3075, %v2273, 0
      %v3351 = vsel %vm3075, %v2275, 0
      %v3353 = vsel %vm3075, %v2277, 0
      %3355 = vmatprep.subr.bf16.mxu0 0
      %3356 = vmatpush1.bf16.msra.mxu0 %v3305
      %3357 = vmatprep.subr.bf16.mxu0 0
      %3358 = vmatpush1.bf16.msra.mxu0 %v3306
      %3359 = vmatprep.subr.bf16.mxu0 0
      %3360 = vmatpush1.bf16.msra.mxu0 %v3307
      %3361 = vmatprep.subr.bf16.mxu0 0
      %3362 = vmatpush1.bf16.msra.mxu0 %v3308
      %3363 = vmatprep.subr.bf16.mxu0 0
      %3364 = vmatpush1.bf16.msra.mxu0 %v3309
      %3365 = vmatprep.subr.bf16.mxu0 0
      %3366 = vmatpush1.bf16.msra.mxu0 %v3310
      %3367 = vmatprep.subr.bf16.mxu0 0
      %3368 = vmatpush1.bf16.msra.mxu0 %v3311
      %3369 = vmatprep.subr.bf16.mxu0 0
      %3370 = vmatpush1.bf16.msra.mxu0 %v3312
      %3371 = vmatprep.subr.bf16.mxu0 0
      %3372 = vmatpush1.bf16.msra.mxu0 %v3313
      %3373 = vmatprep.subr.bf16.mxu0 0
      %3374 = vmatpush1.bf16.msra.mxu0 0
      %3375 = vmatprep.subr.bf16.mxu0 0
      %3376 = vmatpush1.bf16.msra.mxu0 0
      %3377 = vmatprep.subr.bf16.mxu0 0
      %3378 = vmatpush1.bf16.msra.mxu0 0
      %3379 = vmatprep.subr.bf16.mxu0 0
      %3380 = vmatpush1.bf16.msra.mxu0 0
      %3381 = vmatprep.subr.bf16.mxu0 0
      %3382 = vmatpush1.bf16.msra.mxu0 0
      %3383 = vmatprep.subr.bf16.mxu0 0
      %3384 = vmatpush1.bf16.msra.mxu0 0
      %3385 = vmatprep.subr.bf16.mxu0 0
      %3386 = vmatpush1.bf16.msra.mxu0 0
      %3387 = vmatprep.mubr.bf16.mxu0 %v3323
      %3388 = vmatmul.mubr.bf16.gmra.mrb[0].mxu0 %v2313
      %v3389 = vpop.f32.mrb[0].mxu0
      %v3390 = vadd.f32 %v3143, %v3389
      %v3391 = vpop.f32.mrb[0].mxu0
      %v3392 = vpop.f32.mrb[0].mxu0
      %v3393 = vadd.f32 %v3146, %v3392
      %v3394 = vpop.f32.mrb[0].mxu0
      %3395 = vmatprep.mubr.bf16.mxu0 %v3325
      %3396 = vmatmul.mubr.bf16.gmra.mrb[0].mxu0 %v2316
      %v3397 = vpop.f32.mrb[0].mxu0
      %v3398 = vadd.f32 %v3151, %v3397
      %v3399 = vpop.f32.mrb[0].mxu0
      %v3400 = vpop.f32.mrb[0].mxu0
      %v3401 = vadd.f32 %v3154, %v3400
      %v3402 = vpop.f32.mrb[0].mxu0
      %3403 = vmatprep.mubr.bf16.mxu0 %v3327
      %3404 = vmatmul.mubr.bf16.gmra.mrb[0].mxu0 %v2319
      %v3405 = vpop.f32.mrb[0].mxu0
      %v3406 = vadd.f32 %v3159, %v3405
      %v3407 = vpop.f32.mrb[0].mxu0
      %v3408 = vpop.f32.mrb[0].mxu0
      %v3409 = vadd.f32 %v3162, %v3408
      %v3410 = vpop.f32.mrb[0].mxu0
      %3411 = vmatprep.mubr.bf16.mxu0 %v3329
      %3412 = vmatmul.mubr.bf16.gmra.mrb[0].mxu0 %v2322
      %v3413 = vpop.f32.mrb[0].mxu0
      %v3414 = vadd.f32 %v3167, %v3413
      %v3415 = vpop.f32.mrb[0].mxu0
      %v3416 = vpop.f32.mrb[0].mxu0
      %v3417 = vadd.f32 %v3170, %v3416
      %v3418 = vpop.f32.mrb[0].mxu0
      %3419 = vmatprep.mubr.bf16.mxu0 %v3331
      %3420 = vmatmul.mubr.bf16.gmra.mrb[0].mxu0 %v2325
      %v3421 = vpop.f32.mrb[0].mxu0
      %v3422 = vadd.f32 %v3175, %v3421
      %v3423 = vpop.f32.mrb[0].mxu0
      %v3424 = vpop.f32.mrb[0].mxu0
      %v3425 = vadd.f32 %v3178, %v3424
      %v3426 = vpop.f32.mrb[0].mxu0
      %3427 = vmatprep.mubr.bf16.mxu0 %v3333
      %3428 = vmatmul.mubr.bf16.gmra.mrb[0].mxu0 %v2328
      %v3429 = vpop.f32.mrb[0].mxu0
      %v3430 = vadd.f32 %v3183, %v3429
      %v3431 = vpop.f32.mrb[0].mxu0
      %v3432 = vpop.f32.mrb[0].mxu0
      %v3433 = vadd.f32 %v3186, %v3432
      %v3434 = vpop.f32.mrb[0].mxu0
      %3435 = vmatprep.mubr.bf16.mxu0 %v3335
      %3436 = vmatmul.mubr.bf16.gmra.mrb[0].mxu0 %v2331
      %v3437 = vpop.f32.mrb[0].mxu0
      %v3438 = vadd.f32 %v3191, %v3437
      %v3439 = vpop.f32.mrb[0].mxu0
      %v3440 = vpop.f32.mrb[0].mxu0
      %v3441 = vadd.f32 %v3194, %v3440
      %v3442 = vpop.f32.mrb[0].mxu0
      %3443 = vmatprep.mubr.bf16.mxu0 %v3337
      %3444 = vmatmul.mubr.bf16.gmra.mrb[0].mxu0 %v2334
      %v3445 = vpop.f32.mrb[0].mxu0
      %v3446 = vadd.f32 %v3199, %v3445
      %v3447 = vpop.f32.mrb[0].mxu0
      %v3448 = vpop.f32.mrb[0].mxu0
      %v3449 = vadd.f32 %v3202, %v3448
      %v3450 = vpop.f32.mrb[0].mxu0
      %3451 = vmatprep.mubr.bf16.mxu0 %v3339
      %3452 = vmatmul.mubr.bf16.gmra.mrb[0].mxu0 %v2337
      %v3453 = vpop.f32.mrb[0].mxu0
      %v3454 = vadd.f32 %v3207, %v3453
      %v3455 = vpop.f32.mrb[0].mxu0
      %v3456 = vpop.f32.mrb[0].mxu0
      %v3457 = vadd.f32 %v3210, %v3456
      %v3458 = vpop.f32.mrb[0].mxu0
      %3459 = vmatprep.mubr.bf16.mxu0 %v3341
      %3460 = vmatmul.mubr.bf16.gmra.mrb[0].mxu0 %v2340
      %v3461 = vpop.f32.mrb[0].mxu0
      %v3462 = vadd.f32 %v3215, %v3461
      %v3463 = vpop.f32.mrb[0].mxu0
      %v3464 = vpop.f32.mrb[0].mxu0
      %v3465 = vadd.f32 %v3218, %v3464
      %v3466 = vpop.f32.mrb[0].mxu0
      %3467 = vmatprep.mubr.bf16.mxu0 %v3343
      %3468 = vmatmul.mubr.bf16.gmra.mrb[0].mxu0 %v2343
      %v3469 = vpop.f32.mrb[0].mxu0
      %v3470 = vadd.f32 %v3223, %v3469
      %v3471 = vpop.f32.mrb[0].mxu0
      %v3472 = vpop.f32.mrb[0].mxu0
      %v3473 = vadd.f32 %v3226, %v3472
      %v3474 = vpop.f32.mrb[0].mxu0
      %3475 = vmatprep.mubr.bf16.mxu0 %v3345
      %3476 = vmatmul.mubr.bf16.gmra.mrb[0].mxu0 %v2346
      %v3477 = vpop.f32.mrb[0].mxu0
      %v3478 = vadd.f32 %v3231, %v3477
      %v3479 = vpop.f32.mrb[0].mxu0
      %v3480 = vpop.f32.mrb[0].mxu0
      %v3481 = vadd.f32 %v3234, %v3480
      %v3482 = vpop.f32.mrb[0].mxu0
      %3483 = vmatprep.mubr.bf16.mxu0 %v3347
      %3484 = vmatmul.mubr.bf16.gmra.mrb[0].mxu0 %v2349
      %v3485 = vpop.f32.mrb[0].mxu0
      %v3486 = vadd.f32 %v3239, %v3485
      %v3487 = vpop.f32.mrb[0].mxu0
      %v3488 = vpop.f32.mrb[0].mxu0
      %v3489 = vadd.f32 %v3242, %v3488
      %v3490 = vpop.f32.mrb[0].mxu0
      %3491 = vmatprep.mubr.bf16.mxu0 %v3349
      %3492 = vmatmul.mubr.bf16.gmra.mrb[0].mxu0 %v2352
      %v3493 = vpop.f32.mrb[0].mxu0
      %v3494 = vadd.f32 %v3247, %v3493
      %v3495 = vpop.f32.mrb[0].mxu0
      %v3496 = vpop.f32.mrb[0].mxu0
      %v3497 = vadd.f32 %v3250, %v3496
      %v3498 = vpop.f32.mrb[0].mxu0
      %3499 = vmatprep.mubr.bf16.mxu0 %v3351
      %3500 = vmatmul.mubr.bf16.gmra.mrb[0].mxu0 %v2355
      %v3501 = vpop.f32.mrb[0].mxu0
      %v3502 = vadd.f32 %v3255, %v3501
      %v3503 = vpop.f32.mrb[0].mxu0
      %v3504 = vpop.f32.mrb[0].mxu0
      %v3505 = vadd.f32 %v3258, %v3504
      %v3506 = vpop.f32.mrb[0].mxu0
      %3507 = vmatprep.mubr.bf16.mxu0 %v3353
      %3508 = vmatmul.mubr.bf16.gmra.mrb[0].mxu0 %v2358
      %v3509 = vpop.f32.mrb[0].mxu0
      %v3510 = vadd.f32 %v3263, %v3509
      %v3511 = vpop.f32.mrb[0].mxu0
      %v3512 = vpop.f32.mrb[0].mxu0
      %v3513 = vadd.f32 %v3266, %v3512
      %v3514 = vpop.f32.mrb[0].mxu0
      %3515 = vdwg.mxu0
      %s3516 = scalar_lea.vmem [#allocation4], 24
      %v3517 = vld [vmem:[%s3516] sm:$0xf]
      %v3518 = vld [vmem:[%s3516 + $0x4] sm:$0xf]
      %v3519 = vld [vmem:[%s3516 + $0xc] sm:$0xf]
      %v3520 = vld [vmem:[%s3516 + $0x10] sm:$0xf]
      %v3521 = vld [vmem:[%s3516 + $0x18] sm:$0xf]
      %v3522 = vld [vmem:[%s3516 + $0x1c] sm:$0xf]
      %v3523 = vld [vmem:[%s3516 + $0x24] sm:$0xf]
      %v3524 = vld [vmem:[%s3516 + $0x28] sm:$0xf]
      %v3525 = vld [vmem:[%s3516 + $0x30] sm:$0xf]
      %v3526 = vld [vmem:[%s3516 + $0x34] sm:$0xf]
      %v3527 = vld [vmem:[%s3516 + $0x3c] sm:$0xf]
      %v3528 = vld [vmem:[%s3516 + $0x40] sm:$0xf]
      %v3529 = vld [vmem:[%s3516 + $0x48] sm:$0xf]
      %v3530 = vld [vmem:[%s3516 + $0x4c] sm:$0xf]
      %v3531 = vld [vmem:[%s3516 + $0x54] sm:$0xf]
      %v3532 = vld [vmem:[%s3516 + $0x58] sm:$0xf]
      %v3533 = vld [vmem:[%s3516 + $0x60] sm:$0xf]
      %v3534 = vld [vmem:[%s3516 + $0x64] sm:$0xf]
      %v3535 = vld [vmem:[%s3516 + $0x6c] sm:$0xf]
      %v3536 = vld [vmem:[%s3516 + $0x70] sm:$0xf]
      %v3537 = vld [vmem:[%s3516 + $0x78] sm:$0xf]
      %v3538 = vld [vmem:[%s3516 + $0x7c] sm:$0xf]
      %v3539 = vld [vmem:[%s3516 + $0x84] sm:$0xf]
      %v3540 = vld [vmem:[%s3516 + $0x88] sm:$0xf]
      %v3541 = vld [vmem:[%s3516 + $0x90] sm:$0xf]
      %v3542 = vld [vmem:[%s3516 + $0x94] sm:$0xf]
      %v3543 = vld [vmem:[%s3516 + $0x9c] sm:$0xf]
      %v3544 = vld [vmem:[%s3516 + $0xa0] sm:$0xf]
      %v3545 = vld [vmem:[%s3516 + $0xa8] sm:$0xf]
      %v3546 = vld [vmem:[%s3516 + $0xac] sm:$0xf]
      %v3547 = vld [vmem:[%s3516 + $0xb4] sm:$0xf]
      %v3548 = vld [vmem:[%s3516 + $0xb8] sm:$0xf]
      %v3549 = vld [vmem:[%s3516 + $0x8] sm:$0x1]
      %v3550 = vld [vmem:[%s3516 + $0x14] sm:$0x1]
      %v3551 = vld [vmem:[%s3516 + $0x20] sm:$0x1]
      %v3552 = vld [vmem:[%s3516 + $0x2c] sm:$0x1]
      %v3553 = vld [vmem:[%s3516 + $0x38] sm:$0x1]
      %v3554 = vld [vmem:[%s3516 + $0x44] sm:$0x1]
      %v3555 = vld [vmem:[%s3516 + $0x50] sm:$0x1]
      %v3556 = vld [vmem:[%s3516 + $0x5c] sm:$0x1]
      %v3557 = vld [vmem:[%s3516 + $0x68] sm:$0x1]
      %v3558 = vld [vmem:[%s3516 + $0x74] sm:$0x1]
      %v3559 = vld [vmem:[%s3516 + $0x80] sm:$0x1]
      %v3560 = vld [vmem:[%s3516 + $0x8c] sm:$0x1]
      %v3561 = vld [vmem:[%s3516 + $0x98] sm:$0x1]
      %v3562 = vld [vmem:[%s3516 + $0xa4] sm:$0x1]
      %v3563 = vld [vmem:[%s3516 + $0xb0] sm:$0x1]
      %v3564 = vld [vmem:[%s3516 + $0xbc] sm:$0x1]
      %v3565 = vld [vmem:[%s3516] sm:$0xe]
      %v3566 = vld [vmem:[%s3516 + $0xc] sm:$0xe]
      %v3567 = vld [vmem:[%s3516 + $0x18] sm:$0xe]
      %v3568 = vld [vmem:[%s3516 + $0x24] sm:$0xe]
      %v3569 = vld [vmem:[%s3516 + $0x30] sm:$0xe]
      %v3570 = vld [vmem:[%s3516 + $0x3c] sm:$0xe]
      %v3571 = vld [vmem:[%s3516 + $0x48] sm:$0xe]
      %v3572 = vld [vmem:[%s3516 + $0x54] sm:$0xe]
      %v3573 = vld [vmem:[%s3516 + $0x60] sm:$0xe]
      %v3574 = vld [vmem:[%s3516 + $0x6c] sm:$0xe]
      %v3575 = vld [vmem:[%s3516 + $0x78] sm:$0xe]
      %v3576 = vld [vmem:[%s3516 + $0x84] sm:$0xe]
      %v3577 = vld [vmem:[%s3516 + $0x90] sm:$0xe]
      %v3578 = vld [vmem:[%s3516 + $0x9c] sm:$0xe]
      %v3579 = vld [vmem:[%s3516 + $0xa8] sm:$0xe]
      %v3580 = vld [vmem:[%s3516 + $0xb4] sm:$0xe]
      %v3613 = vunpack.c.l.b16 %v3517
      %v3614 = vunpack.c.l.b16 %v3518
      %v3615 = vunpack.c.l.b16 %v3519
      %v3616 = vunpack.c.l.b16 %v3520
      %v3617 = vunpack.c.l.b16 %v3521
      %v3618 = vunpack.c.l.b16 %v3522
      %v3619 = vunpack.c.l.b16 %v3523
      %v3620 = vunpack.c.l.b16 %v3524
      %v3621 = vunpack.c.l.b16 %v3525
      %v3622 = vunpack.c.l.b16 %v3526
      %v3623 = vunpack.c.l.b16 %v3527
      %v3624 = vunpack.c.l.b16 %v3528
      %v3625 = vunpack.c.l.b16 %v3529
      %v3626 = vunpack.c.l.b16 %v3530
      %v3627 = vunpack.c.l.b16 %v3531
      %v3628 = vunpack.c.l.b16 %v3532
      %v3629 = vunpack.c.l.b16 %v3533
      %v3630 = vunpack.c.l.b16 %v3534
      %v3631 = vunpack.c.l.b16 %v3535
      %v3632 = vunpack.c.l.b16 %v3536
      %v3633 = vunpack.c.l.b16 %v3537
      %v3634 = vunpack.c.l.b16 %v3538
      %v3635 = vunpack.c.l.b16 %v3539
      %v3636 = vunpack.c.l.b16 %v3540
      %v3637 = vunpack.c.l.b16 %v3541
      %v3638 = vunpack.c.l.b16 %v3542
      %v3639 = vunpack.c.l.b16 %v3543
      %v3640 = vunpack.c.l.b16 %v3544
      %v3641 = vunpack.c.l.b16 %v3545
      %v3642 = vunpack.c.l.b16 %v3546
      %v3643 = vunpack.c.l.b16 %v3547
      %v3644 = vunpack.c.l.b16 %v3548
      %v3645 = vpack.c.b16 %v3614, %v3613
      %v3646 = vpack.c.b16 %v3616, %v3615
      %v3647 = vpack.c.b16 %v3618, %v3617
      %v3648 = vpack.c.b16 %v3620, %v3619
      %v3649 = vpack.c.b16 %v3622, %v3621
      %v3650 = vpack.c.b16 %v3624, %v3623
      %v3651 = vpack.c.b16 %v3626, %v3625
      %v3652 = vpack.c.b16 %v3628, %v3627
      %v3653 = vpack.c.b16 %v3630, %v3629
      %v3654 = vpack.c.b16 %v3632, %v3631
      %v3655 = vpack.c.b16 %v3634, %v3633
      %v3656 = vpack.c.b16 %v3636, %v3635
      %v3657 = vpack.c.b16 %v3638, %v3637
      %v3658 = vpack.c.b16 %v3640, %v3639
      %v3659 = vpack.c.b16 %v3642, %v3641
      %v3660 = vpack.c.b16 %v3644, %v3643
      %v3677 = vunpack.c.l.b16 %v3549
      %v3678 = vunpack.c.l.b16 %v3550
      %v3679 = vunpack.c.l.b16 %v3551
      %v3680 = vunpack.c.l.b16 %v3552
      %v3681 = vunpack.c.l.b16 %v3553
      %v3682 = vunpack.c.l.b16 %v3554
      %v3683 = vunpack.c.l.b16 %v3555
      %v3684 = vunpack.c.l.b16 %v3556
      %v3685 = vunpack.c.l.b16 %v3557
      %v3686 = vunpack.c.l.b16 %v3558
      %v3687 = vunpack.c.l.b16 %v3559
      %v3688 = vunpack.c.l.b16 %v3560
      %v3689 = vunpack.c.l.b16 %v3561
      %v3690 = vunpack.c.l.b16 %v3562
      %v3691 = vunpack.c.l.b16 %v3563
      %v3692 = vunpack.c.l.b16 %v3564
      %v3693 = vpack.c.b16 %v3677, %v3677
      %v3694 = vpack.c.b16 %v3678, %v3678
      %v3695 = vpack.c.b16 %v3679, %v3679
      %v3696 = vpack.c.b16 %v3680, %v3680
      %v3697 = vpack.c.b16 %v3681, %v3681
      %v3698 = vpack.c.b16 %v3682, %v3682
      %v3699 = vpack.c.b16 %v3683, %v3683
      %v3700 = vpack.c.b16 %v3684, %v3684
      %v3701 = vpack.c.b16 %v3685, %v3685
      %v3702 = vpack.c.b16 %v3686, %v3686
      %v3703 = vpack.c.b16 %v3687, %v3687
      %v3704 = vpack.c.b16 %v3688, %v3688
      %v3705 = vpack.c.b16 %v3689, %v3689
      %v3706 = vpack.c.b16 %v3690, %v3690
      %v3707 = vpack.c.b16 %v3691, %v3691
      %v3708 = vpack.c.b16 %v3692, %v3692
      %v3710 = vshrl.u32 %v3645, 16
      %v3712 = vshll.u32 %v3645, 16
      %v3714 = vrot.slane %v3712, 1
      %v3715 = vor.u32 %v3710, %v3714
      %v3717 = vshll.u32 %v3693, 16
      %v3719 = vrot.slane %v3717, 1
      %v3720 = vsel %vm1924, %v3715, %v3719
      %v3722 = vshrl.u32 %v3646, 16
      %v3724 = vshll.u32 %v3646, 16
      %v3726 = vrot.slane %v3724, 1
      %v3727 = vor.u32 %v3722, %v3726
      %v3729 = vshll.u32 %v3694, 16
      %v3731 = vrot.slane %v3729, 1
      %v3732 = vsel %vm1924, %v3727, %v3731
      %v3734 = vshrl.u32 %v3647, 16
      %v3736 = vshll.u32 %v3647, 16
      %v3738 = vrot.slane %v3736, 1
      %v3739 = vor.u32 %v3734, %v3738
      %v3741 = vshll.u32 %v3695, 16
      %v3743 = vrot.slane %v3741, 1
      %v3744 = vsel %vm1924, %v3739, %v3743
      %v3746 = vshrl.u32 %v3648, 16
      %v3748 = vshll.u32 %v3648, 16
      %v3750 = vrot.slane %v3748, 1
      %v3751 = vor.u32 %v3746, %v3750
      %v3753 = vshll.u32 %v3696, 16
      %v3755 = vrot.slane %v3753, 1
      %v3756 = vsel %vm1924, %v3751, %v3755
      %v3758 = vshrl.u32 %v3649, 16
      %v3760 = vshll.u32 %v3649, 16
      %v3762 = vrot.slane %v3760, 1
      %v3763 = vor.u32 %v3758, %v3762
      %v3765 = vshll.u32 %v3697, 16
      %v3767 = vrot.slane %v3765, 1
      %v3768 = vsel %vm1924, %v3763, %v3767
      %v3770 = vshrl.u32 %v3650, 16
      %v3772 = vshll.u32 %v3650, 16
      %v3774 = vrot.slane %v3772, 1
      %v3775 = vor.u32 %v3770, %v3774
      %v3777 = vshll.u32 %v3698, 16
      %v3779 = vrot.slane %v3777, 1
      %v3780 = vsel %vm1924, %v3775, %v3779
      %v3782 = vshrl.u32 %v3651, 16
      %v3784 = vshll.u32 %v3651, 16
      %v3786 = vrot.slane %v3784, 1
      %v3787 = vor.u32 %v3782, %v3786
      %v3789 = vshll.u32 %v3699, 16
      %v3791 = vrot.slane %v3789, 1
      %v3792 = vsel %vm1924, %v3787, %v3791
      %v3794 = vshrl.u32 %v3652, 16
      %v3796 = vshll.u32 %v3652, 16
      %v3798 = vrot.slane %v3796, 1
      %v3799 = vor.u32 %v3794, %v3798
      %v3801 = vshll.u32 %v3700, 16
      %v3803 = vrot.slane %v3801, 1
      %v3804 = vsel %vm1924, %v3799, %v3803
      %v3806 = vshrl.u32 %v3653, 16
      %v3808 = vshll.u32 %v3653, 16
      %v3810 = vrot.slane %v3808, 1
      %v3811 = vor.u32 %v3806, %v3810
      %v3813 = vshll.u32 %v3701, 16
      %v3815 = vrot.slane %v3813, 1
      %v3816 = vsel %vm1924, %v3811, %v3815
      %v3818 = vshrl.u32 %v3654, 16
      %v3820 = vshll.u32 %v3654, 16
      %v3822 = vrot.slane %v3820, 1
      %v3823 = vor.u32 %v3818, %v3822
      %v3825 = vshll.u32 %v3702, 16
      %v3827 = vrot.slane %v3825, 1
      %v3828 = vsel %vm1924, %v3823, %v3827
      %v3830 = vshrl.u32 %v3655, 16
      %v3832 = vshll.u32 %v3655, 16
      %v3834 = vrot.slane %v3832, 1
      %v3835 = vor.u32 %v3830, %v3834
      %v3837 = vshll.u32 %v3703, 16
      %v3839 = vrot.slane %v3837, 1
      %v3840 = vsel %vm1924, %v3835, %v3839
      %v3842 = vshrl.u32 %v3656, 16
      %v3844 = vshll.u32 %v3656, 16
      %v3846 = vrot.slane %v3844, 1
      %v3847 = vor.u32 %v3842, %v3846
      %v3849 = vshll.u32 %v3704, 16
      %v3851 = vrot.slane %v3849, 1
      %v3852 = vsel %vm1924, %v3847, %v3851
      %v3854 = vshrl.u32 %v3657, 16
      %v3856 = vshll.u32 %v3657, 16
      %v3858 = vrot.slane %v3856, 1
      %v3859 = vor.u32 %v3854, %v3858
      %v3861 = vshll.u32 %v3705, 16
      %v3863 = vrot.slane %v3861, 1
      %v3864 = vsel %vm1924, %v3859, %v3863
      %v3866 = vshrl.u32 %v3658, 16
      %v3868 = vshll.u32 %v3658, 16
      %v3870 = vrot.slane %v3868, 1
      %v3871 = vor.u32 %v3866, %v3870
      %v3873 = vshll.u32 %v3706, 16
      %v3875 = vrot.slane %v3873, 1
      %v3876 = vsel %vm1924, %v3871, %v3875
      %v3878 = vshrl.u32 %v3659, 16
      %v3880 = vshll.u32 %v3659, 16
      %v3882 = vrot.slane %v3880, 1
      %v3883 = vor.u32 %v3878, %v3882
      %v3885 = vshll.u32 %v3707, 16
      %v3887 = vrot.slane %v3885, 1
      %v3888 = vsel %vm1924, %v3883, %v3887
      %v3890 = vshrl.u32 %v3660, 16
      %v3892 = vshll.u32 %v3660, 16
      %v3894 = vrot.slane %v3892, 1
      %v3895 = vor.u32 %v3890, %v3894
      %v3897 = vshll.u32 %v3708, 16
      %v3899 = vrot.slane %v3897, 1
      %v3900 = vsel %vm1924, %v3895, %v3899
      %3901 = vrot.lane.b32.xlu0 %v3720, 48
      %v3902 = vpop.permute.xlu0 %3901
      %3903 = vrot.lane.b32.xlu0 %v3732, 48
      %v3904 = vpop.permute.xlu0 %3903
      %3905 = vrot.lane.b32.xlu0 %v3744, 48
      %v3906 = vpop.permute.xlu0 %3905
      %3907 = vrot.lane.b32.xlu0 %v3756, 48
      %v3908 = vpop.permute.xlu0 %3907
      %3909 = vrot.lane.b32.xlu0 %v3768, 48
      %v3910 = vpop.permute.xlu0 %3909
      %3911 = vrot.lane.b32.xlu0 %v3780, 48
      %v3912 = vpop.permute.xlu0 %3911
      %3913 = vrot.lane.b32.xlu0 %v3792, 48
      %v3914 = vpop.permute.xlu0 %3913
      %3915 = vrot.lane.b32.xlu0 %v3804, 48
      %v3916 = vpop.permute.xlu0 %3915
      %3917 = vrot.lane.b32.xlu0 %v3816, 48
      %v3918 = vpop.permute.xlu0 %3917
      %3919 = vrot.lane.b32.xlu0 %v3828, 48
      %v3920 = vpop.permute.xlu0 %3919
      %3921 = vrot.lane.b32.xlu0 %v3840, 48
      %v3922 = vpop.permute.xlu0 %3921
      %3923 = vrot.lane.b32.xlu0 %v3852, 48
      %v3924 = vpop.permute.xlu0 %3923
      %3925 = vrot.lane.b32.xlu0 %v3864, 48
      %v3926 = vpop.permute.xlu0 %3925
      %3927 = vrot.lane.b32.xlu0 %v3876, 48
      %v3928 = vpop.permute.xlu0 %3927
      %3929 = vrot.lane.b32.xlu0 %v3888, 48
      %v3930 = vpop.permute.xlu0 %3929
      %3931 = vrot.lane.b32.xlu0 %v3900, 48
      %v3932 = vpop.permute.xlu0 %3931
      %v3949 = vunpack.c.l.b16 %v3565
      %v3950 = vunpack.c.l.b16 %v3566
      %v3951 = vunpack.c.l.b16 %v3567
      %v3952 = vunpack.c.l.b16 %v3568
      %v3953 = vunpack.c.l.b16 %v3569
      %v3954 = vunpack.c.l.b16 %v3570
      %v3955 = vunpack.c.l.b16 %v3571
      %v3956 = vunpack.c.l.b16 %v3572
      %v3957 = vunpack.c.l.b16 %v3573
      %v3958 = vunpack.c.l.b16 %v3574
      %v3959 = vunpack.c.l.b16 %v3575
      %v3960 = vunpack.c.l.b16 %v3576
      %v3961 = vunpack.c.l.b16 %v3577
      %v3962 = vunpack.c.l.b16 %v3578
      %v3963 = vunpack.c.l.b16 %v3579
      %v3964 = vunpack.c.l.b16 %v3580
      %v3965 = vpack.c.b16 %v3614, %v3949
      %v3966 = vpack.c.b16 %v3616, %v3950
      %v3967 = vpack.c.b16 %v3618, %v3951
      %v3968 = vpack.c.b16 %v3620, %v3952
      %v3969 = vpack.c.b16 %v3622, %v3953
      %v3970 = vpack.c.b16 %v3624, %v3954
      %v3971 = vpack.c.b16 %v3626, %v3955
      %v3972 = vpack.c.b16 %v3628, %v3956
      %v3973 = vpack.c.b16 %v3630, %v3957
      %v3974 = vpack.c.b16 %v3632, %v3958
      %v3975 = vpack.c.b16 %v3634, %v3959
      %v3976 = vpack.c.b16 %v3636, %v3960
      %v3977 = vpack.c.b16 %v3638, %v3961
      %v3978 = vpack.c.b16 %v3640, %v3962
      %v3979 = vpack.c.b16 %v3642, %v3963
      %v3980 = vpack.c.b16 %v3644, %v3964
      %v3981 = vrot.slane %v3965, 1
      %v3982 = vrot.slane %v3693, 1
      %v3983 = vsel %vm2197, %v3981, %v3982
      %v3984 = vrot.slane %v3966, 1
      %v3985 = vrot.slane %v3694, 1
      %v3986 = vsel %vm2197, %v3984, %v3985
      %v3987 = vrot.slane %v3967, 1
      %v3988 = vrot.slane %v3695, 1
      %v3989 = vsel %vm2197, %v3987, %v3988
      %v3990 = vrot.slane %v3968, 1
      %v3991 = vrot.slane %v3696, 1
      %v3992 = vsel %vm2197, %v3990, %v3991
      %v3993 = vrot.slane %v3969, 1
      %v3994 = vrot.slane %v3697, 1
      %v3995 = vsel %vm2197, %v3993, %v3994
      %v3996 = vrot.slane %v3970, 1
      %v3997 = vrot.slane %v3698, 1
      %v3998 = vsel %vm2197, %v3996, %v3997
      %v3999 = vrot.slane %v3971, 1
      %v4000 = vrot.slane %v3699, 1
      %v4001 = vsel %vm2197, %v3999, %v4000
      %v4002 = vrot.slane %v3972, 1
      %v4003 = vrot.slane %v3700, 1
      %v4004 = vsel %vm2197, %v4002, %v4003
      %v4005 = vrot.slane %v3973, 1
      %v4006 = vrot.slane %v3701, 1
      %v4007 = vsel %vm2197, %v4005, %v4006
      %v4008 = vrot.slane %v3974, 1
      %v4009 = vrot.slane %v3702, 1
      %v4010 = vsel %vm2197, %v4008, %v4009
      %v4011 = vrot.slane %v3975, 1
      %v4012 = vrot.slane %v3703, 1
      %v4013 = vsel %vm2197, %v4011, %v4012
      %v4014 = vrot.slane %v3976, 1
      %v4015 = vrot.slane %v3704, 1
      %v4016 = vsel %vm2197, %v4014, %v4015
      %v4017 = vrot.slane %v3977, 1
      %v4018 = vrot.slane %v3705, 1
      %v4019 = vsel %vm2197, %v4017, %v4018
      %v4020 = vrot.slane %v3978, 1
      %v4021 = vrot.slane %v3706, 1
      %v4022 = vsel %vm2197, %v4020, %v4021
      %v4023 = vrot.slane %v3979, 1
      %v4024 = vrot.slane %v3707, 1
      %v4025 = vsel %vm2197, %v4023, %v4024
      %v4026 = vrot.slane %v3980, 1
      %v4027 = vrot.slane %v3708, 1
      %v4028 = vsel %vm2197, %v4026, %v4027
      %4029 = vrot.lane.b32.xlu0 %v3983, 96
      %v4030 = vpop.permute.xlu0 %4029
      %4031 = vrot.lane.b32.xlu0 %v3986, 96
      %v4032 = vpop.permute.xlu0 %4031
      %4033 = vrot.lane.b32.xlu0 %v3989, 96
      %v4034 = vpop.permute.xlu0 %4033
      %4035 = vrot.lane.b32.xlu0 %v3992, 96
      %v4036 = vpop.permute.xlu0 %4035
      %4037 = vrot.lane.b32.xlu0 %v3995, 96
      %v4038 = vpop.permute.xlu0 %4037
      %4039 = vrot.lane.b32.xlu0 %v3998, 96
      %v4040 = vpop.permute.xlu0 %4039
      %4041 = vrot.lane.b32.xlu0 %v4001, 96
      %v4042 = vpop.permute.xlu0 %4041
      %4043 = vrot.lane.b32.xlu0 %v4004, 96
      %v4044 = vpop.permute.xlu0 %4043
      %4045 = vrot.lane.b32.xlu0 %v4007, 96
      %v4046 = vpop.permute.xlu0 %4045
      %4047 = vrot.lane.b32.xlu0 %v4010, 96
      %v4048 = vpop.permute.xlu0 %4047
      %4049 = vrot.lane.b32.xlu0 %v4013, 96
      %v4050 = vpop.permute.xlu0 %4049
      %4051 = vrot.lane.b32.xlu0 %v4016, 96
      %v4052 = vpop.permute.xlu0 %4051
      %4053 = vrot.lane.b32.xlu0 %v4019, 96
      %v4054 = vpop.permute.xlu0 %4053
      %4055 = vrot.lane.b32.xlu0 %v4022, 96
      %v4056 = vpop.permute.xlu0 %4055
      %4057 = vrot.lane.b32.xlu0 %v4025, 96
      %v4058 = vpop.permute.xlu0 %4057
      %4059 = vrot.lane.b32.xlu0 %v4028, 96
      %v4060 = vpop.permute.xlu0 %4059
      %v4062 = vsel %vm2278, %v3645, %v3902
      %v4064 = vsel %vm2278, %v3646, %v3904
      %v4066 = vsel %vm2278, %v3647, %v3906
      %v4068 = vsel %vm2278, %v3648, %v3908
      %v4070 = vsel %vm2278, %v3649, %v3910
      %v4072 = vsel %vm2278, %v3650, %v3912
      %v4074 = vsel %vm2278, %v3651, %v3914
      %v4076 = vsel %vm2278, %v3652, %v3916
      %v4078 = vsel %vm2278, %v3653, %v3918
      %v4080 = vsel %vm2278, %v3654, %v3920
      %v4082 = vsel %vm2278, %v3655, %v3922
      %v4084 = vsel %vm2278, %v3656, %v3924
      %v4086 = vsel %vm2278, %v3657, %v3926
      %v4088 = vsel %vm2278, %v3658, %v3928
      %v4090 = vsel %vm2278, %v3659, %v3930
      %v4092 = vsel %vm2278, %v3660, %v3932
      %v4094 = vsel %vm2311, %v4062, %v4030
      %v4097 = vsel %vm2311, %v4064, %v4032
      %v4100 = vsel %vm2311, %v4066, %v4034
      %v4103 = vsel %vm2311, %v4068, %v4036
      %v4106 = vsel %vm2311, %v4070, %v4038
      %v4109 = vsel %vm2311, %v4072, %v4040
      %v4112 = vsel %vm2311, %v4074, %v4042
      %v4115 = vsel %vm2311, %v4076, %v4044
      %v4118 = vsel %vm2311, %v4078, %v4046
      %v4121 = vsel %vm2311, %v4080, %v4048
      %v4124 = vsel %vm2311, %v4082, %v4050
      %v4127 = vsel %vm2311, %v4084, %v4052
      %v4130 = vsel %vm2311, %v4086, %v4054
      %v4133 = vsel %vm2311, %v4088, %v4056
      %v4136 = vsel %vm2311, %v4090, %v4058
      %v4139 = vsel %vm2311, %v4092, %v4060
      %s4141 = scalar_lea.vmem %s4, 144
      %v4142 = vld [vmem:[%s4141] sm:$0xf]
      %v4143 = vld [vmem:[%s4141 + $0x4] sm:$0xf]
      %v4144 = vld [vmem:[%s4141 + $0x8] sm:$0xf]
      %v4145 = vld [vmem:[%s4141 + $0xc] sm:$0xf]
      %v4146 = vld [vmem:[%s4141 + $0x10] sm:$0xf]
      %v4147 = vld [vmem:[%s4141 + $0x14] sm:$0xf]
      %v4148 = vld [vmem:[%s4141 + $0x18] sm:$0xf]
      %v4149 = vld [vmem:[%s4141 + $0x1c] sm:$0xf]
      %v4150 = vld [vmem:[%s4141 + $0x20] sm:$0xf]
      %v4151 = vld [vmem:[%s4141 + $0x24] sm:$0xf]
      %v4152 = vld [vmem:[%s4141 + $0x28] sm:$0xf]
      %v4153 = vld [vmem:[%s4141 + $0x2c] sm:$0xf]
      %v4154 = vld [vmem:[%s4141 + $0x30] sm:$0xf]
      %v4155 = vld [vmem:[%s4141 + $0x34] sm:$0xf]
      %v4156 = vld [vmem:[%s4141 + $0x38] sm:$0xf]
      %v4157 = vld [vmem:[%s4141 + $0x3c] sm:$0xf]
      %v4158 = vld [vmem:[%s4141 + $0x40] sm:$0xf]
      %v4159 = vld [vmem:[%s4141 + $0x44] sm:$0xf]
      %v4178 = vunpack.c.l.b16 %v4142
      %v4179 = vunpack.c.l.b16 %v4143
      %v4180 = vunpack.c.l.b16 %v4144
      %v4181 = vunpack.c.l.b16 %v4145
      %v4182 = vunpack.c.l.b16 %v4146
      %v4183 = vunpack.c.l.b16 %v4147
      %v4184 = vunpack.c.l.b16 %v4148
      %v4185 = vunpack.c.l.b16 %v4149
      %v4186 = vunpack.c.l.b16 %v4150
      %v4187 = vunpack.c.l.b16 %v4151
      %v4188 = vunpack.c.l.b16 %v4152
      %v4189 = vunpack.c.l.b16 %v4153
      %v4190 = vunpack.c.l.b16 %v4154
      %v4191 = vunpack.c.l.b16 %v4155
      %v4192 = vunpack.c.l.b16 %v4156
      %v4193 = vunpack.c.l.b16 %v4157
      %v4194 = vunpack.c.l.b16 %v4158
      %v4195 = vunpack.c.l.b16 %v4159
      %v4196 = vpack.c.b16 %v4179, %v4178
      %v4197 = vpack.c.b16 %v4181, %v4180
      %v4198 = vpack.c.b16 %v4183, %v4182
      %v4199 = vpack.c.b16 %v4185, %v4184
      %v4200 = vpack.c.b16 %v4187, %v4186
      %v4201 = vpack.c.b16 %v4189, %v4188
      %v4202 = vpack.c.b16 %v4191, %v4190
      %v4203 = vpack.c.b16 %v4193, %v4192
      %v4204 = vpack.c.b16 %v4195, %v4194
      %v4214 = vsel %vm3075, %v4030, 0
      %v4216 = vsel %vm3075, %v4032, 0
      %v4218 = vsel %vm3075, %v4034, 0
      %v4220 = vsel %vm3075, %v4036, 0
      %v4222 = vsel %vm3075, %v4038, 0
      %v4224 = vsel %vm3075, %v4040, 0
      %v4226 = vsel %vm3075, %v4042, 0
      %v4228 = vsel %vm3075, %v4044, 0
      %v4230 = vsel %vm3075, %v4046, 0
      %v4232 = vsel %vm3075, %v4048, 0
      %v4234 = vsel %vm3075, %v4050, 0
      %v4236 = vsel %vm3075, %v4052, 0
      %v4238 = vsel %vm3075, %v4054, 0
      %v4240 = vsel %vm3075, %v4056, 0
      %v4242 = vsel %vm3075, %v4058, 0
      %v4244 = vsel %vm3075, %v4060, 0
      %4246 = vmatprep.subr.bf16.mxu0 0
      %4247 = vmatpush1.bf16.msra.mxu0 %v4196
      %4248 = vmatprep.subr.bf16.mxu0 0
      %4249 = vmatpush1.bf16.msra.mxu0 %v4197
      %4250 = vmatprep.subr.bf16.mxu0 0
      %4251 = vmatpush1.bf16.msra.mxu0 %v4198
      %4252 = vmatprep.subr.bf16.mxu0 0
      %4253 = vmatpush1.bf16.msra.mxu0 %v4199
      %4254 = vmatprep.subr.bf16.mxu0 0
      %4255 = vmatpush1.bf16.msra.mxu0 %v4200
      %4256 = vmatprep.subr.bf16.mxu0 0
      %4257 = vmatpush1.bf16.msra.mxu0 %v4201
      %4258 = vmatprep.subr.bf16.mxu0 0
      %4259 = vmatpush1.bf16.msra.mxu0 %v4202
      %4260 = vmatprep.subr.bf16.mxu0 0
      %4261 = vmatpush1.bf16.msra.mxu0 %v4203
      %4262 = vmatprep.subr.bf16.mxu0 0
      %4263 = vmatpush1.bf16.msra.mxu0 %v4204
      %4264 = vmatprep.subr.bf16.mxu0 0
      %4265 = vmatpush1.bf16.msra.mxu0 0
      %4266 = vmatprep.subr.bf16.mxu0 0
      %4267 = vmatpush1.bf16.msra.mxu0 0
      %4268 = vmatprep.subr.bf16.mxu0 0
      %4269 = vmatpush1.bf16.msra.mxu0 0
      %4270 = vmatprep.subr.bf16.mxu0 0
      %4271 = vmatpush1.bf16.msra.mxu0 0
      %4272 = vmatprep.subr.bf16.mxu0 0
      %4273 = vmatpush1.bf16.msra.mxu0 0
      %4274 = vmatprep.subr.bf16.mxu0 0
      %4275 = vmatpush1.bf16.msra.mxu0 0
      %4276 = vmatprep.subr.bf16.mxu0 0
      %4277 = vmatpush1.bf16.msra.mxu0 0
      %4278 = vmatprep.mubr.bf16.mxu0 %v4214
      %4279 = vmatmul.mubr.bf16.gmra.mrb[0].mxu0 %v4094
      %v4280 = vpop.f32.mrb[0].mxu0
      %v4281 = vadd.f32 0.0, %v4280
      %v4282 = vpop.f32.mrb[0].mxu0
      %v4283 = vpop.f32.mrb[0].mxu0
      %v4284 = vadd.f32 0.0, %v4283
      %v4285 = vpop.f32.mrb[0].mxu0
      %4286 = vmatprep.mubr.bf16.mxu0 %v4216
      %4287 = vmatmul.mubr.bf16.gmra.mrb[0].mxu0 %v4097
      %v4288 = vpop.f32.mrb[0].mxu0
      %v4289 = vadd.f32 0.0, %v4288
      %v4290 = vpop.f32.mrb[0].mxu0
      %v4291 = vpop.f32.mrb[0].mxu0
      %v4292 = vadd.f32 0.0, %v4291
      %v4293 = vpop.f32.mrb[0].mxu0
      %4294 = vmatprep.mubr.bf16.mxu0 %v4218
      %4295 = vmatmul.mubr.bf16.gmra.mrb[0].mxu0 %v4100
      %v4296 = vpop.f32.mrb[0].mxu0
      %v4297 = vadd.f32 0.0, %v4296
      %v4298 = vpop.f32.mrb[0].mxu0
      %v4299 = vpop.f32.mrb[0].mxu0
      %v4300 = vadd.f32 0.0, %v4299
      %v4301 = vpop.f32.mrb[0].mxu0
      %4302 = vmatprep.mubr.bf16.mxu0 %v4220
      %4303 = vmatmul.mubr.bf16.gmra.mrb[0].mxu0 %v4103
      %v4304 = vpop.f32.mrb[0].mxu0
      %v4305 = vadd.f32 0.0, %v4304
      %v4306 = vpop.f32.mrb[0].mxu0
      %v4307 = vpop.f32.mrb[0].mxu0
      %v4308 = vadd.f32 0.0, %v4307
      %v4309 = vpop.f32.mrb[0].mxu0
      %4310 = vmatprep.mubr.bf16.mxu0 %v4222
      %4311 = vmatmul.mubr.bf16.gmra.mrb[0].mxu0 %v4106
      %v4312 = vpop.f32.mrb[0].mxu0
      %v4313 = vadd.f32 0.0, %v4312
      %v4314 = vpop.f32.mrb[0].mxu0
      %v4315 = vpop.f32.mrb[0].mxu0
      %v4316 = vadd.f32 0.0, %v4315
      %v4317 = vpop.f32.mrb[0].mxu0
      %4318 = vmatprep.mubr.bf16.mxu0 %v4224
      %4319 = vmatmul.mubr.bf16.gmra.mrb[0].mxu0 %v4109
      %v4320 = vpop.f32.mrb[0].mxu0
      %v4321 = vadd.f32 0.0, %v4320
      %v4322 = vpop.f32.mrb[0].mxu0
      %v4323 = vpop.f32.mrb[0].mxu0
      %v4324 = vadd.f32 0.0, %v4323
      %v4325 = vpop.f32.mrb[0].mxu0
      %4326 = vmatprep.mubr.bf16.mxu0 %v4226
      %4327 = vmatmul.mubr.bf16.gmra.mrb[0].mxu0 %v4112
      %v4328 = vpop.f32.mrb[0].mxu0
      %v4329 = vadd.f32 0.0, %v4328
      %v4330 = vpop.f32.mrb[0].mxu0
      %v4331 = vpop.f32.mrb[0].mxu0
      %v4332 = vadd.f32 0.0, %v4331
      %v4333 = vpop.f32.mrb[0].mxu0
      %4334 = vmatprep.mubr.bf16.mxu0 %v4228
      %4335 = vmatmul.mubr.bf16.gmra.mrb[0].mxu0 %v4115
      %v4336 = vpop.f32.mrb[0].mxu0
      %v4337 = vadd.f32 0.0, %v4336
      %v4338 = vpop.f32.mrb[0].mxu0
      %v4339 = vpop.f32.mrb[0].mxu0
      %v4340 = vadd.f32 0.0, %v4339
      %v4341 = vpop.f32.mrb[0].mxu0
      %4342 = vmatprep.mubr.bf16.mxu0 %v4230
      %4343 = vmatmul.mubr.bf16.gmra.mrb[0].mxu0 %v4118
      %v4344 = vpop.f32.mrb[0].mxu0
      %v4345 = vadd.f32 0.0, %v4344
      %v4346 = vpop.f32.mrb[0].mxu0
      %v4347 = vpop.f32.mrb[0].mxu0
      %v4348 = vadd.f32 0.0, %v4347
      %v4349 = vpop.f32.mrb[0].mxu0
      %4350 = vmatprep.mubr.bf16.mxu0 %v4232
      %4351 = vmatmul.mubr.bf16.gmra.mrb[0].mxu0 %v4121
      %v4352 = vpop.f32.mrb[0].mxu0
      %v4353 = vadd.f32 0.0, %v4352
      %v4354 = vpop.f32.mrb[0].mxu0
      %v4355 = vpop.f32.mrb[0].mxu0
      %v4356 = vadd.f32 0.0, %v4355
      %v4357 = vpop.f32.mrb[0].mxu0
      %4358 = vmatprep.mubr.bf16.mxu0 %v4234
      %4359 = vmatmul.mubr.bf16.gmra.mrb[0].mxu0 %v4124
      %v4360 = vpop.f32.mrb[0].mxu0
      %v4361 = vadd.f32 0.0, %v4360
      %v4362 = vpop.f32.mrb[0].mxu0
      %v4363 = vpop.f32.mrb[0].mxu0
      %v4364 = vadd.f32 0.0, %v4363
      %v4365 = vpop.f32.mrb[0].mxu0
      %4366 = vmatprep.mubr.bf16.mxu0 %v4236
      %4367 = vmatmul.mubr.bf16.gmra.mrb[0].mxu0 %v4127
      %v4368 = vpop.f32.mrb[0].mxu0
      %v4369 = vadd.f32 0.0, %v4368
      %v4370 = vpop.f32.mrb[0].mxu0
      %v4371 = vpop.f32.mrb[0].mxu0
      %v4372 = vadd.f32 0.0, %v4371
      %v4373 = vpop.f32.mrb[0].mxu0
      %4374 = vmatprep.mubr.bf16.mxu0 %v4238
      %4375 = vmatmul.mubr.bf16.gmra.mrb[0].mxu0 %v4130
      %v4376 = vpop.f32.mrb[0].mxu0
      %v4377 = vadd.f32 0.0, %v4376
      %v4378 = vpop.f32.mrb[0].mxu0
      %v4379 = vpop.f32.mrb[0].mxu0
      %v4380 = vadd.f32 0.0, %v4379
      %v4381 = vpop.f32.mrb[0].mxu0
      %4382 = vmatprep.mubr.bf16.mxu0 %v4240
      %4383 = vmatmul.mubr.bf16.gmra.mrb[0].mxu0 %v4133
      %v4384 = vpop.f32.mrb[0].mxu0
      %v4385 = vadd.f32 0.0, %v4384
      %v4386 = vpop.f32.mrb[0].mxu0
      %v4387 = vpop.f32.mrb[0].mxu0
      %v4388 = vadd.f32 0.0, %v4387
      %v4389 = vpop.f32.mrb[0].mxu0
      %4390 = vmatprep.mubr.bf16.mxu0 %v4242
      %4391 = vmatmul.mubr.bf16.gmra.mrb[0].mxu0 %v4136
      %v4392 = vpop.f32.mrb[0].mxu0
      %v4393 = vadd.f32 0.0, %v4392
      %v4394 = vpop.f32.mrb[0].mxu0
      %v4395 = vpop.f32.mrb[0].mxu0
      %v4396 = vadd.f32 0.0, %v4395
      %v4397 = vpop.f32.mrb[0].mxu0
      %4398 = vmatprep.mubr.bf16.mxu0 %v4244
      %4399 = vmatmul.mubr.bf16.gmra.mrb[0].mxu0 %v4139
      %v4400 = vpop.f32.mrb[0].mxu0
      %v4401 = vadd.f32 0.0, %v4400
      %v4402 = vpop.f32.mrb[0].mxu0
      %v4403 = vpop.f32.mrb[0].mxu0
      %v4404 = vadd.f32 0.0, %v4403
      %v4405 = vpop.f32.mrb[0].mxu0
      %4406 = vdwg.mxu0
      %v4407 = vadd.f32 %v3390, %v4281
      %v4408 = vadd.f32 %v3393, %v4284
      %v4409 = vadd.f32 %v3398, %v4289
      %v4410 = vadd.f32 %v3401, %v4292
      %v4411 = vadd.f32 %v3406, %v4297
      %v4412 = vadd.f32 %v3409, %v4300
      %v4413 = vadd.f32 %v3414, %v4305
      %v4414 = vadd.f32 %v3417, %v4308
      %v4415 = vadd.f32 %v3422, %v4313
      %v4416 = vadd.f32 %v3425, %v4316
      %v4417 = vadd.f32 %v3430, %v4321
      %v4418 = vadd.f32 %v3433, %v4324
      %v4419 = vadd.f32 %v3438, %v4329
      %v4420 = vadd.f32 %v3441, %v4332
      %v4421 = vadd.f32 %v3446, %v4337
      %v4422 = vadd.f32 %v3449, %v4340
      %v4423 = vadd.f32 %v3454, %v4345
      %v4424 = vadd.f32 %v3457, %v4348
      %v4425 = vadd.f32 %v3462, %v4353
      %v4426 = vadd.f32 %v3465, %v4356
      %v4427 = vadd.f32 %v3470, %v4361
      %v4428 = vadd.f32 %v3473, %v4364
      %v4429 = vadd.f32 %v3478, %v4369
      %v4430 = vadd.f32 %v3481, %v4372
      %v4431 = vadd.f32 %v3486, %v4377
      %v4432 = vadd.f32 %v3489, %v4380
      %v4433 = vadd.f32 %v3494, %v4385
      %v4434 = vadd.f32 %v3497, %v4388
      %v4435 = vadd.f32 %v3502, %v4393
      %v4436 = vadd.f32 %v3505, %v4396
      %v4437 = vadd.f32 %v3510, %v4401
      %v4438 = vadd.f32 %v3513, %v4404
      %4503 = vrot.lane.b32.xlu0 %v945, 80
      %v4504 = vpop.permute.xlu0 %4503
      %4505 = vrot.lane.b32.xlu0 %v947, 80
      %v4506 = vpop.permute.xlu0 %4505
      %4507 = vrot.lane.b32.xlu0 %v949, 80
      %v4508 = vpop.permute.xlu0 %4507
      %4509 = vrot.lane.b32.xlu0 %v951, 80
      %v4510 = vpop.permute.xlu0 %4509
      %4511 = vrot.lane.b32.xlu0 %v955, 80
      %v4512 = vpop.permute.xlu0 %4511
      %4513 = vrot.lane.b32.xlu0 %v957, 80
      %v4514 = vpop.permute.xlu0 %4513
      %4515 = vrot.lane.b32.xlu0 %v959, 80
      %v4516 = vpop.permute.xlu0 %4515
      %4517 = vrot.lane.b32.xlu0 %v961, 80
      %v4518 = vpop.permute.xlu0 %4517
      %4519 = vrot.lane.b32.xlu0 %v965, 80
      %v4520 = vpop.permute.xlu0 %4519
      %4521 = vrot.lane.b32.xlu0 %v967, 80
      %v4522 = vpop.permute.xlu0 %4521
      %4523 = vrot.lane.b32.xlu0 %v969, 80
      %v4524 = vpop.permute.xlu0 %4523
      %4525 = vrot.lane.b32.xlu0 %v971, 80
      %v4526 = vpop.permute.xlu0 %4525
      %4527 = vrot.lane.b32.xlu0 %v975, 80
      %v4528 = vpop.permute.xlu0 %4527
      %4529 = vrot.lane.b32.xlu0 %v977, 80
      %v4530 = vpop.permute.xlu0 %4529
      %4531 = vrot.lane.b32.xlu0 %v979, 80
      %v4532 = vpop.permute.xlu0 %4531
      %4533 = vrot.lane.b32.xlu0 %v981, 80
      %v4534 = vpop.permute.xlu0 %4533
      %4535 = vrot.lane.b32.xlu0 %v985, 80
      %v4536 = vpop.permute.xlu0 %4535
      %4537 = vrot.lane.b32.xlu0 %v987, 80
      %v4538 = vpop.permute.xlu0 %4537
      %4539 = vrot.lane.b32.xlu0 %v989, 80
      %v4540 = vpop.permute.xlu0 %4539
      %4541 = vrot.lane.b32.xlu0 %v991, 80
      %v4542 = vpop.permute.xlu0 %4541
      %4543 = vrot.lane.b32.xlu0 %v995, 80
      %v4544 = vpop.permute.xlu0 %4543
      %4545 = vrot.lane.b32.xlu0 %v997, 80
      %v4546 = vpop.permute.xlu0 %4545
      %4547 = vrot.lane.b32.xlu0 %v999, 80
      %v4548 = vpop.permute.xlu0 %4547
      %4549 = vrot.lane.b32.xlu0 %v1001, 80
      %v4550 = vpop.permute.xlu0 %4549
      %4551 = vrot.lane.b32.xlu0 %v1005, 80
      %v4552 = vpop.permute.xlu0 %4551
      %4553 = vrot.lane.b32.xlu0 %v1007, 80
      %v4554 = vpop.permute.xlu0 %4553
      %4555 = vrot.lane.b32.xlu0 %v1009, 80
      %v4556 = vpop.permute.xlu0 %4555
      %4557 = vrot.lane.b32.xlu0 %v1011, 80
      %v4558 = vpop.permute.xlu0 %4557
      %4559 = vrot.lane.b32.xlu0 %v1015, 80
      %v4560 = vpop.permute.xlu0 %4559
      %4561 = vrot.lane.b32.xlu0 %v1017, 80
      %v4562 = vpop.permute.xlu0 %4561
      %4563 = vrot.lane.b32.xlu0 %v1019, 80
      %v4564 = vpop.permute.xlu0 %4563
      %4565 = vrot.lane.b32.xlu0 %v1021, 80
      %v4566 = vpop.permute.xlu0 %4565
      %4567 = vrot.lane.b32.xlu0 %v1025, 80
      %v4568 = vpop.permute.xlu0 %4567
      %4569 = vrot.lane.b32.xlu0 %v1027, 80
      %v4570 = vpop.permute.xlu0 %4569
      %4571 = vrot.lane.b32.xlu0 %v1029, 80
      %v4572 = vpop.permute.xlu0 %4571
      %4573 = vrot.lane.b32.xlu0 %v1031, 80
      %v4574 = vpop.permute.xlu0 %4573
      %4575 = vrot.lane.b32.xlu0 %v1035, 80
      %v4576 = vpop.permute.xlu0 %4575
      %4577 = vrot.lane.b32.xlu0 %v1037, 80
      %v4578 = vpop.permute.xlu0 %4577
      %4579 = vrot.lane.b32.xlu0 %v1039, 80
      %v4580 = vpop.permute.xlu0 %4579
      %4581 = vrot.lane.b32.xlu0 %v1041, 80
      %v4582 = vpop.permute.xlu0 %4581
      %4583 = vrot.lane.b32.xlu0 %v1045, 80
      %v4584 = vpop.permute.xlu0 %4583
      %4585 = vrot.lane.b32.xlu0 %v1047, 80
      %v4586 = vpop.permute.xlu0 %4585
      %4587 = vrot.lane.b32.xlu0 %v1049, 80
      %v4588 = vpop.permute.xlu0 %4587
      %4589 = vrot.lane.b32.xlu0 %v1051, 80
      %v4590 = vpop.permute.xlu0 %4589
      %4591 = vrot.lane.b32.xlu0 %v1055, 80
      %v4592 = vpop.permute.xlu0 %4591
      %4593 = vrot.lane.b32.xlu0 %v1057, 80
      %v4594 = vpop.permute.xlu0 %4593
      %4595 = vrot.lane.b32.xlu0 %v1059, 80
      %v4596 = vpop.permute.xlu0 %4595
      %4597 = vrot.lane.b32.xlu0 %v1061, 80
      %v4598 = vpop.permute.xlu0 %4597
      %4599 = vrot.lane.b32.xlu0 %v1065, 80
      %v4600 = vpop.permute.xlu0 %4599
      %4601 = vrot.lane.b32.xlu0 %v1067, 80
      %v4602 = vpop.permute.xlu0 %4601
      %4603 = vrot.lane.b32.xlu0 %v1069, 80
      %v4604 = vpop.permute.xlu0 %4603
      %4605 = vrot.lane.b32.xlu0 %v1071, 80
      %v4606 = vpop.permute.xlu0 %4605
      %4607 = vrot.lane.b32.xlu0 %v1075, 80
      %v4608 = vpop.permute.xlu0 %4607
      %4609 = vrot.lane.b32.xlu0 %v1077, 80
      %v4610 = vpop.permute.xlu0 %4609
      %4611 = vrot.lane.b32.xlu0 %v1079, 80
      %v4612 = vpop.permute.xlu0 %4611
      %4613 = vrot.lane.b32.xlu0 %v1081, 80
      %v4614 = vpop.permute.xlu0 %4613
      %4615 = vrot.lane.b32.xlu0 %v1085, 80
      %v4616 = vpop.permute.xlu0 %4615
      %4617 = vrot.lane.b32.xlu0 %v1087, 80
      %v4618 = vpop.permute.xlu0 %4617
      %4619 = vrot.lane.b32.xlu0 %v1089, 80
      %v4620 = vpop.permute.xlu0 %4619
      %4621 = vrot.lane.b32.xlu0 %v1091, 80
      %v4622 = vpop.permute.xlu0 %4621
      %4623 = vrot.lane.b32.xlu0 %v1095, 80
      %v4624 = vpop.permute.xlu0 %4623
      %4625 = vrot.lane.b32.xlu0 %v1097, 80
      %v4626 = vpop.permute.xlu0 %4625
      %4627 = vrot.lane.b32.xlu0 %v1099, 80
      %v4628 = vpop.permute.xlu0 %4627
      %4629 = vrot.lane.b32.xlu0 %v1101, 80
      %v4630 = vpop.permute.xlu0 %4629
      %vm4631 = vcmask 654336
      %v4632 = vsel %vm4631, %v4504, %v4506
      %v4633 = vsel %vm4631, %v4508, %v4510
      %v4634 = vsel %vm4631, %v4512, %v4514
      %v4635 = vsel %vm4631, %v4516, %v4518
      %v4636 = vsel %vm4631, %v4520, %v4522
      %v4637 = vsel %vm4631, %v4524, %v4526
      %v4638 = vsel %vm4631, %v4528, %v4530
      %v4639 = vsel %vm4631, %v4532, %v4534
      %v4640 = vsel %vm4631, %v4536, %v4538
      %v4641 = vsel %vm4631, %v4540, %v4542
      %v4642 = vsel %vm4631, %v4544, %v4546
      %v4643 = vsel %vm4631, %v4548, %v4550
      %v4644 = vsel %vm4631, %v4552, %v4554
      %v4645 = vsel %vm4631, %v4556, %v4558
      %v4646 = vsel %vm4631, %v4560, %v4562
      %v4647 = vsel %vm4631, %v4564, %v4566
      %v4648 = vsel %vm4631, %v4568, %v4570
      %v4649 = vsel %vm4631, %v4572, %v4574
      %v4650 = vsel %vm4631, %v4576, %v4578
      %v4651 = vsel %vm4631, %v4580, %v4582
      %v4652 = vsel %vm4631, %v4584, %v4586
      %v4653 = vsel %vm4631, %v4588, %v4590
      %v4654 = vsel %vm4631, %v4592, %v4594
      %v4655 = vsel %vm4631, %v4596, %v4598
      %v4656 = vsel %vm4631, %v4600, %v4602
      %v4657 = vsel %vm4631, %v4604, %v4606
      %v4658 = vsel %vm4631, %v4608, %v4610
      %v4659 = vsel %vm4631, %v4612, %v4614
      %v4660 = vsel %vm4631, %v4616, %v4618
      %v4661 = vsel %vm4631, %v4620, %v4622
      %v4662 = vsel %vm4631, %v4624, %v4626
      %v4663 = vsel %vm4631, %v4628, %v4630
      %vm4696 = vcmask 523264
      %v4697 = vsel %vm4696, %v4407, %v4632
      %v4698 = vsel %vm4696, %v4408, %v4633
      %v4699 = vsel %vm4696, %v4409, %v4634
      %v4700 = vsel %vm4696, %v4410, %v4635
      %v4701 = vsel %vm4696, %v4411, %v4636
      %v4702 = vsel %vm4696, %v4412, %v4637
      %v4703 = vsel %vm4696, %v4413, %v4638
      %v4704 = vsel %vm4696, %v4414, %v4639
      %v4705 = vsel %vm4696, %v4415, %v4640
      %v4706 = vsel %vm4696, %v4416, %v4641
      %v4707 = vsel %vm4696, %v4417, %v4642
      %v4708 = vsel %vm4696, %v4418, %v4643
      %v4709 = vsel %vm4696, %v4419, %v4644
      %v4710 = vsel %vm4696, %v4420, %v4645
      %v4711 = vsel %vm4696, %v4421, %v4646
      %v4712 = vsel %vm4696, %v4422, %v4647
      %v4713 = vsel %vm4696, %v4423, %v4648
      %v4714 = vsel %vm4696, %v4424, %v4649
      %v4715 = vsel %vm4696, %v4425, %v4650
      %v4716 = vsel %vm4696, %v4426, %v4651
      %v4717 = vsel %vm4696, %v4427, %v4652
      %v4718 = vsel %vm4696, %v4428, %v4653
      %v4719 = vsel %vm4696, %v4429, %v4654
      %v4720 = vsel %vm4696, %v4430, %v4655
      %v4721 = vsel %vm4696, %v4431, %v4656
      %v4722 = vsel %vm4696, %v4432, %v4657
      %v4723 = vsel %vm4696, %v4433, %v4658
      %v4724 = vsel %vm4696, %v4434, %v4659
      %v4725 = vsel %vm4696, %v4435, %v4660
      %v4726 = vsel %vm4696, %v4436, %v4661
      %v4727 = vsel %vm4696, %v4437, %v4662
      %v4728 = vsel %vm4696, %v4438, %v4663
      %v4729 = vpack.c.bf16 %v4698, %v4697
      %v4730 = vpack.c.bf16 %v4700, %v4699
      %v4731 = vpack.c.bf16 %v4702, %v4701
      %v4732 = vpack.c.bf16 %v4704, %v4703
      %v4733 = vpack.c.bf16 %v4706, %v4705
      %v4734 = vpack.c.bf16 %v4708, %v4707
      %v4735 = vpack.c.bf16 %v4710, %v4709
      %v4736 = vpack.c.bf16 %v4712, %v4711
      %v4737 = vpack.c.bf16 %v4714, %v4713
      %v4738 = vpack.c.bf16 %v4716, %v4715
      %v4739 = vpack.c.bf16 %v4718, %v4717
      %v4740 = vpack.c.bf16 %v4720, %v4719
      %v4741 = vpack.c.bf16 %v4722, %v4721
      %v4742 = vpack.c.bf16 %v4724, %v4723
      %v4743 = vpack.c.bf16 %v4726, %v4725
      %v4744 = vpack.c.bf16 %v4728, %v4727
      %v4761 = vunpack.c.l.b16 %v4729
      %v4762 = vunpack.c.h.b16 %v4729
      %v4763 = vunpack.c.l.b16 %v4730
      %v4764 = vunpack.c.h.b16 %v4730
      %v4765 = vunpack.c.l.b16 %v4731
      %v4766 = vunpack.c.h.b16 %v4731
      %v4767 = vunpack.c.l.b16 %v4732
      %v4768 = vunpack.c.h.b16 %v4732
      %v4769 = vunpack.c.l.b16 %v4733
      %v4770 = vunpack.c.h.b16 %v4733
      %v4771 = vunpack.c.l.b16 %v4734
      %v4772 = vunpack.c.h.b16 %v4734
      %v4773 = vunpack.c.l.b16 %v4735
      %v4774 = vunpack.c.h.b16 %v4735
      %v4775 = vunpack.c.l.b16 %v4736
      %v4776 = vunpack.c.h.b16 %v4736
      %v4777 = vunpack.c.l.b16 %v4737
      %v4778 = vunpack.c.h.b16 %v4737
      %v4779 = vunpack.c.l.b16 %v4738
      %v4780 = vunpack.c.h.b16 %v4738
      %v4781 = vunpack.c.l.b16 %v4739
      %v4782 = vunpack.c.h.b16 %v4739
      %v4783 = vunpack.c.l.b16 %v4740
      %v4784 = vunpack.c.h.b16 %v4740
      %v4785 = vunpack.c.l.b16 %v4741
      %v4786 = vunpack.c.h.b16 %v4741
      %v4787 = vunpack.c.l.b16 %v4742
      %v4788 = vunpack.c.h.b16 %v4742
      %v4789 = vunpack.c.l.b16 %v4743
      %v4790 = vunpack.c.h.b16 %v4743
      %v4791 = vunpack.c.l.b16 %v4744
      %v4792 = vunpack.c.h.b16 %v4744
      %v4793 = vpack.c.b16 %v4761, %v4761
      %v4794 = vpack.c.b16 %v4762, %v4762
      %v4795 = vpack.c.b16 %v4763, %v4763
      %v4796 = vpack.c.b16 %v4764, %v4764
      %v4797 = vpack.c.b16 %v4765, %v4765
      %v4798 = vpack.c.b16 %v4766, %v4766
      %v4799 = vpack.c.b16 %v4767, %v4767
      %v4800 = vpack.c.b16 %v4768, %v4768
      %v4801 = vpack.c.b16 %v4769, %v4769
      %v4802 = vpack.c.b16 %v4770, %v4770
      %v4803 = vpack.c.b16 %v4771, %v4771
      %v4804 = vpack.c.b16 %v4772, %v4772
      %v4805 = vpack.c.b16 %v4773, %v4773
      %v4806 = vpack.c.b16 %v4774, %v4774
      %v4807 = vpack.c.b16 %v4775, %v4775
      %v4808 = vpack.c.b16 %v4776, %v4776
      %v4809 = vpack.c.b16 %v4777, %v4777
      %v4810 = vpack.c.b16 %v4778, %v4778
      %v4811 = vpack.c.b16 %v4779, %v4779
      %v4812 = vpack.c.b16 %v4780, %v4780
      %v4813 = vpack.c.b16 %v4781, %v4781
      %v4814 = vpack.c.b16 %v4782, %v4782
      %v4815 = vpack.c.b16 %v4783, %v4783
      %v4816 = vpack.c.b16 %v4784, %v4784
      %v4817 = vpack.c.b16 %v4785, %v4785
      %v4818 = vpack.c.b16 %v4786, %v4786
      %v4819 = vpack.c.b16 %v4787, %v4787
      %v4820 = vpack.c.b16 %v4788, %v4788
      %v4821 = vpack.c.b16 %v4789, %v4789
      %v4822 = vpack.c.b16 %v4790, %v4790
      %v4823 = vpack.c.b16 %v4791, %v4791
      %v4824 = vpack.c.b16 %v4792, %v4792
      %4857 = vst [vmem:[%s251 + $0x4] sm:$0xf] %v4793
      %4858 = vst [vmem:[%s251 + $0xc] sm:$0xf] %v4794
      %4859 = vst [vmem:[%s251 + $0x14] sm:$0xf] %v4795
      %4860 = vst [vmem:[%s251 + $0x1c] sm:$0xf] %v4796
      %4861 = vst [vmem:[%s251 + $0x24] sm:$0xf] %v4797
      %4862 = vst [vmem:[%s251 + $0x2c] sm:$0xf] %v4798
      %4863 = vst [vmem:[%s251 + $0x34] sm:$0xf] %v4799
      %4864 = vst [vmem:[%s251 + $0x3c] sm:$0xf] %v4800
      %4865 = vst [vmem:[%s251 + $0x44] sm:$0xf] %v4801
      %4866 = vst [vmem:[%s251 + $0x4c] sm:$0xf] %v4802
      %4867 = vst [vmem:[%s251 + $0x54] sm:$0xf] %v4803
      %4868 = vst [vmem:[%s251 + $0x5c] sm:$0xf] %v4804
      %4869 = vst [vmem:[%s251 + $0x64] sm:$0xf] %v4805
      %4870 = vst [vmem:[%s251 + $0x6c] sm:$0xf] %v4806
      %4871 = vst [vmem:[%s251 + $0x74] sm:$0xf] %v4807
      %4872 = vst [vmem:[%s251 + $0x7c] sm:$0xf] %v4808
      %4873 = vst [vmem:[%s251 + $0x84] sm:$0xf] %v4809
      %4874 = vst [vmem:[%s251 + $0x8c] sm:$0xf] %v4810
      %4875 = vst [vmem:[%s251 + $0x94] sm:$0xf] %v4811
      %4876 = vst [vmem:[%s251 + $0x9c] sm:$0xf] %v4812
      %4877 = vst [vmem:[%s251 + $0xa4] sm:$0xf] %v4813
      %4878 = vst [vmem:[%s251 + $0xac] sm:$0xf] %v4814
      %4879 = vst [vmem:[%s251 + $0xb4] sm:$0xf] %v4815
      %4880 = vst [vmem:[%s251 + $0xbc] sm:$0xf] %v4816
      %4881 = vst [vmem:[%s251 + $0xc4] sm:$0xf] %v4817
      %4882 = vst [vmem:[%s251 + $0xcc] sm:$0xf] %v4818
      %4883 = vst [vmem:[%s251 + $0xd4] sm:$0xf] %v4819
      %4884 = vst [vmem:[%s251 + $0xdc] sm:$0xf] %v4820
      %4885 = vst [vmem:[%s251 + $0xe4] sm:$0xf] %v4821
      %4886 = vst [vmem:[%s251 + $0xec] sm:$0xf] %v4822
      %4887 = vst [vmem:[%s251 + $0xf4] sm:$0xf] %v4823
      %4888 = vst [vmem:[%s251 + $0xfc] sm:$0xf] %v4824
      %v4890 = vshrl.u32 %v736, 16
      %v4892 = vrot.slane %v4890, 7
      %v4893 = vshll.u32 %v736, 16
      %v4895 = vor.u32 %v4892, %v4893
      %v4896 = vrot.slane %v4892, 4
      %v4898 = vshrl.u32 %v737, 16
      %v4900 = vrot.slane %v4898, 7
      %v4901 = vshll.u32 %v737, 16
      %v4903 = vor.u32 %v4900, %v4901
      %v4904 = vsel %vm1200, %v4896, %v4903
      %v4905 = vrot.slane %v4900, 4
      %v4907 = vshrl.u32 %v738, 16
      %v4909 = vrot.slane %v4907, 7
      %v4910 = vshll.u32 %v738, 16
      %v4912 = vor.u32 %v4909, %v4910
      %v4913 = vrot.slane %v4909, 4
      %v4915 = vshrl.u32 %v739, 16
      %v4917 = vrot.slane %v4915, 7
      %v4918 = vshll.u32 %v739, 16
      %v4920 = vor.u32 %v4917, %v4918
      %v4921 = vsel %vm1200, %v4913, %v4920
      %v4922 = vrot.slane %v4917, 4
      %v4924 = vshrl.u32 %v740, 16
      %v4926 = vrot.slane %v4924, 7
      %v4927 = vshll.u32 %v740, 16
      %v4929 = vor.u32 %v4926, %v4927
      %v4930 = vrot.slane %v4926, 4
      %v4932 = vshrl.u32 %v741, 16
      %v4934 = vrot.slane %v4932, 7
      %v4935 = vshll.u32 %v741, 16
      %v4937 = vor.u32 %v4934, %v4935
      %v4938 = vsel %vm1200, %v4930, %v4937
      %v4939 = vrot.slane %v4934, 4
      %v4941 = vshrl.u32 %v742, 16
      %v4943 = vrot.slane %v4941, 7
      %v4944 = vshll.u32 %v742, 16
      %v4946 = vor.u32 %v4943, %v4944
      %v4947 = vrot.slane %v4943, 4
      %v4949 = vshrl.u32 %v743, 16
      %v4951 = vrot.slane %v4949, 7
      %v4952 = vshll.u32 %v743, 16
      %v4954 = vor.u32 %v4951, %v4952
      %v4955 = vsel %vm1200, %v4947, %v4954
      %v4956 = vrot.slane %v4951, 4
      %v4958 = vshrl.u32 %v744, 16
      %v4960 = vrot.slane %v4958, 7
      %v4961 = vshll.u32 %v744, 16
      %v4963 = vor.u32 %v4960, %v4961
      %v4964 = vrot.slane %v4960, 4
      %v4966 = vshrl.u32 %v745, 16
      %v4968 = vrot.slane %v4966, 7
      %v4969 = vshll.u32 %v745, 16
      %v4971 = vor.u32 %v4968, %v4969
      %v4972 = vsel %vm1200, %v4964, %v4971
      %v4973 = vrot.slane %v4968, 4
      %v4975 = vshrl.u32 %v746, 16
      %v4977 = vrot.slane %v4975, 7
      %v4978 = vshll.u32 %v746, 16
      %v4980 = vor.u32 %v4977, %v4978
      %v4981 = vrot.slane %v4977, 4
      %v4983 = vshrl.u32 %v747, 16
      %v4985 = vrot.slane %v4983, 7
      %v4986 = vshll.u32 %v747, 16
      %v4988 = vor.u32 %v4985, %v4986
      %v4989 = vsel %vm1200, %v4981, %v4988
      %v4990 = vrot.slane %v4985, 4
      %v4992 = vshrl.u32 %v748, 16
      %v4994 = vrot.slane %v4992, 7
      %v4995 = vshll.u32 %v748, 16
      %v4997 = vor.u32 %v4994, %v4995
      %v4998 = vrot.slane %v4994, 4
      %v5000 = vshrl.u32 %v749, 16
      %v5002 = vrot.slane %v5000, 7
      %v5003 = vshll.u32 %v749, 16
      %v5005 = vor.u32 %v5002, %v5003
      %v5006 = vsel %vm1200, %v4998, %v5005
      %v5007 = vrot.slane %v5002, 4
      %v5009 = vshrl.u32 %v750, 16
      %v5011 = vrot.slane %v5009, 7
      %v5012 = vshll.u32 %v750, 16
      %v5014 = vor.u32 %v5011, %v5012
      %v5015 = vrot.slane %v5011, 4
      %v5017 = vshrl.u32 %v751, 16
      %v5019 = vrot.slane %v5017, 7
      %v5020 = vshll.u32 %v751, 16
      %v5022 = vor.u32 %v5019, %v5020
      %v5023 = vsel %vm1200, %v5015, %v5022
      %v5024 = vrot.slane %v5019, 4
      %v5026 = vshrl.u32 %v752, 16
      %v5028 = vrot.slane %v5026, 7
      %v5029 = vshll.u32 %v752, 16
      %v5031 = vor.u32 %v5028, %v5029
      %v5032 = vrot.slane %v5028, 4
      %v5034 = vshrl.u32 %v753, 16
      %v5036 = vrot.slane %v5034, 7
      %v5037 = vshll.u32 %v753, 16
      %v5039 = vor.u32 %v5036, %v5037
      %v5040 = vsel %vm1200, %v5032, %v5039
      %v5041 = vrot.slane %v5036, 4
      %v5043 = vshrl.u32 %v754, 16
      %v5045 = vrot.slane %v5043, 7
      %v5046 = vshll.u32 %v754, 16
      %v5048 = vor.u32 %v5045, %v5046
      %v5049 = vrot.slane %v5045, 4
      %v5051 = vshrl.u32 %v755, 16
      %v5053 = vrot.slane %v5051, 7
      %v5054 = vshll.u32 %v755, 16
      %v5056 = vor.u32 %v5053, %v5054
      %v5057 = vsel %vm1200, %v5049, %v5056
      %v5058 = vrot.slane %v5053, 4
      %v5060 = vshrl.u32 %v756, 16
      %v5062 = vrot.slane %v5060, 7
      %v5063 = vshll.u32 %v756, 16
      %v5065 = vor.u32 %v5062, %v5063
      %v5066 = vrot.slane %v5062, 4
      %v5068 = vshrl.u32 %v757, 16
      %v5070 = vrot.slane %v5068, 7
      %v5071 = vshll.u32 %v757, 16
      %v5073 = vor.u32 %v5070, %v5071
      %v5074 = vsel %vm1200, %v5066, %v5073
      %v5075 = vrot.slane %v5070, 4
      %v5077 = vshrl.u32 %v758, 16
      %v5079 = vrot.slane %v5077, 7
      %v5080 = vshll.u32 %v758, 16
      %v5082 = vor.u32 %v5079, %v5080
      %v5083 = vrot.slane %v5079, 4
      %v5085 = vshrl.u32 %v759, 16
      %v5087 = vrot.slane %v5085, 7
      %v5088 = vshll.u32 %v759, 16
      %v5090 = vor.u32 %v5087, %v5088
      %v5091 = vsel %vm1200, %v5083, %v5090
      %v5092 = vrot.slane %v5087, 4
      %v5094 = vshrl.u32 %v760, 16
      %v5096 = vrot.slane %v5094, 7
      %v5097 = vshll.u32 %v760, 16
      %v5099 = vor.u32 %v5096, %v5097
      %v5100 = vrot.slane %v5096, 4
      %v5102 = vshrl.u32 %v761, 16
      %v5104 = vrot.slane %v5102, 7
      %v5105 = vshll.u32 %v761, 16
      %v5107 = vor.u32 %v5104, %v5105
      %v5108 = vsel %vm1200, %v5100, %v5107
      %v5109 = vrot.slane %v5104, 4
      %v5111 = vshrl.u32 %v762, 16
      %v5113 = vrot.slane %v5111, 7
      %v5114 = vshll.u32 %v762, 16
      %v5116 = vor.u32 %v5113, %v5114
      %v5117 = vrot.slane %v5113, 4
      %v5119 = vshrl.u32 %v763, 16
      %v5121 = vrot.slane %v5119, 7
      %v5122 = vshll.u32 %v763, 16
      %v5124 = vor.u32 %v5121, %v5122
      %v5125 = vsel %vm1200, %v5117, %v5124
      %v5126 = vrot.slane %v5121, 4
      %v5128 = vshrl.u32 %v764, 16
      %v5130 = vrot.slane %v5128, 7
      %v5131 = vshll.u32 %v764, 16
      %v5133 = vor.u32 %v5130, %v5131
      %v5134 = vrot.slane %v5130, 4
      %v5136 = vshrl.u32 %v765, 16
      %v5138 = vrot.slane %v5136, 7
      %v5139 = vshll.u32 %v765, 16
      %v5141 = vor.u32 %v5138, %v5139
      %v5142 = vsel %vm1200, %v5134, %v5141
      %v5143 = vrot.slane %v5138, 4
      %v5145 = vshrl.u32 %v766, 16
      %v5147 = vrot.slane %v5145, 7
      %v5148 = vshll.u32 %v766, 16
      %v5150 = vor.u32 %v5147, %v5148
      %v5151 = vrot.slane %v5147, 4
      %v5153 = vshrl.u32 %v767, 16
      %v5155 = vrot.slane %v5153, 7
      %v5156 = vshll.u32 %v767, 16
      %v5158 = vor.u32 %v5155, %v5156
      %v5159 = vsel %vm1200, %v5151, %v5158
      %v5160 = vrot.slane %v5155, 4
      %s5209 = scalar_lea.vmem [#allocation5], 12
      %vm5210 = vcmask 60416
      %vm5211 = vmand %vm5210, %vm320
      %v5212 = vld [vmem:[%s5209] sm:$0xf]
      %v5213 = vsel %vm5211, %v4895, %v5212
      %5214 = vst [vmem:[%s5209] sm:$0xf] %v5213
      %5215 = vst.msk [vmem:[%s5209 + $0x4] sm:$0xf] %vm616, %v4904
      %v5216 = vld [vmem:[%s5209 + $0x8] sm:$0x1]
      %v5217 = vsel %vm626, %v4905, %v5216
      %5218 = vst [vmem:[%s5209 + $0x8] sm:$0x1] %v5217
      %v5219 = vld [vmem:[%s5209 + $0xc] sm:$0xf]
      %v5220 = vsel %vm5211, %v4912, %v5219
      %5221 = vst [vmem:[%s5209 + $0xc] sm:$0xf] %v5220
      %5222 = vst.msk [vmem:[%s5209 + $0x10] sm:$0xf] %vm616, %v4921
      %v5223 = vld [vmem:[%s5209 + $0x14] sm:$0x1]
      %v5224 = vsel %vm626, %v4922, %v5223
      %5225 = vst [vmem:[%s5209 + $0x14] sm:$0x1] %v5224
      %v5226 = vld [vmem:[%s5209 + $0x18] sm:$0xf]
      %v5227 = vsel %vm5211, %v4929, %v5226
      %5228 = vst [vmem:[%s5209 + $0x18] sm:$0xf] %v5227
      %5229 = vst.msk [vmem:[%s5209 + $0x1c] sm:$0xf] %vm616, %v4938
      %v5230 = vld [vmem:[%s5209 + $0x20] sm:$0x1]
      %v5231 = vsel %vm626, %v4939, %v5230
      %5232 = vst [vmem:[%s5209 + $0x20] sm:$0x1] %v5231
      %v5233 = vld [vmem:[%s5209 + $0x24] sm:$0xf]
      %v5234 = vsel %vm5211, %v4946, %v5233
      %5235 = vst [vmem:[%s5209 + $0x24] sm:$0xf] %v5234
      %5236 = vst.msk [vmem:[%s5209 + $0x28] sm:$0xf] %vm616, %v4955
      %v5237 = vld [vmem:[%s5209 + $0x2c] sm:$0x1]
      %v5238 = vsel %vm626, %v4956, %v5237
      %5239 = vst [vmem:[%s5209 + $0x2c] sm:$0x1] %v5238
      %v5240 = vld [vmem:[%s5209 + $0x30] sm:$0xf]
      %v5241 = vsel %vm5211, %v4963, %v5240
      %5242 = vst [vmem:[%s5209 + $0x30] sm:$0xf] %v5241
      %5243 = vst.msk [vmem:[%s5209 + $0x34] sm:$0xf] %vm616, %v4972
      %v5244 = vld [vmem:[%s5209 + $0x38] sm:$0x1]
      %v5245 = vsel %vm626, %v4973, %v5244
      %5246 = vst [vmem:[%s5209 + $0x38] sm:$0x1] %v5245
      %v5247 = vld [vmem:[%s5209 + $0x3c] sm:$0xf]
      %v5248 = vsel %vm5211, %v4980, %v5247
      %5249 = vst [vmem:[%s5209 + $0x3c] sm:$0xf] %v5248
      %5250 = vst.msk [vmem:[%s5209 + $0x40] sm:$0xf] %vm616, %v4989
      %v5251 = vld [vmem:[%s5209 + $0x44] sm:$0x1]
      %v5252 = vsel %vm626, %v4990, %v5251
      %5253 = vst [vmem:[%s5209 + $0x44] sm:$0x1] %v5252
      %v5254 = vld [vmem:[%s5209 + $0x48] sm:$0xf]
      %v5255 = vsel %vm5211, %v4997, %v5254
      %5256 = vst [vmem:[%s5209 + $0x48] sm:$0xf] %v5255
      %5257 = vst.msk [vmem:[%s5209 + $0x4c] sm:$0xf] %vm616, %v5006
      %v5258 = vld [vmem:[%s5209 + $0x50] sm:$0x1]
      %v5259 = vsel %vm626, %v5007, %v5258
      %5260 = vst [vmem:[%s5209 + $0x50] sm:$0x1] %v5259
      %v5261 = vld [vmem:[%s5209 + $0x54] sm:$0xf]
      %v5262 = vsel %vm5211, %v5014, %v5261
      %5263 = vst [vmem:[%s5209 + $0x54] sm:$0xf] %v5262
      %5264 = vst.msk [vmem:[%s5209 + $0x58] sm:$0xf] %vm616, %v5023
      %v5265 = vld [vmem:[%s5209 + $0x5c] sm:$0x1]
      %v5266 = vsel %vm626, %v5024, %v5265
      %5267 = vst [vmem:[%s5209 + $0x5c] sm:$0x1] %v5266
      %v5268 = vld [vmem:[%s5209 + $0x60] sm:$0xf]
      %v5269 = vsel %vm5211, %v5031, %v5268
      %5270 = vst [vmem:[%s5209 + $0x60] sm:$0xf] %v5269
      %5271 = vst.msk [vmem:[%s5209 + $0x64] sm:$0xf] %vm616, %v5040
      %v5272 = vld [vmem:[%s5209 + $0x68] sm:$0x1]
      %v5273 = vsel %vm626, %v5041, %v5272
      %5274 = vst [vmem:[%s5209 + $0x68] sm:$0x1] %v5273
      %v5275 = vld [vmem:[%s5209 + $0x6c] sm:$0xf]
      %v5276 = vsel %vm5211, %v5048, %v5275
      %5277 = vst [vmem:[%s5209 + $0x6c] sm:$0xf] %v5276
      %5278 = vst.msk [vmem:[%s5209 + $0x70] sm:$0xf] %vm616, %v5057
      %v5279 = vld [vmem:[%s5209 + $0x74] sm:$0x1]
      %v5280 = vsel %vm626, %v5058, %v5279
      %5281 = vst [vmem:[%s5209 + $0x74] sm:$0x1] %v5280
      %v5282 = vld [vmem:[%s5209 + $0x78] sm:$0xf]
      %v5283 = vsel %vm5211, %v5065, %v5282
      %5284 = vst [vmem:[%s5209 + $0x78] sm:$0xf] %v5283
      %5285 = vst.msk [vmem:[%s5209 + $0x7c] sm:$0xf] %vm616, %v5074
      %v5286 = vld [vmem:[%s5209 + $0x80] sm:$0x1]
      %v5287 = vsel %vm626, %v5075, %v5286
      %5288 = vst [vmem:[%s5209 + $0x80] sm:$0x1] %v5287
      %v5289 = vld [vmem:[%s5209 + $0x84] sm:$0xf]
      %v5290 = vsel %vm5211, %v5082, %v5289
      %5291 = vst [vmem:[%s5209 + $0x84] sm:$0xf] %v5290
      %5292 = vst.msk [vmem:[%s5209 + $0x88] sm:$0xf] %vm616, %v5091
      %v5293 = vld [vmem:[%s5209 + $0x8c] sm:$0x1]
      %v5294 = vsel %vm626, %v5092, %v5293
      %5295 = vst [vmem:[%s5209 + $0x8c] sm:$0x1] %v5294
      %v5296 = vld [vmem:[%s5209 + $0x90] sm:$0xf]
      %v5297 = vsel %vm5211, %v5099, %v5296
      %5298 = vst [vmem:[%s5209 + $0x90] sm:$0xf] %v5297
      %5299 = vst.msk [vmem:[%s5209 + $0x94] sm:$0xf] %vm616, %v5108
      %v5300 = vld [vmem:[%s5209 + $0x98] sm:$0x1]
      %v5301 = vsel %vm626, %v5109, %v5300
      %5302 = vst [vmem:[%s5209 + $0x98] sm:$0x1] %v5301
      %v5303 = vld [vmem:[%s5209 + $0x9c] sm:$0xf]
      %v5304 = vsel %vm5211, %v5116, %v5303
      %5305 = vst [vmem:[%s5209 + $0x9c] sm:$0xf] %v5304
      %5306 = vst.msk [vmem:[%s5209 + $0xa0] sm:$0xf] %vm616, %v5125
      %v5307 = vld [vmem:[%s5209 + $0xa4] sm:$0x1]
      %v5308 = vsel %vm626, %v5126, %v5307
      %5309 = vst [vmem:[%s5209 + $0xa4] sm:$0x1] %v5308
      %v5310 = vld [vmem:[%s5209 + $0xa8] sm:$0xf]
      %v5311 = vsel %vm5211, %v5133, %v5310
      %5312 = vst [vmem:[%s5209 + $0xa8] sm:$0xf] %v5311
      %5313 = vst.msk [vmem:[%s5209 + $0xac] sm:$0xf] %vm616, %v5142
      %v5314 = vld [vmem:[%s5209 + $0xb0] sm:$0x1]
      %v5315 = vsel %vm626, %v5143, %v5314
      %5316 = vst [vmem:[%s5209 + $0xb0] sm:$0x1] %v5315
      %v5317 = vld [vmem:[%s5209 + $0xb4] sm:$0xf]
      %v5318 = vsel %vm5211, %v5150, %v5317
      %5319 = vst [vmem:[%s5209 + $0xb4] sm:$0xf] %v5318
      %5320 = vst.msk [vmem:[%s5209 + $0xb8] sm:$0xf] %vm616, %v5159
      %v5321 = vld [vmem:[%s5209 + $0xbc] sm:$0x1]
      %v5322 = vsel %vm626, %v5160, %v5321
      %5323 = vst [vmem:[%s5209 + $0xbc] sm:$0x1] %v5322
      %v5324 = vld [vmem:[#allocation5] sm:$0xf]
      %v5325 = vld [vmem:[#allocation5 + $0x4] sm:$0xf]
      %v5326 = vld [vmem:[#allocation5 + $0xc] sm:$0xf]
      %v5327 = vld [vmem:[#allocation5 + $0x10] sm:$0xf]
      %v5328 = vld [vmem:[#allocation5 + $0x18] sm:$0xf]
      %v5329 = vld [vmem:[#allocation5 + $0x1c] sm:$0xf]
      %v5330 = vld [vmem:[#allocation5 + $0x24] sm:$0xf]
      %v5331 = vld [vmem:[#allocation5 + $0x28] sm:$0xf]
      %v5332 = vld [vmem:[#allocation5 + $0x30] sm:$0xf]
      %v5333 = vld [vmem:[#allocation5 + $0x34] sm:$0xf]
      %v5334 = vld [vmem:[#allocation5 + $0x3c] sm:$0xf]
      %v5335 = vld [vmem:[#allocation5 + $0x40] sm:$0xf]
      %v5336 = vld [vmem:[#allocation5 + $0x48] sm:$0xf]
      %v5337 = vld [vmem:[#allocation5 + $0x4c] sm:$0xf]
      %v5338 = vld [vmem:[#allocation5 + $0x54] sm:$0xf]
      %v5339 = vld [vmem:[#allocation5 + $0x58] sm:$0xf]
      %v5340 = vld [vmem:[#allocation5 + $0x60] sm:$0xf]
      %v5341 = vld [vmem:[#allocation5 + $0x64] sm:$0xf]
      %v5342 = vld [vmem:[#allocation5 + $0x6c] sm:$0xf]
      %v5343 = vld [vmem:[#allocation5 + $0x70] sm:$0xf]
      %v5344 = vld [vmem:[#allocation5 + $0x78] sm:$0xf]
      %v5345 = vld [vmem:[#allocation5 + $0x7c] sm:$0xf]
      %v5346 = vld [vmem:[#allocation5 + $0x84] sm:$0xf]
      %v5347 = vld [vmem:[#allocation5 + $0x88] sm:$0xf]
      %v5348 = vld [vmem:[#allocation5 + $0x90] sm:$0xf]
      %v5349 = vld [vmem:[#allocation5 + $0x94] sm:$0xf]
      %v5350 = vld [vmem:[#allocation5 + $0x9c] sm:$0xf]
      %v5351 = vld [vmem:[#allocation5 + $0xa0] sm:$0xf]
      %v5352 = vld [vmem:[#allocation5 + $0xa8] sm:$0xf]
      %v5353 = vld [vmem:[#allocation5 + $0xac] sm:$0xf]
      %v5354 = vld [vmem:[#allocation5 + $0xb4] sm:$0xf]
      %v5355 = vld [vmem:[#allocation5 + $0xb8] sm:$0xf]
      %v5356 = vld [vmem:[#allocation5 + $0xc0] sm:$0xf]
      %v5357 = vld [vmem:[#allocation5 + $0xc4] sm:$0xf]
      %v5358 = vld [vmem:[#allocation5 + $0xcc] sm:$0xf]
      %v5359 = vld [vmem:[#allocation5 + $0xd0] sm:$0xf]
      %v5360 = vld [vmem:[#allocation5 + $0x8] sm:$0x1]
      %v5361 = vld [vmem:[#allocation5 + $0x14] sm:$0x1]
      %v5362 = vld [vmem:[#allocation5 + $0x20] sm:$0x1]
      %v5363 = vld [vmem:[#allocation5 + $0x2c] sm:$0x1]
      %v5364 = vld [vmem:[#allocation5 + $0x38] sm:$0x1]
      %v5365 = vld [vmem:[#allocation5 + $0x44] sm:$0x1]
      %v5366 = vld [vmem:[#allocation5 + $0x50] sm:$0x1]
      %v5367 = vld [vmem:[#allocation5 + $0x5c] sm:$0x1]
      %v5368 = vld [vmem:[#allocation5 + $0x68] sm:$0x1]
      %v5369 = vld [vmem:[#allocation5 + $0x74] sm:$0x1]
      %v5370 = vld [vmem:[#allocation5 + $0x80] sm:$0x1]
      %v5371 = vld [vmem:[#allocation5 + $0x8c] sm:$0x1]
      %v5372 = vld [vmem:[#allocation5 + $0x98] sm:$0x1]
      %v5373 = vld [vmem:[#allocation5 + $0xa4] sm:$0x1]
      %v5374 = vld [vmem:[#allocation5 + $0xb0] sm:$0x1]
      %v5375 = vld [vmem:[#allocation5 + $0xbc] sm:$0x1]
      %v5376 = vld [vmem:[#allocation5 + $0xc8] sm:$0x1]
      %v5377 = vld [vmem:[#allocation5 + $0xd4] sm:$0x1]
      %vm5378 = vsmask.f32 3328
      %vm5379 = vsmask.f32 7440
      %vm5380 = vmor %vm5378, %vm5379
      %v5382 = vshrl.u32 %v5324, 16
      %v5384 = vrot.slane %v5382, 4
      %v5385 = vshll.u32 %v5324, 16
      %v5387 = vrot.slane %v5385, 5
      %v5388 = vor.u32 %v5384, %v5387
      %v5389 = vrot.slane %v5388, 4
      %v5391 = vshll.u32 %v5325, 16
      %v5393 = vrot.slane %v5391, 5
      %v5394 = vsel %vm5380, %v5389, %v5393
      %v5395 = vshrl.u32 %v5325, 16
      %v5397 = vrot.slane %v5395, 4
      %v5398 = vor.u32 %v5397, %v5393
      %v5399 = vrot.slane %v5398, 4
      %v5401 = vshll.u32 %v5360, 16
      %v5403 = vrot.slane %v5401, 5
      %v5404 = vsel %vm5380, %v5399, %v5403
      %v5406 = vshrl.u32 %v5326, 16
      %v5408 = vrot.slane %v5406, 4
      %v5409 = vshll.u32 %v5326, 16
      %v5411 = vrot.slane %v5409, 5
      %v5412 = vor.u32 %v5408, %v5411
      %v5413 = vrot.slane %v5412, 4
      %v5415 = vshll.u32 %v5327, 16
      %v5417 = vrot.slane %v5415, 5
      %v5418 = vsel %vm5380, %v5413, %v5417
      %v5419 = vshrl.u32 %v5327, 16
      %v5421 = vrot.slane %v5419, 4
      %v5422 = vor.u32 %v5421, %v5417
      %v5423 = vrot.slane %v5422, 4
      %v5425 = vshll.u32 %v5361, 16
      %v5427 = vrot.slane %v5425, 5
      %v5428 = vsel %vm5380, %v5423, %v5427
      %v5430 = vshrl.u32 %v5328, 16
      %v5432 = vrot.slane %v5430, 4
      %v5433 = vshll.u32 %v5328, 16
      %v5435 = vrot.slane %v5433, 5
      %v5436 = vor.u32 %v5432, %v5435
      %v5437 = vrot.slane %v5436, 4
      %v5439 = vshll.u32 %v5329, 16
      %v5441 = vrot.slane %v5439, 5
      %v5442 = vsel %vm5380, %v5437, %v5441
      %v5443 = vshrl.u32 %v5329, 16
      %v5445 = vrot.slane %v5443, 4
      %v5446 = vor.u32 %v5445, %v5441
      %v5447 = vrot.slane %v5446, 4
      %v5449 = vshll.u32 %v5362, 16
      %v5451 = vrot.slane %v5449, 5
      %v5452 = vsel %vm5380, %v5447, %v5451
      %v5454 = vshrl.u32 %v5330, 16
      %v5456 = vrot.slane %v5454, 4
      %v5457 = vshll.u32 %v5330, 16
      %v5459 = vrot.slane %v5457, 5
      %v5460 = vor.u32 %v5456, %v5459
      %v5461 = vrot.slane %v5460, 4
      %v5463 = vshll.u32 %v5331, 16
      %v5465 = vrot.slane %v5463, 5
      %v5466 = vsel %vm5380, %v5461, %v5465
      %v5467 = vshrl.u32 %v5331, 16
      %v5469 = vrot.slane %v5467, 4
      %v5470 = vor.u32 %v5469, %v5465
      %v5471 = vrot.slane %v5470, 4
      %v5473 = vshll.u32 %v5363, 16
      %v5475 = vrot.slane %v5473, 5
      %v5476 = vsel %vm5380, %v5471, %v5475
      %v5478 = vshrl.u32 %v5332, 16
      %v5480 = vrot.slane %v5478, 4
      %v5481 = vshll.u32 %v5332, 16
      %v5483 = vrot.slane %v5481, 5
      %v5484 = vor.u32 %v5480, %v5483
      %v5485 = vrot.slane %v5484, 4
      %v5487 = vshll.u32 %v5333, 16
      %v5489 = vrot.slane %v5487, 5
      %v5490 = vsel %vm5380, %v5485, %v5489
      %v5491 = vshrl.u32 %v5333, 16
      %v5493 = vrot.slane %v5491, 4
      %v5494 = vor.u32 %v5493, %v5489
      %v5495 = vrot.slane %v5494, 4
      %v5497 = vshll.u32 %v5364, 16
      %v5499 = vrot.slane %v5497, 5
      %v5500 = vsel %vm5380, %v5495, %v5499
      %v5502 = vshrl.u32 %v5334, 16
      %v5504 = vrot.slane %v5502, 4
      %v5505 = vshll.u32 %v5334, 16
      %v5507 = vrot.slane %v5505, 5
      %v5508 = vor.u32 %v5504, %v5507
      %v5509 = vrot.slane %v5508, 4
      %v5511 = vshll.u32 %v5335, 16
      %v5513 = vrot.slane %v5511, 5
      %v5514 = vsel %vm5380, %v5509, %v5513
      %v5515 = vshrl.u32 %v5335, 16
      %v5517 = vrot.slane %v5515, 4
      %v5518 = vor.u32 %v5517, %v5513
      %v5519 = vrot.slane %v5518, 4
      %v5521 = vshll.u32 %v5365, 16
      %v5523 = vrot.slane %v5521, 5
      %v5524 = vsel %vm5380, %v5519, %v5523
      %v5526 = vshrl.u32 %v5336, 16
      %v5528 = vrot.slane %v5526, 4
      %v5529 = vshll.u32 %v5336, 16
      %v5531 = vrot.slane %v5529, 5
      %v5532 = vor.u32 %v5528, %v5531
      %v5533 = vrot.slane %v5532, 4
      %v5535 = vshll.u32 %v5337, 16
      %v5537 = vrot.slane %v5535, 5
      %v5538 = vsel %vm5380, %v5533, %v5537
      %v5539 = vshrl.u32 %v5337, 16
      %v5541 = vrot.slane %v5539, 4
      %v5542 = vor.u32 %v5541, %v5537
      %v5543 = vrot.slane %v5542, 4
      %v5545 = vshll.u32 %v5366, 16
      %v5547 = vrot.slane %v5545, 5
      %v5548 = vsel %vm5380, %v5543, %v5547
      %v5550 = vshrl.u32 %v5338, 16
      %v5552 = vrot.slane %v5550, 4
      %v5553 = vshll.u32 %v5338, 16
      %v5555 = vrot.slane %v5553, 5
      %v5556 = vor.u32 %v5552, %v5555
      %v5557 = vrot.slane %v5556, 4
      %v5559 = vshll.u32 %v5339, 16
      %v5561 = vrot.slane %v5559, 5
      %v5562 = vsel %vm5380, %v5557, %v5561
      %v5563 = vshrl.u32 %v5339, 16
      %v5565 = vrot.slane %v5563, 4
      %v5566 = vor.u32 %v5565, %v5561
      %v5567 = vrot.slane %v5566, 4
      %v5569 = vshll.u32 %v5367, 16
      %v5571 = vrot.slane %v5569, 5
      %v5572 = vsel %vm5380, %v5567, %v5571
      %v5574 = vshrl.u32 %v5340, 16
      %v5576 = vrot.slane %v5574, 4
      %v5577 = vshll.u32 %v5340, 16
      %v5579 = vrot.slane %v5577, 5
      %v5580 = vor.u32 %v5576, %v5579
      %v5581 = vrot.slane %v5580, 4
      %v5583 = vshll.u32 %v5341, 16
      %v5585 = vrot.slane %v5583, 5
      %v5586 = vsel %vm5380, %v5581, %v5585
      %v5587 = vshrl.u32 %v5341, 16
      %v5589 = vrot.slane %v5587, 4
      %v5590 = vor.u32 %v5589, %v5585
      %v5591 = vrot.slane %v5590, 4
      %v5593 = vshll.u32 %v5368, 16
      %v5595 = vrot.slane %v5593, 5
      %v5596 = vsel %vm5380, %v5591, %v5595
      %v5598 = vshrl.u32 %v5342, 16
      %v5600 = vrot.slane %v5598, 4
      %v5601 = vshll.u32 %v5342, 16
      %v5603 = vrot.slane %v5601, 5
      %v5604 = vor.u32 %v5600, %v5603
      %v5605 = vrot.slane %v5604, 4
      %v5607 = vshll.u32 %v5343, 16
      %v5609 = vrot.slane %v5607, 5
      %v5610 = vsel %vm5380, %v5605, %v5609
      %v5611 = vshrl.u32 %v5343, 16
      %v5613 = vrot.slane %v5611, 4
      %v5614 = vor.u32 %v5613, %v5609
      %v5615 = vrot.slane %v5614, 4
      %v5617 = vshll.u32 %v5369, 16
      %v5619 = vrot.slane %v5617, 5
      %v5620 = vsel %vm5380, %v5615, %v5619
      %v5622 = vshrl.u32 %v5344, 16
      %v5624 = vrot.slane %v5622, 4
      %v5625 = vshll.u32 %v5344, 16
      %v5627 = vrot.slane %v5625, 5
      %v5628 = vor.u32 %v5624, %v5627
      %v5629 = vrot.slane %v5628, 4
      %v5631 = vshll.u32 %v5345, 16
      %v5633 = vrot.slane %v5631, 5
      %v5634 = vsel %vm5380, %v5629, %v5633
      %v5635 = vshrl.u32 %v5345, 16
      %v5637 = vrot.slane %v5635, 4
      %v5638 = vor.u32 %v5637, %v5633
      %v5639 = vrot.slane %v5638, 4
      %v5641 = vshll.u32 %v5370, 16
      %v5643 = vrot.slane %v5641, 5
      %v5644 = vsel %vm5380, %v5639, %v5643
      %v5646 = vshrl.u32 %v5346, 16
      %v5648 = vrot.slane %v5646, 4
      %v5649 = vshll.u32 %v5346, 16
      %v5651 = vrot.slane %v5649, 5
      %v5652 = vor.u32 %v5648, %v5651
      %v5653 = vrot.slane %v5652, 4
      %v5655 = vshll.u32 %v5347, 16
      %v5657 = vrot.slane %v5655, 5
      %v5658 = vsel %vm5380, %v5653, %v5657
      %v5659 = vshrl.u32 %v5347, 16
      %v5661 = vrot.slane %v5659, 4
      %v5662 = vor.u32 %v5661, %v5657
      %v5663 = vrot.slane %v5662, 4
      %v5665 = vshll.u32 %v5371, 16
      %v5667 = vrot.slane %v5665, 5
      %v5668 = vsel %vm5380, %v5663, %v5667
      %v5670 = vshrl.u32 %v5348, 16
      %v5672 = vrot.slane %v5670, 4
      %v5673 = vshll.u32 %v5348, 16
      %v5675 = vrot.slane %v5673, 5
      %v5676 = vor.u32 %v5672, %v5675
      %v5677 = vrot.slane %v5676, 4
      %v5679 = vshll.u32 %v5349, 16
      %v5681 = vrot.slane %v5679, 5
      %v5682 = vsel %vm5380, %v5677, %v5681
      %v5683 = vshrl.u32 %v5349, 16
      %v5685 = vrot.slane %v5683, 4
      %v5686 = vor.u32 %v5685, %v5681
      %v5687 = vrot.slane %v5686, 4
      %v5689 = vshll.u32 %v5372, 16
      %v5691 = vrot.slane %v5689, 5
      %v5692 = vsel %vm5380, %v5687, %v5691
      %v5694 = vshrl.u32 %v5350, 16
      %v5696 = vrot.slane %v5694, 4
      %v5697 = vshll.u32 %v5350, 16
      %v5699 = vrot.slane %v5697, 5
      %v5700 = vor.u32 %v5696, %v5699
      %v5701 = vrot.slane %v5700, 4
      %v5703 = vshll.u32 %v5351, 16
      %v5705 = vrot.slane %v5703, 5
      %v5706 = vsel %vm5380, %v5701, %v5705
      %v5707 = vshrl.u32 %v5351, 16
      %v5709 = vrot.slane %v5707, 4
      %v5710 = vor.u32 %v5709, %v5705
      %v5711 = vrot.slane %v5710, 4
      %v5713 = vshll.u32 %v5373, 16
      %v5715 = vrot.slane %v5713, 5
      %v5716 = vsel %vm5380, %v5711, %v5715
      %v5718 = vshrl.u32 %v5352, 16
      %v5720 = vrot.slane %v5718, 4
      %v5721 = vshll.u32 %v5352, 16
      %v5723 = vrot.slane %v5721, 5
      %v5724 = vor.u32 %v5720, %v5723
      %v5725 = vrot.slane %v5724, 4
      %v5727 = vshll.u32 %v5353, 16
      %v5729 = vrot.slane %v5727, 5
      %v5730 = vsel %vm5380, %v5725, %v5729
      %v5731 = vshrl.u32 %v5353, 16
      %v5733 = vrot.slane %v5731, 4
      %v5734 = vor.u32 %v5733, %v5729
      %v5735 = vrot.slane %v5734, 4
      %v5737 = vshll.u32 %v5374, 16
      %v5739 = vrot.slane %v5737, 5
      %v5740 = vsel %vm5380, %v5735, %v5739
      %v5742 = vshrl.u32 %v5354, 16
      %v5744 = vrot.slane %v5742, 4
      %v5745 = vshll.u32 %v5354, 16
      %v5747 = vrot.slane %v5745, 5
      %v5748 = vor.u32 %v5744, %v5747
      %v5749 = vrot.slane %v5748, 4
      %v5751 = vshll.u32 %v5355, 16
      %v5753 = vrot.slane %v5751, 5
      %v5754 = vsel %vm5380, %v5749, %v5753
      %v5755 = vshrl.u32 %v5355, 16
      %v5757 = vrot.slane %v5755, 4
      %v5758 = vor.u32 %v5757, %v5753
      %v5759 = vrot.slane %v5758, 4
      %v5761 = vshll.u32 %v5375, 16
      %v5763 = vrot.slane %v5761, 5
      %v5764 = vsel %vm5380, %v5759, %v5763
      %v5766 = vshrl.u32 %v5356, 16
      %v5768 = vrot.slane %v5766, 4
      %v5769 = vshll.u32 %v5356, 16
      %v5771 = vrot.slane %v5769, 5
      %v5772 = vor.u32 %v5768, %v5771
      %v5773 = vrot.slane %v5772, 4
      %v5775 = vshll.u32 %v5357, 16
      %v5777 = vrot.slane %v5775, 5
      %v5778 = vsel %vm5380, %v5773, %v5777
      %v5779 = vshrl.u32 %v5357, 16
      %v5781 = vrot.slane %v5779, 4
      %v5782 = vor.u32 %v5781, %v5777
      %v5783 = vrot.slane %v5782, 4
      %v5785 = vshll.u32 %v5376, 16
      %v5787 = vrot.slane %v5785, 5
      %v5788 = vsel %vm5380, %v5783, %v5787
      %v5790 = vshrl.u32 %v5358, 16
      %v5792 = vrot.slane %v5790, 4
      %v5793 = vshll.u32 %v5358, 16
      %v5795 = vrot.slane %v5793, 5
      %v5796 = vor.u32 %v5792, %v5795
      %v5797 = vrot.slane %v5796, 4
      %v5799 = vshll.u32 %v5359, 16
      %v5801 = vrot.slane %v5799, 5
      %v5802 = vsel %vm5380, %v5797, %v5801
      %v5803 = vshrl.u32 %v5359, 16
      %v5805 = vrot.slane %v5803, 4
      %v5806 = vor.u32 %v5805, %v5801
      %v5807 = vrot.slane %v5806, 4
      %v5809 = vshll.u32 %v5377, 16
      %v5811 = vrot.slane %v5809, 5
      %v5812 = vsel %vm5380, %v5807, %v5811
      %v5849 = vmax.bf16 %v5324, %v5394
      %v5850 = vmax.bf16 %v5325, %v5404
      %v5851 = vmax.bf16 %v5326, %v5418
      %v5852 = vmax.bf16 %v5327, %v5428
      %v5853 = vmax.bf16 %v5328, %v5442
      %v5854 = vmax.bf16 %v5329, %v5452
      %v5855 = vmax.bf16 %v5330, %v5466
      %v5856 = vmax.bf16 %v5331, %v5476
      %v5857 = vmax.bf16 %v5332, %v5490
      %v5858 = vmax.bf16 %v5333, %v5500
      %v5859 = vmax.bf16 %v5334, %v5514
      %v5860 = vmax.bf16 %v5335, %v5524
      %v5861 = vmax.bf16 %v5336, %v5538
      %v5862 = vmax.bf16 %v5337, %v5548
      %v5863 = vmax.bf16 %v5338, %v5562
      %v5864 = vmax.bf16 %v5339, %v5572
      %v5865 = vmax.bf16 %v5340, %v5586
      %v5866 = vmax.bf16 %v5341, %v5596
      %v5867 = vmax.bf16 %v5342, %v5610
      %v5868 = vmax.bf16 %v5343, %v5620
      %v5869 = vmax.bf16 %v5344, %v5634
      %v5870 = vmax.bf16 %v5345, %v5644
      %v5871 = vmax.bf16 %v5346, %v5658
      %v5872 = vmax.bf16 %v5347, %v5668
      %v5873 = vmax.bf16 %v5348, %v5682
      %v5874 = vmax.bf16 %v5349, %v5692
      %v5875 = vmax.bf16 %v5350, %v5706
      %v5876 = vmax.bf16 %v5351, %v5716
      %v5877 = vmax.bf16 %v5352, %v5730
      %v5878 = vmax.bf16 %v5353, %v5740
      %v5879 = vmax.bf16 %v5354, %v5754
      %v5880 = vmax.bf16 %v5355, %v5764
      %v5881 = vmax.bf16 %v5356, %v5778
      %v5882 = vmax.bf16 %v5357, %v5788
      %v5883 = vmax.bf16 %v5358, %v5802
      %v5884 = vmax.bf16 %v5359, %v5812
      %v5885 = vld [vmem:[#allocation5] sm:$0xe]
      %v5886 = vld [vmem:[#allocation5 + $0xc] sm:$0xe]
      %v5887 = vld [vmem:[#allocation5 + $0x18] sm:$0xe]
      %v5888 = vld [vmem:[#allocation5 + $0x24] sm:$0xe]
      %v5889 = vld [vmem:[#allocation5 + $0x30] sm:$0xe]
      %v5890 = vld [vmem:[#allocation5 + $0x3c] sm:$0xe]
      %v5891 = vld [vmem:[#allocation5 + $0x48] sm:$0xe]
      %v5892 = vld [vmem:[#allocation5 + $0x54] sm:$0xe]
      %v5893 = vld [vmem:[#allocation5 + $0x60] sm:$0xe]
      %v5894 = vld [vmem:[#allocation5 + $0x6c] sm:$0xe]
      %v5895 = vld [vmem:[#allocation5 + $0x78] sm:$0xe]
      %v5896 = vld [vmem:[#allocation5 + $0x84] sm:$0xe]
      %v5897 = vld [vmem:[#allocation5 + $0x90] sm:$0xe]
      %v5898 = vld [vmem:[#allocation5 + $0x9c] sm:$0xe]
      %v5899 = vld [vmem:[#allocation5 + $0xa8] sm:$0xe]
      %v5900 = vld [vmem:[#allocation5 + $0xb4] sm:$0xe]
      %v5901 = vld [vmem:[#allocation5 + $0xc0] sm:$0xe]
      %v5902 = vld [vmem:[#allocation5 + $0xcc] sm:$0xe]
      %vm5957 = vcmask 1042432
      %vm5958 = vcmask 1046532
      %vm5959 = vmor %vm5957, %vm5958
      %v5960 = vrot.slane %v5885, 5
      %v5961 = vrot.slane %v5960, 4
      %v5962 = vrot.slane %v5325, 5
      %v5963 = vsel %vm5959, %v5961, %v5962
      %v5964 = vrot.slane %v5962, 4
      %v5965 = vrot.slane %v5360, 5
      %v5966 = vsel %vm5959, %v5964, %v5965
      %v5967 = vrot.slane %v5886, 5
      %v5968 = vrot.slane %v5967, 4
      %v5969 = vrot.slane %v5327, 5
      %v5970 = vsel %vm5959, %v5968, %v5969
      %v5971 = vrot.slane %v5969, 4
      %v5972 = vrot.slane %v5361, 5
      %v5973 = vsel %vm5959, %v5971, %v5972
      %v5974 = vrot.slane %v5887, 5
      %v5975 = vrot.slane %v5974, 4
      %v5976 = vrot.slane %v5329, 5
      %v5977 = vsel %vm5959, %v5975, %v5976
      %v5978 = vrot.slane %v5976, 4
      %v5979 = vrot.slane %v5362, 5
      %v5980 = vsel %vm5959, %v5978, %v5979
      %v5981 = vrot.slane %v5888, 5
      %v5982 = vrot.slane %v5981, 4
      %v5983 = vrot.slane %v5331, 5
      %v5984 = vsel %vm5959, %v5982, %v5983
      %v5985 = vrot.slane %v5983, 4
      %v5986 = vrot.slane %v5363, 5
      %v5987 = vsel %vm5959, %v5985, %v5986
      %v5988 = vrot.slane %v5889, 5
      %v5989 = vrot.slane %v5988, 4
      %v5990 = vrot.slane %v5333, 5
      %v5991 = vsel %vm5959, %v5989, %v5990
      %v5992 = vrot.slane %v5990, 4
      %v5993 = vrot.slane %v5364, 5
      %v5994 = vsel %vm5959, %v5992, %v5993
      %v5995 = vrot.slane %v5890, 5
      %v5996 = vrot.slane %v5995, 4
      %v5997 = vrot.slane %v5335, 5
      %v5998 = vsel %vm5959, %v5996, %v5997
      %v5999 = vrot.slane %v5997, 4
      %v6000 = vrot.slane %v5365, 5
      %v6001 = vsel %vm5959, %v5999, %v6000
      %v6002 = vrot.slane %v5891, 5
      %v6003 = vrot.slane %v6002, 4
      %v6004 = vrot.slane %v5337, 5
      %v6005 = vsel %vm5959, %v6003, %v6004
      %v6006 = vrot.slane %v6004, 4
      %v6007 = vrot.slane %v5366, 5
      %v6008 = vsel %vm5959, %v6006, %v6007
      %v6009 = vrot.slane %v5892, 5
      %v6010 = vrot.slane %v6009, 4
      %v6011 = vrot.slane %v5339, 5
      %v6012 = vsel %vm5959, %v6010, %v6011
      %v6013 = vrot.slane %v6011, 4
      %v6014 = vrot.slane %v5367, 5
      %v6015 = vsel %vm5959, %v6013, %v6014
      %v6016 = vrot.slane %v5893, 5
      %v6017 = vrot.slane %v6016, 4
      %v6018 = vrot.slane %v5341, 5
      %v6019 = vsel %vm5959, %v6017, %v6018
      %v6020 = vrot.slane %v6018, 4
      %v6021 = vrot.slane %v5368, 5
      %v6022 = vsel %vm5959, %v6020, %v6021
      %v6023 = vrot.slane %v5894, 5
      %v6024 = vrot.slane %v6023, 4
      %v6025 = vrot.slane %v5343, 5
      %v6026 = vsel %vm5959, %v6024, %v6025
      %v6027 = vrot.slane %v6025, 4
      %v6028 = vrot.slane %v5369, 5
      %v6029 = vsel %vm5959, %v6027, %v6028
      %v6030 = vrot.slane %v5895, 5
      %v6031 = vrot.slane %v6030, 4
      %v6032 = vrot.slane %v5345, 5
      %v6033 = vsel %vm5959, %v6031, %v6032
      %v6034 = vrot.slane %v6032, 4
      %v6035 = vrot.slane %v5370, 5
      %v6036 = vsel %vm5959, %v6034, %v6035
      %v6037 = vrot.slane %v5896, 5
      %v6038 = vrot.slane %v6037, 4
      %v6039 = vrot.slane %v5347, 5
      %v6040 = vsel %vm5959, %v6038, %v6039
      %v6041 = vrot.slane %v6039, 4
      %v6042 = vrot.slane %v5371, 5
      %v6043 = vsel %vm5959, %v6041, %v6042
      %v6044 = vrot.slane %v5897, 5
      %v6045 = vrot.slane %v6044, 4
      %v6046 = vrot.slane %v5349, 5
      %v6047 = vsel %vm5959, %v6045, %v6046
      %v6048 = vrot.slane %v6046, 4
      %v6049 = vrot.slane %v5372, 5
      %v6050 = vsel %vm5959, %v6048, %v6049
      %v6051 = vrot.slane %v5898, 5
      %v6052 = vrot.slane %v6051, 4
      %v6053 = vrot.slane %v5351, 5
      %v6054 = vsel %vm5959, %v6052, %v6053
      %v6055 = vrot.slane %v6053, 4
      %v6056 = vrot.slane %v5373, 5
      %v6057 = vsel %vm5959, %v6055, %v6056
      %v6058 = vrot.slane %v5899, 5
      %v6059 = vrot.slane %v6058, 4
      %v6060 = vrot.slane %v5353, 5
      %v6061 = vsel %vm5959, %v6059, %v6060
      %v6062 = vrot.slane %v6060, 4
      %v6063 = vrot.slane %v5374, 5
      %v6064 = vsel %vm5959, %v6062, %v6063
      %v6065 = vrot.slane %v5900, 5
      %v6066 = vrot.slane %v6065, 4
      %v6067 = vrot.slane %v5355, 5
      %v6068 = vsel %vm5959, %v6066, %v6067
      %v6069 = vrot.slane %v6067, 4
      %v6070 = vrot.slane %v5375, 5
      %v6071 = vsel %vm5959, %v6069, %v6070
      %v6072 = vrot.slane %v5901, 5
      %v6073 = vrot.slane %v6072, 4
      %v6074 = vrot.slane %v5357, 5
      %v6075 = vsel %vm5959, %v6073, %v6074
      %v6076 = vrot.slane %v6074, 4
      %v6077 = vrot.slane %v5376, 5
      %v6078 = vsel %vm5959, %v6076, %v6077
      %v6079 = vrot.slane %v5902, 5
      %v6080 = vrot.slane %v6079, 4
      %v6081 = vrot.slane %v5359, 5
      %v6082 = vsel %vm5959, %v6080, %v6081
      %v6083 = vrot.slane %v6081, 4
      %v6084 = vrot.slane %v5377, 5
      %v6085 = vsel %vm5959, %v6083, %v6084
      %v6122 = vmax.bf16 %v5849, %v5963
      %v6123 = vmax.bf16 %v5850, %v5966
      %v6124 = vmax.bf16 %v5851, %v5970
      %v6125 = vmax.bf16 %v5852, %v5973
      %v6126 = vmax.bf16 %v5853, %v5977
      %v6127 = vmax.bf16 %v5854, %v5980
      %v6128 = vmax.bf16 %v5855, %v5984
      %v6129 = vmax.bf16 %v5856, %v5987
      %v6130 = vmax.bf16 %v5857, %v5991
      %v6131 = vmax.bf16 %v5858, %v5994
      %v6132 = vmax.bf16 %v5859, %v5998
      %v6133 = vmax.bf16 %v5860, %v6001
      %v6134 = vmax.bf16 %v5861, %v6005
      %v6135 = vmax.bf16 %v5862, %v6008
      %v6136 = vmax.bf16 %v5863, %v6012
      %v6137 = vmax.bf16 %v5864, %v6015
      %v6138 = vmax.bf16 %v5865, %v6019
      %v6139 = vmax.bf16 %v5866, %v6022
      %v6140 = vmax.bf16 %v5867, %v6026
      %v6141 = vmax.bf16 %v5868, %v6029
      %v6142 = vmax.bf16 %v5869, %v6033
      %v6143 = vmax.bf16 %v5870, %v6036
      %v6144 = vmax.bf16 %v5871, %v6040
      %v6145 = vmax.bf16 %v5872, %v6043
      %v6146 = vmax.bf16 %v5873, %v6047
      %v6147 = vmax.bf16 %v5874, %v6050
      %v6148 = vmax.bf16 %v5875, %v6054
      %v6149 = vmax.bf16 %v5876, %v6057
      %v6150 = vmax.bf16 %v5877, %v6061
      %v6151 = vmax.bf16 %v5878, %v6064
      %v6152 = vmax.bf16 %v5879, %v6068
      %v6153 = vmax.bf16 %v5880, %v6071
      %v6154 = vmax.bf16 %v5881, %v6075
      %v6155 = vmax.bf16 %v5882, %v6078
      %v6156 = vmax.bf16 %v5883, %v6082
      %v6157 = vmax.bf16 %v5884, %v6085
      %v6158 = vmax.bf16 %v6122, %v6124
      %v6159 = vmax.bf16 %v6123, %v6125
      %v6160 = vmax.bf16 %v6124, %v6126
      %v6161 = vmax.bf16 %v6125, %v6127
      %v6162 = vmax.bf16 %v6126, %v6128
      %v6163 = vmax.bf16 %v6127, %v6129
      %v6164 = vmax.bf16 %v6128, %v6130
      %v6165 = vmax.bf16 %v6129, %v6131
      %v6166 = vmax.bf16 %v6130, %v6132
      %v6167 = vmax.bf16 %v6131, %v6133
      %v6168 = vmax.bf16 %v6132, %v6134
      %v6169 = vmax.bf16 %v6133, %v6135
      %v6170 = vmax.bf16 %v6134, %v6136
      %v6171 = vmax.bf16 %v6135, %v6137
      %v6172 = vmax.bf16 %v6136, %v6138
      %v6173 = vmax.bf16 %v6137, %v6139
      %v6174 = vmax.bf16 %v6138, %v6140
      %v6175 = vmax.bf16 %v6139, %v6141
      %v6176 = vmax.bf16 %v6140, %v6142
      %v6177 = vmax.bf16 %v6141, %v6143
      %v6178 = vmax.bf16 %v6142, %v6144
      %v6179 = vmax.bf16 %v6143, %v6145
      %v6180 = vmax.bf16 %v6144, %v6146
      %v6181 = vmax.bf16 %v6145, %v6147
      %v6182 = vmax.bf16 %v6146, %v6148
      %v6183 = vmax.bf16 %v6147, %v6149
      %v6184 = vmax.bf16 %v6148, %v6150
      %v6185 = vmax.bf16 %v6149, %v6151
      %v6186 = vmax.bf16 %v6150, %v6152
      %v6187 = vmax.bf16 %v6151, %v6153
      %v6188 = vmax.bf16 %v6152, %v6154
      %v6189 = vmax.bf16 %v6153, %v6155
      %v6190 = vmax.bf16 %v6158, %v6126
      %v6191 = vmax.bf16 %v6159, %v6127
      %v6192 = vmax.bf16 %v6160, %v6128
      %v6193 = vmax.bf16 %v6161, %v6129
      %v6194 = vmax.bf16 %v6162, %v6130
      %v6195 = vmax.bf16 %v6163, %v6131
      %v6196 = vmax.bf16 %v6164, %v6132
      %v6197 = vmax.bf16 %v6165, %v6133
      %v6198 = vmax.bf16 %v6166, %v6134
      %v6199 = vmax.bf16 %v6167, %v6135
      %v6200 = vmax.bf16 %v6168, %v6136
      %v6201 = vmax.bf16 %v6169, %v6137
      %v6202 = vmax.bf16 %v6170, %v6138
      %v6203 = vmax.bf16 %v6171, %v6139
      %v6204 = vmax.bf16 %v6172, %v6140
      %v6205 = vmax.bf16 %v6173, %v6141
      %v6206 = vmax.bf16 %v6174, %v6142
      %v6207 = vmax.bf16 %v6175, %v6143
      %v6208 = vmax.bf16 %v6176, %v6144
      %v6209 = vmax.bf16 %v6177, %v6145
      %v6210 = vmax.bf16 %v6178, %v6146
      %v6211 = vmax.bf16 %v6179, %v6147
      %v6212 = vmax.bf16 %v6180, %v6148
      %v6213 = vmax.bf16 %v6181, %v6149
      %v6214 = vmax.bf16 %v6182, %v6150
      %v6215 = vmax.bf16 %v6183, %v6151
      %v6216 = vmax.bf16 %v6184, %v6152
      %v6217 = vmax.bf16 %v6185, %v6153
      %v6218 = vmax.bf16 %v6186, %v6154
      %v6219 = vmax.bf16 %v6187, %v6155
      %v6220 = vmax.bf16 %v6188, %v6156
      %v6221 = vmax.bf16 %v6189, %v6157
      %v6222 = vld [vmem:[%s5] sm:$0xf]
      %v6255 = vunpack.c.l.b16 %v6190
      %v6256 = vunpack.c.l.b16 %v6191
      %v6257 = vunpack.c.l.b16 %v6192
      %v6258 = vunpack.c.l.b16 %v6193
      %v6259 = vunpack.c.l.b16 %v6194
      %v6260 = vunpack.c.l.b16 %v6195
      %v6261 = vunpack.c.l.b16 %v6196
      %v6262 = vunpack.c.l.b16 %v6197
      %v6263 = vunpack.c.l.b16 %v6198
      %v6264 = vunpack.c.l.b16 %v6199
      %v6265 = vunpack.c.l.b16 %v6200
      %v6266 = vunpack.c.l.b16 %v6201
      %v6267 = vunpack.c.l.b16 %v6202
      %v6268 = vunpack.c.l.b16 %v6203
      %v6269 = vunpack.c.l.b16 %v6204
      %v6270 = vunpack.c.l.b16 %v6205
      %v6271 = vunpack.c.l.b16 %v6206
      %v6272 = vunpack.c.l.b16 %v6207
      %v6273 = vunpack.c.l.b16 %v6208
      %v6274 = vunpack.c.l.b16 %v6209
      %v6275 = vunpack.c.l.b16 %v6210
      %v6276 = vunpack.c.l.b16 %v6211
      %v6277 = vunpack.c.l.b16 %v6212
      %v6278 = vunpack.c.l.b16 %v6213
      %v6279 = vunpack.c.l.b16 %v6214
      %v6280 = vunpack.c.l.b16 %v6215
      %v6281 = vunpack.c.l.b16 %v6216
      %v6282 = vunpack.c.l.b16 %v6217
      %v6283 = vunpack.c.l.b16 %v6218
      %v6284 = vunpack.c.l.b16 %v6219
      %v6285 = vunpack.c.l.b16 %v6220
      %v6286 = vunpack.c.l.b16 %v6221
      %v6287 = vpack.c.b16 %v6256, %v6255
      %v6288 = vpack.c.b16 %v6258, %v6257
      %v6289 = vpack.c.b16 %v6260, %v6259
      %v6290 = vpack.c.b16 %v6262, %v6261
      %v6291 = vpack.c.b16 %v6264, %v6263
      %v6292 = vpack.c.b16 %v6266, %v6265
      %v6293 = vpack.c.b16 %v6268, %v6267
      %v6294 = vpack.c.b16 %v6270, %v6269
      %v6295 = vpack.c.b16 %v6272, %v6271
      %v6296 = vpack.c.b16 %v6274, %v6273
      %v6297 = vpack.c.b16 %v6276, %v6275
      %v6298 = vpack.c.b16 %v6278, %v6277
      %v6299 = vpack.c.b16 %v6280, %v6279
      %v6300 = vpack.c.b16 %v6282, %v6281
      %v6301 = vpack.c.b16 %v6284, %v6283
      %v6302 = vpack.c.b16 %v6286, %v6285
      %v6304 = vsel %vm854, %v6287, 0
      %v6307 = vsel %vm854, %v6288, 0
      %v6310 = vsel %vm854, %v6289, 0
      %v6313 = vsel %vm854, %v6290, 0
      %v6316 = vsel %vm854, %v6291, 0
      %v6319 = vsel %vm854, %v6292, 0
      %v6322 = vsel %vm854, %v6293, 0
      %v6325 = vsel %vm854, %v6294, 0
      %v6328 = vsel %vm854, %v6295, 0
      %v6331 = vsel %vm854, %v6296, 0
      %v6334 = vsel %vm854, %v6297, 0
      %v6337 = vsel %vm854, %v6298, 0
      %v6340 = vsel %vm854, %v6299, 0
      %v6343 = vsel %vm854, %v6300, 0
      %v6346 = vsel %vm854, %v6301, 0
      %v6349 = vsel %vm854, %v6302, 0
      %v6352 = vsel %vm903, %v6222, 0
      %6354 = vmatprep.subr.bf16.mxu0 0
      %6355 = vmatpush1.bf16.msra.mxu0 %v6352
      %6356 = vmatprep.subr.bf16.mxu0 0
      %6357 = vmatpush1.bf16.msra.mxu0 0
      %6358 = vmatprep.subr.bf16.mxu0 0
      %6359 = vmatpush1.bf16.msra.mxu0 0
      %6360 = vmatprep.subr.bf16.mxu0 0
      %6361 = vmatpush1.bf16.msra.mxu0 0
      %6362 = vmatprep.subr.bf16.mxu0 0
      %6363 = vmatpush1.bf16.msra.mxu0 0
      %6364 = vmatprep.subr.bf16.mxu0 0
      %6365 = vmatpush1.bf16.msra.mxu0 0
      %6366 = vmatprep.subr.bf16.mxu0 0
      %6367 = vmatpush1.bf16.msra.mxu0 0
      %6368 = vmatprep.subr.bf16.mxu0 0
      %6369 = vmatpush1.bf16.msra.mxu0 0
      %6370 = vmatprep.subr.bf16.mxu0 0
      %6371 = vmatpush1.bf16.msra.mxu0 0
      %6372 = vmatprep.subr.bf16.mxu0 0
      %6373 = vmatpush1.bf16.msra.mxu0 0
      %6374 = vmatprep.subr.bf16.mxu0 0
      %6375 = vmatpush1.bf16.msra.mxu0 0
      %6376 = vmatprep.subr.bf16.mxu0 0
      %6377 = vmatpush1.bf16.msra.mxu0 0
      %6378 = vmatprep.subr.bf16.mxu0 0
      %6379 = vmatpush1.bf16.msra.mxu0 0
      %6380 = vmatprep.subr.bf16.mxu0 0
      %6381 = vmatpush1.bf16.msra.mxu0 0
      %6382 = vmatprep.subr.bf16.mxu0 0
      %6383 = vmatpush1.bf16.msra.mxu0 0
      %6384 = vmatprep.subr.bf16.mxu0 0
      %6385 = vmatpush1.bf16.msra.mxu0 0
      %6386 = vmatprep.mubr.bf16.mxu0 0
      %6387 = vmatmul.mubr.bf16.gmra.mrb[0].mxu0 %v6304
      %v6388 = vpop.f32.mrb[0].mxu0
      %v6389 = vadd.f32 0.0, %v6388
      %v6390 = vpop.f32.mrb[0].mxu0
      %v6391 = vpop.f32.mrb[0].mxu0
      %v6392 = vadd.f32 0.0, %v6391
      %v6393 = vpop.f32.mrb[0].mxu0
      %6394 = vmatprep.mubr.bf16.mxu0 0
      %6395 = vmatmul.mubr.bf16.gmra.mrb[0].mxu0 %v6307
      %v6396 = vpop.f32.mrb[0].mxu0
      %v6397 = vadd.f32 0.0, %v6396
      %v6398 = vpop.f32.mrb[0].mxu0
      %v6399 = vpop.f32.mrb[0].mxu0
      %v6400 = vadd.f32 0.0, %v6399
      %v6401 = vpop.f32.mrb[0].mxu0
      %6402 = vmatprep.mubr.bf16.mxu0 0
      %6403 = vmatmul.mubr.bf16.gmra.mrb[0].mxu0 %v6310
      %v6404 = vpop.f32.mrb[0].mxu0
      %v6405 = vadd.f32 0.0, %v6404
      %v6406 = vpop.f32.mrb[0].mxu0
      %v6407 = vpop.f32.mrb[0].mxu0
      %v6408 = vadd.f32 0.0, %v6407
      %v6409 = vpop.f32.mrb[0].mxu0
      %6410 = vmatprep.mubr.bf16.mxu0 0
      %6411 = vmatmul.mubr.bf16.gmra.mrb[0].mxu0 %v6313
      %v6412 = vpop.f32.mrb[0].mxu0
      %v6413 = vadd.f32 0.0, %v6412
      %v6414 = vpop.f32.mrb[0].mxu0
      %v6415 = vpop.f32.mrb[0].mxu0
      %v6416 = vadd.f32 0.0, %v6415
      %v6417 = vpop.f32.mrb[0].mxu0
      %6418 = vmatprep.mubr.bf16.mxu0 0
      %6419 = vmatmul.mubr.bf16.gmra.mrb[0].mxu0 %v6316
      %v6420 = vpop.f32.mrb[0].mxu0
      %v6421 = vadd.f32 0.0, %v6420
      %v6422 = vpop.f32.mrb[0].mxu0
      %v6423 = vpop.f32.mrb[0].mxu0
      %v6424 = vadd.f32 0.0, %v6423
      %v6425 = vpop.f32.mrb[0].mxu0
      %6426 = vmatprep.mubr.bf16.mxu0 0
      %6427 = vmatmul.mubr.bf16.gmra.mrb[0].mxu0 %v6319
      %v6428 = vpop.f32.mrb[0].mxu0
      %v6429 = vadd.f32 0.0, %v6428
      %v6430 = vpop.f32.mrb[0].mxu0
      %v6431 = vpop.f32.mrb[0].mxu0
      %v6432 = vadd.f32 0.0, %v6431
      %v6433 = vpop.f32.mrb[0].mxu0
      %6434 = vmatprep.mubr.bf16.mxu0 0
      %6435 = vmatmul.mubr.bf16.gmra.mrb[0].mxu0 %v6322
      %v6436 = vpop.f32.mrb[0].mxu0
      %v6437 = vadd.f32 0.0, %v6436
      %v6438 = vpop.f32.mrb[0].mxu0
      %v6439 = vpop.f32.mrb[0].mxu0
      %v6440 = vadd.f32 0.0, %v6439
      %v6441 = vpop.f32.mrb[0].mxu0
      %6442 = vmatprep.mubr.bf16.mxu0 0
      %6443 = vmatmul.mubr.bf16.gmra.mrb[0].mxu0 %v6325
      %v6444 = vpop.f32.mrb[0].mxu0
      %v6445 = vadd.f32 0.0, %v6444
      %v6446 = vpop.f32.mrb[0].mxu0
      %v6447 = vpop.f32.mrb[0].mxu0
      %v6448 = vadd.f32 0.0, %v6447
      %v6449 = vpop.f32.mrb[0].mxu0
      %6450 = vmatprep.mubr.bf16.mxu0 0
      %6451 = vmatmul.mubr.bf16.gmra.mrb[0].mxu0 %v6328
      %v6452 = vpop.f32.mrb[0].mxu0
      %v6453 = vadd.f32 0.0, %v6452
      %v6454 = vpop.f32.mrb[0].mxu0
      %v6455 = vpop.f32.mrb[0].mxu0
      %v6456 = vadd.f32 0.0, %v6455
      %v6457 = vpop.f32.mrb[0].mxu0
      %6458 = vmatprep.mubr.bf16.mxu0 0
      %6459 = vmatmul.mubr.bf16.gmra.mrb[0].mxu0 %v6331
      %v6460 = vpop.f32.mrb[0].mxu0
      %v6461 = vadd.f32 0.0, %v6460
      %v6462 = vpop.f32.mrb[0].mxu0
      %v6463 = vpop.f32.mrb[0].mxu0
      %v6464 = vadd.f32 0.0, %v6463
      %v6465 = vpop.f32.mrb[0].mxu0
      %6466 = vmatprep.mubr.bf16.mxu0 0
      %6467 = vmatmul.mubr.bf16.gmra.mrb[0].mxu0 %v6334
      %v6468 = vpop.f32.mrb[0].mxu0
      %v6469 = vadd.f32 0.0, %v6468
      %v6470 = vpop.f32.mrb[0].mxu0
      %v6471 = vpop.f32.mrb[0].mxu0
      %v6472 = vadd.f32 0.0, %v6471
      %v6473 = vpop.f32.mrb[0].mxu0
      %6474 = vmatprep.mubr.bf16.mxu0 0
      %6475 = vmatmul.mubr.bf16.gmra.mrb[0].mxu0 %v6337
      %v6476 = vpop.f32.mrb[0].mxu0
      %v6477 = vadd.f32 0.0, %v6476
      %v6478 = vpop.f32.mrb[0].mxu0
      %v6479 = vpop.f32.mrb[0].mxu0
      %v6480 = vadd.f32 0.0, %v6479
      %v6481 = vpop.f32.mrb[0].mxu0
      %6482 = vmatprep.mubr.bf16.mxu0 0
      %6483 = vmatmul.mubr.bf16.gmra.mrb[0].mxu0 %v6340
      %v6484 = vpop.f32.mrb[0].mxu0
      %v6485 = vadd.f32 0.0, %v6484
      %v6486 = vpop.f32.mrb[0].mxu0
      %v6487 = vpop.f32.mrb[0].mxu0
      %v6488 = vadd.f32 0.0, %v6487
      %v6489 = vpop.f32.mrb[0].mxu0
      %6490 = vmatprep.mubr.bf16.mxu0 0
      %6491 = vmatmul.mubr.bf16.gmra.mrb[0].mxu0 %v6343
      %v6492 = vpop.f32.mrb[0].mxu0
      %v6493 = vadd.f32 0.0, %v6492
      %v6494 = vpop.f32.mrb[0].mxu0
      %v6495 = vpop.f32.mrb[0].mxu0
      %v6496 = vadd.f32 0.0, %v6495
      %v6497 = vpop.f32.mrb[0].mxu0
      %6498 = vmatprep.mubr.bf16.mxu0 0
      %6499 = vmatmul.mubr.bf16.gmra.mrb[0].mxu0 %v6346
      %v6500 = vpop.f32.mrb[0].mxu0
      %v6501 = vadd.f32 0.0, %v6500
      %v6502 = vpop.f32.mrb[0].mxu0
      %v6503 = vpop.f32.mrb[0].mxu0
      %v6504 = vadd.f32 0.0, %v6503
      %v6505 = vpop.f32.mrb[0].mxu0
      %6506 = vmatprep.mubr.bf16.mxu0 0
      %6507 = vmatmul.mubr.bf16.gmra.mrb[0].mxu0 %v6349
      %v6508 = vpop.f32.mrb[0].mxu0
      %v6509 = vadd.f32 0.0, %v6508
      %v6510 = vpop.f32.mrb[0].mxu0
      %v6511 = vpop.f32.mrb[0].mxu0
      %v6512 = vadd.f32 0.0, %v6511
      %v6513 = vpop.f32.mrb[0].mxu0
      %6514 = vdwg.mxu0
      %s6563 = scalar_lea.vmem [#allocation2], 12
      %vm6564 = vcmask 519168
      %vm6565 = vmand %vm6564, %vm320
      %v6566 = vld [vmem:[%s6563] sm:$0xf]
      %v6567 = vsel %vm6565, %v1207, %v6566
      %6568 = vst [vmem:[%s6563] sm:$0xf] %v6567
      %6569 = vst.msk [vmem:[%s6563 + $0x4] sm:$0xf] %vm254, %v1216
      %v6570 = vld [vmem:[%s6563 + $0x8] sm:$0x1]
      %v6571 = vsel %vm265, %v1217, %v6570
      %6572 = vst [vmem:[%s6563 + $0x8] sm:$0x1] %v6571
      %v6573 = vld [vmem:[%s6563 + $0xc] sm:$0xf]
      %v6574 = vsel %vm6565, %v1224, %v6573
      %6575 = vst [vmem:[%s6563 + $0xc] sm:$0xf] %v6574
      %6576 = vst.msk [vmem:[%s6563 + $0x10] sm:$0xf] %vm254, %v1233
      %v6577 = vld [vmem:[%s6563 + $0x14] sm:$0x1]
      %v6578 = vsel %vm265, %v1234, %v6577
      %6579 = vst [vmem:[%s6563 + $0x14] sm:$0x1] %v6578
      %v6580 = vld [vmem:[%s6563 + $0x18] sm:$0xf]
      %v6581 = vsel %vm6565, %v1241, %v6580
      %6582 = vst [vmem:[%s6563 + $0x18] sm:$0xf] %v6581
      %6583 = vst.msk [vmem:[%s6563 + $0x1c] sm:$0xf] %vm254, %v1250
      %v6584 = vld [vmem:[%s6563 + $0x20] sm:$0x1]
      %v6585 = vsel %vm265, %v1251, %v6584
      %6586 = vst [vmem:[%s6563 + $0x20] sm:$0x1] %v6585
      %v6587 = vld [vmem:[%s6563 + $0x24] sm:$0xf]
      %v6588 = vsel %vm6565, %v1258, %v6587
      %6589 = vst [vmem:[%s6563 + $0x24] sm:$0xf] %v6588
      %6590 = vst.msk [vmem:[%s6563 + $0x28] sm:$0xf] %vm254, %v1267
      %v6591 = vld [vmem:[%s6563 + $0x2c] sm:$0x1]
      %v6592 = vsel %vm265, %v1268, %v6591
      %6593 = vst [vmem:[%s6563 + $0x2c] sm:$0x1] %v6592
      %v6594 = vld [vmem:[%s6563 + $0x30] sm:$0xf]
      %v6595 = vsel %vm6565, %v1275, %v6594
      %6596 = vst [vmem:[%s6563 + $0x30] sm:$0xf] %v6595
      %6597 = vst.msk [vmem:[%s6563 + $0x34] sm:$0xf] %vm254, %v1284
      %v6598 = vld [vmem:[%s6563 + $0x38] sm:$0x1]
      %v6599 = vsel %vm265, %v1285, %v6598
      %6600 = vst [vmem:[%s6563 + $0x38] sm:$0x1] %v6599
      %v6601 = vld [vmem:[%s6563 + $0x3c] sm:$0xf]
      %v6602 = vsel %vm6565, %v1292, %v6601
      %6603 = vst [vmem:[%s6563 + $0x3c] sm:$0xf] %v6602
      %6604 = vst.msk [vmem:[%s6563 + $0x40] sm:$0xf] %vm254, %v1301
      %v6605 = vld [vmem:[%s6563 + $0x44] sm:$0x1]
      %v6606 = vsel %vm265, %v1302, %v6605
      %6607 = vst [vmem:[%s6563 + $0x44] sm:$0x1] %v6606
      %v6608 = vld [vmem:[%s6563 + $0x48] sm:$0xf]
      %v6609 = vsel %vm6565, %v1309, %v6608
      %6610 = vst [vmem:[%s6563 + $0x48] sm:$0xf] %v6609
      %6611 = vst.msk [vmem:[%s6563 + $0x4c] sm:$0xf] %vm254, %v1318
      %v6612 = vld [vmem:[%s6563 + $0x50] sm:$0x1]
      %v6613 = vsel %vm265, %v1319, %v6612
      %6614 = vst [vmem:[%s6563 + $0x50] sm:$0x1] %v6613
      %v6615 = vld [vmem:[%s6563 + $0x54] sm:$0xf]
      %v6616 = vsel %vm6565, %v1326, %v6615
      %6617 = vst [vmem:[%s6563 + $0x54] sm:$0xf] %v6616
      %6618 = vst.msk [vmem:[%s6563 + $0x58] sm:$0xf] %vm254, %v1335
      %v6619 = vld [vmem:[%s6563 + $0x5c] sm:$0x1]
      %v6620 = vsel %vm265, %v1336, %v6619
      %6621 = vst [vmem:[%s6563 + $0x5c] sm:$0x1] %v6620
      %v6622 = vld [vmem:[%s6563 + $0x60] sm:$0xf]
      %v6623 = vsel %vm6565, %v1343, %v6622
      %6624 = vst [vmem:[%s6563 + $0x60] sm:$0xf] %v6623
      %6625 = vst.msk [vmem:[%s6563 + $0x64] sm:$0xf] %vm254, %v1352
      %v6626 = vld [vmem:[%s6563 + $0x68] sm:$0x1]
      %v6627 = vsel %vm265, %v1353, %v6626
      %6628 = vst [vmem:[%s6563 + $0x68] sm:$0x1] %v6627
      %v6629 = vld [vmem:[%s6563 + $0x6c] sm:$0xf]
      %v6630 = vsel %vm6565, %v1360, %v6629
      %6631 = vst [vmem:[%s6563 + $0x6c] sm:$0xf] %v6630
      %6632 = vst.msk [vmem:[%s6563 + $0x70] sm:$0xf] %vm254, %v1369
      %v6633 = vld [vmem:[%s6563 + $0x74] sm:$0x1]
      %v6634 = vsel %vm265, %v1370, %v6633
      %6635 = vst [vmem:[%s6563 + $0x74] sm:$0x1] %v6634
      %v6636 = vld [vmem:[%s6563 + $0x78] sm:$0xf]
      %v6637 = vsel %vm6565, %v1377, %v6636
      %6638 = vst [vmem:[%s6563 + $0x78] sm:$0xf] %v6637
      %6639 = vst.msk [vmem:[%s6563 + $0x7c] sm:$0xf] %vm254, %v1386
      %v6640 = vld [vmem:[%s6563 + $0x80] sm:$0x1]
      %v6641 = vsel %vm265, %v1387, %v6640
      %6642 = vst [vmem:[%s6563 + $0x80] sm:$0x1] %v6641
      %v6643 = vld [vmem:[%s6563 + $0x84] sm:$0xf]
      %v6644 = vsel %vm6565, %v1394, %v6643
      %6645 = vst [vmem:[%s6563 + $0x84] sm:$0xf] %v6644
      %6646 = vst.msk [vmem:[%s6563 + $0x88] sm:$0xf] %vm254, %v1403
      %v6647 = vld [vmem:[%s6563 + $0x8c] sm:$0x1]
      %v6648 = vsel %vm265, %v1404, %v6647
      %6649 = vst [vmem:[%s6563 + $0x8c] sm:$0x1] %v6648
      %v6650 = vld [vmem:[%s6563 + $0x90] sm:$0xf]
      %v6651 = vsel %vm6565, %v1411, %v6650
      %6652 = vst [vmem:[%s6563 + $0x90] sm:$0xf] %v6651
      %6653 = vst.msk [vmem:[%s6563 + $0x94] sm:$0xf] %vm254, %v1420
      %v6654 = vld [vmem:[%s6563 + $0x98] sm:$0x1]
      %v6655 = vsel %vm265, %v1421, %v6654
      %6656 = vst [vmem:[%s6563 + $0x98] sm:$0x1] %v6655
      %v6657 = vld [vmem:[%s6563 + $0x9c] sm:$0xf]
      %v6658 = vsel %vm6565, %v1428, %v6657
      %6659 = vst [vmem:[%s6563 + $0x9c] sm:$0xf] %v6658
      %6660 = vst.msk [vmem:[%s6563 + $0xa0] sm:$0xf] %vm254, %v1437
      %v6661 = vld [vmem:[%s6563 + $0xa4] sm:$0x1]
      %v6662 = vsel %vm265, %v1438, %v6661
      %6663 = vst [vmem:[%s6563 + $0xa4] sm:$0x1] %v6662
      %v6664 = vld [vmem:[%s6563 + $0xa8] sm:$0xf]
      %v6665 = vsel %vm6565, %v1445, %v6664
      %6666 = vst [vmem:[%s6563 + $0xa8] sm:$0xf] %v6665
      %6667 = vst.msk [vmem:[%s6563 + $0xac] sm:$0xf] %vm254, %v1454
      %v6668 = vld [vmem:[%s6563 + $0xb0] sm:$0x1]
      %v6669 = vsel %vm265, %v1455, %v6668
      %6670 = vst [vmem:[%s6563 + $0xb0] sm:$0x1] %v6669
      %v6671 = vld [vmem:[%s6563 + $0xb4] sm:$0xf]
      %v6672 = vsel %vm6565, %v1462, %v6671
      %6673 = vst [vmem:[%s6563 + $0xb4] sm:$0xf] %v6672
      %6674 = vst.msk [vmem:[%s6563 + $0xb8] sm:$0xf] %vm254, %v1471
      %v6675 = vld [vmem:[%s6563 + $0xbc] sm:$0x1]
      %v6676 = vsel %vm265, %v1472, %v6675
      %6677 = vst [vmem:[%s6563 + $0xbc] sm:$0x1] %v6676
      %v6678 = vld [vmem:[#allocation2] sm:$0xf]
      %v6679 = vld [vmem:[#allocation2 + $0x4] sm:$0xf]
      %v6680 = vld [vmem:[#allocation2 + $0xc] sm:$0xf]
      %v6681 = vld [vmem:[#allocation2 + $0x10] sm:$0xf]
      %v6682 = vld [vmem:[#allocation2 + $0x18] sm:$0xf]
      %v6683 = vld [vmem:[#allocation2 + $0x1c] sm:$0xf]
      %v6684 = vld [vmem:[#allocation2 + $0x24] sm:$0xf]
      %v6685 = vld [vmem:[#allocation2 + $0x28] sm:$0xf]
      %v6686 = vld [vmem:[#allocation2 + $0x30] sm:$0xf]
      %v6687 = vld [vmem:[#allocation2 + $0x34] sm:$0xf]
      %v6688 = vld [vmem:[#allocation2 + $0x3c] sm:$0xf]
      %v6689 = vld [vmem:[#allocation2 + $0x40] sm:$0xf]
      %v6690 = vld [vmem:[#allocation2 + $0x48] sm:$0xf]
      %v6691 = vld [vmem:[#allocation2 + $0x4c] sm:$0xf]
      %v6692 = vld [vmem:[#allocation2 + $0x54] sm:$0xf]
      %v6693 = vld [vmem:[#allocation2 + $0x58] sm:$0xf]
      %v6694 = vld [vmem:[#allocation2 + $0x60] sm:$0xf]
      %v6695 = vld [vmem:[#allocation2 + $0x64] sm:$0xf]
      %v6696 = vld [vmem:[#allocation2 + $0x6c] sm:$0xf]
      %v6697 = vld [vmem:[#allocation2 + $0x70] sm:$0xf]
      %v6698 = vld [vmem:[#allocation2 + $0x78] sm:$0xf]
      %v6699 = vld [vmem:[#allocation2 + $0x7c] sm:$0xf]
      %v6700 = vld [vmem:[#allocation2 + $0x84] sm:$0xf]
      %v6701 = vld [vmem:[#allocation2 + $0x88] sm:$0xf]
      %v6702 = vld [vmem:[#allocation2 + $0x90] sm:$0xf]
      %v6703 = vld [vmem:[#allocation2 + $0x94] sm:$0xf]
      %v6704 = vld [vmem:[#allocation2 + $0x9c] sm:$0xf]
      %v6705 = vld [vmem:[#allocation2 + $0xa0] sm:$0xf]
      %v6706 = vld [vmem:[#allocation2 + $0xa8] sm:$0xf]
      %v6707 = vld [vmem:[#allocation2 + $0xac] sm:$0xf]
      %v6708 = vld [vmem:[#allocation2 + $0xb4] sm:$0xf]
      %v6709 = vld [vmem:[#allocation2 + $0xb8] sm:$0xf]
      %v6710 = vld [vmem:[#allocation2 + $0x8] sm:$0x1]
      %v6711 = vld [vmem:[#allocation2 + $0x14] sm:$0x1]
      %v6712 = vld [vmem:[#allocation2 + $0x20] sm:$0x1]
      %v6713 = vld [vmem:[#allocation2 + $0x2c] sm:$0x1]
      %v6714 = vld [vmem:[#allocation2 + $0x38] sm:$0x1]
      %v6715 = vld [vmem:[#allocation2 + $0x44] sm:$0x1]
      %v6716 = vld [vmem:[#allocation2 + $0x50] sm:$0x1]
      %v6717 = vld [vmem:[#allocation2 + $0x5c] sm:$0x1]
      %v6718 = vld [vmem:[#allocation2 + $0x68] sm:$0x1]
      %v6719 = vld [vmem:[#allocation2 + $0x74] sm:$0x1]
      %v6720 = vld [vmem:[#allocation2 + $0x80] sm:$0x1]
      %v6721 = vld [vmem:[#allocation2 + $0x8c] sm:$0x1]
      %v6722 = vld [vmem:[#allocation2 + $0x98] sm:$0x1]
      %v6723 = vld [vmem:[#allocation2 + $0xa4] sm:$0x1]
      %v6724 = vld [vmem:[#allocation2 + $0xb0] sm:$0x1]
      %v6725 = vld [vmem:[#allocation2 + $0xbc] sm:$0x1]
      %v6726 = vld [vmem:[#allocation2] sm:$0xe]
      %v6727 = vld [vmem:[#allocation2 + $0xc] sm:$0xe]
      %v6728 = vld [vmem:[#allocation2 + $0x18] sm:$0xe]
      %v6729 = vld [vmem:[#allocation2 + $0x24] sm:$0xe]
      %v6730 = vld [vmem:[#allocation2 + $0x30] sm:$0xe]
      %v6731 = vld [vmem:[#allocation2 + $0x3c] sm:$0xe]
      %v6732 = vld [vmem:[#allocation2 + $0x48] sm:$0xe]
      %v6733 = vld [vmem:[#allocation2 + $0x54] sm:$0xe]
      %v6734 = vld [vmem:[#allocation2 + $0x60] sm:$0xe]
      %v6735 = vld [vmem:[#allocation2 + $0x6c] sm:$0xe]
      %v6736 = vld [vmem:[#allocation2 + $0x78] sm:$0xe]
      %v6737 = vld [vmem:[#allocation2 + $0x84] sm:$0xe]
      %v6738 = vld [vmem:[#allocation2 + $0x90] sm:$0xe]
      %v6739 = vld [vmem:[#allocation2 + $0x9c] sm:$0xe]
      %v6740 = vld [vmem:[#allocation2 + $0xa8] sm:$0xe]
      %v6741 = vld [vmem:[#allocation2 + $0xb4] sm:$0xe]
      %v6774 = vunpack.c.l.b16 %v6678
      %v6775 = vunpack.c.l.b16 %v6679
      %v6776 = vunpack.c.l.b16 %v6680
      %v6777 = vunpack.c.l.b16 %v6681
      %v6778 = vunpack.c.l.b16 %v6682
      %v6779 = vunpack.c.l.b16 %v6683
      %v6780 = vunpack.c.l.b16 %v6684
      %v6781 = vunpack.c.l.b16 %v6685
      %v6782 = vunpack.c.l.b16 %v6686
      %v6783 = vunpack.c.l.b16 %v6687
      %v6784 = vunpack.c.l.b16 %v6688
      %v6785 = vunpack.c.l.b16 %v6689
      %v6786 = vunpack.c.l.b16 %v6690
      %v6787 = vunpack.c.l.b16 %v6691
      %v6788 = vunpack.c.l.b16 %v6692
      %v6789 = vunpack.c.l.b16 %v6693
      %v6790 = vunpack.c.l.b16 %v6694
      %v6791 = vunpack.c.l.b16 %v6695
      %v6792 = vunpack.c.l.b16 %v6696
      %v6793 = vunpack.c.l.b16 %v6697
      %v6794 = vunpack.c.l.b16 %v6698
      %v6795 = vunpack.c.l.b16 %v6699
      %v6796 = vunpack.c.l.b16 %v6700
      %v6797 = vunpack.c.l.b16 %v6701
      %v6798 = vunpack.c.l.b16 %v6702
      %v6799 = vunpack.c.l.b16 %v6703
      %v6800 = vunpack.c.l.b16 %v6704
      %v6801 = vunpack.c.l.b16 %v6705
      %v6802 = vunpack.c.l.b16 %v6706
      %v6803 = vunpack.c.l.b16 %v6707
      %v6804 = vunpack.c.l.b16 %v6708
      %v6805 = vunpack.c.l.b16 %v6709
      %v6806 = vpack.c.b16 %v6775, %v6774
      %v6807 = vpack.c.b16 %v6777, %v6776
      %v6808 = vpack.c.b16 %v6779, %v6778
      %v6809 = vpack.c.b16 %v6781, %v6780
      %v6810 = vpack.c.b16 %v6783, %v6782
      %v6811 = vpack.c.b16 %v6785, %v6784
      %v6812 = vpack.c.b16 %v6787, %v6786
      %v6813 = vpack.c.b16 %v6789, %v6788
      %v6814 = vpack.c.b16 %v6791, %v6790
      %v6815 = vpack.c.b16 %v6793, %v6792
      %v6816 = vpack.c.b16 %v6795, %v6794
      %v6817 = vpack.c.b16 %v6797, %v6796
      %v6818 = vpack.c.b16 %v6799, %v6798
      %v6819 = vpack.c.b16 %v6801, %v6800
      %v6820 = vpack.c.b16 %v6803, %v6802
      %v6821 = vpack.c.b16 %v6805, %v6804
      %v6838 = vunpack.c.l.b16 %v6710
      %v6839 = vunpack.c.l.b16 %v6711
      %v6840 = vunpack.c.l.b16 %v6712
      %v6841 = vunpack.c.l.b16 %v6713
      %v6842 = vunpack.c.l.b16 %v6714
      %v6843 = vunpack.c.l.b16 %v6715
      %v6844 = vunpack.c.l.b16 %v6716
      %v6845 = vunpack.c.l.b16 %v6717
      %v6846 = vunpack.c.l.b16 %v6718
      %v6847 = vunpack.c.l.b16 %v6719
      %v6848 = vunpack.c.l.b16 %v6720
      %v6849 = vunpack.c.l.b16 %v6721
      %v6850 = vunpack.c.l.b16 %v6722
      %v6851 = vunpack.c.l.b16 %v6723
      %v6852 = vunpack.c.l.b16 %v6724
      %v6853 = vunpack.c.l.b16 %v6725
      %v6854 = vpack.c.b16 %v6838, %v6838
      %v6855 = vpack.c.b16 %v6839, %v6839
      %v6856 = vpack.c.b16 %v6840, %v6840
      %v6857 = vpack.c.b16 %v6841, %v6841
      %v6858 = vpack.c.b16 %v6842, %v6842
      %v6859 = vpack.c.b16 %v6843, %v6843
      %v6860 = vpack.c.b16 %v6844, %v6844
      %v6861 = vpack.c.b16 %v6845, %v6845
      %v6862 = vpack.c.b16 %v6846, %v6846
      %v6863 = vpack.c.b16 %v6847, %v6847
      %v6864 = vpack.c.b16 %v6848, %v6848
      %v6865 = vpack.c.b16 %v6849, %v6849
      %v6866 = vpack.c.b16 %v6850, %v6850
      %v6867 = vpack.c.b16 %v6851, %v6851
      %v6868 = vpack.c.b16 %v6852, %v6852
      %v6869 = vpack.c.b16 %v6853, %v6853
      %v6871 = vshrl.u32 %v6806, 16
      %v6873 = vshll.u32 %v6806, 16
      %v6875 = vrot.slane %v6873, 1
      %v6876 = vor.u32 %v6871, %v6875
      %v6878 = vshll.u32 %v6854, 16
      %v6880 = vrot.slane %v6878, 1
      %v6881 = vsel %vm1924, %v6876, %v6880
      %v6883 = vshrl.u32 %v6807, 16
      %v6885 = vshll.u32 %v6807, 16
      %v6887 = vrot.slane %v6885, 1
      %v6888 = vor.u32 %v6883, %v6887
      %v6890 = vshll.u32 %v6855, 16
      %v6892 = vrot.slane %v6890, 1
      %v6893 = vsel %vm1924, %v6888, %v6892
      %v6895 = vshrl.u32 %v6808, 16
      %v6897 = vshll.u32 %v6808, 16
      %v6899 = vrot.slane %v6897, 1
      %v6900 = vor.u32 %v6895, %v6899
      %v6902 = vshll.u32 %v6856, 16
      %v6904 = vrot.slane %v6902, 1
      %v6905 = vsel %vm1924, %v6900, %v6904
      %v6907 = vshrl.u32 %v6809, 16
      %v6909 = vshll.u32 %v6809, 16
      %v6911 = vrot.slane %v6909, 1
      %v6912 = vor.u32 %v6907, %v6911
      %v6914 = vshll.u32 %v6857, 16
      %v6916 = vrot.slane %v6914, 1
      %v6917 = vsel %vm1924, %v6912, %v6916
      %v6919 = vshrl.u32 %v6810, 16
      %v6921 = vshll.u32 %v6810, 16
      %v6923 = vrot.slane %v6921, 1
      %v6924 = vor.u32 %v6919, %v6923
      %v6926 = vshll.u32 %v6858, 16
      %v6928 = vrot.slane %v6926, 1
      %v6929 = vsel %vm1924, %v6924, %v6928
      %v6931 = vshrl.u32 %v6811, 16
      %v6933 = vshll.u32 %v6811, 16
      %v6935 = vrot.slane %v6933, 1
      %v6936 = vor.u32 %v6931, %v6935
      %v6938 = vshll.u32 %v6859, 16
      %v6940 = vrot.slane %v6938, 1
      %v6941 = vsel %vm1924, %v6936, %v6940
      %v6943 = vshrl.u32 %v6812, 16
      %v6945 = vshll.u32 %v6812, 16
      %v6947 = vrot.slane %v6945, 1
      %v6948 = vor.u32 %v6943, %v6947
      %v6950 = vshll.u32 %v6860, 16
      %v6952 = vrot.slane %v6950, 1
      %v6953 = vsel %vm1924, %v6948, %v6952
      %v6955 = vshrl.u32 %v6813, 16
      %v6957 = vshll.u32 %v6813, 16
      %v6959 = vrot.slane %v6957, 1
      %v6960 = vor.u32 %v6955, %v6959
      %v6962 = vshll.u32 %v6861, 16
      %v6964 = vrot.slane %v6962, 1
      %v6965 = vsel %vm1924, %v6960, %v6964
      %v6967 = vshrl.u32 %v6814, 16
      %v6969 = vshll.u32 %v6814, 16
      %v6971 = vrot.slane %v6969, 1
      %v6972 = vor.u32 %v6967, %v6971
      %v6974 = vshll.u32 %v6862, 16
      %v6976 = vrot.slane %v6974, 1
      %v6977 = vsel %vm1924, %v6972, %v6976
      %v6979 = vshrl.u32 %v6815, 16
      %v6981 = vshll.u32 %v6815, 16
      %v6983 = vrot.slane %v6981, 1
      %v6984 = vor.u32 %v6979, %v6983
      %v6986 = vshll.u32 %v6863, 16
      %v6988 = vrot.slane %v6986, 1
      %v6989 = vsel %vm1924, %v6984, %v6988
      %v6991 = vshrl.u32 %v6816, 16
      %v6993 = vshll.u32 %v6816, 16
      %v6995 = vrot.slane %v6993, 1
      %v6996 = vor.u32 %v6991, %v6995
      %v6998 = vshll.u32 %v6864, 16
      %v7000 = vrot.slane %v6998, 1
      %v7001 = vsel %vm1924, %v6996, %v7000
      %v7003 = vshrl.u32 %v6817, 16
      %v7005 = vshll.u32 %v6817, 16
      %v7007 = vrot.slane %v7005, 1
      %v7008 = vor.u32 %v7003, %v7007
      %v7010 = vshll.u32 %v6865, 16
      %v7012 = vrot.slane %v7010, 1
      %v7013 = vsel %vm1924, %v7008, %v7012
      %v7015 = vshrl.u32 %v6818, 16
      %v7017 = vshll.u32 %v6818, 16
      %v7019 = vrot.slane %v7017, 1
      %v7020 = vor.u32 %v7015, %v7019
      %v7022 = vshll.u32 %v6866, 16
      %v7024 = vrot.slane %v7022, 1
      %v7025 = vsel %vm1924, %v7020, %v7024
      %v7027 = vshrl.u32 %v6819, 16
      %v7029 = vshll.u32 %v6819, 16
      %v7031 = vrot.slane %v7029, 1
      %v7032 = vor.u32 %v7027, %v7031
      %v7034 = vshll.u32 %v6867, 16
      %v7036 = vrot.slane %v7034, 1
      %v7037 = vsel %vm1924, %v7032, %v7036
      %v7039 = vshrl.u32 %v6820, 16
      %v7041 = vshll.u32 %v6820, 16
      %v7043 = vrot.slane %v7041, 1
      %v7044 = vor.u32 %v7039, %v7043
      %v7046 = vshll.u32 %v6868, 16
      %v7048 = vrot.slane %v7046, 1
      %v7049 = vsel %vm1924, %v7044, %v7048
      %v7051 = vshrl.u32 %v6821, 16
      %v7053 = vshll.u32 %v6821, 16
      %v7055 = vrot.slane %v7053, 1
      %v7056 = vor.u32 %v7051, %v7055
      %v7058 = vshll.u32 %v6869, 16
      %v7060 = vrot.slane %v7058, 1
      %v7061 = vsel %vm1924, %v7056, %v7060
      %7062 = vrot.lane.b32.xlu0 %v6881, 64
      %v7063 = vpop.permute.xlu0 %7062
      %7064 = vrot.lane.b32.xlu0 %v6893, 64
      %v7065 = vpop.permute.xlu0 %7064
      %7066 = vrot.lane.b32.xlu0 %v6905, 64
      %v7067 = vpop.permute.xlu0 %7066
      %7068 = vrot.lane.b32.xlu0 %v6917, 64
      %v7069 = vpop.permute.xlu0 %7068
      %7070 = vrot.lane.b32.xlu0 %v6929, 64
      %v7071 = vpop.permute.xlu0 %7070
      %7072 = vrot.lane.b32.xlu0 %v6941, 64
      %v7073 = vpop.permute.xlu0 %7072
      %7074 = vrot.lane.b32.xlu0 %v6953, 64
      %v7075 = vpop.permute.xlu0 %7074
      %7076 = vrot.lane.b32.xlu0 %v6965, 64
      %v7077 = vpop.permute.xlu0 %7076
      %7078 = vrot.lane.b32.xlu0 %v6977, 64
      %v7079 = vpop.permute.xlu0 %7078
      %7080 = vrot.lane.b32.xlu0 %v6989, 64
      %v7081 = vpop.permute.xlu0 %7080
      %7082 = vrot.lane.b32.xlu0 %v7001, 64
      %v7083 = vpop.permute.xlu0 %7082
      %7084 = vrot.lane.b32.xlu0 %v7013, 64
      %v7085 = vpop.permute.xlu0 %7084
      %7086 = vrot.lane.b32.xlu0 %v7025, 64
      %v7087 = vpop.permute.xlu0 %7086
      %7088 = vrot.lane.b32.xlu0 %v7037, 64
      %v7089 = vpop.permute.xlu0 %7088
      %7090 = vrot.lane.b32.xlu0 %v7049, 64
      %v7091 = vpop.permute.xlu0 %7090
      %7092 = vrot.lane.b32.xlu0 %v7061, 64
      %v7093 = vpop.permute.xlu0 %7092
      %v7110 = vunpack.c.l.b16 %v6726
      %v7111 = vunpack.c.l.b16 %v6727
      %v7112 = vunpack.c.l.b16 %v6728
      %v7113 = vunpack.c.l.b16 %v6729
      %v7114 = vunpack.c.l.b16 %v6730
      %v7115 = vunpack.c.l.b16 %v6731
      %v7116 = vunpack.c.l.b16 %v6732
      %v7117 = vunpack.c.l.b16 %v6733
      %v7118 = vunpack.c.l.b16 %v6734
      %v7119 = vunpack.c.l.b16 %v6735
      %v7120 = vunpack.c.l.b16 %v6736
      %v7121 = vunpack.c.l.b16 %v6737
      %v7122 = vunpack.c.l.b16 %v6738
      %v7123 = vunpack.c.l.b16 %v6739
      %v7124 = vunpack.c.l.b16 %v6740
      %v7125 = vunpack.c.l.b16 %v6741
      %v7126 = vpack.c.b16 %v6775, %v7110
      %v7127 = vpack.c.b16 %v6777, %v7111
      %v7128 = vpack.c.b16 %v6779, %v7112
      %v7129 = vpack.c.b16 %v6781, %v7113
      %v7130 = vpack.c.b16 %v6783, %v7114
      %v7131 = vpack.c.b16 %v6785, %v7115
      %v7132 = vpack.c.b16 %v6787, %v7116
      %v7133 = vpack.c.b16 %v6789, %v7117
      %v7134 = vpack.c.b16 %v6791, %v7118
      %v7135 = vpack.c.b16 %v6793, %v7119
      %v7136 = vpack.c.b16 %v6795, %v7120
      %v7137 = vpack.c.b16 %v6797, %v7121
      %v7138 = vpack.c.b16 %v6799, %v7122
      %v7139 = vpack.c.b16 %v6801, %v7123
      %v7140 = vpack.c.b16 %v6803, %v7124
      %v7141 = vpack.c.b16 %v6805, %v7125
      %v7142 = vrot.slane %v7126, 1
      %v7143 = vrot.slane %v6854, 1
      %v7144 = vsel %vm2197, %v7142, %v7143
      %v7145 = vrot.slane %v7127, 1
      %v7146 = vrot.slane %v6855, 1
      %v7147 = vsel %vm2197, %v7145, %v7146
      %v7148 = vrot.slane %v7128, 1
      %v7149 = vrot.slane %v6856, 1
      %v7150 = vsel %vm2197, %v7148, %v7149
      %v7151 = vrot.slane %v7129, 1
      %v7152 = vrot.slane %v6857, 1
      %v7153 = vsel %vm2197, %v7151, %v7152
      %v7154 = vrot.slane %v7130, 1
      %v7155 = vrot.slane %v6858, 1
      %v7156 = vsel %vm2197, %v7154, %v7155
      %v7157 = vrot.slane %v7131, 1
      %v7158 = vrot.slane %v6859, 1
      %v7159 = vsel %vm2197, %v7157, %v7158
      %v7160 = vrot.slane %v7132, 1
      %v7161 = vrot.slane %v6860, 1
      %v7162 = vsel %vm2197, %v7160, %v7161
      %v7163 = vrot.slane %v7133, 1
      %v7164 = vrot.slane %v6861, 1
      %v7165 = vsel %vm2197, %v7163, %v7164
      %v7166 = vrot.slane %v7134, 1
      %v7167 = vrot.slane %v6862, 1
      %v7168 = vsel %vm2197, %v7166, %v7167
      %v7169 = vrot.slane %v7135, 1
      %v7170 = vrot.slane %v6863, 1
      %v7171 = vsel %vm2197, %v7169, %v7170
      %v7172 = vrot.slane %v7136, 1
      %v7173 = vrot.slane %v6864, 1
      %v7174 = vsel %vm2197, %v7172, %v7173
      %v7175 = vrot.slane %v7137, 1
      %v7176 = vrot.slane %v6865, 1
      %v7177 = vsel %vm2197, %v7175, %v7176
      %v7178 = vrot.slane %v7138, 1
      %v7179 = vrot.slane %v6866, 1
      %v7180 = vsel %vm2197, %v7178, %v7179
      %v7181 = vrot.slane %v7139, 1
      %v7182 = vrot.slane %v6867, 1
      %v7183 = vsel %vm2197, %v7181, %v7182
      %v7184 = vrot.slane %v7140, 1
      %v7185 = vrot.slane %v6868, 1
      %v7186 = vsel %vm2197, %v7184, %v7185
      %v7187 = vrot.slane %v7141, 1
      %v7188 = vrot.slane %v6869, 1
      %v7189 = vsel %vm2197, %v7187, %v7188
      %v7191 = vsel %vm4696, %v6806, %v7063
      %v7194 = vsel %vm4696, %v6807, %v7065
      %v7197 = vsel %vm4696, %v6808, %v7067
      %v7200 = vsel %vm4696, %v6809, %v7069
      %v7203 = vsel %vm4696, %v6810, %v7071
      %v7206 = vsel %vm4696, %v6811, %v7073
      %v7209 = vsel %vm4696, %v6812, %v7075
      %v7212 = vsel %vm4696, %v6813, %v7077
      %v7215 = vsel %vm4696, %v6814, %v7079
      %v7218 = vsel %vm4696, %v6815, %v7081
      %v7221 = vsel %vm4696, %v6816, %v7083
      %v7224 = vsel %vm4696, %v6817, %v7085
      %v7227 = vsel %vm4696, %v6818, %v7087
      %v7230 = vsel %vm4696, %v6819, %v7089
      %v7233 = vsel %vm4696, %v6820, %v7091
      %v7236 = vsel %vm4696, %v6821, %v7093
      %v7238 = vld [vmem:[%s2] sm:$0xf]
      %v7239 = vld [vmem:[%s2 + $0x4] sm:$0xf]
      %v7240 = vld [vmem:[%s2 + $0x8] sm:$0xf]
      %v7241 = vld [vmem:[%s2 + $0xc] sm:$0xf]
      %v7242 = vld [vmem:[%s2 + $0x10] sm:$0xf]
      %v7243 = vld [vmem:[%s2 + $0x14] sm:$0xf]
      %v7244 = vld [vmem:[%s2 + $0x18] sm:$0xf]
      %v7245 = vld [vmem:[%s2 + $0x1c] sm:$0xf]
      %v7246 = vld [vmem:[%s2 + $0x20] sm:$0xf]
      %v7247 = vld [vmem:[%s2 + $0x24] sm:$0xf]
      %v7248 = vld [vmem:[%s2 + $0x28] sm:$0xf]
      %v7249 = vld [vmem:[%s2 + $0x2c] sm:$0xf]
      %v7250 = vld [vmem:[%s2 + $0x30] sm:$0xf]
      %v7251 = vld [vmem:[%s2 + $0x34] sm:$0xf]
      %v7252 = vld [vmem:[%s2 + $0x38] sm:$0xf]
      %v7253 = vld [vmem:[%s2 + $0x3c] sm:$0xf]
      %v7254 = vld [vmem:[%s2 + $0x40] sm:$0xf]
      %v7255 = vld [vmem:[%s2 + $0x44] sm:$0xf]
      %v7256 = vld [vmem:[%s2 + $0x48] sm:$0xf]
      %v7257 = vld [vmem:[%s2 + $0x4c] sm:$0xf]
      %v7258 = vld [vmem:[%s2 + $0x50] sm:$0xf]
      %v7259 = vld [vmem:[%s2 + $0x54] sm:$0xf]
      %v7260 = vld [vmem:[%s2 + $0x58] sm:$0xf]
      %v7261 = vld [vmem:[%s2 + $0x5c] sm:$0xf]
      %v7262 = vld [vmem:[%s6563] sm:$0xf]
      %v7263 = vld [vmem:[%s6563 + $0x4] sm:$0xf]
      %v7264 = vld [vmem:[%s6563 + $0xc] sm:$0xf]
      %v7265 = vld [vmem:[%s6563 + $0x10] sm:$0xf]
      %v7266 = vld [vmem:[%s6563 + $0x18] sm:$0xf]
      %v7267 = vld [vmem:[%s6563 + $0x1c] sm:$0xf]
      %v7268 = vld [vmem:[%s6563 + $0x24] sm:$0xf]
      %v7269 = vld [vmem:[%s6563 + $0x28] sm:$0xf]
      %v7270 = vld [vmem:[%s6563 + $0x30] sm:$0xf]
      %v7271 = vld [vmem:[%s6563 + $0x34] sm:$0xf]
      %v7272 = vld [vmem:[%s6563 + $0x3c] sm:$0xf]
      %v7273 = vld [vmem:[%s6563 + $0x40] sm:$0xf]
      %v7274 = vld [vmem:[%s6563 + $0x48] sm:$0xf]
      %v7275 = vld [vmem:[%s6563 + $0x4c] sm:$0xf]
      %v7276 = vld [vmem:[%s6563 + $0x54] sm:$0xf]
      %v7277 = vld [vmem:[%s6563 + $0x58] sm:$0xf]
      %v7278 = vld [vmem:[%s6563 + $0x60] sm:$0xf]
      %v7279 = vld [vmem:[%s6563 + $0x64] sm:$0xf]
      %v7280 = vld [vmem:[%s6563 + $0x6c] sm:$0xf]
      %v7281 = vld [vmem:[%s6563 + $0x70] sm:$0xf]
      %v7282 = vld [vmem:[%s6563 + $0x78] sm:$0xf]
      %v7283 = vld [vmem:[%s6563 + $0x7c] sm:$0xf]
      %v7284 = vld [vmem:[%s6563 + $0x84] sm:$0xf]
      %v7285 = vld [vmem:[%s6563 + $0x88] sm:$0xf]
      %v7286 = vld [vmem:[%s6563 + $0x90] sm:$0xf]
      %v7287 = vld [vmem:[%s6563 + $0x94] sm:$0xf]
      %v7288 = vld [vmem:[%s6563 + $0x9c] sm:$0xf]
      %v7289 = vld [vmem:[%s6563 + $0xa0] sm:$0xf]
      %v7290 = vld [vmem:[%s6563 + $0xa8] sm:$0xf]
      %v7291 = vld [vmem:[%s6563 + $0xac] sm:$0xf]
      %v7292 = vld [vmem:[%s6563 + $0xb4] sm:$0xf]
      %v7293 = vld [vmem:[%s6563 + $0xb8] sm:$0xf]
      %v7294 = vld [vmem:[%s6563 + $0x8] sm:$0x1]
      %v7295 = vld [vmem:[%s6563 + $0x14] sm:$0x1]
      %v7296 = vld [vmem:[%s6563 + $0x20] sm:$0x1]
      %v7297 = vld [vmem:[%s6563 + $0x2c] sm:$0x1]
      %v7298 = vld [vmem:[%s6563 + $0x38] sm:$0x1]
      %v7299 = vld [vmem:[%s6563 + $0x44] sm:$0x1]
      %v7300 = vld [vmem:[%s6563 + $0x50] sm:$0x1]
      %v7301 = vld [vmem:[%s6563 + $0x5c] sm:$0x1]
      %v7302 = vld [vmem:[%s6563 + $0x68] sm:$0x1]
      %v7303 = vld [vmem:[%s6563 + $0x74] sm:$0x1]
      %v7304 = vld [vmem:[%s6563 + $0x80] sm:$0x1]
      %v7305 = vld [vmem:[%s6563 + $0x8c] sm:$0x1]
      %v7306 = vld [vmem:[%s6563 + $0x98] sm:$0x1]
      %v7307 = vld [vmem:[%s6563 + $0xa4] sm:$0x1]
      %v7308 = vld [vmem:[%s6563 + $0xb0] sm:$0x1]
      %v7309 = vld [vmem:[%s6563 + $0xbc] sm:$0x1]
      %v7310 = vld [vmem:[%s6563] sm:$0xe]
      %v7311 = vld [vmem:[%s6563 + $0xc] sm:$0xe]
      %v7312 = vld [vmem:[%s6563 + $0x18] sm:$0xe]
      %v7313 = vld [vmem:[%s6563 + $0x24] sm:$0xe]
      %v7314 = vld [vmem:[%s6563 + $0x30] sm:$0xe]
      %v7315 = vld [vmem:[%s6563 + $0x3c] sm:$0xe]
      %v7316 = vld [vmem:[%s6563 + $0x48] sm:$0xe]
      %v7317 = vld [vmem:[%s6563 + $0x54] sm:$0xe]
      %v7318 = vld [vmem:[%s6563 + $0x60] sm:$0xe]
      %v7319 = vld [vmem:[%s6563 + $0x6c] sm:$0xe]
      %v7320 = vld [vmem:[%s6563 + $0x78] sm:$0xe]
      %v7321 = vld [vmem:[%s6563 + $0x84] sm:$0xe]
      %v7322 = vld [vmem:[%s6563 + $0x90] sm:$0xe]
      %v7323 = vld [vmem:[%s6563 + $0x9c] sm:$0xe]
      %v7324 = vld [vmem:[%s6563 + $0xa8] sm:$0xe]
      %v7325 = vld [vmem:[%s6563 + $0xb4] sm:$0xe]
      %v7358 = vunpack.c.l.b16 %v7262
      %v7359 = vunpack.c.l.b16 %v7263
      %v7360 = vunpack.c.l.b16 %v7264
      %v7361 = vunpack.c.l.b16 %v7265
      %v7362 = vunpack.c.l.b16 %v7266
      %v7363 = vunpack.c.l.b16 %v7267
      %v7364 = vunpack.c.l.b16 %v7268
      %v7365 = vunpack.c.l.b16 %v7269
      %v7366 = vunpack.c.l.b16 %v7270
      %v7367 = vunpack.c.l.b16 %v7271
      %v7368 = vunpack.c.l.b16 %v7272
      %v7369 = vunpack.c.l.b16 %v7273
      %v7370 = vunpack.c.l.b16 %v7274
      %v7371 = vunpack.c.l.b16 %v7275
      %v7372 = vunpack.c.l.b16 %v7276
      %v7373 = vunpack.c.l.b16 %v7277
      %v7374 = vunpack.c.l.b16 %v7278
      %v7375 = vunpack.c.l.b16 %v7279
      %v7376 = vunpack.c.l.b16 %v7280
      %v7377 = vunpack.c.l.b16 %v7281
      %v7378 = vunpack.c.l.b16 %v7282
      %v7379 = vunpack.c.l.b16 %v7283
      %v7380 = vunpack.c.l.b16 %v7284
      %v7381 = vunpack.c.l.b16 %v7285
      %v7382 = vunpack.c.l.b16 %v7286
      %v7383 = vunpack.c.l.b16 %v7287
      %v7384 = vunpack.c.l.b16 %v7288
      %v7385 = vunpack.c.l.b16 %v7289
      %v7386 = vunpack.c.l.b16 %v7290
      %v7387 = vunpack.c.l.b16 %v7291
      %v7388 = vunpack.c.l.b16 %v7292
      %v7389 = vunpack.c.l.b16 %v7293
      %v7390 = vpack.c.b16 %v7359, %v7358
      %v7391 = vpack.c.b16 %v7361, %v7360
      %v7392 = vpack.c.b16 %v7363, %v7362
      %v7393 = vpack.c.b16 %v7365, %v7364
      %v7394 = vpack.c.b16 %v7367, %v7366
      %v7395 = vpack.c.b16 %v7369, %v7368
      %v7396 = vpack.c.b16 %v7371, %v7370
      %v7397 = vpack.c.b16 %v7373, %v7372
      %v7398 = vpack.c.b16 %v7375, %v7374
      %v7399 = vpack.c.b16 %v7377, %v7376
      %v7400 = vpack.c.b16 %v7379, %v7378
      %v7401 = vpack.c.b16 %v7381, %v7380
      %v7402 = vpack.c.b16 %v7383, %v7382
      %v7403 = vpack.c.b16 %v7385, %v7384
      %v7404 = vpack.c.b16 %v7387, %v7386
      %v7405 = vpack.c.b16 %v7389, %v7388
      %v7422 = vunpack.c.l.b16 %v7294
      %v7423 = vunpack.c.l.b16 %v7295
      %v7424 = vunpack.c.l.b16 %v7296
      %v7425 = vunpack.c.l.b16 %v7297
      %v7426 = vunpack.c.l.b16 %v7298
      %v7427 = vunpack.c.l.b16 %v7299
      %v7428 = vunpack.c.l.b16 %v7300
      %v7429 = vunpack.c.l.b16 %v7301
      %v7430 = vunpack.c.l.b16 %v7302
      %v7431 = vunpack.c.l.b16 %v7303
      %v7432 = vunpack.c.l.b16 %v7304
      %v7433 = vunpack.c.l.b16 %v7305
      %v7434 = vunpack.c.l.b16 %v7306
      %v7435 = vunpack.c.l.b16 %v7307
      %v7436 = vunpack.c.l.b16 %v7308
      %v7437 = vunpack.c.l.b16 %v7309
      %v7438 = vpack.c.b16 %v7422, %v7422
      %v7439 = vpack.c.b16 %v7423, %v7423
      %v7440 = vpack.c.b16 %v7424, %v7424
      %v7441 = vpack.c.b16 %v7425, %v7425
      %v7442 = vpack.c.b16 %v7426, %v7426
      %v7443 = vpack.c.b16 %v7427, %v7427
      %v7444 = vpack.c.b16 %v7428, %v7428
      %v7445 = vpack.c.b16 %v7429, %v7429
      %v7446 = vpack.c.b16 %v7430, %v7430
      %v7447 = vpack.c.b16 %v7431, %v7431
      %v7448 = vpack.c.b16 %v7432, %v7432
      %v7449 = vpack.c.b16 %v7433, %v7433
      %v7450 = vpack.c.b16 %v7434, %v7434
      %v7451 = vpack.c.b16 %v7435, %v7435
      %v7452 = vpack.c.b16 %v7436, %v7436
      %v7453 = vpack.c.b16 %v7437, %v7437
      %v7455 = vshrl.u32 %v7390, 16
      %v7457 = vshll.u32 %v7390, 16
      %v7459 = vrot.slane %v7457, 1
      %v7460 = vor.u32 %v7455, %v7459
      %v7462 = vshll.u32 %v7438, 16
      %v7464 = vrot.slane %v7462, 1
      %v7465 = vsel %vm1924, %v7460, %v7464
      %v7467 = vshrl.u32 %v7391, 16
      %v7469 = vshll.u32 %v7391, 16
      %v7471 = vrot.slane %v7469, 1
      %v7472 = vor.u32 %v7467, %v7471
      %v7474 = vshll.u32 %v7439, 16
      %v7476 = vrot.slane %v7474, 1
      %v7477 = vsel %vm1924, %v7472, %v7476
      %v7479 = vshrl.u32 %v7392, 16
      %v7481 = vshll.u32 %v7392, 16
      %v7483 = vrot.slane %v7481, 1
      %v7484 = vor.u32 %v7479, %v7483
      %v7486 = vshll.u32 %v7440, 16
      %v7488 = vrot.slane %v7486, 1
      %v7489 = vsel %vm1924, %v7484, %v7488
      %v7491 = vshrl.u32 %v7393, 16
      %v7493 = vshll.u32 %v7393, 16
      %v7495 = vrot.slane %v7493, 1
      %v7496 = vor.u32 %v7491, %v7495
      %v7498 = vshll.u32 %v7441, 16
      %v7500 = vrot.slane %v7498, 1
      %v7501 = vsel %vm1924, %v7496, %v7500
      %v7503 = vshrl.u32 %v7394, 16
      %v7505 = vshll.u32 %v7394, 16
      %v7507 = vrot.slane %v7505, 1
      %v7508 = vor.u32 %v7503, %v7507
      %v7510 = vshll.u32 %v7442, 16
      %v7512 = vrot.slane %v7510, 1
      %v7513 = vsel %vm1924, %v7508, %v7512
      %v7515 = vshrl.u32 %v7395, 16
      %v7517 = vshll.u32 %v7395, 16
      %v7519 = vrot.slane %v7517, 1
      %v7520 = vor.u32 %v7515, %v7519
      %v7522 = vshll.u32 %v7443, 16
      %v7524 = vrot.slane %v7522, 1
      %v7525 = vsel %vm1924, %v7520, %v7524
      %v7527 = vshrl.u32 %v7396, 16
      %v7529 = vshll.u32 %v7396, 16
      %v7531 = vrot.slane %v7529, 1
      %v7532 = vor.u32 %v7527, %v7531
      %v7534 = vshll.u32 %v7444, 16
      %v7536 = vrot.slane %v7534, 1
      %v7537 = vsel %vm1924, %v7532, %v7536
      %v7539 = vshrl.u32 %v7397, 16
      %v7541 = vshll.u32 %v7397, 16
      %v7543 = vrot.slane %v7541, 1
      %v7544 = vor.u32 %v7539, %v7543
      %v7546 = vshll.u32 %v7445, 16
      %v7548 = vrot.slane %v7546, 1
      %v7549 = vsel %vm1924, %v7544, %v7548
      %v7551 = vshrl.u32 %v7398, 16
      %v7553 = vshll.u32 %v7398, 16
      %v7555 = vrot.slane %v7553, 1
      %v7556 = vor.u32 %v7551, %v7555
      %v7558 = vshll.u32 %v7446, 16
      %v7560 = vrot.slane %v7558, 1
      %v7561 = vsel %vm1924, %v7556, %v7560
      %v7563 = vshrl.u32 %v7399, 16
      %v7565 = vshll.u32 %v7399, 16
      %v7567 = vrot.slane %v7565, 1
      %v7568 = vor.u32 %v7563, %v7567
      %v7570 = vshll.u32 %v7447, 16
      %v7572 = vrot.slane %v7570, 1
      %v7573 = vsel %vm1924, %v7568, %v7572
      %v7575 = vshrl.u32 %v7400, 16
      %v7577 = vshll.u32 %v7400, 16
      %v7579 = vrot.slane %v7577, 1
      %v7580 = vor.u32 %v7575, %v7579
      %v7582 = vshll.u32 %v7448, 16
      %v7584 = vrot.slane %v7582, 1
      %v7585 = vsel %vm1924, %v7580, %v7584
      %v7587 = vshrl.u32 %v7401, 16
      %v7589 = vshll.u32 %v7401, 16
      %v7591 = vrot.slane %v7589, 1
      %v7592 = vor.u32 %v7587, %v7591
      %v7594 = vshll.u32 %v7449, 16
      %v7596 = vrot.slane %v7594, 1
      %v7597 = vsel %vm1924, %v7592, %v7596
      %v7599 = vshrl.u32 %v7402, 16
      %v7601 = vshll.u32 %v7402, 16
      %v7603 = vrot.slane %v7601, 1
      %v7604 = vor.u32 %v7599, %v7603
      %v7606 = vshll.u32 %v7450, 16
      %v7608 = vrot.slane %v7606, 1
      %v7609 = vsel %vm1924, %v7604, %v7608
      %v7611 = vshrl.u32 %v7403, 16
      %v7613 = vshll.u32 %v7403, 16
      %v7615 = vrot.slane %v7613, 1
      %v7616 = vor.u32 %v7611, %v7615
      %v7618 = vshll.u32 %v7451, 16
      %v7620 = vrot.slane %v7618, 1
      %v7621 = vsel %vm1924, %v7616, %v7620
      %v7623 = vshrl.u32 %v7404, 16
      %v7625 = vshll.u32 %v7404, 16
      %v7627 = vrot.slane %v7625, 1
      %v7628 = vor.u32 %v7623, %v7627
      %v7630 = vshll.u32 %v7452, 16
      %v7632 = vrot.slane %v7630, 1
      %v7633 = vsel %vm1924, %v7628, %v7632
      %v7635 = vshrl.u32 %v7405, 16
      %v7637 = vshll.u32 %v7405, 16
      %v7639 = vrot.slane %v7637, 1
      %v7640 = vor.u32 %v7635, %v7639
      %v7642 = vshll.u32 %v7453, 16
      %v7644 = vrot.slane %v7642, 1
      %v7645 = vsel %vm1924, %v7640, %v7644
      %7646 = vrot.lane.b32.xlu0 %v7465, 64
      %v7647 = vpop.permute.xlu0 %7646
      %7648 = vrot.lane.b32.xlu0 %v7477, 64
      %v7649 = vpop.permute.xlu0 %7648
      %7650 = vrot.lane.b32.xlu0 %v7489, 64
      %v7651 = vpop.permute.xlu0 %7650
      %7652 = vrot.lane.b32.xlu0 %v7501, 64
      %v7653 = vpop.permute.xlu0 %7652
      %7654 = vrot.lane.b32.xlu0 %v7513, 64
      %v7655 = vpop.permute.xlu0 %7654
      %7656 = vrot.lane.b32.xlu0 %v7525, 64
      %v7657 = vpop.permute.xlu0 %7656
      %7658 = vrot.lane.b32.xlu0 %v7537, 64
      %v7659 = vpop.permute.xlu0 %7658
      %7660 = vrot.lane.b32.xlu0 %v7549, 64
      %v7661 = vpop.permute.xlu0 %7660
      %7662 = vrot.lane.b32.xlu0 %v7561, 64
      %v7663 = vpop.permute.xlu0 %7662
      %7664 = vrot.lane.b32.xlu0 %v7573, 64
      %v7665 = vpop.permute.xlu0 %7664
      %7666 = vrot.lane.b32.xlu0 %v7585, 64
      %v7667 = vpop.permute.xlu0 %7666
      %7668 = vrot.lane.b32.xlu0 %v7597, 64
      %v7669 = vpop.permute.xlu0 %7668
      %7670 = vrot.lane.b32.xlu0 %v7609, 64
      %v7671 = vpop.permute.xlu0 %7670
      %7672 = vrot.lane.b32.xlu0 %v7621, 64
      %v7673 = vpop.permute.xlu0 %7672
      %7674 = vrot.lane.b32.xlu0 %v7633, 64
      %v7675 = vpop.permute.xlu0 %7674
      %7676 = vrot.lane.b32.xlu0 %v7645, 64
      %v7677 = vpop.permute.xlu0 %7676
      %v7694 = vunpack.c.l.b16 %v7310
      %v7695 = vunpack.c.l.b16 %v7311
      %v7696 = vunpack.c.l.b16 %v7312
      %v7697 = vunpack.c.l.b16 %v7313
      %v7698 = vunpack.c.l.b16 %v7314
      %v7699 = vunpack.c.l.b16 %v7315
      %v7700 = vunpack.c.l.b16 %v7316
      %v7701 = vunpack.c.l.b16 %v7317
      %v7702 = vunpack.c.l.b16 %v7318
      %v7703 = vunpack.c.l.b16 %v7319
      %v7704 = vunpack.c.l.b16 %v7320
      %v7705 = vunpack.c.l.b16 %v7321
      %v7706 = vunpack.c.l.b16 %v7322
      %v7707 = vunpack.c.l.b16 %v7323
      %v7708 = vunpack.c.l.b16 %v7324
      %v7709 = vunpack.c.l.b16 %v7325
      %v7710 = vpack.c.b16 %v7359, %v7694
      %v7711 = vpack.c.b16 %v7361, %v7695
      %v7712 = vpack.c.b16 %v7363, %v7696
      %v7713 = vpack.c.b16 %v7365, %v7697
      %v7714 = vpack.c.b16 %v7367, %v7698
      %v7715 = vpack.c.b16 %v7369, %v7699
      %v7716 = vpack.c.b16 %v7371, %v7700
      %v7717 = vpack.c.b16 %v7373, %v7701
      %v7718 = vpack.c.b16 %v7375, %v7702
      %v7719 = vpack.c.b16 %v7377, %v7703
      %v7720 = vpack.c.b16 %v7379, %v7704
      %v7721 = vpack.c.b16 %v7381, %v7705
      %v7722 = vpack.c.b16 %v7383, %v7706
      %v7723 = vpack.c.b16 %v7385, %v7707
      %v7724 = vpack.c.b16 %v7387, %v7708
      %v7725 = vpack.c.b16 %v7389, %v7709
      %v7726 = vrot.slane %v7710, 1
      %v7727 = vrot.slane %v7438, 1
      %v7728 = vsel %vm2197, %v7726, %v7727
      %v7729 = vrot.slane %v7711, 1
      %v7730 = vrot.slane %v7439, 1
      %v7731 = vsel %vm2197, %v7729, %v7730
      %v7732 = vrot.slane %v7712, 1
      %v7733 = vrot.slane %v7440, 1
      %v7734 = vsel %vm2197, %v7732, %v7733
      %v7735 = vrot.slane %v7713, 1
      %v7736 = vrot.slane %v7441, 1
      %v7737 = vsel %vm2197, %v7735, %v7736
      %v7738 = vrot.slane %v7714, 1
      %v7739 = vrot.slane %v7442, 1
      %v7740 = vsel %vm2197, %v7738, %v7739
      %v7741 = vrot.slane %v7715, 1
      %v7742 = vrot.slane %v7443, 1
      %v7743 = vsel %vm2197, %v7741, %v7742
      %v7744 = vrot.slane %v7716, 1
      %v7745 = vrot.slane %v7444, 1
      %v7746 = vsel %vm2197, %v7744, %v7745
      %v7747 = vrot.slane %v7717, 1
      %v7748 = vrot.slane %v7445, 1
      %v7749 = vsel %vm2197, %v7747, %v7748
      %v7750 = vrot.slane %v7718, 1
      %v7751 = vrot.slane %v7446, 1
      %v7752 = vsel %vm2197, %v7750, %v7751
      %v7753 = vrot.slane %v7719, 1
      %v7754 = vrot.slane %v7447, 1
      %v7755 = vsel %vm2197, %v7753, %v7754
      %v7756 = vrot.slane %v7720, 1
      %v7757 = vrot.slane %v7448, 1
      %v7758 = vsel %vm2197, %v7756, %v7757
      %v7759 = vrot.slane %v7721, 1
      %v7760 = vrot.slane %v7449, 1
      %v7761 = vsel %vm2197, %v7759, %v7760
      %v7762 = vrot.slane %v7722, 1
      %v7763 = vrot.slane %v7450, 1
      %v7764 = vsel %vm2197, %v7762, %v7763
      %v7765 = vrot.slane %v7723, 1
      %v7766 = vrot.slane %v7451, 1
      %v7767 = vsel %vm2197, %v7765, %v7766
      %v7768 = vrot.slane %v7724, 1
      %v7769 = vrot.slane %v7452, 1
      %v7770 = vsel %vm2197, %v7768, %v7769
      %v7771 = vrot.slane %v7725, 1
      %v7772 = vrot.slane %v7453, 1
      %v7773 = vsel %vm2197, %v7771, %v7772
      %v7775 = vsel %vm4696, %v7390, %v7647
      %v7778 = vsel %vm4696, %v7391, %v7649
      %v7781 = vsel %vm4696, %v7392, %v7651
      %v7784 = vsel %vm4696, %v7393, %v7653
      %v7787 = vsel %vm4696, %v7394, %v7655
      %v7790 = vsel %vm4696, %v7395, %v7657
      %v7793 = vsel %vm4696, %v7396, %v7659
      %v7796 = vsel %vm4696, %v7397, %v7661
      %v7799 = vsel %vm4696, %v7398, %v7663
      %v7802 = vsel %vm4696, %v7399, %v7665
      %v7805 = vsel %vm4696, %v7400, %v7667
      %v7808 = vsel %vm4696, %v7401, %v7669
      %v7811 = vsel %vm4696, %v7402, %v7671
      %v7814 = vsel %vm4696, %v7403, %v7673
      %v7817 = vsel %vm4696, %v7404, %v7675
      %v7820 = vsel %vm4696, %v7405, %v7677
      %s7822 = scalar_lea.vmem %s2, 96
      %v7823 = vld [vmem:[%s7822] sm:$0xf]
      %v7824 = vld [vmem:[%s7822 + $0x4] sm:$0xf]
      %v7825 = vld [vmem:[%s7822 + $0x8] sm:$0xf]
      %v7826 = vld [vmem:[%s7822 + $0xc] sm:$0xf]
      %v7827 = vld [vmem:[%s7822 + $0x10] sm:$0xf]
      %v7828 = vld [vmem:[%s7822 + $0x14] sm:$0xf]
      %v7829 = vld [vmem:[%s7822 + $0x18] sm:$0xf]
      %v7830 = vld [vmem:[%s7822 + $0x1c] sm:$0xf]
      %v7831 = vld [vmem:[%s7822 + $0x20] sm:$0xf]
      %v7832 = vld [vmem:[%s7822 + $0x24] sm:$0xf]
      %v7833 = vld [vmem:[%s7822 + $0x28] sm:$0xf]
      %v7834 = vld [vmem:[%s7822 + $0x2c] sm:$0xf]
      %v7835 = vld [vmem:[%s7822 + $0x30] sm:$0xf]
      %v7836 = vld [vmem:[%s7822 + $0x34] sm:$0xf]
      %v7837 = vld [vmem:[%s7822 + $0x38] sm:$0xf]
      %v7838 = vld [vmem:[%s7822 + $0x3c] sm:$0xf]
      %v7839 = vld [vmem:[%s7822 + $0x40] sm:$0xf]
      %v7840 = vld [vmem:[%s7822 + $0x44] sm:$0xf]
      %v7841 = vld [vmem:[%s7822 + $0x48] sm:$0xf]
      %v7842 = vld [vmem:[%s7822 + $0x4c] sm:$0xf]
      %v7843 = vld [vmem:[%s7822 + $0x50] sm:$0xf]
      %v7844 = vld [vmem:[%s7822 + $0x54] sm:$0xf]
      %v7845 = vld [vmem:[%s7822 + $0x58] sm:$0xf]
      %v7846 = vld [vmem:[%s7822 + $0x5c] sm:$0xf]
      %v7871 = vunpack.c.l.b16 %v7823
      %v7872 = vunpack.c.l.b16 %v7824
      %v7873 = vunpack.c.l.b16 %v7825
      %v7874 = vunpack.c.l.b16 %v7826
      %v7875 = vunpack.c.l.b16 %v7827
      %v7876 = vunpack.c.l.b16 %v7828
      %v7877 = vunpack.c.l.b16 %v7829
      %v7878 = vunpack.c.l.b16 %v7830
      %v7879 = vunpack.c.l.b16 %v7831
      %v7880 = vunpack.c.l.b16 %v7832
      %v7881 = vunpack.c.l.b16 %v7833
      %v7882 = vunpack.c.l.b16 %v7834
      %v7883 = vunpack.c.l.b16 %v7835
      %v7884 = vunpack.c.l.b16 %v7836
      %v7885 = vunpack.c.l.b16 %v7837
      %v7886 = vunpack.c.l.b16 %v7838
      %v7887 = vunpack.c.l.b16 %v7839
      %v7888 = vunpack.c.l.b16 %v7840
      %v7889 = vunpack.c.l.b16 %v7841
      %v7890 = vunpack.c.l.b16 %v7842
      %v7891 = vunpack.c.l.b16 %v7843
      %v7892 = vunpack.c.l.b16 %v7844
      %v7893 = vunpack.c.l.b16 %v7845
      %v7894 = vunpack.c.l.b16 %v7846
      %v7895 = vpack.c.b16 %v7872, %v7871
      %v7896 = vpack.c.b16 %v7874, %v7873
      %v7897 = vpack.c.b16 %v7876, %v7875
      %v7898 = vpack.c.b16 %v7878, %v7877
      %v7899 = vpack.c.b16 %v7880, %v7879
      %v7900 = vpack.c.b16 %v7882, %v7881
      %v7901 = vpack.c.b16 %v7884, %v7883
      %v7902 = vpack.c.b16 %v7886, %v7885
      %v7903 = vpack.c.b16 %v7888, %v7887
      %v7904 = vpack.c.b16 %v7890, %v7889
      %v7905 = vpack.c.b16 %v7892, %v7891
      %v7906 = vpack.c.b16 %v7894, %v7893
      %v7920 = vsel %vm4696, %v7728, 0
      %v7923 = vsel %vm4696, %v7731, 0
      %v7926 = vsel %vm4696, %v7734, 0
      %v7929 = vsel %vm4696, %v7737, 0
      %v7932 = vsel %vm4696, %v7740, 0
      %v7935 = vsel %vm4696, %v7743, 0
      %v7938 = vsel %vm4696, %v7746, 0
      %v7941 = vsel %vm4696, %v7749, 0
      %v7944 = vsel %vm4696, %v7752, 0
      %v7947 = vsel %vm4696, %v7755, 0
      %v7950 = vsel %vm4696, %v7758, 0
      %v7953 = vsel %vm4696, %v7761, 0
      %v7956 = vsel %vm4696, %v7764, 0
      %v7959 = vsel %vm4696, %v7767, 0
      %v7962 = vsel %vm4696, %v7770, 0
      %v7965 = vsel %vm4696, %v7773, 0
      %7967 = vmatprep.subr.bf16.mxu0 0
      %7968 = vmatpush1.bf16.msra.mxu0 %v7895
      %7969 = vmatprep.subr.bf16.mxu0 0
      %7970 = vmatpush1.bf16.msra.mxu0 %v7896
      %7971 = vmatprep.subr.bf16.mxu0 0
      %7972 = vmatpush1.bf16.msra.mxu0 %v7897
      %7973 = vmatprep.subr.bf16.mxu0 0
      %7974 = vmatpush1.bf16.msra.mxu0 %v7898
      %7975 = vmatprep.subr.bf16.mxu0 0
      %7976 = vmatpush1.bf16.msra.mxu0 %v7899
      %7977 = vmatprep.subr.bf16.mxu0 0
      %7978 = vmatpush1.bf16.msra.mxu0 %v7900
      %7979 = vmatprep.subr.bf16.mxu0 0
      %7980 = vmatpush1.bf16.msra.mxu0 %v7901
      %7981 = vmatprep.subr.bf16.mxu0 0
      %7982 = vmatpush1.bf16.msra.mxu0 %v7902
      %7983 = vmatprep.subr.bf16.mxu0 0
      %7984 = vmatpush1.bf16.msra.mxu0 %v7903
      %7985 = vmatprep.subr.bf16.mxu0 0
      %7986 = vmatpush1.bf16.msra.mxu0 %v7904
      %7987 = vmatprep.subr.bf16.mxu0 0
      %7988 = vmatpush1.bf16.msra.mxu0 %v7905
      %7989 = vmatprep.subr.bf16.mxu0 0
      %7990 = vmatpush1.bf16.msra.mxu0 %v7906
      %7991 = vmatprep.subr.bf16.mxu0 0
      %7992 = vmatpush1.bf16.msra.mxu0 0
      %7993 = vmatprep.subr.bf16.mxu0 0
      %7994 = vmatpush1.bf16.msra.mxu0 0
      %7995 = vmatprep.subr.bf16.mxu0 0
      %7996 = vmatpush1.bf16.msra.mxu0 0
      %7997 = vmatprep.subr.bf16.mxu0 0
      %7998 = vmatpush1.bf16.msra.mxu0 0
      %7999 = vmatprep.mubr.bf16.mxu0 %v7920
      %8000 = vmatmul.mubr.bf16.gmra.mrb[0].mxu0 %v7775
      %v8001 = vpop.f32.mrb[0].mxu0
      %v8002 = vadd.f32 0.0, %v8001
      %v8003 = vpop.f32.mrb[0].mxu0
      %v8004 = vpop.f32.mrb[0].mxu0
      %v8005 = vadd.f32 0.0, %v8004
      %v8006 = vpop.f32.mrb[0].mxu0
      %8007 = vmatprep.mubr.bf16.mxu0 %v7923
      %8008 = vmatmul.mubr.bf16.gmra.mrb[0].mxu0 %v7778
      %v8009 = vpop.f32.mrb[0].mxu0
      %v8010 = vadd.f32 0.0, %v8009
      %v8011 = vpop.f32.mrb[0].mxu0
      %v8012 = vpop.f32.mrb[0].mxu0
      %v8013 = vadd.f32 0.0, %v8012
      %v8014 = vpop.f32.mrb[0].mxu0
      %8015 = vmatprep.mubr.bf16.mxu0 %v7926
      %8016 = vmatmul.mubr.bf16.gmra.mrb[0].mxu0 %v7781
      %v8017 = vpop.f32.mrb[0].mxu0
      %v8018 = vadd.f32 0.0, %v8017
      %v8019 = vpop.f32.mrb[0].mxu0
      %v8020 = vpop.f32.mrb[0].mxu0
      %v8021 = vadd.f32 0.0, %v8020
      %v8022 = vpop.f32.mrb[0].mxu0
      %8023 = vmatprep.mubr.bf16.mxu0 %v7929
      %8024 = vmatmul.mubr.bf16.gmra.mrb[0].mxu0 %v7784
      %v8025 = vpop.f32.mrb[0].mxu0
      %v8026 = vadd.f32 0.0, %v8025
      %v8027 = vpop.f32.mrb[0].mxu0
      %v8028 = vpop.f32.mrb[0].mxu0
      %v8029 = vadd.f32 0.0, %v8028
      %v8030 = vpop.f32.mrb[0].mxu0
      %8031 = vmatprep.mubr.bf16.mxu0 %v7932
      %8032 = vmatmul.mubr.bf16.gmra.mrb[0].mxu0 %v7787
      %v8033 = vpop.f32.mrb[0].mxu0
      %v8034 = vadd.f32 0.0, %v8033
      %v8035 = vpop.f32.mrb[0].mxu0
      %v8036 = vpop.f32.mrb[0].mxu0
      %v8037 = vadd.f32 0.0, %v8036
      %v8038 = vpop.f32.mrb[0].mxu0
      %8039 = vmatprep.mubr.bf16.mxu0 %v7935
      %8040 = vmatmul.mubr.bf16.gmra.mrb[0].mxu0 %v7790
      %v8041 = vpop.f32.mrb[0].mxu0
      %v8042 = vadd.f32 0.0, %v8041
      %v8043 = vpop.f32.mrb[0].mxu0
      %v8044 = vpop.f32.mrb[0].mxu0
      %v8045 = vadd.f32 0.0, %v8044
      %v8046 = vpop.f32.mrb[0].mxu0
      %8047 = vmatprep.mubr.bf16.mxu0 %v7938
      %8048 = vmatmul.mubr.bf16.gmra.mrb[0].mxu0 %v7793
      %v8049 = vpop.f32.mrb[0].mxu0
      %v8050 = vadd.f32 0.0, %v8049
      %v8051 = vpop.f32.mrb[0].mxu0
      %v8052 = vpop.f32.mrb[0].mxu0
      %v8053 = vadd.f32 0.0, %v8052
      %v8054 = vpop.f32.mrb[0].mxu0
      %8055 = vmatprep.mubr.bf16.mxu0 %v7941
      %8056 = vmatmul.mubr.bf16.gmra.mrb[0].mxu0 %v7796
      %v8057 = vpop.f32.mrb[0].mxu0
      %v8058 = vadd.f32 0.0, %v8057
      %v8059 = vpop.f32.mrb[0].mxu0
      %v8060 = vpop.f32.mrb[0].mxu0
      %v8061 = vadd.f32 0.0, %v8060
      %v8062 = vpop.f32.mrb[0].mxu0
      %8063 = vmatprep.mubr.bf16.mxu0 %v7944
      %8064 = vmatmul.mubr.bf16.gmra.mrb[0].mxu0 %v7799
      %v8065 = vpop.f32.mrb[0].mxu0
      %v8066 = vadd.f32 0.0, %v8065
      %v8067 = vpop.f32.mrb[0].mxu0
      %v8068 = vpop.f32.mrb[0].mxu0
      %v8069 = vadd.f32 0.0, %v8068
      %v8070 = vpop.f32.mrb[0].mxu0
      %8071 = vmatprep.mubr.bf16.mxu0 %v7947
      %8072 = vmatmul.mubr.bf16.gmra.mrb[0].mxu0 %v7802
      %v8073 = vpop.f32.mrb[0].mxu0
      %v8074 = vadd.f32 0.0, %v8073
      %v8075 = vpop.f32.mrb[0].mxu0
      %v8076 = vpop.f32.mrb[0].mxu0
      %v8077 = vadd.f32 0.0, %v8076
      %v8078 = vpop.f32.mrb[0].mxu0
      %8079 = vmatprep.mubr.bf16.mxu0 %v7950
      %8080 = vmatmul.mubr.bf16.gmra.mrb[0].mxu0 %v7805
      %v8081 = vpop.f32.mrb[0].mxu0
      %v8082 = vadd.f32 0.0, %v8081
      %v8083 = vpop.f32.mrb[0].mxu0
      %v8084 = vpop.f32.mrb[0].mxu0
      %v8085 = vadd.f32 0.0, %v8084
      %v8086 = vpop.f32.mrb[0].mxu0
      %8087 = vmatprep.mubr.bf16.mxu0 %v7953
      %8088 = vmatmul.mubr.bf16.gmra.mrb[0].mxu0 %v7808
      %v8089 = vpop.f32.mrb[0].mxu0
      %v8090 = vadd.f32 0.0, %v8089
      %v8091 = vpop.f32.mrb[0].mxu0
      %v8092 = vpop.f32.mrb[0].mxu0
      %v8093 = vadd.f32 0.0, %v8092
      %v8094 = vpop.f32.mrb[0].mxu0
      %8095 = vmatprep.mubr.bf16.mxu0 %v7956
      %8096 = vmatmul.mubr.bf16.gmra.mrb[0].mxu0 %v7811
      %v8097 = vpop.f32.mrb[0].mxu0
      %v8098 = vadd.f32 0.0, %v8097
      %v8099 = vpop.f32.mrb[0].mxu0
      %v8100 = vpop.f32.mrb[0].mxu0
      %v8101 = vadd.f32 0.0, %v8100
      %v8102 = vpop.f32.mrb[0].mxu0
      %8103 = vmatprep.mubr.bf16.mxu0 %v7959
      %8104 = vmatmul.mubr.bf16.gmra.mrb[0].mxu0 %v7814
      %v8105 = vpop.f32.mrb[0].mxu0
      %v8106 = vadd.f32 0.0, %v8105
      %v8107 = vpop.f32.mrb[0].mxu0
      %v8108 = vpop.f32.mrb[0].mxu0
      %v8109 = vadd.f32 0.0, %v8108
      %v8110 = vpop.f32.mrb[0].mxu0
      %8111 = vmatprep.mubr.bf16.mxu0 %v7962
      %8112 = vmatmul.mubr.bf16.gmra.mrb[0].mxu0 %v7817
      %v8113 = vpop.f32.mrb[0].mxu0
      %v8114 = vadd.f32 0.0, %v8113
      %v8115 = vpop.f32.mrb[0].mxu0
      %v8116 = vpop.f32.mrb[0].mxu0
      %v8117 = vadd.f32 0.0, %v8116
      %v8118 = vpop.f32.mrb[0].mxu0
      %8119 = vmatprep.mubr.bf16.mxu0 %v7965
      %8120 = vmatmul.mubr.bf16.gmra.mrb[0].mxu0 %v7820
      %v8121 = vpop.f32.mrb[0].mxu0
      %v8122 = vadd.f32 0.0, %v8121
      %v8123 = vpop.f32.mrb[0].mxu0
      %v8124 = vpop.f32.mrb[0].mxu0
      %v8125 = vadd.f32 0.0, %v8124
      %v8126 = vpop.f32.mrb[0].mxu0
      %8127 = vdwg.mxu0
      %v8152 = vunpack.c.l.b16 %v7238
      %v8153 = vunpack.c.l.b16 %v7239
      %v8154 = vunpack.c.l.b16 %v7240
      %v8155 = vunpack.c.l.b16 %v7241
      %v8156 = vunpack.c.l.b16 %v7242
      %v8157 = vunpack.c.l.b16 %v7243
      %v8158 = vunpack.c.l.b16 %v7244
      %v8159 = vunpack.c.l.b16 %v7245
      %v8160 = vunpack.c.l.b16 %v7246
      %v8161 = vunpack.c.l.b16 %v7247
      %v8162 = vunpack.c.l.b16 %v7248
      %v8163 = vunpack.c.l.b16 %v7249
      %v8164 = vunpack.c.l.b16 %v7250
      %v8165 = vunpack.c.l.b16 %v7251
      %v8166 = vunpack.c.l.b16 %v7252
      %v8167 = vunpack.c.l.b16 %v7253
      %v8168 = vunpack.c.l.b16 %v7254
      %v8169 = vunpack.c.l.b16 %v7255
      %v8170 = vunpack.c.l.b16 %v7256
      %v8171 = vunpack.c.l.b16 %v7257
      %v8172 = vunpack.c.l.b16 %v7258
      %v8173 = vunpack.c.l.b16 %v7259
      %v8174 = vunpack.c.l.b16 %v7260
      %v8175 = vunpack.c.l.b16 %v7261
      %v8176 = vpack.c.b16 %v8153, %v8152
      %v8177 = vpack.c.b16 %v8155, %v8154
      %v8178 = vpack.c.b16 %v8157, %v8156
      %v8179 = vpack.c.b16 %v8159, %v8158
      %v8180 = vpack.c.b16 %v8161, %v8160
      %v8181 = vpack.c.b16 %v8163, %v8162
      %v8182 = vpack.c.b16 %v8165, %v8164
      %v8183 = vpack.c.b16 %v8167, %v8166
      %v8184 = vpack.c.b16 %v8169, %v8168
      %v8185 = vpack.c.b16 %v8171, %v8170
      %v8186 = vpack.c.b16 %v8173, %v8172
      %v8187 = vpack.c.b16 %v8175, %v8174
      %v8201 = vsel %vm4696, %v7144, 0
      %v8204 = vsel %vm4696, %v7147, 0
      %v8207 = vsel %vm4696, %v7150, 0
      %v8210 = vsel %vm4696, %v7153, 0
      %v8213 = vsel %vm4696, %v7156, 0
      %v8216 = vsel %vm4696, %v7159, 0
      %v8219 = vsel %vm4696, %v7162, 0
      %v8222 = vsel %vm4696, %v7165, 0
      %v8225 = vsel %vm4696, %v7168, 0
      %v8228 = vsel %vm4696, %v7171, 0
      %v8231 = vsel %vm4696, %v7174, 0
      %v8234 = vsel %vm4696, %v7177, 0
      %v8237 = vsel %vm4696, %v7180, 0
      %v8240 = vsel %vm4696, %v7183, 0
      %v8243 = vsel %vm4696, %v7186, 0
      %v8246 = vsel %vm4696, %v7189, 0
      %8248 = vmatprep.subr.bf16.mxu0 0
      %8249 = vmatpush1.bf16.msra.mxu0 %v8176
      %8250 = vmatprep.subr.bf16.mxu0 0
      %8251 = vmatpush1.bf16.msra.mxu0 %v8177
      %8252 = vmatprep.subr.bf16.mxu0 0
      %8253 = vmatpush1.bf16.msra.mxu0 %v8178
      %8254 = vmatprep.subr.bf16.mxu0 0
      %8255 = vmatpush1.bf16.msra.mxu0 %v8179
      %8256 = vmatprep.subr.bf16.mxu0 0
      %8257 = vmatpush1.bf16.msra.mxu0 %v8180
      %8258 = vmatprep.subr.bf16.mxu0 0
      %8259 = vmatpush1.bf16.msra.mxu0 %v8181
      %8260 = vmatprep.subr.bf16.mxu0 0
      %8261 = vmatpush1.bf16.msra.mxu0 %v8182
      %8262 = vmatprep.subr.bf16.mxu0 0
      %8263 = vmatpush1.bf16.msra.mxu0 %v8183
      %8264 = vmatprep.subr.bf16.mxu0 0
      %8265 = vmatpush1.bf16.msra.mxu0 %v8184
      %8266 = vmatprep.subr.bf16.mxu0 0
      %8267 = vmatpush1.bf16.msra.mxu0 %v8185
      %8268 = vmatprep.subr.bf16.mxu0 0
      %8269 = vmatpush1.bf16.msra.mxu0 %v8186
      %8270 = vmatprep.subr.bf16.mxu0 0
      %8271 = vmatpush1.bf16.msra.mxu0 %v8187
      %8272 = vmatprep.subr.bf16.mxu0 0
      %8273 = vmatpush1.bf16.msra.mxu0 0
      %8274 = vmatprep.subr.bf16.mxu0 0
      %8275 = vmatpush1.bf16.msra.mxu0 0
      %8276 = vmatprep.subr.bf16.mxu0 0
      %8277 = vmatpush1.bf16.msra.mxu0 0
      %8278 = vmatprep.subr.bf16.mxu0 0
      %8279 = vmatpush1.bf16.msra.mxu0 0
      %8280 = vmatprep.mubr.bf16.mxu0 %v8201
      %8281 = vmatmul.mubr.bf16.gmra.mrb[0].mxu0 %v7191
      %v8282 = vpop.f32.mrb[0].mxu0
      %v8283 = vadd.f32 %v8002, %v8282
      %v8284 = vpop.f32.mrb[0].mxu0
      %v8285 = vpop.f32.mrb[0].mxu0
      %v8286 = vadd.f32 %v8005, %v8285
      %v8287 = vpop.f32.mrb[0].mxu0
      %8288 = vmatprep.mubr.bf16.mxu0 %v8204
      %8289 = vmatmul.mubr.bf16.gmra.mrb[0].mxu0 %v7194
      %v8290 = vpop.f32.mrb[0].mxu0
      %v8291 = vadd.f32 %v8010, %v8290
      %v8292 = vpop.f32.mrb[0].mxu0
      %v8293 = vpop.f32.mrb[0].mxu0
      %v8294 = vadd.f32 %v8013, %v8293
      %v8295 = vpop.f32.mrb[0].mxu0
      %8296 = vmatprep.mubr.bf16.mxu0 %v8207
      %8297 = vmatmul.mubr.bf16.gmra.mrb[0].mxu0 %v7197
      %v8298 = vpop.f32.mrb[0].mxu0
      %v8299 = vadd.f32 %v8018, %v8298
      %v8300 = vpop.f32.mrb[0].mxu0
      %v8301 = vpop.f32.mrb[0].mxu0
      %v8302 = vadd.f32 %v8021, %v8301
      %v8303 = vpop.f32.mrb[0].mxu0
      %8304 = vmatprep.mubr.bf16.mxu0 %v8210
      %8305 = vmatmul.mubr.bf16.gmra.mrb[0].mxu0 %v7200
      %v8306 = vpop.f32.mrb[0].mxu0
      %v8307 = vadd.f32 %v8026, %v8306
      %v8308 = vpop.f32.mrb[0].mxu0
      %v8309 = vpop.f32.mrb[0].mxu0
      %v8310 = vadd.f32 %v8029, %v8309
      %v8311 = vpop.f32.mrb[0].mxu0
      %8312 = vmatprep.mubr.bf16.mxu0 %v8213
      %8313 = vmatmul.mubr.bf16.gmra.mrb[0].mxu0 %v7203
      %v8314 = vpop.f32.mrb[0].mxu0
      %v8315 = vadd.f32 %v8034, %v8314
      %v8316 = vpop.f32.mrb[0].mxu0
      %v8317 = vpop.f32.mrb[0].mxu0
      %v8318 = vadd.f32 %v8037, %v8317
      %v8319 = vpop.f32.mrb[0].mxu0
      %8320 = vmatprep.mubr.bf16.mxu0 %v8216
      %8321 = vmatmul.mubr.bf16.gmra.mrb[0].mxu0 %v7206
      %v8322 = vpop.f32.mrb[0].mxu0
      %v8323 = vadd.f32 %v8042, %v8322
      %v8324 = vpop.f32.mrb[0].mxu0
      %v8325 = vpop.f32.mrb[0].mxu0
      %v8326 = vadd.f32 %v8045, %v8325
      %v8327 = vpop.f32.mrb[0].mxu0
      %8328 = vmatprep.mubr.bf16.mxu0 %v8219
      %8329 = vmatmul.mubr.bf16.gmra.mrb[0].mxu0 %v7209
      %v8330 = vpop.f32.mrb[0].mxu0
      %v8331 = vadd.f32 %v8050, %v8330
      %v8332 = vpop.f32.mrb[0].mxu0
      %v8333 = vpop.f32.mrb[0].mxu0
      %v8334 = vadd.f32 %v8053, %v8333
      %v8335 = vpop.f32.mrb[0].mxu0
      %8336 = vmatprep.mubr.bf16.mxu0 %v8222
      %8337 = vmatmul.mubr.bf16.gmra.mrb[0].mxu0 %v7212
      %v8338 = vpop.f32.mrb[0].mxu0
      %v8339 = vadd.f32 %v8058, %v8338
      %v8340 = vpop.f32.mrb[0].mxu0
      %v8341 = vpop.f32.mrb[0].mxu0
      %v8342 = vadd.f32 %v8061, %v8341
      %v8343 = vpop.f32.mrb[0].mxu0
      %8344 = vmatprep.mubr.bf16.mxu0 %v8225
      %8345 = vmatmul.mubr.bf16.gmra.mrb[0].mxu0 %v7215
      %v8346 = vpop.f32.mrb[0].mxu0
      %v8347 = vadd.f32 %v8066, %v8346
      %v8348 = vpop.f32.mrb[0].mxu0
      %v8349 = vpop.f32.mrb[0].mxu0
      %v8350 = vadd.f32 %v8069, %v8349
      %v8351 = vpop.f32.mrb[0].mxu0
      %8352 = vmatprep.mubr.bf16.mxu0 %v8228
      %8353 = vmatmul.mubr.bf16.gmra.mrb[0].mxu0 %v7218
      %v8354 = vpop.f32.mrb[0].mxu0
      %v8355 = vadd.f32 %v8074, %v8354
      %v8356 = vpop.f32.mrb[0].mxu0
      %v8357 = vpop.f32.mrb[0].mxu0
      %v8358 = vadd.f32 %v8077, %v8357
      %v8359 = vpop.f32.mrb[0].mxu0
      %8360 = vmatprep.mubr.bf16.mxu0 %v8231
      %8361 = vmatmul.mubr.bf16.gmra.mrb[0].mxu0 %v7221
      %v8362 = vpop.f32.mrb[0].mxu0
      %v8363 = vadd.f32 %v8082, %v8362
      %v8364 = vpop.f32.mrb[0].mxu0
      %v8365 = vpop.f32.mrb[0].mxu0
      %v8366 = vadd.f32 %v8085, %v8365
      %v8367 = vpop.f32.mrb[0].mxu0
      %8368 = vmatprep.mubr.bf16.mxu0 %v8234
      %8369 = vmatmul.mubr.bf16.gmra.mrb[0].mxu0 %v7224
      %v8370 = vpop.f32.mrb[0].mxu0
      %v8371 = vadd.f32 %v8090, %v8370
      %v8372 = vpop.f32.mrb[0].mxu0
      %v8373 = vpop.f32.mrb[0].mxu0
      %v8374 = vadd.f32 %v8093, %v8373
      %v8375 = vpop.f32.mrb[0].mxu0
      %8376 = vmatprep.mubr.bf16.mxu0 %v8237
      %8377 = vmatmul.mubr.bf16.gmra.mrb[0].mxu0 %v7227
      %v8378 = vpop.f32.mrb[0].mxu0
      %v8379 = vadd.f32 %v8098, %v8378
      %v8380 = vpop.f32.mrb[0].mxu0
      %v8381 = vpop.f32.mrb[0].mxu0
      %v8382 = vadd.f32 %v8101, %v8381
      %v8383 = vpop.f32.mrb[0].mxu0
      %8384 = vmatprep.mubr.bf16.mxu0 %v8240
      %8385 = vmatmul.mubr.bf16.gmra.mrb[0].mxu0 %v7230
      %v8386 = vpop.f32.mrb[0].mxu0
      %v8387 = vadd.f32 %v8106, %v8386
      %v8388 = vpop.f32.mrb[0].mxu0
      %v8389 = vpop.f32.mrb[0].mxu0
      %v8390 = vadd.f32 %v8109, %v8389
      %v8391 = vpop.f32.mrb[0].mxu0
      %8392 = vmatprep.mubr.bf16.mxu0 %v8243
      %8393 = vmatmul.mubr.bf16.gmra.mrb[0].mxu0 %v7233
      %v8394 = vpop.f32.mrb[0].mxu0
      %v8395 = vadd.f32 %v8114, %v8394
      %v8396 = vpop.f32.mrb[0].mxu0
      %v8397 = vpop.f32.mrb[0].mxu0
      %v8398 = vadd.f32 %v8117, %v8397
      %v8399 = vpop.f32.mrb[0].mxu0
      %8400 = vmatprep.mubr.bf16.mxu0 %v8246
      %8401 = vmatmul.mubr.bf16.gmra.mrb[0].mxu0 %v7236
      %v8402 = vpop.f32.mrb[0].mxu0
      %v8403 = vadd.f32 %v8122, %v8402
      %v8404 = vpop.f32.mrb[0].mxu0
      %v8405 = vpop.f32.mrb[0].mxu0
      %v8406 = vadd.f32 %v8125, %v8405
      %v8407 = vpop.f32.mrb[0].mxu0
      %8408 = vdwg.mxu0
      %s8409 = scalar_lea.vmem [#allocation2], 24
      %v8410 = vld [vmem:[%s8409] sm:$0xf]
      %v8411 = vld [vmem:[%s8409 + $0x4] sm:$0xf]
      %v8412 = vld [vmem:[%s8409 + $0xc] sm:$0xf]
      %v8413 = vld [vmem:[%s8409 + $0x10] sm:$0xf]
      %v8414 = vld [vmem:[%s8409 + $0x18] sm:$0xf]
      %v8415 = vld [vmem:[%s8409 + $0x1c] sm:$0xf]
      %v8416 = vld [vmem:[%s8409 + $0x24] sm:$0xf]
      %v8417 = vld [vmem:[%s8409 + $0x28] sm:$0xf]
      %v8418 = vld [vmem:[%s8409 + $0x30] sm:$0xf]
      %v8419 = vld [vmem:[%s8409 + $0x34] sm:$0xf]
      %v8420 = vld [vmem:[%s8409 + $0x3c] sm:$0xf]
      %v8421 = vld [vmem:[%s8409 + $0x40] sm:$0xf]
      %v8422 = vld [vmem:[%s8409 + $0x48] sm:$0xf]
      %v8423 = vld [vmem:[%s8409 + $0x4c] sm:$0xf]
      %v8424 = vld [vmem:[%s8409 + $0x54] sm:$0xf]
      %v8425 = vld [vmem:[%s8409 + $0x58] sm:$0xf]
      %v8426 = vld [vmem:[%s8409 + $0x60] sm:$0xf]
      %v8427 = vld [vmem:[%s8409 + $0x64] sm:$0xf]
      %v8428 = vld [vmem:[%s8409 + $0x6c] sm:$0xf]
      %v8429 = vld [vmem:[%s8409 + $0x70] sm:$0xf]
      %v8430 = vld [vmem:[%s8409 + $0x78] sm:$0xf]
      %v8431 = vld [vmem:[%s8409 + $0x7c] sm:$0xf]
      %v8432 = vld [vmem:[%s8409 + $0x84] sm:$0xf]
      %v8433 = vld [vmem:[%s8409 + $0x88] sm:$0xf]
      %v8434 = vld [vmem:[%s8409 + $0x90] sm:$0xf]
      %v8435 = vld [vmem:[%s8409 + $0x94] sm:$0xf]
      %v8436 = vld [vmem:[%s8409 + $0x9c] sm:$0xf]
      %v8437 = vld [vmem:[%s8409 + $0xa0] sm:$0xf]
      %v8438 = vld [vmem:[%s8409 + $0xa8] sm:$0xf]
      %v8439 = vld [vmem:[%s8409 + $0xac] sm:$0xf]
      %v8440 = vld [vmem:[%s8409 + $0xb4] sm:$0xf]
      %v8441 = vld [vmem:[%s8409 + $0xb8] sm:$0xf]
      %v8442 = vld [vmem:[%s8409 + $0x8] sm:$0x1]
      %v8443 = vld [vmem:[%s8409 + $0x14] sm:$0x1]
      %v8444 = vld [vmem:[%s8409 + $0x20] sm:$0x1]
      %v8445 = vld [vmem:[%s8409 + $0x2c] sm:$0x1]
      %v8446 = vld [vmem:[%s8409 + $0x38] sm:$0x1]
      %v8447 = vld [vmem:[%s8409 + $0x44] sm:$0x1]
      %v8448 = vld [vmem:[%s8409 + $0x50] sm:$0x1]
      %v8449 = vld [vmem:[%s8409 + $0x5c] sm:$0x1]
      %v8450 = vld [vmem:[%s8409 + $0x68] sm:$0x1]
      %v8451 = vld [vmem:[%s8409 + $0x74] sm:$0x1]
      %v8452 = vld [vmem:[%s8409 + $0x80] sm:$0x1]
      %v8453 = vld [vmem:[%s8409 + $0x8c] sm:$0x1]
      %v8454 = vld [vmem:[%s8409 + $0x98] sm:$0x1]
      %v8455 = vld [vmem:[%s8409 + $0xa4] sm:$0x1]
      %v8456 = vld [vmem:[%s8409 + $0xb0] sm:$0x1]
      %v8457 = vld [vmem:[%s8409 + $0xbc] sm:$0x1]
      %v8458 = vld [vmem:[%s8409] sm:$0xe]
      %v8459 = vld [vmem:[%s8409 + $0xc] sm:$0xe]
      %v8460 = vld [vmem:[%s8409 + $0x18] sm:$0xe]
      %v8461 = vld [vmem:[%s8409 + $0x24] sm:$0xe]
      %v8462 = vld [vmem:[%s8409 + $0x30] sm:$0xe]
      %v8463 = vld [vmem:[%s8409 + $0x3c] sm:$0xe]
      %v8464 = vld [vmem:[%s8409 + $0x48] sm:$0xe]
      %v8465 = vld [vmem:[%s8409 + $0x54] sm:$0xe]
      %v8466 = vld [vmem:[%s8409 + $0x60] sm:$0xe]
      %v8467 = vld [vmem:[%s8409 + $0x6c] sm:$0xe]
      %v8468 = vld [vmem:[%s8409 + $0x78] sm:$0xe]
      %v8469 = vld [vmem:[%s8409 + $0x84] sm:$0xe]
      %v8470 = vld [vmem:[%s8409 + $0x90] sm:$0xe]
      %v8471 = vld [vmem:[%s8409 + $0x9c] sm:$0xe]
      %v8472 = vld [vmem:[%s8409 + $0xa8] sm:$0xe]
      %v8473 = vld [vmem:[%s8409 + $0xb4] sm:$0xe]
      %v8506 = vunpack.c.l.b16 %v8410
      %v8507 = vunpack.c.l.b16 %v8411
      %v8508 = vunpack.c.l.b16 %v8412
      %v8509 = vunpack.c.l.b16 %v8413
      %v8510 = vunpack.c.l.b16 %v8414
      %v8511 = vunpack.c.l.b16 %v8415
      %v8512 = vunpack.c.l.b16 %v8416
      %v8513 = vunpack.c.l.b16 %v8417
      %v8514 = vunpack.c.l.b16 %v8418
      %v8515 = vunpack.c.l.b16 %v8419
      %v8516 = vunpack.c.l.b16 %v8420
      %v8517 = vunpack.c.l.b16 %v8421
      %v8518 = vunpack.c.l.b16 %v8422
      %v8519 = vunpack.c.l.b16 %v8423
      %v8520 = vunpack.c.l.b16 %v8424
      %v8521 = vunpack.c.l.b16 %v8425
      %v8522 = vunpack.c.l.b16 %v8426
      %v8523 = vunpack.c.l.b16 %v8427
      %v8524 = vunpack.c.l.b16 %v8428
      %v8525 = vunpack.c.l.b16 %v8429
      %v8526 = vunpack.c.l.b16 %v8430
      %v8527 = vunpack.c.l.b16 %v8431
      %v8528 = vunpack.c.l.b16 %v8432
      %v8529 = vunpack.c.l.b16 %v8433
      %v8530 = vunpack.c.l.b16 %v8434
      %v8531 = vunpack.c.l.b16 %v8435
      %v8532 = vunpack.c.l.b16 %v8436
      %v8533 = vunpack.c.l.b16 %v8437
      %v8534 = vunpack.c.l.b16 %v8438
      %v8535 = vunpack.c.l.b16 %v8439
      %v8536 = vunpack.c.l.b16 %v8440
      %v8537 = vunpack.c.l.b16 %v8441
      %v8538 = vpack.c.b16 %v8507, %v8506
      %v8539 = vpack.c.b16 %v8509, %v8508
      %v8540 = vpack.c.b16 %v8511, %v8510
      %v8541 = vpack.c.b16 %v8513, %v8512
      %v8542 = vpack.c.b16 %v8515, %v8514
      %v8543 = vpack.c.b16 %v8517, %v8516
      %v8544 = vpack.c.b16 %v8519, %v8518
      %v8545 = vpack.c.b16 %v8521, %v8520
      %v8546 = vpack.c.b16 %v8523, %v8522
      %v8547 = vpack.c.b16 %v8525, %v8524
      %v8548 = vpack.c.b16 %v8527, %v8526
      %v8549 = vpack.c.b16 %v8529, %v8528
      %v8550 = vpack.c.b16 %v8531, %v8530
      %v8551 = vpack.c.b16 %v8533, %v8532
      %v8552 = vpack.c.b16 %v8535, %v8534
      %v8553 = vpack.c.b16 %v8537, %v8536
      %v8570 = vunpack.c.l.b16 %v8442
      %v8571 = vunpack.c.l.b16 %v8443
      %v8572 = vunpack.c.l.b16 %v8444
      %v8573 = vunpack.c.l.b16 %v8445
      %v8574 = vunpack.c.l.b16 %v8446
      %v8575 = vunpack.c.l.b16 %v8447
      %v8576 = vunpack.c.l.b16 %v8448
      %v8577 = vunpack.c.l.b16 %v8449
      %v8578 = vunpack.c.l.b16 %v8450
      %v8579 = vunpack.c.l.b16 %v8451
      %v8580 = vunpack.c.l.b16 %v8452
      %v8581 = vunpack.c.l.b16 %v8453
      %v8582 = vunpack.c.l.b16 %v8454
      %v8583 = vunpack.c.l.b16 %v8455
      %v8584 = vunpack.c.l.b16 %v8456
      %v8585 = vunpack.c.l.b16 %v8457
      %v8586 = vpack.c.b16 %v8570, %v8570
      %v8587 = vpack.c.b16 %v8571, %v8571
      %v8588 = vpack.c.b16 %v8572, %v8572
      %v8589 = vpack.c.b16 %v8573, %v8573
      %v8590 = vpack.c.b16 %v8574, %v8574
      %v8591 = vpack.c.b16 %v8575, %v8575
      %v8592 = vpack.c.b16 %v8576, %v8576
      %v8593 = vpack.c.b16 %v8577, %v8577
      %v8594 = vpack.c.b16 %v8578, %v8578
      %v8595 = vpack.c.b16 %v8579, %v8579
      %v8596 = vpack.c.b16 %v8580, %v8580
      %v8597 = vpack.c.b16 %v8581, %v8581
      %v8598 = vpack.c.b16 %v8582, %v8582
      %v8599 = vpack.c.b16 %v8583, %v8583
      %v8600 = vpack.c.b16 %v8584, %v8584
      %v8601 = vpack.c.b16 %v8585, %v8585
      %v8603 = vshrl.u32 %v8538, 16
      %v8605 = vshll.u32 %v8538, 16
      %v8607 = vrot.slane %v8605, 1
      %v8608 = vor.u32 %v8603, %v8607
      %v8610 = vshll.u32 %v8586, 16
      %v8612 = vrot.slane %v8610, 1
      %v8613 = vsel %vm1924, %v8608, %v8612
      %v8615 = vshrl.u32 %v8539, 16
      %v8617 = vshll.u32 %v8539, 16
      %v8619 = vrot.slane %v8617, 1
      %v8620 = vor.u32 %v8615, %v8619
      %v8622 = vshll.u32 %v8587, 16
      %v8624 = vrot.slane %v8622, 1
      %v8625 = vsel %vm1924, %v8620, %v8624
      %v8627 = vshrl.u32 %v8540, 16
      %v8629 = vshll.u32 %v8540, 16
      %v8631 = vrot.slane %v8629, 1
      %v8632 = vor.u32 %v8627, %v8631
      %v8634 = vshll.u32 %v8588, 16
      %v8636 = vrot.slane %v8634, 1
      %v8637 = vsel %vm1924, %v8632, %v8636
      %v8639 = vshrl.u32 %v8541, 16
      %v8641 = vshll.u32 %v8541, 16
      %v8643 = vrot.slane %v8641, 1
      %v8644 = vor.u32 %v8639, %v8643
      %v8646 = vshll.u32 %v8589, 16
      %v8648 = vrot.slane %v8646, 1
      %v8649 = vsel %vm1924, %v8644, %v8648
      %v8651 = vshrl.u32 %v8542, 16
      %v8653 = vshll.u32 %v8542, 16
      %v8655 = vrot.slane %v8653, 1
      %v8656 = vor.u32 %v8651, %v8655
      %v8658 = vshll.u32 %v8590, 16
      %v8660 = vrot.slane %v8658, 1
      %v8661 = vsel %vm1924, %v8656, %v8660
      %v8663 = vshrl.u32 %v8543, 16
      %v8665 = vshll.u32 %v8543, 16
      %v8667 = vrot.slane %v8665, 1
      %v8668 = vor.u32 %v8663, %v8667
      %v8670 = vshll.u32 %v8591, 16
      %v8672 = vrot.slane %v8670, 1
      %v8673 = vsel %vm1924, %v8668, %v8672
      %v8675 = vshrl.u32 %v8544, 16
      %v8677 = vshll.u32 %v8544, 16
      %v8679 = vrot.slane %v8677, 1
      %v8680 = vor.u32 %v8675, %v8679
      %v8682 = vshll.u32 %v8592, 16
      %v8684 = vrot.slane %v8682, 1
      %v8685 = vsel %vm1924, %v8680, %v8684
      %v8687 = vshrl.u32 %v8545, 16
      %v8689 = vshll.u32 %v8545, 16
      %v8691 = vrot.slane %v8689, 1
      %v8692 = vor.u32 %v8687, %v8691
      %v8694 = vshll.u32 %v8593, 16
      %v8696 = vrot.slane %v8694, 1
      %v8697 = vsel %vm1924, %v8692, %v8696
      %v8699 = vshrl.u32 %v8546, 16
      %v8701 = vshll.u32 %v8546, 16
      %v8703 = vrot.slane %v8701, 1
      %v8704 = vor.u32 %v8699, %v8703
      %v8706 = vshll.u32 %v8594, 16
      %v8708 = vrot.slane %v8706, 1
      %v8709 = vsel %vm1924, %v8704, %v8708
      %v8711 = vshrl.u32 %v8547, 16
      %v8713 = vshll.u32 %v8547, 16
      %v8715 = vrot.slane %v8713, 1
      %v8716 = vor.u32 %v8711, %v8715
      %v8718 = vshll.u32 %v8595, 16
      %v8720 = vrot.slane %v8718, 1
      %v8721 = vsel %vm1924, %v8716, %v8720
      %v8723 = vshrl.u32 %v8548, 16
      %v8725 = vshll.u32 %v8548, 16
      %v8727 = vrot.slane %v8725, 1
      %v8728 = vor.u32 %v8723, %v8727
      %v8730 = vshll.u32 %v8596, 16
      %v8732 = vrot.slane %v8730, 1
      %v8733 = vsel %vm1924, %v8728, %v8732
      %v8735 = vshrl.u32 %v8549, 16
      %v8737 = vshll.u32 %v8549, 16
      %v8739 = vrot.slane %v8737, 1
      %v8740 = vor.u32 %v8735, %v8739
      %v8742 = vshll.u32 %v8597, 16
      %v8744 = vrot.slane %v8742, 1
      %v8745 = vsel %vm1924, %v8740, %v8744
      %v8747 = vshrl.u32 %v8550, 16
      %v8749 = vshll.u32 %v8550, 16
      %v8751 = vrot.slane %v8749, 1
      %v8752 = vor.u32 %v8747, %v8751
      %v8754 = vshll.u32 %v8598, 16
      %v8756 = vrot.slane %v8754, 1
      %v8757 = vsel %vm1924, %v8752, %v8756
      %v8759 = vshrl.u32 %v8551, 16
      %v8761 = vshll.u32 %v8551, 16
      %v8763 = vrot.slane %v8761, 1
      %v8764 = vor.u32 %v8759, %v8763
      %v8766 = vshll.u32 %v8599, 16
      %v8768 = vrot.slane %v8766, 1
      %v8769 = vsel %vm1924, %v8764, %v8768
      %v8771 = vshrl.u32 %v8552, 16
      %v8773 = vshll.u32 %v8552, 16
      %v8775 = vrot.slane %v8773, 1
      %v8776 = vor.u32 %v8771, %v8775
      %v8778 = vshll.u32 %v8600, 16
      %v8780 = vrot.slane %v8778, 1
      %v8781 = vsel %vm1924, %v8776, %v8780
      %v8783 = vshrl.u32 %v8553, 16
      %v8785 = vshll.u32 %v8553, 16
      %v8787 = vrot.slane %v8785, 1
      %v8788 = vor.u32 %v8783, %v8787
      %v8790 = vshll.u32 %v8601, 16
      %v8792 = vrot.slane %v8790, 1
      %v8793 = vsel %vm1924, %v8788, %v8792
      %8794 = vrot.lane.b32.xlu0 %v8613, 64
      %v8795 = vpop.permute.xlu0 %8794
      %8796 = vrot.lane.b32.xlu0 %v8625, 64
      %v8797 = vpop.permute.xlu0 %8796
      %8798 = vrot.lane.b32.xlu0 %v8637, 64
      %v8799 = vpop.permute.xlu0 %8798
      %8800 = vrot.lane.b32.xlu0 %v8649, 64
      %v8801 = vpop.permute.xlu0 %8800
      %8802 = vrot.lane.b32.xlu0 %v8661, 64
      %v8803 = vpop.permute.xlu0 %8802
      %8804 = vrot.lane.b32.xlu0 %v8673, 64
      %v8805 = vpop.permute.xlu0 %8804
      %8806 = vrot.lane.b32.xlu0 %v8685, 64
      %v8807 = vpop.permute.xlu0 %8806
      %8808 = vrot.lane.b32.xlu0 %v8697, 64
      %v8809 = vpop.permute.xlu0 %8808
      %8810 = vrot.lane.b32.xlu0 %v8709, 64
      %v8811 = vpop.permute.xlu0 %8810
      %8812 = vrot.lane.b32.xlu0 %v8721, 64
      %v8813 = vpop.permute.xlu0 %8812
      %8814 = vrot.lane.b32.xlu0 %v8733, 64
      %v8815 = vpop.permute.xlu0 %8814
      %8816 = vrot.lane.b32.xlu0 %v8745, 64
      %v8817 = vpop.permute.xlu0 %8816
      %8818 = vrot.lane.b32.xlu0 %v8757, 64
      %v8819 = vpop.permute.xlu0 %8818
      %8820 = vrot.lane.b32.xlu0 %v8769, 64
      %v8821 = vpop.permute.xlu0 %8820
      %8822 = vrot.lane.b32.xlu0 %v8781, 64
      %v8823 = vpop.permute.xlu0 %8822
      %8824 = vrot.lane.b32.xlu0 %v8793, 64
      %v8825 = vpop.permute.xlu0 %8824
      %v8842 = vunpack.c.l.b16 %v8458
      %v8843 = vunpack.c.l.b16 %v8459
      %v8844 = vunpack.c.l.b16 %v8460
      %v8845 = vunpack.c.l.b16 %v8461
      %v8846 = vunpack.c.l.b16 %v8462
      %v8847 = vunpack.c.l.b16 %v8463
      %v8848 = vunpack.c.l.b16 %v8464
      %v8849 = vunpack.c.l.b16 %v8465
      %v8850 = vunpack.c.l.b16 %v8466
      %v8851 = vunpack.c.l.b16 %v8467
      %v8852 = vunpack.c.l.b16 %v8468
      %v8853 = vunpack.c.l.b16 %v8469
      %v8854 = vunpack.c.l.b16 %v8470
      %v8855 = vunpack.c.l.b16 %v8471
      %v8856 = vunpack.c.l.b16 %v8472
      %v8857 = vunpack.c.l.b16 %v8473
      %v8858 = vpack.c.b16 %v8507, %v8842
      %v8859 = vpack.c.b16 %v8509, %v8843
      %v8860 = vpack.c.b16 %v8511, %v8844
      %v8861 = vpack.c.b16 %v8513, %v8845
      %v8862 = vpack.c.b16 %v8515, %v8846
      %v8863 = vpack.c.b16 %v8517, %v8847
      %v8864 = vpack.c.b16 %v8519, %v8848
      %v8865 = vpack.c.b16 %v8521, %v8849
      %v8866 = vpack.c.b16 %v8523, %v8850
      %v8867 = vpack.c.b16 %v8525, %v8851
      %v8868 = vpack.c.b16 %v8527, %v8852
      %v8869 = vpack.c.b16 %v8529, %v8853
      %v8870 = vpack.c.b16 %v8531, %v8854
      %v8871 = vpack.c.b16 %v8533, %v8855
      %v8872 = vpack.c.b16 %v8535, %v8856
      %v8873 = vpack.c.b16 %v8537, %v8857
      %v8874 = vrot.slane %v8858, 1
      %v8875 = vrot.slane %v8586, 1
      %v8876 = vsel %vm2197, %v8874, %v8875
      %v8877 = vrot.slane %v8859, 1
      %v8878 = vrot.slane %v8587, 1
      %v8879 = vsel %vm2197, %v8877, %v8878
      %v8880 = vrot.slane %v8860, 1
      %v8881 = vrot.slane %v8588, 1
      %v8882 = vsel %vm2197, %v8880, %v8881
      %v8883 = vrot.slane %v8861, 1
      %v8884 = vrot.slane %v8589, 1
      %v8885 = vsel %vm2197, %v8883, %v8884
      %v8886 = vrot.slane %v8862, 1
      %v8887 = vrot.slane %v8590, 1
      %v8888 = vsel %vm2197, %v8886, %v8887
      %v8889 = vrot.slane %v8863, 1
      %v8890 = vrot.slane %v8591, 1
      %v8891 = vsel %vm2197, %v8889, %v8890
      %v8892 = vrot.slane %v8864, 1
      %v8893 = vrot.slane %v8592, 1
      %v8894 = vsel %vm2197, %v8892, %v8893
      %v8895 = vrot.slane %v8865, 1
      %v8896 = vrot.slane %v8593, 1
      %v8897 = vsel %vm2197, %v8895, %v8896
      %v8898 = vrot.slane %v8866, 1
      %v8899 = vrot.slane %v8594, 1
      %v8900 = vsel %vm2197, %v8898, %v8899
      %v8901 = vrot.slane %v8867, 1
      %v8902 = vrot.slane %v8595, 1
      %v8903 = vsel %vm2197, %v8901, %v8902
      %v8904 = vrot.slane %v8868, 1
      %v8905 = vrot.slane %v8596, 1
      %v8906 = vsel %vm2197, %v8904, %v8905
      %v8907 = vrot.slane %v8869, 1
      %v8908 = vrot.slane %v8597, 1
      %v8909 = vsel %vm2197, %v8907, %v8908
      %v8910 = vrot.slane %v8870, 1
      %v8911 = vrot.slane %v8598, 1
      %v8912 = vsel %vm2197, %v8910, %v8911
      %v8913 = vrot.slane %v8871, 1
      %v8914 = vrot.slane %v8599, 1
      %v8915 = vsel %vm2197, %v8913, %v8914
      %v8916 = vrot.slane %v8872, 1
      %v8917 = vrot.slane %v8600, 1
      %v8918 = vsel %vm2197, %v8916, %v8917
      %v8919 = vrot.slane %v8873, 1
      %v8920 = vrot.slane %v8601, 1
      %v8921 = vsel %vm2197, %v8919, %v8920
      %v8923 = vsel %vm4696, %v8538, %v8795
      %v8926 = vsel %vm4696, %v8539, %v8797
      %v8929 = vsel %vm4696, %v8540, %v8799
      %v8932 = vsel %vm4696, %v8541, %v8801
      %v8935 = vsel %vm4696, %v8542, %v8803
      %v8938 = vsel %vm4696, %v8543, %v8805
      %v8941 = vsel %vm4696, %v8544, %v8807
      %v8944 = vsel %vm4696, %v8545, %v8809
      %v8947 = vsel %vm4696, %v8546, %v8811
      %v8950 = vsel %vm4696, %v8547, %v8813
      %v8953 = vsel %vm4696, %v8548, %v8815
      %v8956 = vsel %vm4696, %v8549, %v8817
      %v8959 = vsel %vm4696, %v8550, %v8819
      %v8962 = vsel %vm4696, %v8551, %v8821
      %v8965 = vsel %vm4696, %v8552, %v8823
      %v8968 = vsel %vm4696, %v8553, %v8825
      %s8970 = scalar_lea.vmem %s2, 192
      %v8971 = vld [vmem:[%s8970] sm:$0xf]
      %v8972 = vld [vmem:[%s8970 + $0x4] sm:$0xf]
      %v8973 = vld [vmem:[%s8970 + $0x8] sm:$0xf]
      %v8974 = vld [vmem:[%s8970 + $0xc] sm:$0xf]
      %v8975 = vld [vmem:[%s8970 + $0x10] sm:$0xf]
      %v8976 = vld [vmem:[%s8970 + $0x14] sm:$0xf]
      %v8977 = vld [vmem:[%s8970 + $0x18] sm:$0xf]
      %v8978 = vld [vmem:[%s8970 + $0x1c] sm:$0xf]
      %v8979 = vld [vmem:[%s8970 + $0x20] sm:$0xf]
      %v8980 = vld [vmem:[%s8970 + $0x24] sm:$0xf]
      %v8981 = vld [vmem:[%s8970 + $0x28] sm:$0xf]
      %v8982 = vld [vmem:[%s8970 + $0x2c] sm:$0xf]
      %v8983 = vld [vmem:[%s8970 + $0x30] sm:$0xf]
      %v8984 = vld [vmem:[%s8970 + $0x34] sm:$0xf]
      %v8985 = vld [vmem:[%s8970 + $0x38] sm:$0xf]
      %v8986 = vld [vmem:[%s8970 + $0x3c] sm:$0xf]
      %v8987 = vld [vmem:[%s8970 + $0x40] sm:$0xf]
      %v8988 = vld [vmem:[%s8970 + $0x44] sm:$0xf]
      %v8989 = vld [vmem:[%s8970 + $0x48] sm:$0xf]
      %v8990 = vld [vmem:[%s8970 + $0x4c] sm:$0xf]
      %v8991 = vld [vmem:[%s8970 + $0x50] sm:$0xf]
      %v8992 = vld [vmem:[%s8970 + $0x54] sm:$0xf]
      %v8993 = vld [vmem:[%s8970 + $0x58] sm:$0xf]
      %v8994 = vld [vmem:[%s8970 + $0x5c] sm:$0xf]
      %v9019 = vunpack.c.l.b16 %v8971
      %v9020 = vunpack.c.l.b16 %v8972
      %v9021 = vunpack.c.l.b16 %v8973
      %v9022 = vunpack.c.l.b16 %v8974
      %v9023 = vunpack.c.l.b16 %v8975
      %v9024 = vunpack.c.l.b16 %v8976
      %v9025 = vunpack.c.l.b16 %v8977
      %v9026 = vunpack.c.l.b16 %v8978
      %v9027 = vunpack.c.l.b16 %v8979
      %v9028 = vunpack.c.l.b16 %v8980
      %v9029 = vunpack.c.l.b16 %v8981
      %v9030 = vunpack.c.l.b16 %v8982
      %v9031 = vunpack.c.l.b16 %v8983
      %v9032 = vunpack.c.l.b16 %v8984
      %v9033 = vunpack.c.l.b16 %v8985
      %v9034 = vunpack.c.l.b16 %v8986
      %v9035 = vunpack.c.l.b16 %v8987
      %v9036 = vunpack.c.l.b16 %v8988
      %v9037 = vunpack.c.l.b16 %v8989
      %v9038 = vunpack.c.l.b16 %v8990
      %v9039 = vunpack.c.l.b16 %v8991
      %v9040 = vunpack.c.l.b16 %v8992
      %v9041 = vunpack.c.l.b16 %v8993
      %v9042 = vunpack.c.l.b16 %v8994
      %v9043 = vpack.c.b16 %v9020, %v9019
      %v9044 = vpack.c.b16 %v9022, %v9021
      %v9045 = vpack.c.b16 %v9024, %v9023
      %v9046 = vpack.c.b16 %v9026, %v9025
      %v9047 = vpack.c.b16 %v9028, %v9027
      %v9048 = vpack.c.b16 %v9030, %v9029
      %v9049 = vpack.c.b16 %v9032, %v9031
      %v9050 = vpack.c.b16 %v9034, %v9033
      %v9051 = vpack.c.b16 %v9036, %v9035
      %v9052 = vpack.c.b16 %v9038, %v9037
      %v9053 = vpack.c.b16 %v9040, %v9039
      %v9054 = vpack.c.b16 %v9042, %v9041
      %v9068 = vsel %vm4696, %v8876, 0
      %v9071 = vsel %vm4696, %v8879, 0
      %v9074 = vsel %vm4696, %v8882, 0
      %v9077 = vsel %vm4696, %v8885, 0
      %v9080 = vsel %vm4696, %v8888, 0
      %v9083 = vsel %vm4696, %v8891, 0
      %v9086 = vsel %vm4696, %v8894, 0
      %v9089 = vsel %vm4696, %v8897, 0
      %v9092 = vsel %vm4696, %v8900, 0
      %v9095 = vsel %vm4696, %v8903, 0
      %v9098 = vsel %vm4696, %v8906, 0
      %v9101 = vsel %vm4696, %v8909, 0
      %v9104 = vsel %vm4696, %v8912, 0
      %v9107 = vsel %vm4696, %v8915, 0
      %v9110 = vsel %vm4696, %v8918, 0
      %v9113 = vsel %vm4696, %v8921, 0
      %9115 = vmatprep.subr.bf16.mxu0 0
      %9116 = vmatpush1.bf16.msra.mxu0 %v9043
      %9117 = vmatprep.subr.bf16.mxu0 0
      %9118 = vmatpush1.bf16.msra.mxu0 %v9044
      %9119 = vmatprep.subr.bf16.mxu0 0
      %9120 = vmatpush1.bf16.msra.mxu0 %v9045
      %9121 = vmatprep.subr.bf16.mxu0 0
      %9122 = vmatpush1.bf16.msra.mxu0 %v9046
      %9123 = vmatprep.subr.bf16.mxu0 0
      %9124 = vmatpush1.bf16.msra.mxu0 %v9047
      %9125 = vmatprep.subr.bf16.mxu0 0
      %9126 = vmatpush1.bf16.msra.mxu0 %v9048
      %9127 = vmatprep.subr.bf16.mxu0 0
      %9128 = vmatpush1.bf16.msra.mxu0 %v9049
      %9129 = vmatprep.subr.bf16.mxu0 0
      %9130 = vmatpush1.bf16.msra.mxu0 %v9050
      %9131 = vmatprep.subr.bf16.mxu0 0
      %9132 = vmatpush1.bf16.msra.mxu0 %v9051
      %9133 = vmatprep.subr.bf16.mxu0 0
      %9134 = vmatpush1.bf16.msra.mxu0 %v9052
      %9135 = vmatprep.subr.bf16.mxu0 0
      %9136 = vmatpush1.bf16.msra.mxu0 %v9053
      %9137 = vmatprep.subr.bf16.mxu0 0
      %9138 = vmatpush1.bf16.msra.mxu0 %v9054
      %9139 = vmatprep.subr.bf16.mxu0 0
      %9140 = vmatpush1.bf16.msra.mxu0 0
      %9141 = vmatprep.subr.bf16.mxu0 0
      %9142 = vmatpush1.bf16.msra.mxu0 0
      %9143 = vmatprep.subr.bf16.mxu0 0
      %9144 = vmatpush1.bf16.msra.mxu0 0
      %9145 = vmatprep.subr.bf16.mxu0 0
      %9146 = vmatpush1.bf16.msra.mxu0 0
      %9147 = vmatprep.mubr.bf16.mxu0 %v9068
      %9148 = vmatmul.mubr.bf16.gmra.mrb[0].mxu0 %v8923
      %v9149 = vpop.f32.mrb[0].mxu0
      %v9150 = vadd.f32 0.0, %v9149
      %v9151 = vpop.f32.mrb[0].mxu0
      %v9152 = vpop.f32.mrb[0].mxu0
      %v9153 = vadd.f32 0.0, %v9152
      %v9154 = vpop.f32.mrb[0].mxu0
      %9155 = vmatprep.mubr.bf16.mxu0 %v9071
      %9156 = vmatmul.mubr.bf16.gmra.mrb[0].mxu0 %v8926
      %v9157 = vpop.f32.mrb[0].mxu0
      %v9158 = vadd.f32 0.0, %v9157
      %v9159 = vpop.f32.mrb[0].mxu0
      %v9160 = vpop.f32.mrb[0].mxu0
      %v9161 = vadd.f32 0.0, %v9160
      %v9162 = vpop.f32.mrb[0].mxu0
      %9163 = vmatprep.mubr.bf16.mxu0 %v9074
      %9164 = vmatmul.mubr.bf16.gmra.mrb[0].mxu0 %v8929
      %v9165 = vpop.f32.mrb[0].mxu0
      %v9166 = vadd.f32 0.0, %v9165
      %v9167 = vpop.f32.mrb[0].mxu0
      %v9168 = vpop.f32.mrb[0].mxu0
      %v9169 = vadd.f32 0.0, %v9168
      %v9170 = vpop.f32.mrb[0].mxu0
      %9171 = vmatprep.mubr.bf16.mxu0 %v9077
      %9172 = vmatmul.mubr.bf16.gmra.mrb[0].mxu0 %v8932
      %v9173 = vpop.f32.mrb[0].mxu0
      %v9174 = vadd.f32 0.0, %v9173
      %v9175 = vpop.f32.mrb[0].mxu0
      %v9176 = vpop.f32.mrb[0].mxu0
      %v9177 = vadd.f32 0.0, %v9176
      %v9178 = vpop.f32.mrb[0].mxu0
      %9179 = vmatprep.mubr.bf16.mxu0 %v9080
      %9180 = vmatmul.mubr.bf16.gmra.mrb[0].mxu0 %v8935
      %v9181 = vpop.f32.mrb[0].mxu0
      %v9182 = vadd.f32 0.0, %v9181
      %v9183 = vpop.f32.mrb[0].mxu0
      %v9184 = vpop.f32.mrb[0].mxu0
      %v9185 = vadd.f32 0.0, %v9184
      %v9186 = vpop.f32.mrb[0].mxu0
      %9187 = vmatprep.mubr.bf16.mxu0 %v9083
      %9188 = vmatmul.mubr.bf16.gmra.mrb[0].mxu0 %v8938
      %v9189 = vpop.f32.mrb[0].mxu0
      %v9190 = vadd.f32 0.0, %v9189
      %v9191 = vpop.f32.mrb[0].mxu0
      %v9192 = vpop.f32.mrb[0].mxu0
      %v9193 = vadd.f32 0.0, %v9192
      %v9194 = vpop.f32.mrb[0].mxu0
      %9195 = vmatprep.mubr.bf16.mxu0 %v9086
      %9196 = vmatmul.mubr.bf16.gmra.mrb[0].mxu0 %v8941
      %v9197 = vpop.f32.mrb[0].mxu0
      %v9198 = vadd.f32 0.0, %v9197
      %v9199 = vpop.f32.mrb[0].mxu0
      %v9200 = vpop.f32.mrb[0].mxu0
      %v9201 = vadd.f32 0.0, %v9200
      %v9202 = vpop.f32.mrb[0].mxu0
      %9203 = vmatprep.mubr.bf16.mxu0 %v9089
      %9204 = vmatmul.mubr.bf16.gmra.mrb[0].mxu0 %v8944
      %v9205 = vpop.f32.mrb[0].mxu0
      %v9206 = vadd.f32 0.0, %v9205
      %v9207 = vpop.f32.mrb[0].mxu0
      %v9208 = vpop.f32.mrb[0].mxu0
      %v9209 = vadd.f32 0.0, %v9208
      %v9210 = vpop.f32.mrb[0].mxu0
      %9211 = vmatprep.mubr.bf16.mxu0 %v9092
      %9212 = vmatmul.mubr.bf16.gmra.mrb[0].mxu0 %v8947
      %v9213 = vpop.f32.mrb[0].mxu0
      %v9214 = vadd.f32 0.0, %v9213
      %v9215 = vpop.f32.mrb[0].mxu0
      %v9216 = vpop.f32.mrb[0].mxu0
      %v9217 = vadd.f32 0.0, %v9216
      %v9218 = vpop.f32.mrb[0].mxu0
      %9219 = vmatprep.mubr.bf16.mxu0 %v9095
      %9220 = vmatmul.mubr.bf16.gmra.mrb[0].mxu0 %v8950
      %v9221 = vpop.f32.mrb[0].mxu0
      %v9222 = vadd.f32 0.0, %v9221
      %v9223 = vpop.f32.mrb[0].mxu0
      %v9224 = vpop.f32.mrb[0].mxu0
      %v9225 = vadd.f32 0.0, %v9224
      %v9226 = vpop.f32.mrb[0].mxu0
      %9227 = vmatprep.mubr.bf16.mxu0 %v9098
      %9228 = vmatmul.mubr.bf16.gmra.mrb[0].mxu0 %v8953
      %v9229 = vpop.f32.mrb[0].mxu0
      %v9230 = vadd.f32 0.0, %v9229
      %v9231 = vpop.f32.mrb[0].mxu0
      %v9232 = vpop.f32.mrb[0].mxu0
      %v9233 = vadd.f32 0.0, %v9232
      %v9234 = vpop.f32.mrb[0].mxu0
      %9235 = vmatprep.mubr.bf16.mxu0 %v9101
      %9236 = vmatmul.mubr.bf16.gmra.mrb[0].mxu0 %v8956
      %v9237 = vpop.f32.mrb[0].mxu0
      %v9238 = vadd.f32 0.0, %v9237
      %v9239 = vpop.f32.mrb[0].mxu0
      %v9240 = vpop.f32.mrb[0].mxu0
      %v9241 = vadd.f32 0.0, %v9240
      %v9242 = vpop.f32.mrb[0].mxu0
      %9243 = vmatprep.mubr.bf16.mxu0 %v9104
      %9244 = vmatmul.mubr.bf16.gmra.mrb[0].mxu0 %v8959
      %v9245 = vpop.f32.mrb[0].mxu0
      %v9246 = vadd.f32 0.0, %v9245
      %v9247 = vpop.f32.mrb[0].mxu0
      %v9248 = vpop.f32.mrb[0].mxu0
      %v9249 = vadd.f32 0.0, %v9248
      %v9250 = vpop.f32.mrb[0].mxu0
      %9251 = vmatprep.mubr.bf16.mxu0 %v9107
      %9252 = vmatmul.mubr.bf16.gmra.mrb[0].mxu0 %v8962
      %v9253 = vpop.f32.mrb[0].mxu0
      %v9254 = vadd.f32 0.0, %v9253
      %v9255 = vpop.f32.mrb[0].mxu0
      %v9256 = vpop.f32.mrb[0].mxu0
      %v9257 = vadd.f32 0.0, %v9256
      %v9258 = vpop.f32.mrb[0].mxu0
      %9259 = vmatprep.mubr.bf16.mxu0 %v9110
      %9260 = vmatmul.mubr.bf16.gmra.mrb[0].mxu0 %v8965
      %v9261 = vpop.f32.mrb[0].mxu0
      %v9262 = vadd.f32 0.0, %v9261
      %v9263 = vpop.f32.mrb[0].mxu0
      %v9264 = vpop.f32.mrb[0].mxu0
      %v9265 = vadd.f32 0.0, %v9264
      %v9266 = vpop.f32.mrb[0].mxu0
      %9267 = vmatprep.mubr.bf16.mxu0 %v9113
      %9268 = vmatmul.mubr.bf16.gmra.mrb[0].mxu0 %v8968
      %v9269 = vpop.f32.mrb[0].mxu0
      %v9270 = vadd.f32 0.0, %v9269
      %v9271 = vpop.f32.mrb[0].mxu0
      %v9272 = vpop.f32.mrb[0].mxu0
      %v9273 = vadd.f32 0.0, %v9272
      %v9274 = vpop.f32.mrb[0].mxu0
      %9275 = vdwg.mxu0
      %v9276 = vadd.f32 %v8283, %v9150
      %v9277 = vadd.f32 %v8286, %v9153
      %v9278 = vadd.f32 %v8291, %v9158
      %v9279 = vadd.f32 %v8294, %v9161
      %v9280 = vadd.f32 %v8299, %v9166
      %v9281 = vadd.f32 %v8302, %v9169
      %v9282 = vadd.f32 %v8307, %v9174
      %v9283 = vadd.f32 %v8310, %v9177
      %v9284 = vadd.f32 %v8315, %v9182
      %v9285 = vadd.f32 %v8318, %v9185
      %v9286 = vadd.f32 %v8323, %v9190
      %v9287 = vadd.f32 %v8326, %v9193
      %v9288 = vadd.f32 %v8331, %v9198
      %v9289 = vadd.f32 %v8334, %v9201
      %v9290 = vadd.f32 %v8339, %v9206
      %v9291 = vadd.f32 %v8342, %v9209
      %v9292 = vadd.f32 %v8347, %v9214
      %v9293 = vadd.f32 %v8350, %v9217
      %v9294 = vadd.f32 %v8355, %v9222
      %v9295 = vadd.f32 %v8358, %v9225
      %v9296 = vadd.f32 %v8363, %v9230
      %v9297 = vadd.f32 %v8366, %v9233
      %v9298 = vadd.f32 %v8371, %v9238
      %v9299 = vadd.f32 %v8374, %v9241
      %v9300 = vadd.f32 %v8379, %v9246
      %v9301 = vadd.f32 %v8382, %v9249
      %v9302 = vadd.f32 %v8387, %v9254
      %v9303 = vadd.f32 %v8390, %v9257
      %v9304 = vadd.f32 %v8395, %v9262
      %v9305 = vadd.f32 %v8398, %v9265
      %v9306 = vadd.f32 %v8403, %v9270
      %v9307 = vadd.f32 %v8406, %v9273
      %v9308 = vpack.c.bf16 %v9277, %v9276
      %v9309 = vpack.c.bf16 %v9279, %v9278
      %v9310 = vpack.c.bf16 %v9281, %v9280
      %v9311 = vpack.c.bf16 %v9283, %v9282
      %v9312 = vpack.c.bf16 %v9285, %v9284
      %v9313 = vpack.c.bf16 %v9287, %v9286
      %v9314 = vpack.c.bf16 %v9289, %v9288
      %v9315 = vpack.c.bf16 %v9291, %v9290
      %v9316 = vpack.c.bf16 %v9293, %v9292
      %v9317 = vpack.c.bf16 %v9295, %v9294
      %v9318 = vpack.c.bf16 %v9297, %v9296
      %v9319 = vpack.c.bf16 %v9299, %v9298
      %v9320 = vpack.c.bf16 %v9301, %v9300
      %v9321 = vpack.c.bf16 %v9303, %v9302
      %v9322 = vpack.c.bf16 %v9305, %v9304
      %v9323 = vpack.c.bf16 %v9307, %v9306
      %v9340 = vunpack.c.l.b16 %v9308
      %v9341 = vunpack.c.h.b16 %v9308
      %v9342 = vunpack.c.l.b16 %v9309
      %v9343 = vunpack.c.h.b16 %v9309
      %v9344 = vunpack.c.l.b16 %v9310
      %v9345 = vunpack.c.h.b16 %v9310
      %v9346 = vunpack.c.l.b16 %v9311
      %v9347 = vunpack.c.h.b16 %v9311
      %v9348 = vunpack.c.l.b16 %v9312
      %v9349 = vunpack.c.h.b16 %v9312
      %v9350 = vunpack.c.l.b16 %v9313
      %v9351 = vunpack.c.h.b16 %v9313
      %v9352 = vunpack.c.l.b16 %v9314
      %v9353 = vunpack.c.h.b16 %v9314
      %v9354 = vunpack.c.l.b16 %v9315
      %v9355 = vunpack.c.h.b16 %v9315
      %v9356 = vunpack.c.l.b16 %v9316
      %v9357 = vunpack.c.h.b16 %v9316
      %v9358 = vunpack.c.l.b16 %v9317
      %v9359 = vunpack.c.h.b16 %v9317
      %v9360 = vunpack.c.l.b16 %v9318
      %v9361 = vunpack.c.h.b16 %v9318
      %v9362 = vunpack.c.l.b16 %v9319
      %v9363 = vunpack.c.h.b16 %v9319
      %v9364 = vunpack.c.l.b16 %v9320
      %v9365 = vunpack.c.h.b16 %v9320
      %v9366 = vunpack.c.l.b16 %v9321
      %v9367 = vunpack.c.h.b16 %v9321
      %v9368 = vunpack.c.l.b16 %v9322
      %v9369 = vunpack.c.h.b16 %v9322
      %v9370 = vunpack.c.l.b16 %v9323
      %v9371 = vunpack.c.h.b16 %v9323
      %v9372 = vpack.c.b16 %v9340, %v9340
      %v9373 = vpack.c.b16 %v9341, %v9341
      %v9374 = vpack.c.b16 %v9342, %v9342
      %v9375 = vpack.c.b16 %v9343, %v9343
      %v9376 = vpack.c.b16 %v9344, %v9344
      %v9377 = vpack.c.b16 %v9345, %v9345
      %v9378 = vpack.c.b16 %v9346, %v9346
      %v9379 = vpack.c.b16 %v9347, %v9347
      %v9380 = vpack.c.b16 %v9348, %v9348
      %v9381 = vpack.c.b16 %v9349, %v9349
      %v9382 = vpack.c.b16 %v9350, %v9350
      %v9383 = vpack.c.b16 %v9351, %v9351
      %v9384 = vpack.c.b16 %v9352, %v9352
      %v9385 = vpack.c.b16 %v9353, %v9353
      %v9386 = vpack.c.b16 %v9354, %v9354
      %v9387 = vpack.c.b16 %v9355, %v9355
      %v9388 = vpack.c.b16 %v9356, %v9356
      %v9389 = vpack.c.b16 %v9357, %v9357
      %v9390 = vpack.c.b16 %v9358, %v9358
      %v9391 = vpack.c.b16 %v9359, %v9359
      %v9392 = vpack.c.b16 %v9360, %v9360
      %v9393 = vpack.c.b16 %v9361, %v9361
      %v9394 = vpack.c.b16 %v9362, %v9362
      %v9395 = vpack.c.b16 %v9363, %v9363
      %v9396 = vpack.c.b16 %v9364, %v9364
      %v9397 = vpack.c.b16 %v9365, %v9365
      %v9398 = vpack.c.b16 %v9366, %v9366
      %v9399 = vpack.c.b16 %v9367, %v9367
      %v9400 = vpack.c.b16 %v9368, %v9368
      %v9401 = vpack.c.b16 %v9369, %v9369
      %v9402 = vpack.c.b16 %v9370, %v9370
      %v9403 = vpack.c.b16 %v9371, %v9371
      %v9405 = vshrl.u32 %v9372, 16
      %v9407 = vrot.slane %v9405, 7
      %v9408 = vshll.u32 %v9372, 16
      %v9410 = vor.u32 %v9407, %v9408
      %v9411 = vrot.slane %v9407, 4
      %v9413 = vshrl.u32 %v9373, 16
      %v9415 = vrot.slane %v9413, 7
      %v9416 = vshll.u32 %v9373, 16
      %v9418 = vor.u32 %v9415, %v9416
      %v9419 = vsel %vm1200, %v9411, %v9418
      %v9420 = vrot.slane %v9415, 4
      %v9422 = vshrl.u32 %v9374, 16
      %v9424 = vrot.slane %v9422, 7
      %v9425 = vshll.u32 %v9374, 16
      %v9427 = vor.u32 %v9424, %v9425
      %v9428 = vrot.slane %v9424, 4
      %v9430 = vshrl.u32 %v9375, 16
      %v9432 = vrot.slane %v9430, 7
      %v9433 = vshll.u32 %v9375, 16
      %v9435 = vor.u32 %v9432, %v9433
      %v9436 = vsel %vm1200, %v9428, %v9435
      %v9437 = vrot.slane %v9432, 4
      %v9439 = vshrl.u32 %v9376, 16
      %v9441 = vrot.slane %v9439, 7
      %v9442 = vshll.u32 %v9376, 16
      %v9444 = vor.u32 %v9441, %v9442
      %v9445 = vrot.slane %v9441, 4
      %v9447 = vshrl.u32 %v9377, 16
      %v9449 = vrot.slane %v9447, 7
      %v9450 = vshll.u32 %v9377, 16
      %v9452 = vor.u32 %v9449, %v9450
      %v9453 = vsel %vm1200, %v9445, %v9452
      %v9454 = vrot.slane %v9449, 4
      %v9456 = vshrl.u32 %v9378, 16
      %v9458 = vrot.slane %v9456, 7
      %v9459 = vshll.u32 %v9378, 16
      %v9461 = vor.u32 %v9458, %v9459
      %v9462 = vrot.slane %v9458, 4
      %v9464 = vshrl.u32 %v9379, 16
      %v9466 = vrot.slane %v9464, 7
      %v9467 = vshll.u32 %v9379, 16
      %v9469 = vor.u32 %v9466, %v9467
      %v9470 = vsel %vm1200, %v9462, %v9469
      %v9471 = vrot.slane %v9466, 4
      %v9473 = vshrl.u32 %v9380, 16
      %v9475 = vrot.slane %v9473, 7
      %v9476 = vshll.u32 %v9380, 16
      %v9478 = vor.u32 %v9475, %v9476
      %v9479 = vrot.slane %v9475, 4
      %v9481 = vshrl.u32 %v9381, 16
      %v9483 = vrot.slane %v9481, 7
      %v9484 = vshll.u32 %v9381, 16
      %v9486 = vor.u32 %v9483, %v9484
      %v9487 = vsel %vm1200, %v9479, %v9486
      %v9488 = vrot.slane %v9483, 4
      %v9490 = vshrl.u32 %v9382, 16
      %v9492 = vrot.slane %v9490, 7
      %v9493 = vshll.u32 %v9382, 16
      %v9495 = vor.u32 %v9492, %v9493
      %v9496 = vrot.slane %v9492, 4
      %v9498 = vshrl.u32 %v9383, 16
      %v9500 = vrot.slane %v9498, 7
      %v9501 = vshll.u32 %v9383, 16
      %v9503 = vor.u32 %v9500, %v9501
      %v9504 = vsel %vm1200, %v9496, %v9503
      %v9505 = vrot.slane %v9500, 4
      %v9507 = vshrl.u32 %v9384, 16
      %v9509 = vrot.slane %v9507, 7
      %v9510 = vshll.u32 %v9384, 16
      %v9512 = vor.u32 %v9509, %v9510
      %v9513 = vrot.slane %v9509, 4
      %v9515 = vshrl.u32 %v9385, 16
      %v9517 = vrot.slane %v9515, 7
      %v9518 = vshll.u32 %v9385, 16
      %v9520 = vor.u32 %v9517, %v9518
      %v9521 = vsel %vm1200, %v9513, %v9520
      %v9522 = vrot.slane %v9517, 4
      %v9524 = vshrl.u32 %v9386, 16
      %v9526 = vrot.slane %v9524, 7
      %v9527 = vshll.u32 %v9386, 16
      %v9529 = vor.u32 %v9526, %v9527
      %v9530 = vrot.slane %v9526, 4
      %v9532 = vshrl.u32 %v9387, 16
      %v9534 = vrot.slane %v9532, 7
      %v9535 = vshll.u32 %v9387, 16
      %v9537 = vor.u32 %v9534, %v9535
      %v9538 = vsel %vm1200, %v9530, %v9537
      %v9539 = vrot.slane %v9534, 4
      %v9541 = vshrl.u32 %v9388, 16
      %v9543 = vrot.slane %v9541, 7
      %v9544 = vshll.u32 %v9388, 16
      %v9546 = vor.u32 %v9543, %v9544
      %v9547 = vrot.slane %v9543, 4
      %v9549 = vshrl.u32 %v9389, 16
      %v9551 = vrot.slane %v9549, 7
      %v9552 = vshll.u32 %v9389, 16
      %v9554 = vor.u32 %v9551, %v9552
      %v9555 = vsel %vm1200, %v9547, %v9554
      %v9556 = vrot.slane %v9551, 4
      %v9558 = vshrl.u32 %v9390, 16
      %v9560 = vrot.slane %v9558, 7
      %v9561 = vshll.u32 %v9390, 16
      %v9563 = vor.u32 %v9560, %v9561
      %v9564 = vrot.slane %v9560, 4
      %v9566 = vshrl.u32 %v9391, 16
      %v9568 = vrot.slane %v9566, 7
      %v9569 = vshll.u32 %v9391, 16
      %v9571 = vor.u32 %v9568, %v9569
      %v9572 = vsel %vm1200, %v9564, %v9571
      %v9573 = vrot.slane %v9568, 4
      %v9575 = vshrl.u32 %v9392, 16
      %v9577 = vrot.slane %v9575, 7
      %v9578 = vshll.u32 %v9392, 16
      %v9580 = vor.u32 %v9577, %v9578
      %v9581 = vrot.slane %v9577, 4
      %v9583 = vshrl.u32 %v9393, 16
      %v9585 = vrot.slane %v9583, 7
      %v9586 = vshll.u32 %v9393, 16
      %v9588 = vor.u32 %v9585, %v9586
      %v9589 = vsel %vm1200, %v9581, %v9588
      %v9590 = vrot.slane %v9585, 4
      %v9592 = vshrl.u32 %v9394, 16
      %v9594 = vrot.slane %v9592, 7
      %v9595 = vshll.u32 %v9394, 16
      %v9597 = vor.u32 %v9594, %v9595
      %v9598 = vrot.slane %v9594, 4
      %v9600 = vshrl.u32 %v9395, 16
      %v9602 = vrot.slane %v9600, 7
      %v9603 = vshll.u32 %v9395, 16
      %v9605 = vor.u32 %v9602, %v9603
      %v9606 = vsel %vm1200, %v9598, %v9605
      %v9607 = vrot.slane %v9602, 4
      %v9609 = vshrl.u32 %v9396, 16
      %v9611 = vrot.slane %v9609, 7
      %v9612 = vshll.u32 %v9396, 16
      %v9614 = vor.u32 %v9611, %v9612
      %v9615 = vrot.slane %v9611, 4
      %v9617 = vshrl.u32 %v9397, 16
      %v9619 = vrot.slane %v9617, 7
      %v9620 = vshll.u32 %v9397, 16
      %v9622 = vor.u32 %v9619, %v9620
      %v9623 = vsel %vm1200, %v9615, %v9622
      %v9624 = vrot.slane %v9619, 4
      %v9626 = vshrl.u32 %v9398, 16
      %v9628 = vrot.slane %v9626, 7
      %v9629 = vshll.u32 %v9398, 16
      %v9631 = vor.u32 %v9628, %v9629
      %v9632 = vrot.slane %v9628, 4
      %v9634 = vshrl.u32 %v9399, 16
      %v9636 = vrot.slane %v9634, 7
      %v9637 = vshll.u32 %v9399, 16
      %v9639 = vor.u32 %v9636, %v9637
      %v9640 = vsel %vm1200, %v9632, %v9639
      %v9641 = vrot.slane %v9636, 4
      %v9643 = vshrl.u32 %v9400, 16
      %v9645 = vrot.slane %v9643, 7
      %v9646 = vshll.u32 %v9400, 16
      %v9648 = vor.u32 %v9645, %v9646
      %v9649 = vrot.slane %v9645, 4
      %v9651 = vshrl.u32 %v9401, 16
      %v9653 = vrot.slane %v9651, 7
      %v9654 = vshll.u32 %v9401, 16
      %v9656 = vor.u32 %v9653, %v9654
      %v9657 = vsel %vm1200, %v9649, %v9656
      %v9658 = vrot.slane %v9653, 4
      %v9660 = vshrl.u32 %v9402, 16
      %v9662 = vrot.slane %v9660, 7
      %v9663 = vshll.u32 %v9402, 16
      %v9665 = vor.u32 %v9662, %v9663
      %v9666 = vrot.slane %v9662, 4
      %v9668 = vshrl.u32 %v9403, 16
      %v9670 = vrot.slane %v9668, 7
      %v9671 = vshll.u32 %v9403, 16
      %v9673 = vor.u32 %v9670, %v9671
      %v9674 = vsel %vm1200, %v9666, %v9673
      %v9675 = vrot.slane %v9670, 4
      %s9724 = scalar_lea.vmem [#allocation3], 12
      %vm9725 = vcmask 781312
      %vm9726 = vmand %vm9725, %vm320
      %v9727 = vld [vmem:[%s9724] sm:$0xf]
      %v9728 = vsel %vm9726, %v9410, %v9727
      %9729 = vst [vmem:[%s9724] sm:$0xf] %v9728
      %9730 = vst.msk [vmem:[%s9724 + $0x4] sm:$0xf] %vm376, %v9419
      %v9731 = vld [vmem:[%s9724 + $0x8] sm:$0x1]
      %v9732 = vsel %vm386, %v9420, %v9731
      %9733 = vst [vmem:[%s9724 + $0x8] sm:$0x1] %v9732
      %v9734 = vld [vmem:[%s9724 + $0xc] sm:$0xf]
      %v9735 = vsel %vm9726, %v9427, %v9734
      %9736 = vst [vmem:[%s9724 + $0xc] sm:$0xf] %v9735
      %9737 = vst.msk [vmem:[%s9724 + $0x10] sm:$0xf] %vm376, %v9436
      %v9738 = vld [vmem:[%s9724 + $0x14] sm:$0x1]
      %v9739 = vsel %vm386, %v9437, %v9738
      %9740 = vst [vmem:[%s9724 + $0x14] sm:$0x1] %v9739
      %v9741 = vld [vmem:[%s9724 + $0x18] sm:$0xf]
      %v9742 = vsel %vm9726, %v9444, %v9741
      %9743 = vst [vmem:[%s9724 + $0x18] sm:$0xf] %v9742
      %9744 = vst.msk [vmem:[%s9724 + $0x1c] sm:$0xf] %vm376, %v9453
      %v9745 = vld [vmem:[%s9724 + $0x20] sm:$0x1]
      %v9746 = vsel %vm386, %v9454, %v9745
      %9747 = vst [vmem:[%s9724 + $0x20] sm:$0x1] %v9746
      %v9748 = vld [vmem:[%s9724 + $0x24] sm:$0xf]
      %v9749 = vsel %vm9726, %v9461, %v9748
      %9750 = vst [vmem:[%s9724 + $0x24] sm:$0xf] %v9749
      %9751 = vst.msk [vmem:[%s9724 + $0x28] sm:$0xf] %vm376, %v9470
      %v9752 = vld [vmem:[%s9724 + $0x2c] sm:$0x1]
      %v9753 = vsel %vm386, %v9471, %v9752
      %9754 = vst [vmem:[%s9724 + $0x2c] sm:$0x1] %v9753
      %v9755 = vld [vmem:[%s9724 + $0x30] sm:$0xf]
      %v9756 = vsel %vm9726, %v9478, %v9755
      %9757 = vst [vmem:[%s9724 + $0x30] sm:$0xf] %v9756
      %9758 = vst.msk [vmem:[%s9724 + $0x34] sm:$0xf] %vm376, %v9487
      %v9759 = vld [vmem:[%s9724 + $0x38] sm:$0x1]
      %v9760 = vsel %vm386, %v9488, %v9759
      %9761 = vst [vmem:[%s9724 + $0x38] sm:$0x1] %v9760
      %v9762 = vld [vmem:[%s9724 + $0x3c] sm:$0xf]
      %v9763 = vsel %vm9726, %v9495, %v9762
      %9764 = vst [vmem:[%s9724 + $0x3c] sm:$0xf] %v9763
      %9765 = vst.msk [vmem:[%s9724 + $0x40] sm:$0xf] %vm376, %v9504
      %v9766 = vld [vmem:[%s9724 + $0x44] sm:$0x1]
      %v9767 = vsel %vm386, %v9505, %v9766
      %9768 = vst [vmem:[%s9724 + $0x44] sm:$0x1] %v9767
      %v9769 = vld [vmem:[%s9724 + $0x48] sm:$0xf]
      %v9770 = vsel %vm9726, %v9512, %v9769
      %9771 = vst [vmem:[%s9724 + $0x48] sm:$0xf] %v9770
      %9772 = vst.msk [vmem:[%s9724 + $0x4c] sm:$0xf] %vm376, %v9521
      %v9773 = vld [vmem:[%s9724 + $0x50] sm:$0x1]
      %v9774 = vsel %vm386, %v9522, %v9773
      %9775 = vst [vmem:[%s9724 + $0x50] sm:$0x1] %v9774
      %v9776 = vld [vmem:[%s9724 + $0x54] sm:$0xf]
      %v9777 = vsel %vm9726, %v9529, %v9776
      %9778 = vst [vmem:[%s9724 + $0x54] sm:$0xf] %v9777
      %9779 = vst.msk [vmem:[%s9724 + $0x58] sm:$0xf] %vm376, %v9538
      %v9780 = vld [vmem:[%s9724 + $0x5c] sm:$0x1]
      %v9781 = vsel %vm386, %v9539, %v9780
      %9782 = vst [vmem:[%s9724 + $0x5c] sm:$0x1] %v9781
      %v9783 = vld [vmem:[%s9724 + $0x60] sm:$0xf]
      %v9784 = vsel %vm9726, %v9546, %v9783
      %9785 = vst [vmem:[%s9724 + $0x60] sm:$0xf] %v9784
      %9786 = vst.msk [vmem:[%s9724 + $0x64] sm:$0xf] %vm376, %v9555
      %v9787 = vld [vmem:[%s9724 + $0x68] sm:$0x1]
      %v9788 = vsel %vm386, %v9556, %v9787
      %9789 = vst [vmem:[%s9724 + $0x68] sm:$0x1] %v9788
      %v9790 = vld [vmem:[%s9724 + $0x6c] sm:$0xf]
      %v9791 = vsel %vm9726, %v9563, %v9790
      %9792 = vst [vmem:[%s9724 + $0x6c] sm:$0xf] %v9791
      %9793 = vst.msk [vmem:[%s9724 + $0x70] sm:$0xf] %vm376, %v9572
      %v9794 = vld [vmem:[%s9724 + $0x74] sm:$0x1]
      %v9795 = vsel %vm386, %v9573, %v9794
      %9796 = vst [vmem:[%s9724 + $0x74] sm:$0x1] %v9795
      %v9797 = vld [vmem:[%s9724 + $0x78] sm:$0xf]
      %v9798 = vsel %vm9726, %v9580, %v9797
      %9799 = vst [vmem:[%s9724 + $0x78] sm:$0xf] %v9798
      %9800 = vst.msk [vmem:[%s9724 + $0x7c] sm:$0xf] %vm376, %v9589
      %v9801 = vld [vmem:[%s9724 + $0x80] sm:$0x1]
      %v9802 = vsel %vm386, %v9590, %v9801
      %9803 = vst [vmem:[%s9724 + $0x80] sm:$0x1] %v9802
      %v9804 = vld [vmem:[%s9724 + $0x84] sm:$0xf]
      %v9805 = vsel %vm9726, %v9597, %v9804
      %9806 = vst [vmem:[%s9724 + $0x84] sm:$0xf] %v9805
      %9807 = vst.msk [vmem:[%s9724 + $0x88] sm:$0xf] %vm376, %v9606
      %v9808 = vld [vmem:[%s9724 + $0x8c] sm:$0x1]
      %v9809 = vsel %vm386, %v9607, %v9808
      %9810 = vst [vmem:[%s9724 + $0x8c] sm:$0x1] %v9809
      %v9811 = vld [vmem:[%s9724 + $0x90] sm:$0xf]
      %v9812 = vsel %vm9726, %v9614, %v9811
      %9813 = vst [vmem:[%s9724 + $0x90] sm:$0xf] %v9812
      %9814 = vst.msk [vmem:[%s9724 + $0x94] sm:$0xf] %vm376, %v9623
      %v9815 = vld [vmem:[%s9724 + $0x98] sm:$0x1]
      %v9816 = vsel %vm386, %v9624, %v9815
      %9817 = vst [vmem:[%s9724 + $0x98] sm:$0x1] %v9816
      %v9818 = vld [vmem:[%s9724 + $0x9c] sm:$0xf]
      %v9819 = vsel %vm9726, %v9631, %v9818
      %9820 = vst [vmem:[%s9724 + $0x9c] sm:$0xf] %v9819
      %9821 = vst.msk [vmem:[%s9724 + $0xa0] sm:$0xf] %vm376, %v9640
      %v9822 = vld [vmem:[%s9724 + $0xa4] sm:$0x1]
      %v9823 = vsel %vm386, %v9641, %v9822
      %9824 = vst [vmem:[%s9724 + $0xa4] sm:$0x1] %v9823
      %v9825 = vld [vmem:[%s9724 + $0xa8] sm:$0xf]
      %v9826 = vsel %vm9726, %v9648, %v9825
      %9827 = vst [vmem:[%s9724 + $0xa8] sm:$0xf] %v9826
      %9828 = vst.msk [vmem:[%s9724 + $0xac] sm:$0xf] %vm376, %v9657
      %v9829 = vld [vmem:[%s9724 + $0xb0] sm:$0x1]
      %v9830 = vsel %vm386, %v9658, %v9829
      %9831 = vst [vmem:[%s9724 + $0xb0] sm:$0x1] %v9830
      %v9832 = vld [vmem:[%s9724 + $0xb4] sm:$0xf]
      %v9833 = vsel %vm9726, %v9665, %v9832
      %9834 = vst [vmem:[%s9724 + $0xb4] sm:$0xf] %v9833
      %9835 = vst.msk [vmem:[%s9724 + $0xb8] sm:$0xf] %vm376, %v9674
      %v9836 = vld [vmem:[%s9724 + $0xbc] sm:$0x1]
      %v9837 = vsel %vm386, %v9675, %v9836
      %9838 = vst [vmem:[%s9724 + $0xbc] sm:$0x1] %v9837
      %v9839 = vld [vmem:[#allocation3] sm:$0xf]
      %v9840 = vld [vmem:[#allocation3 + $0x4] sm:$0xf]
      %v9841 = vld [vmem:[#allocation3 + $0xc] sm:$0xf]
      %v9842 = vld [vmem:[#allocation3 + $0x10] sm:$0xf]
      %v9843 = vld [vmem:[#allocation3 + $0x18] sm:$0xf]
      %v9844 = vld [vmem:[#allocation3 + $0x1c] sm:$0xf]
      %v9845 = vld [vmem:[#allocation3 + $0x24] sm:$0xf]
      %v9846 = vld [vmem:[#allocation3 + $0x28] sm:$0xf]
      %v9847 = vld [vmem:[#allocation3 + $0x30] sm:$0xf]
      %v9848 = vld [vmem:[#allocation3 + $0x34] sm:$0xf]
      %v9849 = vld [vmem:[#allocation3 + $0x3c] sm:$0xf]
      %v9850 = vld [vmem:[#allocation3 + $0x40] sm:$0xf]
      %v9851 = vld [vmem:[#allocation3 + $0x48] sm:$0xf]
      %v9852 = vld [vmem:[#allocation3 + $0x4c] sm:$0xf]
      %v9853 = vld [vmem:[#allocation3 + $0x54] sm:$0xf]
      %v9854 = vld [vmem:[#allocation3 + $0x58] sm:$0xf]
      %v9855 = vld [vmem:[#allocation3 + $0x60] sm:$0xf]
      %v9856 = vld [vmem:[#allocation3 + $0x64] sm:$0xf]
      %v9857 = vld [vmem:[#allocation3 + $0x6c] sm:$0xf]
      %v9858 = vld [vmem:[#allocation3 + $0x70] sm:$0xf]
      %v9859 = vld [vmem:[#allocation3 + $0x78] sm:$0xf]
      %v9860 = vld [vmem:[#allocation3 + $0x7c] sm:$0xf]
      %v9861 = vld [vmem:[#allocation3 + $0x84] sm:$0xf]
      %v9862 = vld [vmem:[#allocation3 + $0x88] sm:$0xf]
      %v9863 = vld [vmem:[#allocation3 + $0x90] sm:$0xf]
      %v9864 = vld [vmem:[#allocation3 + $0x94] sm:$0xf]
      %v9865 = vld [vmem:[#allocation3 + $0x9c] sm:$0xf]
      %v9866 = vld [vmem:[#allocation3 + $0xa0] sm:$0xf]
      %v9867 = vld [vmem:[#allocation3 + $0xa8] sm:$0xf]
      %v9868 = vld [vmem:[#allocation3 + $0xac] sm:$0xf]
      %v9869 = vld [vmem:[#allocation3 + $0xb4] sm:$0xf]
      %v9870 = vld [vmem:[#allocation3 + $0xb8] sm:$0xf]
      %v9871 = vld [vmem:[#allocation3 + $0x8] sm:$0x1]
      %v9872 = vld [vmem:[#allocation3 + $0x14] sm:$0x1]
      %v9873 = vld [vmem:[#allocation3 + $0x20] sm:$0x1]
      %v9874 = vld [vmem:[#allocation3 + $0x2c] sm:$0x1]
      %v9875 = vld [vmem:[#allocation3 + $0x38] sm:$0x1]
      %v9876 = vld [vmem:[#allocation3 + $0x44] sm:$0x1]
      %v9877 = vld [vmem:[#allocation3 + $0x50] sm:$0x1]
      %v9878 = vld [vmem:[#allocation3 + $0x5c] sm:$0x1]
      %v9879 = vld [vmem:[#allocation3 + $0x68] sm:$0x1]
      %v9880 = vld [vmem:[#allocation3 + $0x74] sm:$0x1]
      %v9881 = vld [vmem:[#allocation3 + $0x80] sm:$0x1]
      %v9882 = vld [vmem:[#allocation3 + $0x8c] sm:$0x1]
      %v9883 = vld [vmem:[#allocation3 + $0x98] sm:$0x1]
      %v9884 = vld [vmem:[#allocation3 + $0xa4] sm:$0x1]
      %v9885 = vld [vmem:[#allocation3 + $0xb0] sm:$0x1]
      %v9886 = vld [vmem:[#allocation3 + $0xbc] sm:$0x1]
      %v9887 = vld [vmem:[#allocation3] sm:$0xe]
      %v9888 = vld [vmem:[#allocation3 + $0xc] sm:$0xe]
      %v9889 = vld [vmem:[#allocation3 + $0x18] sm:$0xe]
      %v9890 = vld [vmem:[#allocation3 + $0x24] sm:$0xe]
      %v9891 = vld [vmem:[#allocation3 + $0x30] sm:$0xe]
      %v9892 = vld [vmem:[#allocation3 + $0x3c] sm:$0xe]
      %v9893 = vld [vmem:[#allocation3 + $0x48] sm:$0xe]
      %v9894 = vld [vmem:[#allocation3 + $0x54] sm:$0xe]
      %v9895 = vld [vmem:[#allocation3 + $0x60] sm:$0xe]
      %v9896 = vld [vmem:[#allocation3 + $0x6c] sm:$0xe]
      %v9897 = vld [vmem:[#allocation3 + $0x78] sm:$0xe]
      %v9898 = vld [vmem:[#allocation3 + $0x84] sm:$0xe]
      %v9899 = vld [vmem:[#allocation3 + $0x90] sm:$0xe]
      %v9900 = vld [vmem:[#allocation3 + $0x9c] sm:$0xe]
      %v9901 = vld [vmem:[#allocation3 + $0xa8] sm:$0xe]
      %v9902 = vld [vmem:[#allocation3 + $0xb4] sm:$0xe]
      %v9935 = vunpack.c.l.b16 %v9839
      %v9936 = vunpack.c.l.b16 %v9840
      %v9937 = vunpack.c.l.b16 %v9841
      %v9938 = vunpack.c.l.b16 %v9842
      %v9939 = vunpack.c.l.b16 %v9843
      %v9940 = vunpack.c.l.b16 %v9844
      %v9941 = vunpack.c.l.b16 %v9845
      %v9942 = vunpack.c.l.b16 %v9846
      %v9943 = vunpack.c.l.b16 %v9847
      %v9944 = vunpack.c.l.b16 %v9848
      %v9945 = vunpack.c.l.b16 %v9849
      %v9946 = vunpack.c.l.b16 %v9850
      %v9947 = vunpack.c.l.b16 %v9851
      %v9948 = vunpack.c.l.b16 %v9852
      %v9949 = vunpack.c.l.b16 %v9853
      %v9950 = vunpack.c.l.b16 %v9854
      %v9951 = vunpack.c.l.b16 %v9855
      %v9952 = vunpack.c.l.b16 %v9856
      %v9953 = vunpack.c.l.b16 %v9857
      %v9954 = vunpack.c.l.b16 %v9858
      %v9955 = vunpack.c.l.b16 %v9859
      %v9956 = vunpack.c.l.b16 %v9860
      %v9957 = vunpack.c.l.b16 %v9861
      %v9958 = vunpack.c.l.b16 %v9862
      %v9959 = vunpack.c.l.b16 %v9863
      %v9960 = vunpack.c.l.b16 %v9864
      %v9961 = vunpack.c.l.b16 %v9865
      %v9962 = vunpack.c.l.b16 %v9866
      %v9963 = vunpack.c.l.b16 %v9867
      %v9964 = vunpack.c.l.b16 %v9868
      %v9965 = vunpack.c.l.b16 %v9869
      %v9966 = vunpack.c.l.b16 %v9870
      %v9967 = vpack.c.b16 %v9936, %v9935
      %v9968 = vpack.c.b16 %v9938, %v9937
      %v9969 = vpack.c.b16 %v9940, %v9939
      %v9970 = vpack.c.b16 %v9942, %v9941
      %v9971 = vpack.c.b16 %v9944, %v9943
      %v9972 = vpack.c.b16 %v9946, %v9945
      %v9973 = vpack.c.b16 %v9948, %v9947
      %v9974 = vpack.c.b16 %v9950, %v9949
      %v9975 = vpack.c.b16 %v9952, %v9951
      %v9976 = vpack.c.b16 %v9954, %v9953
      %v9977 = vpack.c.b16 %v9956, %v9955
      %v9978 = vpack.c.b16 %v9958, %v9957
      %v9979 = vpack.c.b16 %v9960, %v9959
      %v9980 = vpack.c.b16 %v9962, %v9961
      %v9981 = vpack.c.b16 %v9964, %v9963
      %v9982 = vpack.c.b16 %v9966, %v9965
      %v9999 = vunpack.c.l.b16 %v9871
      %v10000 = vunpack.c.l.b16 %v9872
      %v10001 = vunpack.c.l.b16 %v9873
      %v10002 = vunpack.c.l.b16 %v9874
      %v10003 = vunpack.c.l.b16 %v9875
      %v10004 = vunpack.c.l.b16 %v9876
      %v10005 = vunpack.c.l.b16 %v9877
      %v10006 = vunpack.c.l.b16 %v9878
      %v10007 = vunpack.c.l.b16 %v9879
      %v10008 = vunpack.c.l.b16 %v9880
      %v10009 = vunpack.c.l.b16 %v9881
      %v10010 = vunpack.c.l.b16 %v9882
      %v10011 = vunpack.c.l.b16 %v9883
      %v10012 = vunpack.c.l.b16 %v9884
      %v10013 = vunpack.c.l.b16 %v9885
      %v10014 = vunpack.c.l.b16 %v9886
      %v10015 = vpack.c.b16 %v9999, %v9999
      %v10016 = vpack.c.b16 %v10000, %v10000
      %v10017 = vpack.c.b16 %v10001, %v10001
      %v10018 = vpack.c.b16 %v10002, %v10002
      %v10019 = vpack.c.b16 %v10003, %v10003
      %v10020 = vpack.c.b16 %v10004, %v10004
      %v10021 = vpack.c.b16 %v10005, %v10005
      %v10022 = vpack.c.b16 %v10006, %v10006
      %v10023 = vpack.c.b16 %v10007, %v10007
      %v10024 = vpack.c.b16 %v10008, %v10008
      %v10025 = vpack.c.b16 %v10009, %v10009
      %v10026 = vpack.c.b16 %v10010, %v10010
      %v10027 = vpack.c.b16 %v10011, %v10011
      %v10028 = vpack.c.b16 %v10012, %v10012
      %v10029 = vpack.c.b16 %v10013, %v10013
      %v10030 = vpack.c.b16 %v10014, %v10014
      %v10032 = vshrl.u32 %v9967, 16
      %v10034 = vshll.u32 %v9967, 16
      %v10036 = vrot.slane %v10034, 1
      %v10037 = vor.u32 %v10032, %v10036
      %v10039 = vshll.u32 %v10015, 16
      %v10041 = vrot.slane %v10039, 1
      %v10042 = vsel %vm1924, %v10037, %v10041
      %v10044 = vshrl.u32 %v9968, 16
      %v10046 = vshll.u32 %v9968, 16
      %v10048 = vrot.slane %v10046, 1
      %v10049 = vor.u32 %v10044, %v10048
      %v10051 = vshll.u32 %v10016, 16
      %v10053 = vrot.slane %v10051, 1
      %v10054 = vsel %vm1924, %v10049, %v10053
      %v10056 = vshrl.u32 %v9969, 16
      %v10058 = vshll.u32 %v9969, 16
      %v10060 = vrot.slane %v10058, 1
      %v10061 = vor.u32 %v10056, %v10060
      %v10063 = vshll.u32 %v10017, 16
      %v10065 = vrot.slane %v10063, 1
      %v10066 = vsel %vm1924, %v10061, %v10065
      %v10068 = vshrl.u32 %v9970, 16
      %v10070 = vshll.u32 %v9970, 16
      %v10072 = vrot.slane %v10070, 1
      %v10073 = vor.u32 %v10068, %v10072
      %v10075 = vshll.u32 %v10018, 16
      %v10077 = vrot.slane %v10075, 1
      %v10078 = vsel %vm1924, %v10073, %v10077
      %v10080 = vshrl.u32 %v9971, 16
      %v10082 = vshll.u32 %v9971, 16
      %v10084 = vrot.slane %v10082, 1
      %v10085 = vor.u32 %v10080, %v10084
      %v10087 = vshll.u32 %v10019, 16
      %v10089 = vrot.slane %v10087, 1
      %v10090 = vsel %vm1924, %v10085, %v10089
      %v10092 = vshrl.u32 %v9972, 16
      %v10094 = vshll.u32 %v9972, 16
      %v10096 = vrot.slane %v10094, 1
      %v10097 = vor.u32 %v10092, %v10096
      %v10099 = vshll.u32 %v10020, 16
      %v10101 = vrot.slane %v10099, 1
      %v10102 = vsel %vm1924, %v10097, %v10101
      %v10104 = vshrl.u32 %v9973, 16
      %v10106 = vshll.u32 %v9973, 16
      %v10108 = vrot.slane %v10106, 1
      %v10109 = vor.u32 %v10104, %v10108
      %v10111 = vshll.u32 %v10021, 16
      %v10113 = vrot.slane %v10111, 1
      %v10114 = vsel %vm1924, %v10109, %v10113
      %v10116 = vshrl.u32 %v9974, 16
      %v10118 = vshll.u32 %v9974, 16
      %v10120 = vrot.slane %v10118, 1
      %v10121 = vor.u32 %v10116, %v10120
      %v10123 = vshll.u32 %v10022, 16
      %v10125 = vrot.slane %v10123, 1
      %v10126 = vsel %vm1924, %v10121, %v10125
      %v10128 = vshrl.u32 %v9975, 16
      %v10130 = vshll.u32 %v9975, 16
      %v10132 = vrot.slane %v10130, 1
      %v10133 = vor.u32 %v10128, %v10132
      %v10135 = vshll.u32 %v10023, 16
      %v10137 = vrot.slane %v10135, 1
      %v10138 = vsel %vm1924, %v10133, %v10137
      %v10140 = vshrl.u32 %v9976, 16
      %v10142 = vshll.u32 %v9976, 16
      %v10144 = vrot.slane %v10142, 1
      %v10145 = vor.u32 %v10140, %v10144
      %v10147 = vshll.u32 %v10024, 16
      %v10149 = vrot.slane %v10147, 1
      %v10150 = vsel %vm1924, %v10145, %v10149
      %v10152 = vshrl.u32 %v9977, 16
      %v10154 = vshll.u32 %v9977, 16
      %v10156 = vrot.slane %v10154, 1
      %v10157 = vor.u32 %v10152, %v10156
      %v10159 = vshll.u32 %v10025, 16
      %v10161 = vrot.slane %v10159, 1
      %v10162 = vsel %vm1924, %v10157, %v10161
      %v10164 = vshrl.u32 %v9978, 16
      %v10166 = vshll.u32 %v9978, 16
      %v10168 = vrot.slane %v10166, 1
      %v10169 = vor.u32 %v10164, %v10168
      %v10171 = vshll.u32 %v10026, 16
      %v10173 = vrot.slane %v10171, 1
      %v10174 = vsel %vm1924, %v10169, %v10173
      %v10176 = vshrl.u32 %v9979, 16
      %v10178 = vshll.u32 %v9979, 16
      %v10180 = vrot.slane %v10178, 1
      %v10181 = vor.u32 %v10176, %v10180
      %v10183 = vshll.u32 %v10027, 16
      %v10185 = vrot.slane %v10183, 1
      %v10186 = vsel %vm1924, %v10181, %v10185
      %v10188 = vshrl.u32 %v9980, 16
      %v10190 = vshll.u32 %v9980, 16
      %v10192 = vrot.slane %v10190, 1
      %v10193 = vor.u32 %v10188, %v10192
      %v10195 = vshll.u32 %v10028, 16
      %v10197 = vrot.slane %v10195, 1
      %v10198 = vsel %vm1924, %v10193, %v10197
      %v10200 = vshrl.u32 %v9981, 16
      %v10202 = vshll.u32 %v9981, 16
      %v10204 = vrot.slane %v10202, 1
      %v10205 = vor.u32 %v10200, %v10204
      %v10207 = vshll.u32 %v10029, 16
      %v10209 = vrot.slane %v10207, 1
      %v10210 = vsel %vm1924, %v10205, %v10209
      %v10212 = vshrl.u32 %v9982, 16
      %v10214 = vshll.u32 %v9982, 16
      %v10216 = vrot.slane %v10214, 1
      %v10217 = vor.u32 %v10212, %v10216
      %v10219 = vshll.u32 %v10030, 16
      %v10221 = vrot.slane %v10219, 1
      %v10222 = vsel %vm1924, %v10217, %v10221
      %10223 = vrot.lane.b32.xlu0 %v10042, 96
      %v10224 = vpop.permute.xlu0 %10223
      %10225 = vrot.lane.b32.xlu0 %v10054, 96
      %v10226 = vpop.permute.xlu0 %10225
      %10227 = vrot.lane.b32.xlu0 %v10066, 96
      %v10228 = vpop.permute.xlu0 %10227
      %10229 = vrot.lane.b32.xlu0 %v10078, 96
      %v10230 = vpop.permute.xlu0 %10229
      %10231 = vrot.lane.b32.xlu0 %v10090, 96
      %v10232 = vpop.permute.xlu0 %10231
      %10233 = vrot.lane.b32.xlu0 %v10102, 96
      %v10234 = vpop.permute.xlu0 %10233
      %10235 = vrot.lane.b32.xlu0 %v10114, 96
      %v10236 = vpop.permute.xlu0 %10235
      %10237 = vrot.lane.b32.xlu0 %v10126, 96
      %v10238 = vpop.permute.xlu0 %10237
      %10239 = vrot.lane.b32.xlu0 %v10138, 96
      %v10240 = vpop.permute.xlu0 %10239
      %10241 = vrot.lane.b32.xlu0 %v10150, 96
      %v10242 = vpop.permute.xlu0 %10241
      %10243 = vrot.lane.b32.xlu0 %v10162, 96
      %v10244 = vpop.permute.xlu0 %10243
      %10245 = vrot.lane.b32.xlu0 %v10174, 96
      %v10246 = vpop.permute.xlu0 %10245
      %10247 = vrot.lane.b32.xlu0 %v10186, 96
      %v10248 = vpop.permute.xlu0 %10247
      %10249 = vrot.lane.b32.xlu0 %v10198, 96
      %v10250 = vpop.permute.xlu0 %10249
      %10251 = vrot.lane.b32.xlu0 %v10210, 96
      %v10252 = vpop.permute.xlu0 %10251
      %10253 = vrot.lane.b32.xlu0 %v10222, 96
      %v10254 = vpop.permute.xlu0 %10253
      %v10271 = vunpack.c.l.b16 %v9887
      %v10272 = vunpack.c.l.b16 %v9888
      %v10273 = vunpack.c.l.b16 %v9889
      %v10274 = vunpack.c.l.b16 %v9890
      %v10275 = vunpack.c.l.b16 %v9891
      %v10276 = vunpack.c.l.b16 %v9892
      %v10277 = vunpack.c.l.b16 %v9893
      %v10278 = vunpack.c.l.b16 %v9894
      %v10279 = vunpack.c.l.b16 %v9895
      %v10280 = vunpack.c.l.b16 %v9896
      %v10281 = vunpack.c.l.b16 %v9897
      %v10282 = vunpack.c.l.b16 %v9898
      %v10283 = vunpack.c.l.b16 %v9899
      %v10284 = vunpack.c.l.b16 %v9900
      %v10285 = vunpack.c.l.b16 %v9901
      %v10286 = vunpack.c.l.b16 %v9902
      %v10287 = vpack.c.b16 %v9936, %v10271
      %v10288 = vpack.c.b16 %v9938, %v10272
      %v10289 = vpack.c.b16 %v9940, %v10273
      %v10290 = vpack.c.b16 %v9942, %v10274
      %v10291 = vpack.c.b16 %v9944, %v10275
      %v10292 = vpack.c.b16 %v9946, %v10276
      %v10293 = vpack.c.b16 %v9948, %v10277
      %v10294 = vpack.c.b16 %v9950, %v10278
      %v10295 = vpack.c.b16 %v9952, %v10279
      %v10296 = vpack.c.b16 %v9954, %v10280
      %v10297 = vpack.c.b16 %v9956, %v10281
      %v10298 = vpack.c.b16 %v9958, %v10282
      %v10299 = vpack.c.b16 %v9960, %v10283
      %v10300 = vpack.c.b16 %v9962, %v10284
      %v10301 = vpack.c.b16 %v9964, %v10285
      %v10302 = vpack.c.b16 %v9966, %v10286
      %v10303 = vrot.slane %v10287, 1
      %v10304 = vrot.slane %v10015, 1
      %v10305 = vsel %vm2197, %v10303, %v10304
      %v10306 = vrot.slane %v10288, 1
      %v10307 = vrot.slane %v10016, 1
      %v10308 = vsel %vm2197, %v10306, %v10307
      %v10309 = vrot.slane %v10289, 1
      %v10310 = vrot.slane %v10017, 1
      %v10311 = vsel %vm2197, %v10309, %v10310
      %v10312 = vrot.slane %v10290, 1
      %v10313 = vrot.slane %v10018, 1
      %v10314 = vsel %vm2197, %v10312, %v10313
      %v10315 = vrot.slane %v10291, 1
      %v10316 = vrot.slane %v10019, 1
      %v10317 = vsel %vm2197, %v10315, %v10316
      %v10318 = vrot.slane %v10292, 1
      %v10319 = vrot.slane %v10020, 1
      %v10320 = vsel %vm2197, %v10318, %v10319
      %v10321 = vrot.slane %v10293, 1
      %v10322 = vrot.slane %v10021, 1
      %v10323 = vsel %vm2197, %v10321, %v10322
      %v10324 = vrot.slane %v10294, 1
      %v10325 = vrot.slane %v10022, 1
      %v10326 = vsel %vm2197, %v10324, %v10325
      %v10327 = vrot.slane %v10295, 1
      %v10328 = vrot.slane %v10023, 1
      %v10329 = vsel %vm2197, %v10327, %v10328
      %v10330 = vrot.slane %v10296, 1
      %v10331 = vrot.slane %v10024, 1
      %v10332 = vsel %vm2197, %v10330, %v10331
      %v10333 = vrot.slane %v10297, 1
      %v10334 = vrot.slane %v10025, 1
      %v10335 = vsel %vm2197, %v10333, %v10334
      %v10336 = vrot.slane %v10298, 1
      %v10337 = vrot.slane %v10026, 1
      %v10338 = vsel %vm2197, %v10336, %v10337
      %v10339 = vrot.slane %v10299, 1
      %v10340 = vrot.slane %v10027, 1
      %v10341 = vsel %vm2197, %v10339, %v10340
      %v10342 = vrot.slane %v10300, 1
      %v10343 = vrot.slane %v10028, 1
      %v10344 = vsel %vm2197, %v10342, %v10343
      %v10345 = vrot.slane %v10301, 1
      %v10346 = vrot.slane %v10029, 1
      %v10347 = vsel %vm2197, %v10345, %v10346
      %v10348 = vrot.slane %v10302, 1
      %v10349 = vrot.slane %v10030, 1
      %v10350 = vsel %vm2197, %v10348, %v10349
      %10351 = vrot.lane.b32.xlu0 %v10305, 64
      %v10352 = vpop.permute.xlu0 %10351
      %10353 = vrot.lane.b32.xlu0 %v10308, 64
      %v10354 = vpop.permute.xlu0 %10353
      %10355 = vrot.lane.b32.xlu0 %v10311, 64
      %v10356 = vpop.permute.xlu0 %10355
      %10357 = vrot.lane.b32.xlu0 %v10314, 64
      %v10358 = vpop.permute.xlu0 %10357
      %10359 = vrot.lane.b32.xlu0 %v10317, 64
      %v10360 = vpop.permute.xlu0 %10359
      %10361 = vrot.lane.b32.xlu0 %v10320, 64
      %v10362 = vpop.permute.xlu0 %10361
      %10363 = vrot.lane.b32.xlu0 %v10323, 64
      %v10364 = vpop.permute.xlu0 %10363
      %10365 = vrot.lane.b32.xlu0 %v10326, 64
      %v10366 = vpop.permute.xlu0 %10365
      %10367 = vrot.lane.b32.xlu0 %v10329, 64
      %v10368 = vpop.permute.xlu0 %10367
      %10369 = vrot.lane.b32.xlu0 %v10332, 64
      %v10370 = vpop.permute.xlu0 %10369
      %10371 = vrot.lane.b32.xlu0 %v10335, 64
      %v10372 = vpop.permute.xlu0 %10371
      %10373 = vrot.lane.b32.xlu0 %v10338, 64
      %v10374 = vpop.permute.xlu0 %10373
      %10375 = vrot.lane.b32.xlu0 %v10341, 64
      %v10376 = vpop.permute.xlu0 %10375
      %10377 = vrot.lane.b32.xlu0 %v10344, 64
      %v10378 = vpop.permute.xlu0 %10377
      %10379 = vrot.lane.b32.xlu0 %v10347, 64
      %v10380 = vpop.permute.xlu0 %10379
      %10381 = vrot.lane.b32.xlu0 %v10350, 64
      %v10382 = vpop.permute.xlu0 %10381
      %v10384 = vsel %vm2311, %v9967, %v10224
      %v10387 = vsel %vm2311, %v9968, %v10226
      %v10390 = vsel %vm2311, %v9969, %v10228
      %v10393 = vsel %vm2311, %v9970, %v10230
      %v10396 = vsel %vm2311, %v9971, %v10232
      %v10399 = vsel %vm2311, %v9972, %v10234
      %v10402 = vsel %vm2311, %v9973, %v10236
      %v10405 = vsel %vm2311, %v9974, %v10238
      %v10408 = vsel %vm2311, %v9975, %v10240
      %v10411 = vsel %vm2311, %v9976, %v10242
      %v10414 = vsel %vm2311, %v9977, %v10244
      %v10417 = vsel %vm2311, %v9978, %v10246
      %v10420 = vsel %vm2311, %v9979, %v10248
      %v10423 = vsel %vm2311, %v9980, %v10250
      %v10426 = vsel %vm2311, %v9981, %v10252
      %v10429 = vsel %vm2311, %v9982, %v10254
      %v10432 = vsel %vm4696, %v10224, %v10352
      %v10435 = vsel %vm4696, %v10226, %v10354
      %v10438 = vsel %vm4696, %v10228, %v10356
      %v10441 = vsel %vm4696, %v10230, %v10358
      %v10444 = vsel %vm4696, %v10232, %v10360
      %v10447 = vsel %vm4696, %v10234, %v10362
      %v10450 = vsel %vm4696, %v10236, %v10364
      %v10453 = vsel %vm4696, %v10238, %v10366
      %v10456 = vsel %vm4696, %v10240, %v10368
      %v10459 = vsel %vm4696, %v10242, %v10370
      %v10462 = vsel %vm4696, %v10244, %v10372
      %v10465 = vsel %vm4696, %v10246, %v10374
      %v10468 = vsel %vm4696, %v10248, %v10376
      %v10471 = vsel %vm4696, %v10250, %v10378
      %v10474 = vsel %vm4696, %v10252, %v10380
      %v10477 = vsel %vm4696, %v10254, %v10382
      %v10479 = vld [vmem:[%s3] sm:$0xf]
      %v10480 = vld [vmem:[%s3 + $0x4] sm:$0xf]
      %v10481 = vld [vmem:[%s3 + $0x8] sm:$0xf]
      %v10482 = vld [vmem:[%s3 + $0xc] sm:$0xf]
      %v10483 = vld [vmem:[%s3 + $0x10] sm:$0xf]
      %v10484 = vld [vmem:[%s3 + $0x14] sm:$0xf]
      %v10485 = vld [vmem:[%s3 + $0x18] sm:$0xf]
      %v10486 = vld [vmem:[%s3 + $0x1c] sm:$0xf]
      %v10487 = vld [vmem:[%s3 + $0x20] sm:$0xf]
      %v10488 = vld [vmem:[%s3 + $0x24] sm:$0xf]
      %v10489 = vld [vmem:[%s3 + $0x28] sm:$0xf]
      %v10490 = vld [vmem:[%s3 + $0x2c] sm:$0xf]
      %v10491 = vld [vmem:[%s3 + $0x30] sm:$0xf]
      %v10492 = vld [vmem:[%s3 + $0x34] sm:$0xf]
      %v10493 = vld [vmem:[%s3 + $0x38] sm:$0xf]
      %v10494 = vld [vmem:[%s3 + $0x3c] sm:$0xf]
      %v10495 = vld [vmem:[%s3 + $0x40] sm:$0xf]
      %v10496 = vld [vmem:[%s3 + $0x44] sm:$0xf]
      %v10497 = vld [vmem:[%s3 + $0x48] sm:$0xf]
      %v10498 = vld [vmem:[%s3 + $0x4c] sm:$0xf]
      %v10499 = vld [vmem:[%s3 + $0x50] sm:$0xf]
      %v10500 = vld [vmem:[%s3 + $0x54] sm:$0xf]
      %v10501 = vld [vmem:[%s3 + $0x58] sm:$0xf]
      %v10502 = vld [vmem:[%s3 + $0x5c] sm:$0xf]
      %v10503 = vld [vmem:[%s3 + $0x60] sm:$0xf]
      %v10504 = vld [vmem:[%s3 + $0x64] sm:$0xf]
      %v10505 = vld [vmem:[%s3 + $0x68] sm:$0xf]
      %v10506 = vld [vmem:[%s3 + $0x6c] sm:$0xf]
      %v10507 = vld [vmem:[%s3 + $0x70] sm:$0xf]
      %v10508 = vld [vmem:[%s3 + $0x74] sm:$0xf]
      %v10509 = vld [vmem:[%s3 + $0x78] sm:$0xf]
      %v10510 = vld [vmem:[%s3 + $0x7c] sm:$0xf]
      %v10511 = vld [vmem:[%s3 + $0x80] sm:$0xf]
      %v10512 = vld [vmem:[%s3 + $0x84] sm:$0xf]
      %v10513 = vld [vmem:[%s3 + $0x88] sm:$0xf]
      %v10514 = vld [vmem:[%s3 + $0x8c] sm:$0xf]
      %v10515 = vld [vmem:[%s9724] sm:$0xf]
      %v10516 = vld [vmem:[%s9724 + $0x4] sm:$0xf]
      %v10517 = vld [vmem:[%s9724 + $0xc] sm:$0xf]
      %v10518 = vld [vmem:[%s9724 + $0x10] sm:$0xf]
      %v10519 = vld [vmem:[%s9724 + $0x18] sm:$0xf]
      %v10520 = vld [vmem:[%s9724 + $0x1c] sm:$0xf]
      %v10521 = vld [vmem:[%s9724 + $0x24] sm:$0xf]
      %v10522 = vld [vmem:[%s9724 + $0x28] sm:$0xf]
      %v10523 = vld [vmem:[%s9724 + $0x30] sm:$0xf]
      %v10524 = vld [vmem:[%s9724 + $0x34] sm:$0xf]
      %v10525 = vld [vmem:[%s9724 + $0x3c] sm:$0xf]
      %v10526 = vld [vmem:[%s9724 + $0x40] sm:$0xf]
      %v10527 = vld [vmem:[%s9724 + $0x48] sm:$0xf]
      %v10528 = vld [vmem:[%s9724 + $0x4c] sm:$0xf]
      %v10529 = vld [vmem:[%s9724 + $0x54] sm:$0xf]
      %v10530 = vld [vmem:[%s9724 + $0x58] sm:$0xf]
      %v10531 = vld [vmem:[%s9724 + $0x60] sm:$0xf]
      %v10532 = vld [vmem:[%s9724 + $0x64] sm:$0xf]
      %v10533 = vld [vmem:[%s9724 + $0x6c] sm:$0xf]
      %v10534 = vld [vmem:[%s9724 + $0x70] sm:$0xf]
      %v10535 = vld [vmem:[%s9724 + $0x78] sm:$0xf]
      %v10536 = vld [vmem:[%s9724 + $0x7c] sm:$0xf]
      %v10537 = vld [vmem:[%s9724 + $0x84] sm:$0xf]
      %v10538 = vld [vmem:[%s9724 + $0x88] sm:$0xf]
      %v10539 = vld [vmem:[%s9724 + $0x90] sm:$0xf]
      %v10540 = vld [vmem:[%s9724 + $0x94] sm:$0xf]
      %v10541 = vld [vmem:[%s9724 + $0x9c] sm:$0xf]
      %v10542 = vld [vmem:[%s9724 + $0xa0] sm:$0xf]
      %v10543 = vld [vmem:[%s9724 + $0xa8] sm:$0xf]
      %v10544 = vld [vmem:[%s9724 + $0xac] sm:$0xf]
      %v10545 = vld [vmem:[%s9724 + $0xb4] sm:$0xf]
      %v10546 = vld [vmem:[%s9724 + $0xb8] sm:$0xf]
      %v10547 = vld [vmem:[%s9724 + $0x8] sm:$0x1]
      %v10548 = vld [vmem:[%s9724 + $0x14] sm:$0x1]
      %v10549 = vld [vmem:[%s9724 + $0x20] sm:$0x1]
      %v10550 = vld [vmem:[%s9724 + $0x2c] sm:$0x1]
      %v10551 = vld [vmem:[%s9724 + $0x38] sm:$0x1]
      %v10552 = vld [vmem:[%s9724 + $0x44] sm:$0x1]
      %v10553 = vld [vmem:[%s9724 + $0x50] sm:$0x1]
      %v10554 = vld [vmem:[%s9724 + $0x5c] sm:$0x1]
      %v10555 = vld [vmem:[%s9724 + $0x68] sm:$0x1]
      %v10556 = vld [vmem:[%s9724 + $0x74] sm:$0x1]
      %v10557 = vld [vmem:[%s9724 + $0x80] sm:$0x1]
      %v10558 = vld [vmem:[%s9724 + $0x8c] sm:$0x1]
      %v10559 = vld [vmem:[%s9724 + $0x98] sm:$0x1]
      %v10560 = vld [vmem:[%s9724 + $0xa4] sm:$0x1]
      %v10561 = vld [vmem:[%s9724 + $0xb0] sm:$0x1]
      %v10562 = vld [vmem:[%s9724 + $0xbc] sm:$0x1]
      %v10563 = vld [vmem:[%s9724] sm:$0xe]
      %v10564 = vld [vmem:[%s9724 + $0xc] sm:$0xe]
      %v10565 = vld [vmem:[%s9724 + $0x18] sm:$0xe]
      %v10566 = vld [vmem:[%s9724 + $0x24] sm:$0xe]
      %v10567 = vld [vmem:[%s9724 + $0x30] sm:$0xe]
      %v10568 = vld [vmem:[%s9724 + $0x3c] sm:$0xe]
      %v10569 = vld [vmem:[%s9724 + $0x48] sm:$0xe]
      %v10570 = vld [vmem:[%s9724 + $0x54] sm:$0xe]
      %v10571 = vld [vmem:[%s9724 + $0x60] sm:$0xe]
      %v10572 = vld [vmem:[%s9724 + $0x6c] sm:$0xe]
      %v10573 = vld [vmem:[%s9724 + $0x78] sm:$0xe]
      %v10574 = vld [vmem:[%s9724 + $0x84] sm:$0xe]
      %v10575 = vld [vmem:[%s9724 + $0x90] sm:$0xe]
      %v10576 = vld [vmem:[%s9724 + $0x9c] sm:$0xe]
      %v10577 = vld [vmem:[%s9724 + $0xa8] sm:$0xe]
      %v10578 = vld [vmem:[%s9724 + $0xb4] sm:$0xe]
      %v10611 = vunpack.c.l.b16 %v10515
      %v10612 = vunpack.c.l.b16 %v10516
      %v10613 = vunpack.c.l.b16 %v10517
      %v10614 = vunpack.c.l.b16 %v10518
      %v10615 = vunpack.c.l.b16 %v10519
      %v10616 = vunpack.c.l.b16 %v10520
      %v10617 = vunpack.c.l.b16 %v10521
      %v10618 = vunpack.c.l.b16 %v10522
      %v10619 = vunpack.c.l.b16 %v10523
      %v10620 = vunpack.c.l.b16 %v10524
      %v10621 = vunpack.c.l.b16 %v10525
      %v10622 = vunpack.c.l.b16 %v10526
      %v10623 = vunpack.c.l.b16 %v10527
      %v10624 = vunpack.c.l.b16 %v10528
      %v10625 = vunpack.c.l.b16 %v10529
      %v10626 = vunpack.c.l.b16 %v10530
      %v10627 = vunpack.c.l.b16 %v10531
      %v10628 = vunpack.c.l.b16 %v10532
      %v10629 = vunpack.c.l.b16 %v10533
      %v10630 = vunpack.c.l.b16 %v10534
      %v10631 = vunpack.c.l.b16 %v10535
      %v10632 = vunpack.c.l.b16 %v10536
      %v10633 = vunpack.c.l.b16 %v10537
      %v10634 = vunpack.c.l.b16 %v10538
      %v10635 = vunpack.c.l.b16 %v10539
      %v10636 = vunpack.c.l.b16 %v10540
      %v10637 = vunpack.c.l.b16 %v10541
      %v10638 = vunpack.c.l.b16 %v10542
      %v10639 = vunpack.c.l.b16 %v10543
      %v10640 = vunpack.c.l.b16 %v10544
      %v10641 = vunpack.c.l.b16 %v10545
      %v10642 = vunpack.c.l.b16 %v10546
      %v10643 = vpack.c.b16 %v10612, %v10611
      %v10644 = vpack.c.b16 %v10614, %v10613
      %v10645 = vpack.c.b16 %v10616, %v10615
      %v10646 = vpack.c.b16 %v10618, %v10617
      %v10647 = vpack.c.b16 %v10620, %v10619
      %v10648 = vpack.c.b16 %v10622, %v10621
      %v10649 = vpack.c.b16 %v10624, %v10623
      %v10650 = vpack.c.b16 %v10626, %v10625
      %v10651 = vpack.c.b16 %v10628, %v10627
      %v10652 = vpack.c.b16 %v10630, %v10629
      %v10653 = vpack.c.b16 %v10632, %v10631
      %v10654 = vpack.c.b16 %v10634, %v10633
      %v10655 = vpack.c.b16 %v10636, %v10635
      %v10656 = vpack.c.b16 %v10638, %v10637
      %v10657 = vpack.c.b16 %v10640, %v10639
      %v10658 = vpack.c.b16 %v10642, %v10641
      %v10675 = vunpack.c.l.b16 %v10547
      %v10676 = vunpack.c.l.b16 %v10548
      %v10677 = vunpack.c.l.b16 %v10549
      %v10678 = vunpack.c.l.b16 %v10550
      %v10679 = vunpack.c.l.b16 %v10551
      %v10680 = vunpack.c.l.b16 %v10552
      %v10681 = vunpack.c.l.b16 %v10553
      %v10682 = vunpack.c.l.b16 %v10554
      %v10683 = vunpack.c.l.b16 %v10555
      %v10684 = vunpack.c.l.b16 %v10556
      %v10685 = vunpack.c.l.b16 %v10557
      %v10686 = vunpack.c.l.b16 %v10558
      %v10687 = vunpack.c.l.b16 %v10559
      %v10688 = vunpack.c.l.b16 %v10560
      %v10689 = vunpack.c.l.b16 %v10561
      %v10690 = vunpack.c.l.b16 %v10562
      %v10691 = vpack.c.b16 %v10675, %v10675
      %v10692 = vpack.c.b16 %v10676, %v10676
      %v10693 = vpack.c.b16 %v10677, %v10677
      %v10694 = vpack.c.b16 %v10678, %v10678
      %v10695 = vpack.c.b16 %v10679, %v10679
      %v10696 = vpack.c.b16 %v10680, %v10680
      %v10697 = vpack.c.b16 %v10681, %v10681
      %v10698 = vpack.c.b16 %v10682, %v10682
      %v10699 = vpack.c.b16 %v10683, %v10683
      %v10700 = vpack.c.b16 %v10684, %v10684
      %v10701 = vpack.c.b16 %v10685, %v10685
      %v10702 = vpack.c.b16 %v10686, %v10686
      %v10703 = vpack.c.b16 %v10687, %v10687
      %v10704 = vpack.c.b16 %v10688, %v10688
      %v10705 = vpack.c.b16 %v10689, %v10689
      %v10706 = vpack.c.b16 %v10690, %v10690
      %v10708 = vshrl.u32 %v10643, 16
      %v10710 = vshll.u32 %v10643, 16
      %v10712 = vrot.slane %v10710, 1
      %v10713 = vor.u32 %v10708, %v10712
      %v10715 = vshll.u32 %v10691, 16
      %v10717 = vrot.slane %v10715, 1
      %v10718 = vsel %vm1924, %v10713, %v10717
      %v10720 = vshrl.u32 %v10644, 16
      %v10722 = vshll.u32 %v10644, 16
      %v10724 = vrot.slane %v10722, 1
      %v10725 = vor.u32 %v10720, %v10724
      %v10727 = vshll.u32 %v10692, 16
      %v10729 = vrot.slane %v10727, 1
      %v10730 = vsel %vm1924, %v10725, %v10729
      %v10732 = vshrl.u32 %v10645, 16
      %v10734 = vshll.u32 %v10645, 16
      %v10736 = vrot.slane %v10734, 1
      %v10737 = vor.u32 %v10732, %v10736
      %v10739 = vshll.u32 %v10693, 16
      %v10741 = vrot.slane %v10739, 1
      %v10742 = vsel %vm1924, %v10737, %v10741
      %v10744 = vshrl.u32 %v10646, 16
      %v10746 = vshll.u32 %v10646, 16
      %v10748 = vrot.slane %v10746, 1
      %v10749 = vor.u32 %v10744, %v10748
      %v10751 = vshll.u32 %v10694, 16
      %v10753 = vrot.slane %v10751, 1
      %v10754 = vsel %vm1924, %v10749, %v10753
      %v10756 = vshrl.u32 %v10647, 16
      %v10758 = vshll.u32 %v10647, 16
      %v10760 = vrot.slane %v10758, 1
      %v10761 = vor.u32 %v10756, %v10760
      %v10763 = vshll.u32 %v10695, 16
      %v10765 = vrot.slane %v10763, 1
      %v10766 = vsel %vm1924, %v10761, %v10765
      %v10768 = vshrl.u32 %v10648, 16
      %v10770 = vshll.u32 %v10648, 16
      %v10772 = vrot.slane %v10770, 1
      %v10773 = vor.u32 %v10768, %v10772
      %v10775 = vshll.u32 %v10696, 16
      %v10777 = vrot.slane %v10775, 1
      %v10778 = vsel %vm1924, %v10773, %v10777
      %v10780 = vshrl.u32 %v10649, 16
      %v10782 = vshll.u32 %v10649, 16
      %v10784 = vrot.slane %v10782, 1
      %v10785 = vor.u32 %v10780, %v10784
      %v10787 = vshll.u32 %v10697, 16
      %v10789 = vrot.slane %v10787, 1
      %v10790 = vsel %vm1924, %v10785, %v10789
      %v10792 = vshrl.u32 %v10650, 16
      %v10794 = vshll.u32 %v10650, 16
      %v10796 = vrot.slane %v10794, 1
      %v10797 = vor.u32 %v10792, %v10796
      %v10799 = vshll.u32 %v10698, 16
      %v10801 = vrot.slane %v10799, 1
      %v10802 = vsel %vm1924, %v10797, %v10801
      %v10804 = vshrl.u32 %v10651, 16
      %v10806 = vshll.u32 %v10651, 16
      %v10808 = vrot.slane %v10806, 1
      %v10809 = vor.u32 %v10804, %v10808
      %v10811 = vshll.u32 %v10699, 16
      %v10813 = vrot.slane %v10811, 1
      %v10814 = vsel %vm1924, %v10809, %v10813
      %v10816 = vshrl.u32 %v10652, 16
      %v10818 = vshll.u32 %v10652, 16
      %v10820 = vrot.slane %v10818, 1
      %v10821 = vor.u32 %v10816, %v10820
      %v10823 = vshll.u32 %v10700, 16
      %v10825 = vrot.slane %v10823, 1
      %v10826 = vsel %vm1924, %v10821, %v10825
      %v10828 = vshrl.u32 %v10653, 16
      %v10830 = vshll.u32 %v10653, 16
      %v10832 = vrot.slane %v10830, 1
      %v10833 = vor.u32 %v10828, %v10832
      %v10835 = vshll.u32 %v10701, 16
      %v10837 = vrot.slane %v10835, 1
      %v10838 = vsel %vm1924, %v10833, %v10837
      %v10840 = vshrl.u32 %v10654, 16
      %v10842 = vshll.u32 %v10654, 16
      %v10844 = vrot.slane %v10842, 1
      %v10845 = vor.u32 %v10840, %v10844
      %v10847 = vshll.u32 %v10702, 16
      %v10849 = vrot.slane %v10847, 1
      %v10850 = vsel %vm1924, %v10845, %v10849
      %v10852 = vshrl.u32 %v10655, 16
      %v10854 = vshll.u32 %v10655, 16
      %v10856 = vrot.slane %v10854, 1
      %v10857 = vor.u32 %v10852, %v10856
      %v10859 = vshll.u32 %v10703, 16
      %v10861 = vrot.slane %v10859, 1
      %v10862 = vsel %vm1924, %v10857, %v10861
      %v10864 = vshrl.u32 %v10656, 16
      %v10866 = vshll.u32 %v10656, 16
      %v10868 = vrot.slane %v10866, 1
      %v10869 = vor.u32 %v10864, %v10868
      %v10871 = vshll.u32 %v10704, 16
      %v10873 = vrot.slane %v10871, 1
      %v10874 = vsel %vm1924, %v10869, %v10873
      %v10876 = vshrl.u32 %v10657, 16
      %v10878 = vshll.u32 %v10657, 16
      %v10880 = vrot.slane %v10878, 1
      %v10881 = vor.u32 %v10876, %v10880
      %v10883 = vshll.u32 %v10705, 16
      %v10885 = vrot.slane %v10883, 1
      %v10886 = vsel %vm1924, %v10881, %v10885
      %v10888 = vshrl.u32 %v10658, 16
      %v10890 = vshll.u32 %v10658, 16
      %v10892 = vrot.slane %v10890, 1
      %v10893 = vor.u32 %v10888, %v10892
      %v10895 = vshll.u32 %v10706, 16
      %v10897 = vrot.slane %v10895, 1
      %v10898 = vsel %vm1924, %v10893, %v10897
      %10899 = vrot.lane.b32.xlu0 %v10718, 96
      %v10900 = vpop.permute.xlu0 %10899
      %10901 = vrot.lane.b32.xlu0 %v10730, 96
      %v10902 = vpop.permute.xlu0 %10901
      %10903 = vrot.lane.b32.xlu0 %v10742, 96
      %v10904 = vpop.permute.xlu0 %10903
      %10905 = vrot.lane.b32.xlu0 %v10754, 96
      %v10906 = vpop.permute.xlu0 %10905
      %10907 = vrot.lane.b32.xlu0 %v10766, 96
      %v10908 = vpop.permute.xlu0 %10907
      %10909 = vrot.lane.b32.xlu0 %v10778, 96
      %v10910 = vpop.permute.xlu0 %10909
      %10911 = vrot.lane.b32.xlu0 %v10790, 96
      %v10912 = vpop.permute.xlu0 %10911
      %10913 = vrot.lane.b32.xlu0 %v10802, 96
      %v10914 = vpop.permute.xlu0 %10913
      %10915 = vrot.lane.b32.xlu0 %v10814, 96
      %v10916 = vpop.permute.xlu0 %10915
      %10917 = vrot.lane.b32.xlu0 %v10826, 96
      %v10918 = vpop.permute.xlu0 %10917
      %10919 = vrot.lane.b32.xlu0 %v10838, 96
      %v10920 = vpop.permute.xlu0 %10919
      %10921 = vrot.lane.b32.xlu0 %v10850, 96
      %v10922 = vpop.permute.xlu0 %10921
      %10923 = vrot.lane.b32.xlu0 %v10862, 96
      %v10924 = vpop.permute.xlu0 %10923
      %10925 = vrot.lane.b32.xlu0 %v10874, 96
      %v10926 = vpop.permute.xlu0 %10925
      %10927 = vrot.lane.b32.xlu0 %v10886, 96
      %v10928 = vpop.permute.xlu0 %10927
      %10929 = vrot.lane.b32.xlu0 %v10898, 96
      %v10930 = vpop.permute.xlu0 %10929
      %v10947 = vunpack.c.l.b16 %v10563
      %v10948 = vunpack.c.l.b16 %v10564
      %v10949 = vunpack.c.l.b16 %v10565
      %v10950 = vunpack.c.l.b16 %v10566
      %v10951 = vunpack.c.l.b16 %v10567
      %v10952 = vunpack.c.l.b16 %v10568
      %v10953 = vunpack.c.l.b16 %v10569
      %v10954 = vunpack.c.l.b16 %v10570
      %v10955 = vunpack.c.l.b16 %v10571
      %v10956 = vunpack.c.l.b16 %v10572
      %v10957 = vunpack.c.l.b16 %v10573
      %v10958 = vunpack.c.l.b16 %v10574
      %v10959 = vunpack.c.l.b16 %v10575
      %v10960 = vunpack.c.l.b16 %v10576
      %v10961 = vunpack.c.l.b16 %v10577
      %v10962 = vunpack.c.l.b16 %v10578
      %v10963 = vpack.c.b16 %v10612, %v10947
      %v10964 = vpack.c.b16 %v10614, %v10948
      %v10965 = vpack.c.b16 %v10616, %v10949
      %v10966 = vpack.c.b16 %v10618, %v10950
      %v10967 = vpack.c.b16 %v10620, %v10951
      %v10968 = vpack.c.b16 %v10622, %v10952
      %v10969 = vpack.c.b16 %v10624, %v10953
      %v10970 = vpack.c.b16 %v10626, %v10954
      %v10971 = vpack.c.b16 %v10628, %v10955
      %v10972 = vpack.c.b16 %v10630, %v10956
      %v10973 = vpack.c.b16 %v10632, %v10957
      %v10974 = vpack.c.b16 %v10634, %v10958
      %v10975 = vpack.c.b16 %v10636, %v10959
      %v10976 = vpack.c.b16 %v10638, %v10960
      %v10977 = vpack.c.b16 %v10640, %v10961
      %v10978 = vpack.c.b16 %v10642, %v10962
      %v10979 = vrot.slane %v10963, 1
      %v10980 = vrot.slane %v10691, 1
      %v10981 = vsel %vm2197, %v10979, %v10980
      %v10982 = vrot.slane %v10964, 1
      %v10983 = vrot.slane %v10692, 1
      %v10984 = vsel %vm2197, %v10982, %v10983
      %v10985 = vrot.slane %v10965, 1
      %v10986 = vrot.slane %v10693, 1
      %v10987 = vsel %vm2197, %v10985, %v10986
      %v10988 = vrot.slane %v10966, 1
      %v10989 = vrot.slane %v10694, 1
      %v10990 = vsel %vm2197, %v10988, %v10989
      %v10991 = vrot.slane %v10967, 1
      %v10992 = vrot.slane %v10695, 1
      %v10993 = vsel %vm2197, %v10991, %v10992
      %v10994 = vrot.slane %v10968, 1
      %v10995 = vrot.slane %v10696, 1
      %v10996 = vsel %vm2197, %v10994, %v10995
      %v10997 = vrot.slane %v10969, 1
      %v10998 = vrot.slane %v10697, 1
      %v10999 = vsel %vm2197, %v10997, %v10998
      %v11000 = vrot.slane %v10970, 1
      %v11001 = vrot.slane %v10698, 1
      %v11002 = vsel %vm2197, %v11000, %v11001
      %v11003 = vrot.slane %v10971, 1
      %v11004 = vrot.slane %v10699, 1
      %v11005 = vsel %vm2197, %v11003, %v11004
      %v11006 = vrot.slane %v10972, 1
      %v11007 = vrot.slane %v10700, 1
      %v11008 = vsel %vm2197, %v11006, %v11007
      %v11009 = vrot.slane %v10973, 1
      %v11010 = vrot.slane %v10701, 1
      %v11011 = vsel %vm2197, %v11009, %v11010
      %v11012 = vrot.slane %v10974, 1
      %v11013 = vrot.slane %v10702, 1
      %v11014 = vsel %vm2197, %v11012, %v11013
      %v11015 = vrot.slane %v10975, 1
      %v11016 = vrot.slane %v10703, 1
      %v11017 = vsel %vm2197, %v11015, %v11016
      %v11018 = vrot.slane %v10976, 1
      %v11019 = vrot.slane %v10704, 1
      %v11020 = vsel %vm2197, %v11018, %v11019
      %v11021 = vrot.slane %v10977, 1
      %v11022 = vrot.slane %v10705, 1
      %v11023 = vsel %vm2197, %v11021, %v11022
      %v11024 = vrot.slane %v10978, 1
      %v11025 = vrot.slane %v10706, 1
      %v11026 = vsel %vm2197, %v11024, %v11025
      %11027 = vrot.lane.b32.xlu0 %v10981, 64
      %v11028 = vpop.permute.xlu0 %11027
      %11029 = vrot.lane.b32.xlu0 %v10984, 64
      %v11030 = vpop.permute.xlu0 %11029
      %11031 = vrot.lane.b32.xlu0 %v10987, 64
      %v11032 = vpop.permute.xlu0 %11031
      %11033 = vrot.lane.b32.xlu0 %v10990, 64
      %v11034 = vpop.permute.xlu0 %11033
      %11035 = vrot.lane.b32.xlu0 %v10993, 64
      %v11036 = vpop.permute.xlu0 %11035
      %11037 = vrot.lane.b32.xlu0 %v10996, 64
      %v11038 = vpop.permute.xlu0 %11037
      %11039 = vrot.lane.b32.xlu0 %v10999, 64
      %v11040 = vpop.permute.xlu0 %11039
      %11041 = vrot.lane.b32.xlu0 %v11002, 64
      %v11042 = vpop.permute.xlu0 %11041
      %11043 = vrot.lane.b32.xlu0 %v11005, 64
      %v11044 = vpop.permute.xlu0 %11043
      %11045 = vrot.lane.b32.xlu0 %v11008, 64
      %v11046 = vpop.permute.xlu0 %11045
      %11047 = vrot.lane.b32.xlu0 %v11011, 64
      %v11048 = vpop.permute.xlu0 %11047
      %11049 = vrot.lane.b32.xlu0 %v11014, 64
      %v11050 = vpop.permute.xlu0 %11049
      %11051 = vrot.lane.b32.xlu0 %v11017, 64
      %v11052 = vpop.permute.xlu0 %11051
      %11053 = vrot.lane.b32.xlu0 %v11020, 64
      %v11054 = vpop.permute.xlu0 %11053
      %11055 = vrot.lane.b32.xlu0 %v11023, 64
      %v11056 = vpop.permute.xlu0 %11055
      %11057 = vrot.lane.b32.xlu0 %v11026, 64
      %v11058 = vpop.permute.xlu0 %11057
      %v11060 = vsel %vm2311, %v10643, %v10900
      %v11063 = vsel %vm2311, %v10644, %v10902
      %v11066 = vsel %vm2311, %v10645, %v10904
      %v11069 = vsel %vm2311, %v10646, %v10906
      %v11072 = vsel %vm2311, %v10647, %v10908
      %v11075 = vsel %vm2311, %v10648, %v10910
      %v11078 = vsel %vm2311, %v10649, %v10912
      %v11081 = vsel %vm2311, %v10650, %v10914
      %v11084 = vsel %vm2311, %v10651, %v10916
      %v11087 = vsel %vm2311, %v10652, %v10918
      %v11090 = vsel %vm2311, %v10653, %v10920
      %v11093 = vsel %vm2311, %v10654, %v10922
      %v11096 = vsel %vm2311, %v10655, %v10924
      %v11099 = vsel %vm2311, %v10656, %v10926
      %v11102 = vsel %vm2311, %v10657, %v10928
      %v11105 = vsel %vm2311, %v10658, %v10930
      %v11108 = vsel %vm4696, %v10900, %v11028
      %v11111 = vsel %vm4696, %v10902, %v11030
      %v11114 = vsel %vm4696, %v10904, %v11032
      %v11117 = vsel %vm4696, %v10906, %v11034
      %v11120 = vsel %vm4696, %v10908, %v11036
      %v11123 = vsel %vm4696, %v10910, %v11038
      %v11126 = vsel %vm4696, %v10912, %v11040
      %v11129 = vsel %vm4696, %v10914, %v11042
      %v11132 = vsel %vm4696, %v10916, %v11044
      %v11135 = vsel %vm4696, %v10918, %v11046
      %v11138 = vsel %vm4696, %v10920, %v11048
      %v11141 = vsel %vm4696, %v10922, %v11050
      %v11144 = vsel %vm4696, %v10924, %v11052
      %v11147 = vsel %vm4696, %v10926, %v11054
      %v11150 = vsel %vm4696, %v10928, %v11056
      %v11153 = vsel %vm4696, %v10930, %v11058
      %s11155 = scalar_lea.vmem %s3, 144
      %v11156 = vld [vmem:[%s11155] sm:$0xf]
      %v11157 = vld [vmem:[%s11155 + $0x4] sm:$0xf]
      %v11158 = vld [vmem:[%s11155 + $0x8] sm:$0xf]
      %v11159 = vld [vmem:[%s11155 + $0xc] sm:$0xf]
      %v11160 = vld [vmem:[%s11155 + $0x10] sm:$0xf]
      %v11161 = vld [vmem:[%s11155 + $0x14] sm:$0xf]
      %v11162 = vld [vmem:[%s11155 + $0x18] sm:$0xf]
      %v11163 = vld [vmem:[%s11155 + $0x1c] sm:$0xf]
      %v11164 = vld [vmem:[%s11155 + $0x20] sm:$0xf]
      %v11165 = vld [vmem:[%s11155 + $0x24] sm:$0xf]
      %v11166 = vld [vmem:[%s11155 + $0x28] sm:$0xf]
      %v11167 = vld [vmem:[%s11155 + $0x2c] sm:$0xf]
      %v11168 = vld [vmem:[%s11155 + $0x30] sm:$0xf]
      %v11169 = vld [vmem:[%s11155 + $0x34] sm:$0xf]
      %v11170 = vld [vmem:[%s11155 + $0x38] sm:$0xf]
      %v11171 = vld [vmem:[%s11155 + $0x3c] sm:$0xf]
      %v11172 = vld [vmem:[%s11155 + $0x40] sm:$0xf]
      %v11173 = vld [vmem:[%s11155 + $0x44] sm:$0xf]
      %v11174 = vld [vmem:[%s11155 + $0x48] sm:$0xf]
      %v11175 = vld [vmem:[%s11155 + $0x4c] sm:$0xf]
      %v11176 = vld [vmem:[%s11155 + $0x50] sm:$0xf]
      %v11177 = vld [vmem:[%s11155 + $0x54] sm:$0xf]
      %v11178 = vld [vmem:[%s11155 + $0x58] sm:$0xf]
      %v11179 = vld [vmem:[%s11155 + $0x5c] sm:$0xf]
      %v11180 = vld [vmem:[%s11155 + $0x60] sm:$0xf]
      %v11181 = vld [vmem:[%s11155 + $0x64] sm:$0xf]
      %v11182 = vld [vmem:[%s11155 + $0x68] sm:$0xf]
      %v11183 = vld [vmem:[%s11155 + $0x6c] sm:$0xf]
      %v11184 = vld [vmem:[%s11155 + $0x70] sm:$0xf]
      %v11185 = vld [vmem:[%s11155 + $0x74] sm:$0xf]
      %v11186 = vld [vmem:[%s11155 + $0x78] sm:$0xf]
      %v11187 = vld [vmem:[%s11155 + $0x7c] sm:$0xf]
      %v11188 = vld [vmem:[%s11155 + $0x80] sm:$0xf]
      %v11189 = vld [vmem:[%s11155 + $0x84] sm:$0xf]
      %v11190 = vld [vmem:[%s11155 + $0x88] sm:$0xf]
      %v11191 = vld [vmem:[%s11155 + $0x8c] sm:$0xf]
      %v11228 = vunpack.c.l.b16 %v11156
      %v11229 = vunpack.c.l.b16 %v11157
      %v11230 = vunpack.c.l.b16 %v11158
      %v11231 = vunpack.c.l.b16 %v11159
      %v11232 = vunpack.c.l.b16 %v11160
      %v11233 = vunpack.c.l.b16 %v11161
      %v11234 = vunpack.c.l.b16 %v11162
      %v11235 = vunpack.c.l.b16 %v11163
      %v11236 = vunpack.c.l.b16 %v11164
      %v11237 = vunpack.c.l.b16 %v11165
      %v11238 = vunpack.c.l.b16 %v11166
      %v11239 = vunpack.c.l.b16 %v11167
      %v11240 = vunpack.c.l.b16 %v11168
      %v11241 = vunpack.c.l.b16 %v11169
      %v11242 = vunpack.c.l.b16 %v11170
      %v11243 = vunpack.c.l.b16 %v11171
      %v11244 = vunpack.c.l.b16 %v11172
      %v11245 = vunpack.c.l.b16 %v11173
      %v11246 = vunpack.c.l.b16 %v11174
      %v11247 = vunpack.c.l.b16 %v11175
      %v11248 = vunpack.c.l.b16 %v11176
      %v11249 = vunpack.c.l.b16 %v11177
      %v11250 = vunpack.c.l.b16 %v11178
      %v11251 = vunpack.c.l.b16 %v11179
      %v11252 = vunpack.c.l.b16 %v11180
      %v11253 = vunpack.c.l.b16 %v11181
      %v11254 = vunpack.c.l.b16 %v11182
      %v11255 = vunpack.c.l.b16 %v11183
      %v11256 = vunpack.c.l.b16 %v11184
      %v11257 = vunpack.c.l.b16 %v11185
      %v11258 = vunpack.c.l.b16 %v11186
      %v11259 = vunpack.c.l.b16 %v11187
      %v11260 = vunpack.c.l.b16 %v11188
      %v11261 = vunpack.c.l.b16 %v11189
      %v11262 = vunpack.c.l.b16 %v11190
      %v11263 = vunpack.c.l.b16 %v11191
      %v11264 = vpack.c.b16 %v11229, %v11228
      %v11265 = vpack.c.b16 %v11231, %v11230
      %v11266 = vpack.c.b16 %v11233, %v11232
      %v11267 = vpack.c.b16 %v11235, %v11234
      %v11268 = vpack.c.b16 %v11237, %v11236
      %v11269 = vpack.c.b16 %v11239, %v11238
      %v11270 = vpack.c.b16 %v11241, %v11240
      %v11271 = vpack.c.b16 %v11243, %v11242
      %v11272 = vpack.c.b16 %v11245, %v11244
      %v11273 = vpack.c.b16 %v11247, %v11246
      %v11274 = vpack.c.b16 %v11249, %v11248
      %v11275 = vpack.c.b16 %v11251, %v11250
      %v11276 = vpack.c.b16 %v11253, %v11252
      %v11277 = vpack.c.b16 %v11255, %v11254
      %v11278 = vpack.c.b16 %v11257, %v11256
      %v11279 = vpack.c.b16 %v11259, %v11258
      %v11280 = vpack.c.b16 %v11261, %v11260
      %v11281 = vpack.c.b16 %v11263, %v11262
      %vm11300 = vcmask 261120
      %v11301 = vsel %vm11300, %v11028, 0
      %v11303 = vsel %vm11300, %v11030, 0
      %v11305 = vsel %vm11300, %v11032, 0
      %v11307 = vsel %vm11300, %v11034, 0
      %v11309 = vsel %vm11300, %v11036, 0
      %v11311 = vsel %vm11300, %v11038, 0
      %v11313 = vsel %vm11300, %v11040, 0
      %v11315 = vsel %vm11300, %v11042, 0
      %v11317 = vsel %vm11300, %v11044, 0
      %v11319 = vsel %vm11300, %v11046, 0
      %v11321 = vsel %vm11300, %v11048, 0
      %v11323 = vsel %vm11300, %v11050, 0
      %v11325 = vsel %vm11300, %v11052, 0
      %v11327 = vsel %vm11300, %v11054, 0
      %v11329 = vsel %vm11300, %v11056, 0
      %v11331 = vsel %vm11300, %v11058, 0
      %11333 = vmatprep.subr.bf16.mxu0 0
      %11334 = vmatpush1.bf16.msra.mxu0 %v11264
      %11335 = vmatprep.subr.bf16.mxu0 0
      %11336 = vmatpush1.bf16.msra.mxu0 %v11265
      %11337 = vmatprep.subr.bf16.mxu0 0
      %11338 = vmatpush1.bf16.msra.mxu0 %v11266
      %11339 = vmatprep.subr.bf16.mxu0 0
      %11340 = vmatpush1.bf16.msra.mxu0 %v11267
      %11341 = vmatprep.subr.bf16.mxu0 0
      %11342 = vmatpush1.bf16.msra.mxu0 %v11268
      %11343 = vmatprep.subr.bf16.mxu0 0
      %11344 = vmatpush1.bf16.msra.mxu0 %v11269
      %11345 = vmatprep.subr.bf16.mxu0 0
      %11346 = vmatpush1.bf16.msra.mxu0 %v11270
      %11347 = vmatprep.subr.bf16.mxu0 0
      %11348 = vmatpush1.bf16.msra.mxu0 %v11271
      %11349 = vmatprep.subr.bf16.mxu0 0
      %11350 = vmatpush1.bf16.msra.mxu0 %v11272
      %11351 = vmatprep.subr.bf16.mxu0 0
      %11352 = vmatpush1.bf16.msra.mxu0 %v11273
      %11353 = vmatprep.subr.bf16.mxu0 0
      %11354 = vmatpush1.bf16.msra.mxu0 %v11274
      %11355 = vmatprep.subr.bf16.mxu0 0
      %11356 = vmatpush1.bf16.msra.mxu0 %v11275
      %11357 = vmatprep.subr.bf16.mxu0 0
      %11358 = vmatpush1.bf16.msra.mxu0 %v11276
      %11359 = vmatprep.subr.bf16.mxu0 0
      %11360 = vmatpush1.bf16.msra.mxu0 %v11277
      %11361 = vmatprep.subr.bf16.mxu0 0
      %11362 = vmatpush1.bf16.msra.mxu0 %v11278
      %11363 = vmatprep.subr.bf16.mxu0 0
      %11364 = vmatpush1.bf16.msra.mxu0 %v11279
      %11365 = vmatprep.mubr.bf16.mxu0 %v11108
      %11366 = vmatmul.mubr.bf16.gmra.mrb[0].mxu0 %v11060
      %v11367 = vpop.f32.mrb[0].mxu0
      %v11368 = vadd.f32 0.0, %v11367
      %v11369 = vpop.f32.mrb[0].mxu0
      %v11370 = vpop.f32.mrb[0].mxu0
      %v11371 = vadd.f32 0.0, %v11370
      %v11372 = vpop.f32.mrb[0].mxu0
      %11373 = vmatprep.mubr.bf16.mxu0 %v11111
      %11374 = vmatmul.mubr.bf16.gmra.mrb[0].mxu0 %v11063
      %v11375 = vpop.f32.mrb[0].mxu0
      %v11376 = vadd.f32 0.0, %v11375
      %v11377 = vpop.f32.mrb[0].mxu0
      %v11378 = vpop.f32.mrb[0].mxu0
      %v11379 = vadd.f32 0.0, %v11378
      %v11380 = vpop.f32.mrb[0].mxu0
      %11381 = vmatprep.mubr.bf16.mxu0 %v11114
      %11382 = vmatmul.mubr.bf16.gmra.mrb[0].mxu0 %v11066
      %v11383 = vpop.f32.mrb[0].mxu0
      %v11384 = vadd.f32 0.0, %v11383
      %v11385 = vpop.f32.mrb[0].mxu0
      %v11386 = vpop.f32.mrb[0].mxu0
      %v11387 = vadd.f32 0.0, %v11386
      %v11388 = vpop.f32.mrb[0].mxu0
      %11389 = vmatprep.mubr.bf16.mxu0 %v11117
      %11390 = vmatmul.mubr.bf16.gmra.mrb[0].mxu0 %v11069
      %v11391 = vpop.f32.mrb[0].mxu0
      %v11392 = vadd.f32 0.0, %v11391
      %v11393 = vpop.f32.mrb[0].mxu0
      %v11394 = vpop.f32.mrb[0].mxu0
      %v11395 = vadd.f32 0.0, %v11394
      %v11396 = vpop.f32.mrb[0].mxu0
      %11397 = vmatprep.mubr.bf16.mxu0 %v11120
      %11398 = vmatmul.mubr.bf16.gmra.mrb[0].mxu0 %v11072
      %v11399 = vpop.f32.mrb[0].mxu0
      %v11400 = vadd.f32 0.0, %v11399
      %v11401 = vpop.f32.mrb[0].mxu0
      %v11402 = vpop.f32.mrb[0].mxu0
      %v11403 = vadd.f32 0.0, %v11402
      %v11404 = vpop.f32.mrb[0].mxu0
      %11405 = vmatprep.mubr.bf16.mxu0 %v11123
      %11406 = vmatmul.mubr.bf16.gmra.mrb[0].mxu0 %v11075
      %v11407 = vpop.f32.mrb[0].mxu0
      %v11408 = vadd.f32 0.0, %v11407
      %v11409 = vpop.f32.mrb[0].mxu0
      %v11410 = vpop.f32.mrb[0].mxu0
      %v11411 = vadd.f32 0.0, %v11410
      %v11412 = vpop.f32.mrb[0].mxu0
      %11413 = vmatprep.mubr.bf16.mxu0 %v11126
      %11414 = vmatmul.mubr.bf16.gmra.mrb[0].mxu0 %v11078
      %v11415 = vpop.f32.mrb[0].mxu0
      %v11416 = vadd.f32 0.0, %v11415
      %v11417 = vpop.f32.mrb[0].mxu0
      %v11418 = vpop.f32.mrb[0].mxu0
      %v11419 = vadd.f32 0.0, %v11418
      %v11420 = vpop.f32.mrb[0].mxu0
      %11421 = vmatprep.mubr.bf16.mxu0 %v11129
      %11422 = vmatmul.mubr.bf16.gmra.mrb[0].mxu0 %v11081
      %v11423 = vpop.f32.mrb[0].mxu0
      %v11424 = vadd.f32 0.0, %v11423
      %v11425 = vpop.f32.mrb[0].mxu0
      %v11426 = vpop.f32.mrb[0].mxu0
      %v11427 = vadd.f32 0.0, %v11426
      %v11428 = vpop.f32.mrb[0].mxu0
      %11429 = vmatprep.mubr.bf16.mxu0 %v11132
      %11430 = vmatmul.mubr.bf16.gmra.mrb[0].mxu0 %v11084
      %v11431 = vpop.f32.mrb[0].mxu0
      %v11432 = vadd.f32 0.0, %v11431
      %v11433 = vpop.f32.mrb[0].mxu0
      %v11434 = vpop.f32.mrb[0].mxu0
      %v11435 = vadd.f32 0.0, %v11434
      %v11436 = vpop.f32.mrb[0].mxu0
      %11437 = vmatprep.mubr.bf16.mxu0 %v11135
      %11438 = vmatmul.mubr.bf16.gmra.mrb[0].mxu0 %v11087
      %v11439 = vpop.f32.mrb[0].mxu0
      %v11440 = vadd.f32 0.0, %v11439
      %v11441 = vpop.f32.mrb[0].mxu0
      %v11442 = vpop.f32.mrb[0].mxu0
      %v11443 = vadd.f32 0.0, %v11442
      %v11444 = vpop.f32.mrb[0].mxu0
      %11445 = vmatprep.mubr.bf16.mxu0 %v11138
      %11446 = vmatmul.mubr.bf16.gmra.mrb[0].mxu0 %v11090
      %v11447 = vpop.f32.mrb[0].mxu0
      %v11448 = vadd.f32 0.0, %v11447
      %v11449 = vpop.f32.mrb[0].mxu0
      %v11450 = vpop.f32.mrb[0].mxu0
      %v11451 = vadd.f32 0.0, %v11450
      %v11452 = vpop.f32.mrb[0].mxu0
      %11453 = vmatprep.mubr.bf16.mxu0 %v11141
      %11454 = vmatmul.mubr.bf16.gmra.mrb[0].mxu0 %v11093
      %v11455 = vpop.f32.mrb[0].mxu0
      %v11456 = vadd.f32 0.0, %v11455
      %v11457 = vpop.f32.mrb[0].mxu0
      %v11458 = vpop.f32.mrb[0].mxu0
      %v11459 = vadd.f32 0.0, %v11458
      %v11460 = vpop.f32.mrb[0].mxu0
      %11461 = vmatprep.mubr.bf16.mxu0 %v11144
      %11462 = vmatmul.mubr.bf16.gmra.mrb[0].mxu0 %v11096
      %v11463 = vpop.f32.mrb[0].mxu0
      %v11464 = vadd.f32 0.0, %v11463
      %v11465 = vpop.f32.mrb[0].mxu0
      %v11466 = vpop.f32.mrb[0].mxu0
      %v11467 = vadd.f32 0.0, %v11466
      %v11468 = vpop.f32.mrb[0].mxu0
      %11469 = vmatprep.mubr.bf16.mxu0 %v11147
      %11470 = vmatmul.mubr.bf16.gmra.mrb[0].mxu0 %v11099
      %v11471 = vpop.f32.mrb[0].mxu0
      %v11472 = vadd.f32 0.0, %v11471
      %v11473 = vpop.f32.mrb[0].mxu0
      %v11474 = vpop.f32.mrb[0].mxu0
      %v11475 = vadd.f32 0.0, %v11474
      %v11476 = vpop.f32.mrb[0].mxu0
      %11477 = vmatprep.mubr.bf16.mxu0 %v11150
      %11478 = vmatmul.mubr.bf16.gmra.mrb[0].mxu0 %v11102
      %v11479 = vpop.f32.mrb[0].mxu0
      %v11480 = vadd.f32 0.0, %v11479
      %v11481 = vpop.f32.mrb[0].mxu0
      %v11482 = vpop.f32.mrb[0].mxu0
      %v11483 = vadd.f32 0.0, %v11482
      %v11484 = vpop.f32.mrb[0].mxu0
      %11485 = vmatprep.mubr.bf16.mxu0 %v11153
      %11486 = vmatmul.mubr.bf16.gmra.mrb[0].mxu0 %v11105
      %v11487 = vpop.f32.mrb[0].mxu0
      %v11488 = vadd.f32 0.0, %v11487
      %v11489 = vpop.f32.mrb[0].mxu0
      %v11490 = vpop.f32.mrb[0].mxu0
      %v11491 = vadd.f32 0.0, %v11490
      %v11492 = vpop.f32.mrb[0].mxu0
      %11493 = vdwg.mxu0
      %11494 = vmatprep.subr.bf16.mxu0 0
      %11495 = vmatpush1.bf16.msra.mxu0 %v11280
      %11496 = vmatprep.subr.bf16.mxu0 0
      %11497 = vmatpush1.bf16.msra.mxu0 %v11281
      %11498 = vmatprep.subr.bf16.mxu0 0
      %11499 = vmatpush1.bf16.msra.mxu0 0
      %11500 = vmatprep.subr.bf16.mxu0 0
      %11501 = vmatpush1.bf16.msra.mxu0 0
      %11502 = vmatprep.subr.bf16.mxu0 0
      %11503 = vmatpush1.bf16.msra.mxu0 0
      %11504 = vmatprep.subr.bf16.mxu0 0
      %11505 = vmatpush1.bf16.msra.mxu0 0
      %11506 = vmatprep.subr.bf16.mxu0 0
      %11507 = vmatpush1.bf16.msra.mxu0 0
      %11508 = vmatprep.subr.bf16.mxu0 0
      %11509 = vmatpush1.bf16.msra.mxu0 0
      %11510 = vmatprep.subr.bf16.mxu0 0
      %11511 = vmatpush1.bf16.msra.mxu0 0
      %11512 = vmatprep.subr.bf16.mxu0 0
      %11513 = vmatpush1.bf16.msra.mxu0 0
      %11514 = vmatprep.subr.bf16.mxu0 0
      %11515 = vmatpush1.bf16.msra.mxu0 0
      %11516 = vmatprep.subr.bf16.mxu0 0
      %11517 = vmatpush1.bf16.msra.mxu0 0
      %11518 = vmatprep.subr.bf16.mxu0 0
      %11519 = vmatpush1.bf16.msra.mxu0 0
      %11520 = vmatprep.subr.bf16.mxu0 0
      %11521 = vmatpush1.bf16.msra.mxu0 0
      %11522 = vmatprep.subr.bf16.mxu0 0
      %11523 = vmatpush1.bf16.msra.mxu0 0
      %11524 = vmatprep.subr.bf16.mxu0 0
      %11525 = vmatpush1.bf16.msra.mxu0 0
      %11526 = vmatprep.mubr.bf16.mxu0 0
      %11527 = vmatmul.mubr.bf16.gmra.mrb[0].mxu0 %v11301
      %v11528 = vpop.f32.mrb[0].mxu0
      %v11529 = vadd.f32 %v11368, %v11528
      %v11530 = vpop.f32.mrb[0].mxu0
      %v11531 = vpop.f32.mrb[0].mxu0
      %v11532 = vadd.f32 %v11371, %v11531
      %v11533 = vpop.f32.mrb[0].mxu0
      %11534 = vmatprep.mubr.bf16.mxu0 0
      %11535 = vmatmul.mubr.bf16.gmra.mrb[0].mxu0 %v11303
      %v11536 = vpop.f32.mrb[0].mxu0
      %v11537 = vadd.f32 %v11376, %v11536
      %v11538 = vpop.f32.mrb[0].mxu0
      %v11539 = vpop.f32.mrb[0].mxu0
      %v11540 = vadd.f32 %v11379, %v11539
      %v11541 = vpop.f32.mrb[0].mxu0
      %11542 = vmatprep.mubr.bf16.mxu0 0
      %11543 = vmatmul.mubr.bf16.gmra.mrb[0].mxu0 %v11305
      %v11544 = vpop.f32.mrb[0].mxu0
      %v11545 = vadd.f32 %v11384, %v11544
      %v11546 = vpop.f32.mrb[0].mxu0
      %v11547 = vpop.f32.mrb[0].mxu0
      %v11548 = vadd.f32 %v11387, %v11547
      %v11549 = vpop.f32.mrb[0].mxu0
      %11550 = vmatprep.mubr.bf16.mxu0 0
      %11551 = vmatmul.mubr.bf16.gmra.mrb[0].mxu0 %v11307
      %v11552 = vpop.f32.mrb[0].mxu0
      %v11553 = vadd.f32 %v11392, %v11552
      %v11554 = vpop.f32.mrb[0].mxu0
      %v11555 = vpop.f32.mrb[0].mxu0
      %v11556 = vadd.f32 %v11395, %v11555
      %v11557 = vpop.f32.mrb[0].mxu0
      %11558 = vmatprep.mubr.bf16.mxu0 0
      %11559 = vmatmul.mubr.bf16.gmra.mrb[0].mxu0 %v11309
      %v11560 = vpop.f32.mrb[0].mxu0
      %v11561 = vadd.f32 %v11400, %v11560
      %v11562 = vpop.f32.mrb[0].mxu0
      %v11563 = vpop.f32.mrb[0].mxu0
      %v11564 = vadd.f32 %v11403, %v11563
      %v11565 = vpop.f32.mrb[0].mxu0
      %11566 = vmatprep.mubr.bf16.mxu0 0
      %11567 = vmatmul.mubr.bf16.gmra.mrb[0].mxu0 %v11311
      %v11568 = vpop.f32.mrb[0].mxu0
      %v11569 = vadd.f32 %v11408, %v11568
      %v11570 = vpop.f32.mrb[0].mxu0
      %v11571 = vpop.f32.mrb[0].mxu0
      %v11572 = vadd.f32 %v11411, %v11571
      %v11573 = vpop.f32.mrb[0].mxu0
      %11574 = vmatprep.mubr.bf16.mxu0 0
      %11575 = vmatmul.mubr.bf16.gmra.mrb[0].mxu0 %v11313
      %v11576 = vpop.f32.mrb[0].mxu0
      %v11577 = vadd.f32 %v11416, %v11576
      %v11578 = vpop.f32.mrb[0].mxu0
      %v11579 = vpop.f32.mrb[0].mxu0
      %v11580 = vadd.f32 %v11419, %v11579
      %v11581 = vpop.f32.mrb[0].mxu0
      %11582 = vmatprep.mubr.bf16.mxu0 0
      %11583 = vmatmul.mubr.bf16.gmra.mrb[0].mxu0 %v11315
      %v11584 = vpop.f32.mrb[0].mxu0
      %v11585 = vadd.f32 %v11424, %v11584
      %v11586 = vpop.f32.mrb[0].mxu0
      %v11587 = vpop.f32.mrb[0].mxu0
      %v11588 = vadd.f32 %v11427, %v11587
      %v11589 = vpop.f32.mrb[0].mxu0
      %11590 = vmatprep.mubr.bf16.mxu0 0
      %11591 = vmatmul.mubr.bf16.gmra.mrb[0].mxu0 %v11317
      %v11592 = vpop.f32.mrb[0].mxu0
      %v11593 = vadd.f32 %v11432, %v11592
      %v11594 = vpop.f32.mrb[0].mxu0
      %v11595 = vpop.f32.mrb[0].mxu0
      %v11596 = vadd.f32 %v11435, %v11595
      %v11597 = vpop.f32.mrb[0].mxu0
      %11598 = vmatprep.mubr.bf16.mxu0 0
      %11599 = vmatmul.mubr.bf16.gmra.mrb[0].mxu0 %v11319
      %v11600 = vpop.f32.mrb[0].mxu0
      %v11601 = vadd.f32 %v11440, %v11600
      %v11602 = vpop.f32.mrb[0].mxu0
      %v11603 = vpop.f32.mrb[0].mxu0
      %v11604 = vadd.f32 %v11443, %v11603
      %v11605 = vpop.f32.mrb[0].mxu0
      %11606 = vmatprep.mubr.bf16.mxu0 0
      %11607 = vmatmul.mubr.bf16.gmra.mrb[0].mxu0 %v11321
      %v11608 = vpop.f32.mrb[0].mxu0
      %v11609 = vadd.f32 %v11448, %v11608
      %v11610 = vpop.f32.mrb[0].mxu0
      %v11611 = vpop.f32.mrb[0].mxu0
      %v11612 = vadd.f32 %v11451, %v11611
      %v11613 = vpop.f32.mrb[0].mxu0
      %11614 = vmatprep.mubr.bf16.mxu0 0
      %11615 = vmatmul.mubr.bf16.gmra.mrb[0].mxu0 %v11323
      %v11616 = vpop.f32.mrb[0].mxu0
      %v11617 = vadd.f32 %v11456, %v11616
      %v11618 = vpop.f32.mrb[0].mxu0
      %v11619 = vpop.f32.mrb[0].mxu0
      %v11620 = vadd.f32 %v11459, %v11619
      %v11621 = vpop.f32.mrb[0].mxu0
      %11622 = vmatprep.mubr.bf16.mxu0 0
      %11623 = vmatmul.mubr.bf16.gmra.mrb[0].mxu0 %v11325
      %v11624 = vpop.f32.mrb[0].mxu0
      %v11625 = vadd.f32 %v11464, %v11624
      %v11626 = vpop.f32.mrb[0].mxu0
      %v11627 = vpop.f32.mrb[0].mxu0
      %v11628 = vadd.f32 %v11467, %v11627
      %v11629 = vpop.f32.mrb[0].mxu0
      %11630 = vmatprep.mubr.bf16.mxu0 0
      %11631 = vmatmul.mubr.bf16.gmra.mrb[0].mxu0 %v11327
      %v11632 = vpop.f32.mrb[0].mxu0
      %v11633 = vadd.f32 %v11472, %v11632
      %v11634 = vpop.f32.mrb[0].mxu0
      %v11635 = vpop.f32.mrb[0].mxu0
      %v11636 = vadd.f32 %v11475, %v11635
      %v11637 = vpop.f32.mrb[0].mxu0
      %11638 = vmatprep.mubr.bf16.mxu0 0
      %11639 = vmatmul.mubr.bf16.gmra.mrb[0].mxu0 %v11329
      %v11640 = vpop.f32.mrb[0].mxu0
      %v11641 = vadd.f32 %v11480, %v11640
      %v11642 = vpop.f32.mrb[0].mxu0
      %v11643 = vpop.f32.mrb[0].mxu0
      %v11644 = vadd.f32 %v11483, %v11643
      %v11645 = vpop.f32.mrb[0].mxu0
      %11646 = vmatprep.mubr.bf16.mxu0 0
      %11647 = vmatmul.mubr.bf16.gmra.mrb[0].mxu0 %v11331
      %v11648 = vpop.f32.mrb[0].mxu0
      %v11649 = vadd.f32 %v11488, %v11648
      %v11650 = vpop.f32.mrb[0].mxu0
      %v11651 = vpop.f32.mrb[0].mxu0
      %v11652 = vadd.f32 %v11491, %v11651
      %v11653 = vpop.f32.mrb[0].mxu0
      %11654 = vdwg.mxu0
      %v11691 = vunpack.c.l.b16 %v10479
      %v11692 = vunpack.c.l.b16 %v10480
      %v11693 = vunpack.c.l.b16 %v10481
      %v11694 = vunpack.c.l.b16 %v10482
      %v11695 = vunpack.c.l.b16 %v10483
      %v11696 = vunpack.c.l.b16 %v10484
      %v11697 = vunpack.c.l.b16 %v10485
      %v11698 = vunpack.c.l.b16 %v10486
      %v11699 = vunpack.c.l.b16 %v10487
      %v11700 = vunpack.c.l.b16 %v10488
      %v11701 = vunpack.c.l.b16 %v10489
      %v11702 = vunpack.c.l.b16 %v10490
      %v11703 = vunpack.c.l.b16 %v10491
      %v11704 = vunpack.c.l.b16 %v10492
      %v11705 = vunpack.c.l.b16 %v10493
      %v11706 = vunpack.c.l.b16 %v10494
      %v11707 = vunpack.c.l.b16 %v10495
      %v11708 = vunpack.c.l.b16 %v10496
      %v11709 = vunpack.c.l.b16 %v10497
      %v11710 = vunpack.c.l.b16 %v10498
      %v11711 = vunpack.c.l.b16 %v10499
      %v11712 = vunpack.c.l.b16 %v10500
      %v11713 = vunpack.c.l.b16 %v10501
      %v11714 = vunpack.c.l.b16 %v10502
      %v11715 = vunpack.c.l.b16 %v10503
      %v11716 = vunpack.c.l.b16 %v10504
      %v11717 = vunpack.c.l.b16 %v10505
      %v11718 = vunpack.c.l.b16 %v10506
      %v11719 = vunpack.c.l.b16 %v10507
      %v11720 = vunpack.c.l.b16 %v10508
      %v11721 = vunpack.c.l.b16 %v10509
      %v11722 = vunpack.c.l.b16 %v10510
      %v11723 = vunpack.c.l.b16 %v10511
      %v11724 = vunpack.c.l.b16 %v10512
      %v11725 = vunpack.c.l.b16 %v10513
      %v11726 = vunpack.c.l.b16 %v10514
      %v11727 = vpack.c.b16 %v11692, %v11691
      %v11728 = vpack.c.b16 %v11694, %v11693
      %v11729 = vpack.c.b16 %v11696, %v11695
      %v11730 = vpack.c.b16 %v11698, %v11697
      %v11731 = vpack.c.b16 %v11700, %v11699
      %v11732 = vpack.c.b16 %v11702, %v11701
      %v11733 = vpack.c.b16 %v11704, %v11703
      %v11734 = vpack.c.b16 %v11706, %v11705
      %v11735 = vpack.c.b16 %v11708, %v11707
      %v11736 = vpack.c.b16 %v11710, %v11709
      %v11737 = vpack.c.b16 %v11712, %v11711
      %v11738 = vpack.c.b16 %v11714, %v11713
      %v11739 = vpack.c.b16 %v11716, %v11715
      %v11740 = vpack.c.b16 %v11718, %v11717
      %v11741 = vpack.c.b16 %v11720, %v11719
      %v11742 = vpack.c.b16 %v11722, %v11721
      %v11743 = vpack.c.b16 %v11724, %v11723
      %v11744 = vpack.c.b16 %v11726, %v11725
      %v11763 = vsel %vm11300, %v10352, 0
      %v11765 = vsel %vm11300, %v10354, 0
      %v11767 = vsel %vm11300, %v10356, 0
      %v11769 = vsel %vm11300, %v10358, 0
      %v11771 = vsel %vm11300, %v10360, 0
      %v11773 = vsel %vm11300, %v10362, 0
      %v11775 = vsel %vm11300, %v10364, 0
      %v11777 = vsel %vm11300, %v10366, 0
      %v11779 = vsel %vm11300, %v10368, 0
      %v11781 = vsel %vm11300, %v10370, 0
      %v11783 = vsel %vm11300, %v10372, 0
      %v11785 = vsel %vm11300, %v10374, 0
      %v11787 = vsel %vm11300, %v10376, 0
      %v11789 = vsel %vm11300, %v10378, 0
      %v11791 = vsel %vm11300, %v10380, 0
      %v11793 = vsel %vm11300, %v10382, 0
      %11795 = vmatprep.subr.bf16.mxu0 0
      %11796 = vmatpush1.bf16.msra.mxu0 %v11727
      %11797 = vmatprep.subr.bf16.mxu0 0
      %11798 = vmatpush1.bf16.msra.mxu0 %v11728
      %11799 = vmatprep.subr.bf16.mxu0 0
      %11800 = vmatpush1.bf16.msra.mxu0 %v11729
      %11801 = vmatprep.subr.bf16.mxu0 0
      %11802 = vmatpush1.bf16.msra.mxu0 %v11730
      %11803 = vmatprep.subr.bf16.mxu0 0
      %11804 = vmatpush1.bf16.msra.mxu0 %v11731
      %11805 = vmatprep.subr.bf16.mxu0 0
      %11806 = vmatpush1.bf16.msra.mxu0 %v11732
      %11807 = vmatprep.subr.bf16.mxu0 0
      %11808 = vmatpush1.bf16.msra.mxu0 %v11733
      %11809 = vmatprep.subr.bf16.mxu0 0
      %11810 = vmatpush1.bf16.msra.mxu0 %v11734
      %11811 = vmatprep.subr.bf16.mxu0 0
      %11812 = vmatpush1.bf16.msra.mxu0 %v11735
      %11813 = vmatprep.subr.bf16.mxu0 0
      %11814 = vmatpush1.bf16.msra.mxu0 %v11736
      %11815 = vmatprep.subr.bf16.mxu0 0
      %11816 = vmatpush1.bf16.msra.mxu0 %v11737
      %11817 = vmatprep.subr.bf16.mxu0 0
      %11818 = vmatpush1.bf16.msra.mxu0 %v11738
      %11819 = vmatprep.subr.bf16.mxu0 0
      %11820 = vmatpush1.bf16.msra.mxu0 %v11739
      %11821 = vmatprep.subr.bf16.mxu0 0
      %11822 = vmatpush1.bf16.msra.mxu0 %v11740
      %11823 = vmatprep.subr.bf16.mxu0 0
      %11824 = vmatpush1.bf16.msra.mxu0 %v11741
      %11825 = vmatprep.subr.bf16.mxu0 0
      %11826 = vmatpush1.bf16.msra.mxu0 %v11742
      %11827 = vmatprep.mubr.bf16.mxu0 %v10432
      %11828 = vmatmul.mubr.bf16.gmra.mrb[0].mxu0 %v10384
      %v11829 = vpop.f32.mrb[0].mxu0
      %v11830 = vadd.f32 %v11529, %v11829
      %v11831 = vpop.f32.mrb[0].mxu0
      %v11832 = vpop.f32.mrb[0].mxu0
      %v11833 = vadd.f32 %v11532, %v11832
      %v11834 = vpop.f32.mrb[0].mxu0
      %11835 = vmatprep.mubr.bf16.mxu0 %v10435
      %11836 = vmatmul.mubr.bf16.gmra.mrb[0].mxu0 %v10387
      %v11837 = vpop.f32.mrb[0].mxu0
      %v11838 = vadd.f32 %v11537, %v11837
      %v11839 = vpop.f32.mrb[0].mxu0
      %v11840 = vpop.f32.mrb[0].mxu0
      %v11841 = vadd.f32 %v11540, %v11840
      %v11842 = vpop.f32.mrb[0].mxu0
      %11843 = vmatprep.mubr.bf16.mxu0 %v10438
      %11844 = vmatmul.mubr.bf16.gmra.mrb[0].mxu0 %v10390
      %v11845 = vpop.f32.mrb[0].mxu0
      %v11846 = vadd.f32 %v11545, %v11845
      %v11847 = vpop.f32.mrb[0].mxu0
      %v11848 = vpop.f32.mrb[0].mxu0
      %v11849 = vadd.f32 %v11548, %v11848
      %v11850 = vpop.f32.mrb[0].mxu0
      %11851 = vmatprep.mubr.bf16.mxu0 %v10441
      %11852 = vmatmul.mubr.bf16.gmra.mrb[0].mxu0 %v10393
      %v11853 = vpop.f32.mrb[0].mxu0
      %v11854 = vadd.f32 %v11553, %v11853
      %v11855 = vpop.f32.mrb[0].mxu0
      %v11856 = vpop.f32.mrb[0].mxu0
      %v11857 = vadd.f32 %v11556, %v11856
      %v11858 = vpop.f32.mrb[0].mxu0
      %11859 = vmatprep.mubr.bf16.mxu0 %v10444
      %11860 = vmatmul.mubr.bf16.gmra.mrb[0].mxu0 %v10396
      %v11861 = vpop.f32.mrb[0].mxu0
      %v11862 = vadd.f32 %v11561, %v11861
      %v11863 = vpop.f32.mrb[0].mxu0
      %v11864 = vpop.f32.mrb[0].mxu0
      %v11865 = vadd.f32 %v11564, %v11864
      %v11866 = vpop.f32.mrb[0].mxu0
      %11867 = vmatprep.mubr.bf16.mxu0 %v10447
      %11868 = vmatmul.mubr.bf16.gmra.mrb[0].mxu0 %v10399
      %v11869 = vpop.f32.mrb[0].mxu0
      %v11870 = vadd.f32 %v11569, %v11869
      %v11871 = vpop.f32.mrb[0].mxu0
      %v11872 = vpop.f32.mrb[0].mxu0
      %v11873 = vadd.f32 %v11572, %v11872
      %v11874 = vpop.f32.mrb[0].mxu0
      %11875 = vmatprep.mubr.bf16.mxu0 %v10450
      %11876 = vmatmul.mubr.bf16.gmra.mrb[0].mxu0 %v10402
      %v11877 = vpop.f32.mrb[0].mxu0
      %v11878 = vadd.f32 %v11577, %v11877
      %v11879 = vpop.f32.mrb[0].mxu0
      %v11880 = vpop.f32.mrb[0].mxu0
      %v11881 = vadd.f32 %v11580, %v11880
      %v11882 = vpop.f32.mrb[0].mxu0
      %11883 = vmatprep.mubr.bf16.mxu0 %v10453
      %11884 = vmatmul.mubr.bf16.gmra.mrb[0].mxu0 %v10405
      %v11885 = vpop.f32.mrb[0].mxu0
      %v11886 = vadd.f32 %v11585, %v11885
      %v11887 = vpop.f32.mrb[0].mxu0
      %v11888 = vpop.f32.mrb[0].mxu0
      %v11889 = vadd.f32 %v11588, %v11888
      %v11890 = vpop.f32.mrb[0].mxu0
      %11891 = vmatprep.mubr.bf16.mxu0 %v10456
      %11892 = vmatmul.mubr.bf16.gmra.mrb[0].mxu0 %v10408
      %v11893 = vpop.f32.mrb[0].mxu0
      %v11894 = vadd.f32 %v11593, %v11893
      %v11895 = vpop.f32.mrb[0].mxu0
      %v11896 = vpop.f32.mrb[0].mxu0
      %v11897 = vadd.f32 %v11596, %v11896
      %v11898 = vpop.f32.mrb[0].mxu0
      %11899 = vmatprep.mubr.bf16.mxu0 %v10459
      %11900 = vmatmul.mubr.bf16.gmra.mrb[0].mxu0 %v10411
      %v11901 = vpop.f32.mrb[0].mxu0
      %v11902 = vadd.f32 %v11601, %v11901
      %v11903 = vpop.f32.mrb[0].mxu0
      %v11904 = vpop.f32.mrb[0].mxu0
      %v11905 = vadd.f32 %v11604, %v11904
      %v11906 = vpop.f32.mrb[0].mxu0
      %11907 = vmatprep.mubr.bf16.mxu0 %v10462
      %11908 = vmatmul.mubr.bf16.gmra.mrb[0].mxu0 %v10414
      %v11909 = vpop.f32.mrb[0].mxu0
      %v11910 = vadd.f32 %v11609, %v11909
      %v11911 = vpop.f32.mrb[0].mxu0
      %v11912 = vpop.f32.mrb[0].mxu0
      %v11913 = vadd.f32 %v11612, %v11912
      %v11914 = vpop.f32.mrb[0].mxu0
      %11915 = vmatprep.mubr.bf16.mxu0 %v10465
      %11916 = vmatmul.mubr.bf16.gmra.mrb[0].mxu0 %v10417
      %v11917 = vpop.f32.mrb[0].mxu0
      %v11918 = vadd.f32 %v11617, %v11917
      %v11919 = vpop.f32.mrb[0].mxu0
      %v11920 = vpop.f32.mrb[0].mxu0
      %v11921 = vadd.f32 %v11620, %v11920
      %v11922 = vpop.f32.mrb[0].mxu0
      %11923 = vmatprep.mubr.bf16.mxu0 %v10468
      %11924 = vmatmul.mubr.bf16.gmra.mrb[0].mxu0 %v10420
      %v11925 = vpop.f32.mrb[0].mxu0
      %v11926 = vadd.f32 %v11625, %v11925
      %v11927 = vpop.f32.mrb[0].mxu0
      %v11928 = vpop.f32.mrb[0].mxu0
      %v11929 = vadd.f32 %v11628, %v11928
      %v11930 = vpop.f32.mrb[0].mxu0
      %11931 = vmatprep.mubr.bf16.mxu0 %v10471
      %11932 = vmatmul.mubr.bf16.gmra.mrb[0].mxu0 %v10423
      %v11933 = vpop.f32.mrb[0].mxu0
      %v11934 = vadd.f32 %v11633, %v11933
      %v11935 = vpop.f32.mrb[0].mxu0
      %v11936 = vpop.f32.mrb[0].mxu0
      %v11937 = vadd.f32 %v11636, %v11936
      %v11938 = vpop.f32.mrb[0].mxu0
      %11939 = vmatprep.mubr.bf16.mxu0 %v10474
      %11940 = vmatmul.mubr.bf16.gmra.mrb[0].mxu0 %v10426
      %v11941 = vpop.f32.mrb[0].mxu0
      %v11942 = vadd.f32 %v11641, %v11941
      %v11943 = vpop.f32.mrb[0].mxu0
      %v11944 = vpop.f32.mrb[0].mxu0
      %v11945 = vadd.f32 %v11644, %v11944
      %v11946 = vpop.f32.mrb[0].mxu0
      %11947 = vmatprep.mubr.bf16.mxu0 %v10477
      %11948 = vmatmul.mubr.bf16.gmra.mrb[0].mxu0 %v10429
      %v11949 = vpop.f32.mrb[0].mxu0
      %v11950 = vadd.f32 %v11649, %v11949
      %v11951 = vpop.f32.mrb[0].mxu0
      %v11952 = vpop.f32.mrb[0].mxu0
      %v11953 = vadd.f32 %v11652, %v11952
      %v11954 = vpop.f32.mrb[0].mxu0
      %11955 = vdwg.mxu0
      %11956 = vmatprep.subr.bf16.mxu0 0
      %11957 = vmatpush1.bf16.msra.mxu0 %v11743
      %11958 = vmatprep.subr.bf16.mxu0 0
      %11959 = vmatpush1.bf16.msra.mxu0 %v11744
      %11960 = vmatprep.subr.bf16.mxu0 0
      %11961 = vmatpush1.bf16.msra.mxu0 0
      %11962 = vmatprep.subr.bf16.mxu0 0
      %11963 = vmatpush1.bf16.msra.mxu0 0
      %11964 = vmatprep.subr.bf16.mxu0 0
      %11965 = vmatpush1.bf16.msra.mxu0 0
      %11966 = vmatprep.subr.bf16.mxu0 0
      %11967 = vmatpush1.bf16.msra.mxu0 0
      %11968 = vmatprep.subr.bf16.mxu0 0
      %11969 = vmatpush1.bf16.msra.mxu0 0
      %11970 = vmatprep.subr.bf16.mxu0 0
      %11971 = vmatpush1.bf16.msra.mxu0 0
      %11972 = vmatprep.subr.bf16.mxu0 0
      %11973 = vmatpush1.bf16.msra.mxu0 0
      %11974 = vmatprep.subr.bf16.mxu0 0
      %11975 = vmatpush1.bf16.msra.mxu0 0
      %11976 = vmatprep.subr.bf16.mxu0 0
      %11977 = vmatpush1.bf16.msra.mxu0 0
      %11978 = vmatprep.subr.bf16.mxu0 0
      %11979 = vmatpush1.bf16.msra.mxu0 0
      %11980 = vmatprep.subr.bf16.mxu0 0
      %11981 = vmatpush1.bf16.msra.mxu0 0
      %11982 = vmatprep.subr.bf16.mxu0 0
      %11983 = vmatpush1.bf16.msra.mxu0 0
      %11984 = vmatprep.subr.bf16.mxu0 0
      %11985 = vmatpush1.bf16.msra.mxu0 0
      %11986 = vmatprep.subr.bf16.mxu0 0
      %11987 = vmatpush1.bf16.msra.mxu0 0
      %11988 = vmatprep.mubr.bf16.mxu0 0
      %11989 = vmatmul.mubr.bf16.gmra.mrb[0].mxu0 %v11763
      %v11990 = vpop.f32.mrb[0].mxu0
      %v11991 = vadd.f32 %v11830, %v11990
      %v11992 = vpop.f32.mrb[0].mxu0
      %v11993 = vpop.f32.mrb[0].mxu0
      %v11994 = vadd.f32 %v11833, %v11993
      %v11995 = vpop.f32.mrb[0].mxu0
      %11996 = vmatprep.mubr.bf16.mxu0 0
      %11997 = vmatmul.mubr.bf16.gmra.mrb[0].mxu0 %v11765
      %v11998 = vpop.f32.mrb[0].mxu0
      %v11999 = vadd.f32 %v11838, %v11998
      %v12000 = vpop.f32.mrb[0].mxu0
      %v12001 = vpop.f32.mrb[0].mxu0
      %v12002 = vadd.f32 %v11841, %v12001
      %v12003 = vpop.f32.mrb[0].mxu0
      %12004 = vmatprep.mubr.bf16.mxu0 0
      %12005 = vmatmul.mubr.bf16.gmra.mrb[0].mxu0 %v11767
      %v12006 = vpop.f32.mrb[0].mxu0
      %v12007 = vadd.f32 %v11846, %v12006
      %v12008 = vpop.f32.mrb[0].mxu0
      %v12009 = vpop.f32.mrb[0].mxu0
      %v12010 = vadd.f32 %v11849, %v12009
      %v12011 = vpop.f32.mrb[0].mxu0
      %12012 = vmatprep.mubr.bf16.mxu0 0
      %12013 = vmatmul.mubr.bf16.gmra.mrb[0].mxu0 %v11769
      %v12014 = vpop.f32.mrb[0].mxu0
      %v12015 = vadd.f32 %v11854, %v12014
      %v12016 = vpop.f32.mrb[0].mxu0
      %v12017 = vpop.f32.mrb[0].mxu0
      %v12018 = vadd.f32 %v11857, %v12017
      %v12019 = vpop.f32.mrb[0].mxu0
      %12020 = vmatprep.mubr.bf16.mxu0 0
      %12021 = vmatmul.mubr.bf16.gmra.mrb[0].mxu0 %v11771
      %v12022 = vpop.f32.mrb[0].mxu0
      %v12023 = vadd.f32 %v11862, %v12022
      %v12024 = vpop.f32.mrb[0].mxu0
      %v12025 = vpop.f32.mrb[0].mxu0
      %v12026 = vadd.f32 %v11865, %v12025
      %v12027 = vpop.f32.mrb[0].mxu0
      %12028 = vmatprep.mubr.bf16.mxu0 0
      %12029 = vmatmul.mubr.bf16.gmra.mrb[0].mxu0 %v11773
      %v12030 = vpop.f32.mrb[0].mxu0
      %v12031 = vadd.f32 %v11870, %v12030
      %v12032 = vpop.f32.mrb[0].mxu0
      %v12033 = vpop.f32.mrb[0].mxu0
      %v12034 = vadd.f32 %v11873, %v12033
      %v12035 = vpop.f32.mrb[0].mxu0
      %12036 = vmatprep.mubr.bf16.mxu0 0
      %12037 = vmatmul.mubr.bf16.gmra.mrb[0].mxu0 %v11775
      %v12038 = vpop.f32.mrb[0].mxu0
      %v12039 = vadd.f32 %v11878, %v12038
      %v12040 = vpop.f32.mrb[0].mxu0
      %v12041 = vpop.f32.mrb[0].mxu0
      %v12042 = vadd.f32 %v11881, %v12041
      %v12043 = vpop.f32.mrb[0].mxu0
      %12044 = vmatprep.mubr.bf16.mxu0 0
      %12045 = vmatmul.mubr.bf16.gmra.mrb[0].mxu0 %v11777
      %v12046 = vpop.f32.mrb[0].mxu0
      %v12047 = vadd.f32 %v11886, %v12046
      %v12048 = vpop.f32.mrb[0].mxu0
      %v12049 = vpop.f32.mrb[0].mxu0
      %v12050 = vadd.f32 %v11889, %v12049
      %v12051 = vpop.f32.mrb[0].mxu0
      %12052 = vmatprep.mubr.bf16.mxu0 0
      %12053 = vmatmul.mubr.bf16.gmra.mrb[0].mxu0 %v11779
      %v12054 = vpop.f32.mrb[0].mxu0
      %v12055 = vadd.f32 %v11894, %v12054
      %v12056 = vpop.f32.mrb[0].mxu0
      %v12057 = vpop.f32.mrb[0].mxu0
      %v12058 = vadd.f32 %v11897, %v12057
      %v12059 = vpop.f32.mrb[0].mxu0
      %12060 = vmatprep.mubr.bf16.mxu0 0
      %12061 = vmatmul.mubr.bf16.gmra.mrb[0].mxu0 %v11781
      %v12062 = vpop.f32.mrb[0].mxu0
      %v12063 = vadd.f32 %v11902, %v12062
      %v12064 = vpop.f32.mrb[0].mxu0
      %v12065 = vpop.f32.mrb[0].mxu0
      %v12066 = vadd.f32 %v11905, %v12065
      %v12067 = vpop.f32.mrb[0].mxu0
      %12068 = vmatprep.mubr.bf16.mxu0 0
      %12069 = vmatmul.mubr.bf16.gmra.mrb[0].mxu0 %v11783
      %v12070 = vpop.f32.mrb[0].mxu0
      %v12071 = vadd.f32 %v11910, %v12070
      %v12072 = vpop.f32.mrb[0].mxu0
      %v12073 = vpop.f32.mrb[0].mxu0
      %v12074 = vadd.f32 %v11913, %v12073
      %v12075 = vpop.f32.mrb[0].mxu0
      %12076 = vmatprep.mubr.bf16.mxu0 0
      %12077 = vmatmul.mubr.bf16.gmra.mrb[0].mxu0 %v11785
      %v12078 = vpop.f32.mrb[0].mxu0
      %v12079 = vadd.f32 %v11918, %v12078
      %v12080 = vpop.f32.mrb[0].mxu0
      %v12081 = vpop.f32.mrb[0].mxu0
      %v12082 = vadd.f32 %v11921, %v12081
      %v12083 = vpop.f32.mrb[0].mxu0
      %12084 = vmatprep.mubr.bf16.mxu0 0
      %12085 = vmatmul.mubr.bf16.gmra.mrb[0].mxu0 %v11787
      %v12086 = vpop.f32.mrb[0].mxu0
      %v12087 = vadd.f32 %v11926, %v12086
      %v12088 = vpop.f32.mrb[0].mxu0
      %v12089 = vpop.f32.mrb[0].mxu0
      %v12090 = vadd.f32 %v11929, %v12089
      %v12091 = vpop.f32.mrb[0].mxu0
      %12092 = vmatprep.mubr.bf16.mxu0 0
      %12093 = vmatmul.mubr.bf16.gmra.mrb[0].mxu0 %v11789
      %v12094 = vpop.f32.mrb[0].mxu0
      %v12095 = vadd.f32 %v11934, %v12094
      %v12096 = vpop.f32.mrb[0].mxu0
      %v12097 = vpop.f32.mrb[0].mxu0
      %v12098 = vadd.f32 %v11937, %v12097
      %v12099 = vpop.f32.mrb[0].mxu0
      %12100 = vmatprep.mubr.bf16.mxu0 0
      %12101 = vmatmul.mubr.bf16.gmra.mrb[0].mxu0 %v11791
      %v12102 = vpop.f32.mrb[0].mxu0
      %v12103 = vadd.f32 %v11942, %v12102
      %v12104 = vpop.f32.mrb[0].mxu0
      %v12105 = vpop.f32.mrb[0].mxu0
      %v12106 = vadd.f32 %v11945, %v12105
      %v12107 = vpop.f32.mrb[0].mxu0
      %12108 = vmatprep.mubr.bf16.mxu0 0
      %12109 = vmatmul.mubr.bf16.gmra.mrb[0].mxu0 %v11793
      %v12110 = vpop.f32.mrb[0].mxu0
      %v12111 = vadd.f32 %v11950, %v12110
      %v12112 = vpop.f32.mrb[0].mxu0
      %v12113 = vpop.f32.mrb[0].mxu0
      %v12114 = vadd.f32 %v11953, %v12113
      %v12115 = vpop.f32.mrb[0].mxu0
      %12116 = vdwg.mxu0
      %s12117 = scalar_lea.vmem [#allocation3], 24
      %v12118 = vld [vmem:[%s12117] sm:$0xf]
      %v12119 = vld [vmem:[%s12117 + $0x4] sm:$0xf]
      %v12120 = vld [vmem:[%s12117 + $0xc] sm:$0xf]
      %v12121 = vld [vmem:[%s12117 + $0x10] sm:$0xf]
      %v12122 = vld [vmem:[%s12117 + $0x18] sm:$0xf]
      %v12123 = vld [vmem:[%s12117 + $0x1c] sm:$0xf]
      %v12124 = vld [vmem:[%s12117 + $0x24] sm:$0xf]
      %v12125 = vld [vmem:[%s12117 + $0x28] sm:$0xf]
      %v12126 = vld [vmem:[%s12117 + $0x30] sm:$0xf]
      %v12127 = vld [vmem:[%s12117 + $0x34] sm:$0xf]
      %v12128 = vld [vmem:[%s12117 + $0x3c] sm:$0xf]
      %v12129 = vld [vmem:[%s12117 + $0x40] sm:$0xf]
      %v12130 = vld [vmem:[%s12117 + $0x48] sm:$0xf]
      %v12131 = vld [vmem:[%s12117 + $0x4c] sm:$0xf]
      %v12132 = vld [vmem:[%s12117 + $0x54] sm:$0xf]
      %v12133 = vld [vmem:[%s12117 + $0x58] sm:$0xf]
      %v12134 = vld [vmem:[%s12117 + $0x60] sm:$0xf]
      %v12135 = vld [vmem:[%s12117 + $0x64] sm:$0xf]
      %v12136 = vld [vmem:[%s12117 + $0x6c] sm:$0xf]
      %v12137 = vld [vmem:[%s12117 + $0x70] sm:$0xf]
      %v12138 = vld [vmem:[%s12117 + $0x78] sm:$0xf]
      %v12139 = vld [vmem:[%s12117 + $0x7c] sm:$0xf]
      %v12140 = vld [vmem:[%s12117 + $0x84] sm:$0xf]
      %v12141 = vld [vmem:[%s12117 + $0x88] sm:$0xf]
      %v12142 = vld [vmem:[%s12117 + $0x90] sm:$0xf]
      %v12143 = vld [vmem:[%s12117 + $0x94] sm:$0xf]
      %v12144 = vld [vmem:[%s12117 + $0x9c] sm:$0xf]
      %v12145 = vld [vmem:[%s12117 + $0xa0] sm:$0xf]
      %v12146 = vld [vmem:[%s12117 + $0xa8] sm:$0xf]
      %v12147 = vld [vmem:[%s12117 + $0xac] sm:$0xf]
      %v12148 = vld [vmem:[%s12117 + $0xb4] sm:$0xf]
      %v12149 = vld [vmem:[%s12117 + $0xb8] sm:$0xf]
      %v12150 = vld [vmem:[%s12117 + $0x8] sm:$0x1]
      %v12151 = vld [vmem:[%s12117 + $0x14] sm:$0x1]
      %v12152 = vld [vmem:[%s12117 + $0x20] sm:$0x1]
      %v12153 = vld [vmem:[%s12117 + $0x2c] sm:$0x1]
      %v12154 = vld [vmem:[%s12117 + $0x38] sm:$0x1]
      %v12155 = vld [vmem:[%s12117 + $0x44] sm:$0x1]
      %v12156 = vld [vmem:[%s12117 + $0x50] sm:$0x1]
      %v12157 = vld [vmem:[%s12117 + $0x5c] sm:$0x1]
      %v12158 = vld [vmem:[%s12117 + $0x68] sm:$0x1]
      %v12159 = vld [vmem:[%s12117 + $0x74] sm:$0x1]
      %v12160 = vld [vmem:[%s12117 + $0x80] sm:$0x1]
      %v12161 = vld [vmem:[%s12117 + $0x8c] sm:$0x1]
      %v12162 = vld [vmem:[%s12117 + $0x98] sm:$0x1]
      %v12163 = vld [vmem:[%s12117 + $0xa4] sm:$0x1]
      %v12164 = vld [vmem:[%s12117 + $0xb0] sm:$0x1]
      %v12165 = vld [vmem:[%s12117 + $0xbc] sm:$0x1]
      %v12166 = vld [vmem:[%s12117] sm:$0xe]
      %v12167 = vld [vmem:[%s12117 + $0xc] sm:$0xe]
      %v12168 = vld [vmem:[%s12117 + $0x18] sm:$0xe]
      %v12169 = vld [vmem:[%s12117 + $0x24] sm:$0xe]
      %v12170 = vld [vmem:[%s12117 + $0x30] sm:$0xe]
      %v12171 = vld [vmem:[%s12117 + $0x3c] sm:$0xe]
      %v12172 = vld [vmem:[%s12117 + $0x48] sm:$0xe]
      %v12173 = vld [vmem:[%s12117 + $0x54] sm:$0xe]
      %v12174 = vld [vmem:[%s12117 + $0x60] sm:$0xe]
      %v12175 = vld [vmem:[%s12117 + $0x6c] sm:$0xe]
      %v12176 = vld [vmem:[%s12117 + $0x78] sm:$0xe]
      %v12177 = vld [vmem:[%s12117 + $0x84] sm:$0xe]
      %v12178 = vld [vmem:[%s12117 + $0x90] sm:$0xe]
      %v12179 = vld [vmem:[%s12117 + $0x9c] sm:$0xe]
      %v12180 = vld [vmem:[%s12117 + $0xa8] sm:$0xe]
      %v12181 = vld [vmem:[%s12117 + $0xb4] sm:$0xe]
      %v12214 = vunpack.c.l.b16 %v12118
      %v12215 = vunpack.c.l.b16 %v12119
      %v12216 = vunpack.c.l.b16 %v12120
      %v12217 = vunpack.c.l.b16 %v12121
      %v12218 = vunpack.c.l.b16 %v12122
      %v12219 = vunpack.c.l.b16 %v12123
      %v12220 = vunpack.c.l.b16 %v12124
      %v12221 = vunpack.c.l.b16 %v12125
      %v12222 = vunpack.c.l.b16 %v12126
      %v12223 = vunpack.c.l.b16 %v12127
      %v12224 = vunpack.c.l.b16 %v12128
      %v12225 = vunpack.c.l.b16 %v12129
      %v12226 = vunpack.c.l.b16 %v12130
      %v12227 = vunpack.c.l.b16 %v12131
      %v12228 = vunpack.c.l.b16 %v12132
      %v12229 = vunpack.c.l.b16 %v12133
      %v12230 = vunpack.c.l.b16 %v12134
      %v12231 = vunpack.c.l.b16 %v12135
      %v12232 = vunpack.c.l.b16 %v12136
      %v12233 = vunpack.c.l.b16 %v12137
      %v12234 = vunpack.c.l.b16 %v12138
      %v12235 = vunpack.c.l.b16 %v12139
      %v12236 = vunpack.c.l.b16 %v12140
      %v12237 = vunpack.c.l.b16 %v12141
      %v12238 = vunpack.c.l.b16 %v12142
      %v12239 = vunpack.c.l.b16 %v12143
      %v12240 = vunpack.c.l.b16 %v12144
      %v12241 = vunpack.c.l.b16 %v12145
      %v12242 = vunpack.c.l.b16 %v12146
      %v12243 = vunpack.c.l.b16 %v12147
      %v12244 = vunpack.c.l.b16 %v12148
      %v12245 = vunpack.c.l.b16 %v12149
      %v12246 = vpack.c.b16 %v12215, %v12214
      %v12247 = vpack.c.b16 %v12217, %v12216
      %v12248 = vpack.c.b16 %v12219, %v12218
      %v12249 = vpack.c.b16 %v12221, %v12220
      %v12250 = vpack.c.b16 %v12223, %v12222
      %v12251 = vpack.c.b16 %v12225, %v12224
      %v12252 = vpack.c.b16 %v12227, %v12226
      %v12253 = vpack.c.b16 %v12229, %v12228
      %v12254 = vpack.c.b16 %v12231, %v12230
      %v12255 = vpack.c.b16 %v12233, %v12232
      %v12256 = vpack.c.b16 %v12235, %v12234
      %v12257 = vpack.c.b16 %v12237, %v12236
      %v12258 = vpack.c.b16 %v12239, %v12238
      %v12259 = vpack.c.b16 %v12241, %v12240
      %v12260 = vpack.c.b16 %v12243, %v12242
      %v12261 = vpack.c.b16 %v12245, %v12244
      %v12278 = vunpack.c.l.b16 %v12150
      %v12279 = vunpack.c.l.b16 %v12151
      %v12280 = vunpack.c.l.b16 %v12152
      %v12281 = vunpack.c.l.b16 %v12153
      %v12282 = vunpack.c.l.b16 %v12154
      %v12283 = vunpack.c.l.b16 %v12155
      %v12284 = vunpack.c.l.b16 %v12156
      %v12285 = vunpack.c.l.b16 %v12157
      %v12286 = vunpack.c.l.b16 %v12158
      %v12287 = vunpack.c.l.b16 %v12159
      %v12288 = vunpack.c.l.b16 %v12160
      %v12289 = vunpack.c.l.b16 %v12161
      %v12290 = vunpack.c.l.b16 %v12162
      %v12291 = vunpack.c.l.b16 %v12163
      %v12292 = vunpack.c.l.b16 %v12164
      %v12293 = vunpack.c.l.b16 %v12165
      %v12294 = vpack.c.b16 %v12278, %v12278
      %v12295 = vpack.c.b16 %v12279, %v12279
      %v12296 = vpack.c.b16 %v12280, %v12280
      %v12297 = vpack.c.b16 %v12281, %v12281
      %v12298 = vpack.c.b16 %v12282, %v12282
      %v12299 = vpack.c.b16 %v12283, %v12283
      %v12300 = vpack.c.b16 %v12284, %v12284
      %v12301 = vpack.c.b16 %v12285, %v12285
      %v12302 = vpack.c.b16 %v12286, %v12286
      %v12303 = vpack.c.b16 %v12287, %v12287
      %v12304 = vpack.c.b16 %v12288, %v12288
      %v12305 = vpack.c.b16 %v12289, %v12289
      %v12306 = vpack.c.b16 %v12290, %v12290
      %v12307 = vpack.c.b16 %v12291, %v12291
      %v12308 = vpack.c.b16 %v12292, %v12292
      %v12309 = vpack.c.b16 %v12293, %v12293
      %v12311 = vshrl.u32 %v12246, 16
      %v12313 = vshll.u32 %v12246, 16
      %v12315 = vrot.slane %v12313, 1
      %v12316 = vor.u32 %v12311, %v12315
      %v12318 = vshll.u32 %v12294, 16
      %v12320 = vrot.slane %v12318, 1
      %v12321 = vsel %vm1924, %v12316, %v12320
      %v12323 = vshrl.u32 %v12247, 16
      %v12325 = vshll.u32 %v12247, 16
      %v12327 = vrot.slane %v12325, 1
      %v12328 = vor.u32 %v12323, %v12327
      %v12330 = vshll.u32 %v12295, 16
      %v12332 = vrot.slane %v12330, 1
      %v12333 = vsel %vm1924, %v12328, %v12332
      %v12335 = vshrl.u32 %v12248, 16
      %v12337 = vshll.u32 %v12248, 16
      %v12339 = vrot.slane %v12337, 1
      %v12340 = vor.u32 %v12335, %v12339
      %v12342 = vshll.u32 %v12296, 16
      %v12344 = vrot.slane %v12342, 1
      %v12345 = vsel %vm1924, %v12340, %v12344
      %v12347 = vshrl.u32 %v12249, 16
      %v12349 = vshll.u32 %v12249, 16
      %v12351 = vrot.slane %v12349, 1
      %v12352 = vor.u32 %v12347, %v12351
      %v12354 = vshll.u32 %v12297, 16
      %v12356 = vrot.slane %v12354, 1
      %v12357 = vsel %vm1924, %v12352, %v12356
      %v12359 = vshrl.u32 %v12250, 16
      %v12361 = vshll.u32 %v12250, 16
      %v12363 = vrot.slane %v12361, 1
      %v12364 = vor.u32 %v12359, %v12363
      %v12366 = vshll.u32 %v12298, 16
      %v12368 = vrot.slane %v12366, 1
      %v12369 = vsel %vm1924, %v12364, %v12368
      %v12371 = vshrl.u32 %v12251, 16
      %v12373 = vshll.u32 %v12251, 16
      %v12375 = vrot.slane %v12373, 1
      %v12376 = vor.u32 %v12371, %v12375
      %v12378 = vshll.u32 %v12299, 16
      %v12380 = vrot.slane %v12378, 1
      %v12381 = vsel %vm1924, %v12376, %v12380
      %v12383 = vshrl.u32 %v12252, 16
      %v12385 = vshll.u32 %v12252, 16
      %v12387 = vrot.slane %v12385, 1
      %v12388 = vor.u32 %v12383, %v12387
      %v12390 = vshll.u32 %v12300, 16
      %v12392 = vrot.slane %v12390, 1
      %v12393 = vsel %vm1924, %v12388, %v12392
      %v12395 = vshrl.u32 %v12253, 16
      %v12397 = vshll.u32 %v12253, 16
      %v12399 = vrot.slane %v12397, 1
      %v12400 = vor.u32 %v12395, %v12399
      %v12402 = vshll.u32 %v12301, 16
      %v12404 = vrot.slane %v12402, 1
      %v12405 = vsel %vm1924, %v12400, %v12404
      %v12407 = vshrl.u32 %v12254, 16
      %v12409 = vshll.u32 %v12254, 16
      %v12411 = vrot.slane %v12409, 1
      %v12412 = vor.u32 %v12407, %v12411
      %v12414 = vshll.u32 %v12302, 16
      %v12416 = vrot.slane %v12414, 1
      %v12417 = vsel %vm1924, %v12412, %v12416
      %v12419 = vshrl.u32 %v12255, 16
      %v12421 = vshll.u32 %v12255, 16
      %v12423 = vrot.slane %v12421, 1
      %v12424 = vor.u32 %v12419, %v12423
      %v12426 = vshll.u32 %v12303, 16
      %v12428 = vrot.slane %v12426, 1
      %v12429 = vsel %vm1924, %v12424, %v12428
      %v12431 = vshrl.u32 %v12256, 16
      %v12433 = vshll.u32 %v12256, 16
      %v12435 = vrot.slane %v12433, 1
      %v12436 = vor.u32 %v12431, %v12435
      %v12438 = vshll.u32 %v12304, 16
      %v12440 = vrot.slane %v12438, 1
      %v12441 = vsel %vm1924, %v12436, %v12440
      %v12443 = vshrl.u32 %v12257, 16
      %v12445 = vshll.u32 %v12257, 16
      %v12447 = vrot.slane %v12445, 1
      %v12448 = vor.u32 %v12443, %v12447
      %v12450 = vshll.u32 %v12305, 16
      %v12452 = vrot.slane %v12450, 1
      %v12453 = vsel %vm1924, %v12448, %v12452
      %v12455 = vshrl.u32 %v12258, 16
      %v12457 = vshll.u32 %v12258, 16
      %v12459 = vrot.slane %v12457, 1
      %v12460 = vor.u32 %v12455, %v12459
      %v12462 = vshll.u32 %v12306, 16
      %v12464 = vrot.slane %v12462, 1
      %v12465 = vsel %vm1924, %v12460, %v12464
      %v12467 = vshrl.u32 %v12259, 16
      %v12469 = vshll.u32 %v12259, 16
      %v12471 = vrot.slane %v12469, 1
      %v12472 = vor.u32 %v12467, %v12471
      %v12474 = vshll.u32 %v12307, 16
      %v12476 = vrot.slane %v12474, 1
      %v12477 = vsel %vm1924, %v12472, %v12476
      %v12479 = vshrl.u32 %v12260, 16
      %v12481 = vshll.u32 %v12260, 16
      %v12483 = vrot.slane %v12481, 1
      %v12484 = vor.u32 %v12479, %v12483
      %v12486 = vshll.u32 %v12308, 16
      %v12488 = vrot.slane %v12486, 1
      %v12489 = vsel %vm1924, %v12484, %v12488
      %v12491 = vshrl.u32 %v12261, 16
      %v12493 = vshll.u32 %v12261, 16
      %v12495 = vrot.slane %v12493, 1
      %v12496 = vor.u32 %v12491, %v12495
      %v12498 = vshll.u32 %v12309, 16
      %v12500 = vrot.slane %v12498, 1
      %v12501 = vsel %vm1924, %v12496, %v12500
      %12502 = vrot.lane.b32.xlu0 %v12321, 96
      %v12503 = vpop.permute.xlu0 %12502
      %12504 = vrot.lane.b32.xlu0 %v12333, 96
      %v12505 = vpop.permute.xlu0 %12504
      %12506 = vrot.lane.b32.xlu0 %v12345, 96
      %v12507 = vpop.permute.xlu0 %12506
      %12508 = vrot.lane.b32.xlu0 %v12357, 96
      %v12509 = vpop.permute.xlu0 %12508
      %12510 = vrot.lane.b32.xlu0 %v12369, 96
      %v12511 = vpop.permute.xlu0 %12510
      %12512 = vrot.lane.b32.xlu0 %v12381, 96
      %v12513 = vpop.permute.xlu0 %12512
      %12514 = vrot.lane.b32.xlu0 %v12393, 96
      %v12515 = vpop.permute.xlu0 %12514
      %12516 = vrot.lane.b32.xlu0 %v12405, 96
      %v12517 = vpop.permute.xlu0 %12516
      %12518 = vrot.lane.b32.xlu0 %v12417, 96
      %v12519 = vpop.permute.xlu0 %12518
      %12520 = vrot.lane.b32.xlu0 %v12429, 96
      %v12521 = vpop.permute.xlu0 %12520
      %12522 = vrot.lane.b32.xlu0 %v12441, 96
      %v12523 = vpop.permute.xlu0 %12522
      %12524 = vrot.lane.b32.xlu0 %v12453, 96
      %v12525 = vpop.permute.xlu0 %12524
      %12526 = vrot.lane.b32.xlu0 %v12465, 96
      %v12527 = vpop.permute.xlu0 %12526
      %12528 = vrot.lane.b32.xlu0 %v12477, 96
      %v12529 = vpop.permute.xlu0 %12528
      %12530 = vrot.lane.b32.xlu0 %v12489, 96
      %v12531 = vpop.permute.xlu0 %12530
      %12532 = vrot.lane.b32.xlu0 %v12501, 96
      %v12533 = vpop.permute.xlu0 %12532
      %v12550 = vunpack.c.l.b16 %v12166
      %v12551 = vunpack.c.l.b16 %v12167
      %v12552 = vunpack.c.l.b16 %v12168
      %v12553 = vunpack.c.l.b16 %v12169
      %v12554 = vunpack.c.l.b16 %v12170
      %v12555 = vunpack.c.l.b16 %v12171
      %v12556 = vunpack.c.l.b16 %v12172
      %v12557 = vunpack.c.l.b16 %v12173
      %v12558 = vunpack.c.l.b16 %v12174
      %v12559 = vunpack.c.l.b16 %v12175
      %v12560 = vunpack.c.l.b16 %v12176
      %v12561 = vunpack.c.l.b16 %v12177
      %v12562 = vunpack.c.l.b16 %v12178
      %v12563 = vunpack.c.l.b16 %v12179
      %v12564 = vunpack.c.l.b16 %v12180
      %v12565 = vunpack.c.l.b16 %v12181
      %v12566 = vpack.c.b16 %v12215, %v12550
      %v12567 = vpack.c.b16 %v12217, %v12551
      %v12568 = vpack.c.b16 %v12219, %v12552
      %v12569 = vpack.c.b16 %v12221, %v12553
      %v12570 = vpack.c.b16 %v12223, %v12554
      %v12571 = vpack.c.b16 %v12225, %v12555
      %v12572 = vpack.c.b16 %v12227, %v12556
      %v12573 = vpack.c.b16 %v12229, %v12557
      %v12574 = vpack.c.b16 %v12231, %v12558
      %v12575 = vpack.c.b16 %v12233, %v12559
      %v12576 = vpack.c.b16 %v12235, %v12560
      %v12577 = vpack.c.b16 %v12237, %v12561
      %v12578 = vpack.c.b16 %v12239, %v12562
      %v12579 = vpack.c.b16 %v12241, %v12563
      %v12580 = vpack.c.b16 %v12243, %v12564
      %v12581 = vpack.c.b16 %v12245, %v12565
      %v12582 = vrot.slane %v12566, 1
      %v12583 = vrot.slane %v12294, 1
      %v12584 = vsel %vm2197, %v12582, %v12583
      %v12585 = vrot.slane %v12567, 1
      %v12586 = vrot.slane %v12295, 1
      %v12587 = vsel %vm2197, %v12585, %v12586
      %v12588 = vrot.slane %v12568, 1
      %v12589 = vrot.slane %v12296, 1
      %v12590 = vsel %vm2197, %v12588, %v12589
      %v12591 = vrot.slane %v12569, 1
      %v12592 = vrot.slane %v12297, 1
      %v12593 = vsel %vm2197, %v12591, %v12592
      %v12594 = vrot.slane %v12570, 1
      %v12595 = vrot.slane %v12298, 1
      %v12596 = vsel %vm2197, %v12594, %v12595
      %v12597 = vrot.slane %v12571, 1
      %v12598 = vrot.slane %v12299, 1
      %v12599 = vsel %vm2197, %v12597, %v12598
      %v12600 = vrot.slane %v12572, 1
      %v12601 = vrot.slane %v12300, 1
      %v12602 = vsel %vm2197, %v12600, %v12601
      %v12603 = vrot.slane %v12573, 1
      %v12604 = vrot.slane %v12301, 1
      %v12605 = vsel %vm2197, %v12603, %v12604
      %v12606 = vrot.slane %v12574, 1
      %v12607 = vrot.slane %v12302, 1
      %v12608 = vsel %vm2197, %v12606, %v12607
      %v12609 = vrot.slane %v12575, 1
      %v12610 = vrot.slane %v12303, 1
      %v12611 = vsel %vm2197, %v12609, %v12610
      %v12612 = vrot.slane %v12576, 1
      %v12613 = vrot.slane %v12304, 1
      %v12614 = vsel %vm2197, %v12612, %v12613
      %v12615 = vrot.slane %v12577, 1
      %v12616 = vrot.slane %v12305, 1
      %v12617 = vsel %vm2197, %v12615, %v12616
      %v12618 = vrot.slane %v12578, 1
      %v12619 = vrot.slane %v12306, 1
      %v12620 = vsel %vm2197, %v12618, %v12619
      %v12621 = vrot.slane %v12579, 1
      %v12622 = vrot.slane %v12307, 1
      %v12623 = vsel %vm2197, %v12621, %v12622
      %v12624 = vrot.slane %v12580, 1
      %v12625 = vrot.slane %v12308, 1
      %v12626 = vsel %vm2197, %v12624, %v12625
      %v12627 = vrot.slane %v12581, 1
      %v12628 = vrot.slane %v12309, 1
      %v12629 = vsel %vm2197, %v12627, %v12628
      %12630 = vrot.lane.b32.xlu0 %v12584, 64
      %v12631 = vpop.permute.xlu0 %12630
      %12632 = vrot.lane.b32.xlu0 %v12587, 64
      %v12633 = vpop.permute.xlu0 %12632
      %12634 = vrot.lane.b32.xlu0 %v12590, 64
      %v12635 = vpop.permute.xlu0 %12634
      %12636 = vrot.lane.b32.xlu0 %v12593, 64
      %v12637 = vpop.permute.xlu0 %12636
      %12638 = vrot.lane.b32.xlu0 %v12596, 64
      %v12639 = vpop.permute.xlu0 %12638
      %12640 = vrot.lane.b32.xlu0 %v12599, 64
      %v12641 = vpop.permute.xlu0 %12640
      %12642 = vrot.lane.b32.xlu0 %v12602, 64
      %v12643 = vpop.permute.xlu0 %12642
      %12644 = vrot.lane.b32.xlu0 %v12605, 64
      %v12645 = vpop.permute.xlu0 %12644
      %12646 = vrot.lane.b32.xlu0 %v12608, 64
      %v12647 = vpop.permute.xlu0 %12646
      %12648 = vrot.lane.b32.xlu0 %v12611, 64
      %v12649 = vpop.permute.xlu0 %12648
      %12650 = vrot.lane.b32.xlu0 %v12614, 64
      %v12651 = vpop.permute.xlu0 %12650
      %12652 = vrot.lane.b32.xlu0 %v12617, 64
      %v12653 = vpop.permute.xlu0 %12652
      %12654 = vrot.lane.b32.xlu0 %v12620, 64
      %v12655 = vpop.permute.xlu0 %12654
      %12656 = vrot.lane.b32.xlu0 %v12623, 64
      %v12657 = vpop.permute.xlu0 %12656
      %12658 = vrot.lane.b32.xlu0 %v12626, 64
      %v12659 = vpop.permute.xlu0 %12658
      %12660 = vrot.lane.b32.xlu0 %v12629, 64
      %v12661 = vpop.permute.xlu0 %12660
      %v12663 = vsel %vm2311, %v12246, %v12503
      %v12666 = vsel %vm2311, %v12247, %v12505
      %v12669 = vsel %vm2311, %v12248, %v12507
      %v12672 = vsel %vm2311, %v12249, %v12509
      %v12675 = vsel %vm2311, %v12250, %v12511
      %v12678 = vsel %vm2311, %v12251, %v12513
      %v12681 = vsel %vm2311, %v12252, %v12515
      %v12684 = vsel %vm2311, %v12253, %v12517
      %v12687 = vsel %vm2311, %v12254, %v12519
      %v12690 = vsel %vm2311, %v12255, %v12521
      %v12693 = vsel %vm2311, %v12256, %v12523
      %v12696 = vsel %vm2311, %v12257, %v12525
      %v12699 = vsel %vm2311, %v12258, %v12527
      %v12702 = vsel %vm2311, %v12259, %v12529
      %v12705 = vsel %vm2311, %v12260, %v12531
      %v12708 = vsel %vm2311, %v12261, %v12533
      %v12711 = vsel %vm4696, %v12503, %v12631
      %v12714 = vsel %vm4696, %v12505, %v12633
      %v12717 = vsel %vm4696, %v12507, %v12635
      %v12720 = vsel %vm4696, %v12509, %v12637
      %v12723 = vsel %vm4696, %v12511, %v12639
      %v12726 = vsel %vm4696, %v12513, %v12641
      %v12729 = vsel %vm4696, %v12515, %v12643
      %v12732 = vsel %vm4696, %v12517, %v12645
      %v12735 = vsel %vm4696, %v12519, %v12647
      %v12738 = vsel %vm4696, %v12521, %v12649
      %v12741 = vsel %vm4696, %v12523, %v12651
      %v12744 = vsel %vm4696, %v12525, %v12653
      %v12747 = vsel %vm4696, %v12527, %v12655
      %v12750 = vsel %vm4696, %v12529, %v12657
      %v12753 = vsel %vm4696, %v12531, %v12659
      %v12756 = vsel %vm4696, %v12533, %v12661
      %s12758 = scalar_lea.vmem %s3, 288
      %v12759 = vld [vmem:[%s12758] sm:$0xf]
      %v12760 = vld [vmem:[%s12758 + $0x4] sm:$0xf]
      %v12761 = vld [vmem:[%s12758 + $0x8] sm:$0xf]
      %v12762 = vld [vmem:[%s12758 + $0xc] sm:$0xf]
      %v12763 = vld [vmem:[%s12758 + $0x10] sm:$0xf]
      %v12764 = vld [vmem:[%s12758 + $0x14] sm:$0xf]
      %v12765 = vld [vmem:[%s12758 + $0x18] sm:$0xf]
      %v12766 = vld [vmem:[%s12758 + $0x1c] sm:$0xf]
      %v12767 = vld [vmem:[%s12758 + $0x20] sm:$0xf]
      %v12768 = vld [vmem:[%s12758 + $0x24] sm:$0xf]
      %v12769 = vld [vmem:[%s12758 + $0x28] sm:$0xf]
      %v12770 = vld [vmem:[%s12758 + $0x2c] sm:$0xf]
      %v12771 = vld [vmem:[%s12758 + $0x30] sm:$0xf]
      %v12772 = vld [vmem:[%s12758 + $0x34] sm:$0xf]
      %v12773 = vld [vmem:[%s12758 + $0x38] sm:$0xf]
      %v12774 = vld [vmem:[%s12758 + $0x3c] sm:$0xf]
      %v12775 = vld [vmem:[%s12758 + $0x40] sm:$0xf]
      %v12776 = vld [vmem:[%s12758 + $0x44] sm:$0xf]
      %v12777 = vld [vmem:[%s12758 + $0x48] sm:$0xf]
      %v12778 = vld [vmem:[%s12758 + $0x4c] sm:$0xf]
      %v12779 = vld [vmem:[%s12758 + $0x50] sm:$0xf]
      %v12780 = vld [vmem:[%s12758 + $0x54] sm:$0xf]
      %v12781 = vld [vmem:[%s12758 + $0x58] sm:$0xf]
      %v12782 = vld [vmem:[%s12758 + $0x5c] sm:$0xf]
      %v12783 = vld [vmem:[%s12758 + $0x60] sm:$0xf]
      %v12784 = vld [vmem:[%s12758 + $0x64] sm:$0xf]
      %v12785 = vld [vmem:[%s12758 + $0x68] sm:$0xf]
      %v12786 = vld [vmem:[%s12758 + $0x6c] sm:$0xf]
      %v12787 = vld [vmem:[%s12758 + $0x70] sm:$0xf]
      %v12788 = vld [vmem:[%s12758 + $0x74] sm:$0xf]
      %v12789 = vld [vmem:[%s12758 + $0x78] sm:$0xf]
      %v12790 = vld [vmem:[%s12758 + $0x7c] sm:$0xf]
      %v12791 = vld [vmem:[%s12758 + $0x80] sm:$0xf]
      %v12792 = vld [vmem:[%s12758 + $0x84] sm:$0xf]
      %v12793 = vld [vmem:[%s12758 + $0x88] sm:$0xf]
      %v12794 = vld [vmem:[%s12758 + $0x8c] sm:$0xf]
      %v12831 = vunpack.c.l.b16 %v12759
      %v12832 = vunpack.c.l.b16 %v12760
      %v12833 = vunpack.c.l.b16 %v12761
      %v12834 = vunpack.c.l.b16 %v12762
      %v12835 = vunpack.c.l.b16 %v12763
      %v12836 = vunpack.c.l.b16 %v12764
      %v12837 = vunpack.c.l.b16 %v12765
      %v12838 = vunpack.c.l.b16 %v12766
      %v12839 = vunpack.c.l.b16 %v12767
      %v12840 = vunpack.c.l.b16 %v12768
      %v12841 = vunpack.c.l.b16 %v12769
      %v12842 = vunpack.c.l.b16 %v12770
      %v12843 = vunpack.c.l.b16 %v12771
      %v12844 = vunpack.c.l.b16 %v12772
      %v12845 = vunpack.c.l.b16 %v12773
      %v12846 = vunpack.c.l.b16 %v12774
      %v12847 = vunpack.c.l.b16 %v12775
      %v12848 = vunpack.c.l.b16 %v12776
      %v12849 = vunpack.c.l.b16 %v12777
      %v12850 = vunpack.c.l.b16 %v12778
      %v12851 = vunpack.c.l.b16 %v12779
      %v12852 = vunpack.c.l.b16 %v12780
      %v12853 = vunpack.c.l.b16 %v12781
      %v12854 = vunpack.c.l.b16 %v12782
      %v12855 = vunpack.c.l.b16 %v12783
      %v12856 = vunpack.c.l.b16 %v12784
      %v12857 = vunpack.c.l.b16 %v12785
      %v12858 = vunpack.c.l.b16 %v12786
      %v12859 = vunpack.c.l.b16 %v12787
      %v12860 = vunpack.c.l.b16 %v12788
      %v12861 = vunpack.c.l.b16 %v12789
      %v12862 = vunpack.c.l.b16 %v12790
      %v12863 = vunpack.c.l.b16 %v12791
      %v12864 = vunpack.c.l.b16 %v12792
      %v12865 = vunpack.c.l.b16 %v12793
      %v12866 = vunpack.c.l.b16 %v12794
      %v12867 = vpack.c.b16 %v12832, %v12831
      %v12868 = vpack.c.b16 %v12834, %v12833
      %v12869 = vpack.c.b16 %v12836, %v12835
      %v12870 = vpack.c.b16 %v12838, %v12837
      %v12871 = vpack.c.b16 %v12840, %v12839
      %v12872 = vpack.c.b16 %v12842, %v12841
      %v12873 = vpack.c.b16 %v12844, %v12843
      %v12874 = vpack.c.b16 %v12846, %v12845
      %v12875 = vpack.c.b16 %v12848, %v12847
      %v12876 = vpack.c.b16 %v12850, %v12849
      %v12877 = vpack.c.b16 %v12852, %v12851
      %v12878 = vpack.c.b16 %v12854, %v12853
      %v12879 = vpack.c.b16 %v12856, %v12855
      %v12880 = vpack.c.b16 %v12858, %v12857
      %v12881 = vpack.c.b16 %v12860, %v12859
      %v12882 = vpack.c.b16 %v12862, %v12861
      %v12883 = vpack.c.b16 %v12864, %v12863
      %v12884 = vpack.c.b16 %v12866, %v12865
      %v12903 = vsel %vm11300, %v12631, 0
      %v12905 = vsel %vm11300, %v12633, 0
      %v12907 = vsel %vm11300, %v12635, 0
      %v12909 = vsel %vm11300, %v12637, 0
      %v12911 = vsel %vm11300, %v12639, 0
      %v12913 = vsel %vm11300, %v12641, 0
      %v12915 = vsel %vm11300, %v12643, 0
      %v12917 = vsel %vm11300, %v12645, 0
      %v12919 = vsel %vm11300, %v12647, 0
      %v12921 = vsel %vm11300, %v12649, 0
      %v12923 = vsel %vm11300, %v12651, 0
      %v12925 = vsel %vm11300, %v12653, 0
      %v12927 = vsel %vm11300, %v12655, 0
      %v12929 = vsel %vm11300, %v12657, 0
      %v12931 = vsel %vm11300, %v12659, 0
      %v12933 = vsel %vm11300, %v12661, 0
      %12935 = vmatprep.subr.bf16.mxu0 0
      %12936 = vmatpush1.bf16.msra.mxu0 %v12867
      %12937 = vmatprep.subr.bf16.mxu0 0
      %12938 = vmatpush1.bf16.msra.mxu0 %v12868
      %12939 = vmatprep.subr.bf16.mxu0 0
      %12940 = vmatpush1.bf16.msra.mxu0 %v12869
      %12941 = vmatprep.subr.bf16.mxu0 0
      %12942 = vmatpush1.bf16.msra.mxu0 %v12870
      %12943 = vmatprep.subr.bf16.mxu0 0
      %12944 = vmatpush1.bf16.msra.mxu0 %v12871
      %12945 = vmatprep.subr.bf16.mxu0 0
      %12946 = vmatpush1.bf16.msra.mxu0 %v12872
      %12947 = vmatprep.subr.bf16.mxu0 0
      %12948 = vmatpush1.bf16.msra.mxu0 %v12873
      %12949 = vmatprep.subr.bf16.mxu0 0
      %12950 = vmatpush1.bf16.msra.mxu0 %v12874
      %12951 = vmatprep.subr.bf16.mxu0 0
      %12952 = vmatpush1.bf16.msra.mxu0 %v12875
      %12953 = vmatprep.subr.bf16.mxu0 0
      %12954 = vmatpush1.bf16.msra.mxu0 %v12876
      %12955 = vmatprep.subr.bf16.mxu0 0
      %12956 = vmatpush1.bf16.msra.mxu0 %v12877
      %12957 = vmatprep.subr.bf16.mxu0 0
      %12958 = vmatpush1.bf16.msra.mxu0 %v12878
      %12959 = vmatprep.subr.bf16.mxu0 0
      %12960 = vmatpush1.bf16.msra.mxu0 %v12879
      %12961 = vmatprep.subr.bf16.mxu0 0
      %12962 = vmatpush1.bf16.msra.mxu0 %v12880
      %12963 = vmatprep.subr.bf16.mxu0 0
      %12964 = vmatpush1.bf16.msra.mxu0 %v12881
      %12965 = vmatprep.subr.bf16.mxu0 0
      %12966 = vmatpush1.bf16.msra.mxu0 %v12882
      %12967 = vmatprep.mubr.bf16.mxu0 %v12711
      %12968 = vmatmul.mubr.bf16.gmra.mrb[0].mxu0 %v12663
      %v12969 = vpop.f32.mrb[0].mxu0
      %v12970 = vadd.f32 0.0, %v12969
      %v12971 = vpop.f32.mrb[0].mxu0
      %v12972 = vpop.f32.mrb[0].mxu0
      %v12973 = vadd.f32 0.0, %v12972
      %v12974 = vpop.f32.mrb[0].mxu0
      %12975 = vmatprep.mubr.bf16.mxu0 %v12714
      %12976 = vmatmul.mubr.bf16.gmra.mrb[0].mxu0 %v12666
      %v12977 = vpop.f32.mrb[0].mxu0
      %v12978 = vadd.f32 0.0, %v12977
      %v12979 = vpop.f32.mrb[0].mxu0
      %v12980 = vpop.f32.mrb[0].mxu0
      %v12981 = vadd.f32 0.0, %v12980
      %v12982 = vpop.f32.mrb[0].mxu0
      %12983 = vmatprep.mubr.bf16.mxu0 %v12717
      %12984 = vmatmul.mubr.bf16.gmra.mrb[0].mxu0 %v12669
      %v12985 = vpop.f32.mrb[0].mxu0
      %v12986 = vadd.f32 0.0, %v12985
      %v12987 = vpop.f32.mrb[0].mxu0
      %v12988 = vpop.f32.mrb[0].mxu0
      %v12989 = vadd.f32 0.0, %v12988
      %v12990 = vpop.f32.mrb[0].mxu0
      %12991 = vmatprep.mubr.bf16.mxu0 %v12720
      %12992 = vmatmul.mubr.bf16.gmra.mrb[0].mxu0 %v12672
      %v12993 = vpop.f32.mrb[0].mxu0
      %v12994 = vadd.f32 0.0, %v12993
      %v12995 = vpop.f32.mrb[0].mxu0
      %v12996 = vpop.f32.mrb[0].mxu0
      %v12997 = vadd.f32 0.0, %v12996
      %v12998 = vpop.f32.mrb[0].mxu0
      %12999 = vmatprep.mubr.bf16.mxu0 %v12723
      %13000 = vmatmul.mubr.bf16.gmra.mrb[0].mxu0 %v12675
      %v13001 = vpop.f32.mrb[0].mxu0
      %v13002 = vadd.f32 0.0, %v13001
      %v13003 = vpop.f32.mrb[0].mxu0
      %v13004 = vpop.f32.mrb[0].mxu0
      %v13005 = vadd.f32 0.0, %v13004
      %v13006 = vpop.f32.mrb[0].mxu0
      %13007 = vmatprep.mubr.bf16.mxu0 %v12726
      %13008 = vmatmul.mubr.bf16.gmra.mrb[0].mxu0 %v12678
      %v13009 = vpop.f32.mrb[0].mxu0
      %v13010 = vadd.f32 0.0, %v13009
      %v13011 = vpop.f32.mrb[0].mxu0
      %v13012 = vpop.f32.mrb[0].mxu0
      %v13013 = vadd.f32 0.0, %v13012
      %v13014 = vpop.f32.mrb[0].mxu0
      %13015 = vmatprep.mubr.bf16.mxu0 %v12729
      %13016 = vmatmul.mubr.bf16.gmra.mrb[0].mxu0 %v12681
      %v13017 = vpop.f32.mrb[0].mxu0
      %v13018 = vadd.f32 0.0, %v13017
      %v13019 = vpop.f32.mrb[0].mxu0
      %v13020 = vpop.f32.mrb[0].mxu0
      %v13021 = vadd.f32 0.0, %v13020
      %v13022 = vpop.f32.mrb[0].mxu0
      %13023 = vmatprep.mubr.bf16.mxu0 %v12732
      %13024 = vmatmul.mubr.bf16.gmra.mrb[0].mxu0 %v12684
      %v13025 = vpop.f32.mrb[0].mxu0
      %v13026 = vadd.f32 0.0, %v13025
      %v13027 = vpop.f32.mrb[0].mxu0
      %v13028 = vpop.f32.mrb[0].mxu0
      %v13029 = vadd.f32 0.0, %v13028
      %v13030 = vpop.f32.mrb[0].mxu0
      %13031 = vmatprep.mubr.bf16.mxu0 %v12735
      %13032 = vmatmul.mubr.bf16.gmra.mrb[0].mxu0 %v12687
      %v13033 = vpop.f32.mrb[0].mxu0
      %v13034 = vadd.f32 0.0, %v13033
      %v13035 = vpop.f32.mrb[0].mxu0
      %v13036 = vpop.f32.mrb[0].mxu0
      %v13037 = vadd.f32 0.0, %v13036
      %v13038 = vpop.f32.mrb[0].mxu0
      %13039 = vmatprep.mubr.bf16.mxu0 %v12738
      %13040 = vmatmul.mubr.bf16.gmra.mrb[0].mxu0 %v12690
      %v13041 = vpop.f32.mrb[0].mxu0
      %v13042 = vadd.f32 0.0, %v13041
      %v13043 = vpop.f32.mrb[0].mxu0
      %v13044 = vpop.f32.mrb[0].mxu0
      %v13045 = vadd.f32 0.0, %v13044
      %v13046 = vpop.f32.mrb[0].mxu0
      %13047 = vmatprep.mubr.bf16.mxu0 %v12741
      %13048 = vmatmul.mubr.bf16.gmra.mrb[0].mxu0 %v12693
      %v13049 = vpop.f32.mrb[0].mxu0
      %v13050 = vadd.f32 0.0, %v13049
      %v13051 = vpop.f32.mrb[0].mxu0
      %v13052 = vpop.f32.mrb[0].mxu0
      %v13053 = vadd.f32 0.0, %v13052
      %v13054 = vpop.f32.mrb[0].mxu0
      %13055 = vmatprep.mubr.bf16.mxu0 %v12744
      %13056 = vmatmul.mubr.bf16.gmra.mrb[0].mxu0 %v12696
      %v13057 = vpop.f32.mrb[0].mxu0
      %v13058 = vadd.f32 0.0, %v13057
      %v13059 = vpop.f32.mrb[0].mxu0
      %v13060 = vpop.f32.mrb[0].mxu0
      %v13061 = vadd.f32 0.0, %v13060
      %v13062 = vpop.f32.mrb[0].mxu0
      %13063 = vmatprep.mubr.bf16.mxu0 %v12747
      %13064 = vmatmul.mubr.bf16.gmra.mrb[0].mxu0 %v12699
      %v13065 = vpop.f32.mrb[0].mxu0
      %v13066 = vadd.f32 0.0, %v13065
      %v13067 = vpop.f32.mrb[0].mxu0
      %v13068 = vpop.f32.mrb[0].mxu0
      %v13069 = vadd.f32 0.0, %v13068
      %v13070 = vpop.f32.mrb[0].mxu0
      %13071 = vmatprep.mubr.bf16.mxu0 %v12750
      %13072 = vmatmul.mubr.bf16.gmra.mrb[0].mxu0 %v12702
      %v13073 = vpop.f32.mrb[0].mxu0
      %v13074 = vadd.f32 0.0, %v13073
      %v13075 = vpop.f32.mrb[0].mxu0
      %v13076 = vpop.f32.mrb[0].mxu0
      %v13077 = vadd.f32 0.0, %v13076
      %v13078 = vpop.f32.mrb[0].mxu0
      %13079 = vmatprep.mubr.bf16.mxu0 %v12753
      %13080 = vmatmul.mubr.bf16.gmra.mrb[0].mxu0 %v12705
      %v13081 = vpop.f32.mrb[0].mxu0
      %v13082 = vadd.f32 0.0, %v13081
      %v13083 = vpop.f32.mrb[0].mxu0
      %v13084 = vpop.f32.mrb[0].mxu0
      %v13085 = vadd.f32 0.0, %v13084
      %v13086 = vpop.f32.mrb[0].mxu0
      %13087 = vmatprep.mubr.bf16.mxu0 %v12756
      %13088 = vmatmul.mubr.bf16.gmra.mrb[0].mxu0 %v12708
      %v13089 = vpop.f32.mrb[0].mxu0
      %v13090 = vadd.f32 0.0, %v13089
      %v13091 = vpop.f32.mrb[0].mxu0
      %v13092 = vpop.f32.mrb[0].mxu0
      %v13093 = vadd.f32 0.0, %v13092
      %v13094 = vpop.f32.mrb[0].mxu0
      %13095 = vdwg.mxu0
      %13096 = vmatprep.subr.bf16.mxu0 0
      %13097 = vmatpush1.bf16.msra.mxu0 %v12883
      %13098 = vmatprep.subr.bf16.mxu0 0
      %13099 = vmatpush1.bf16.msra.mxu0 %v12884
      %13100 = vmatprep.subr.bf16.mxu0 0
      %13101 = vmatpush1.bf16.msra.mxu0 0
      %13102 = vmatprep.subr.bf16.mxu0 0
      %13103 = vmatpush1.bf16.msra.mxu0 0
      %13104 = vmatprep.subr.bf16.mxu0 0
      %13105 = vmatpush1.bf16.msra.mxu0 0
      %13106 = vmatprep.subr.bf16.mxu0 0
      %13107 = vmatpush1.bf16.msra.mxu0 0
      %13108 = vmatprep.subr.bf16.mxu0 0
      %13109 = vmatpush1.bf16.msra.mxu0 0
      %13110 = vmatprep.subr.bf16.mxu0 0
      %13111 = vmatpush1.bf16.msra.mxu0 0
      %13112 = vmatprep.subr.bf16.mxu0 0
      %13113 = vmatpush1.bf16.msra.mxu0 0
      %13114 = vmatprep.subr.bf16.mxu0 0
      %13115 = vmatpush1.bf16.msra.mxu0 0
      %13116 = vmatprep.subr.bf16.mxu0 0
      %13117 = vmatpush1.bf16.msra.mxu0 0
      %13118 = vmatprep.subr.bf16.mxu0 0
      %13119 = vmatpush1.bf16.msra.mxu0 0
      %13120 = vmatprep.subr.bf16.mxu0 0
      %13121 = vmatpush1.bf16.msra.mxu0 0
      %13122 = vmatprep.subr.bf16.mxu0 0
      %13123 = vmatpush1.bf16.msra.mxu0 0
      %13124 = vmatprep.subr.bf16.mxu0 0
      %13125 = vmatpush1.bf16.msra.mxu0 0
      %13126 = vmatprep.subr.bf16.mxu0 0
      %13127 = vmatpush1.bf16.msra.mxu0 0
      %13128 = vmatprep.mubr.bf16.mxu0 0
      %13129 = vmatmul.mubr.bf16.gmra.mrb[0].mxu0 %v12903
      %v13130 = vpop.f32.mrb[0].mxu0
      %v13131 = vadd.f32 %v12970, %v13130
      %v13132 = vpop.f32.mrb[0].mxu0
      %v13133 = vpop.f32.mrb[0].mxu0
      %v13134 = vadd.f32 %v12973, %v13133
      %v13135 = vpop.f32.mrb[0].mxu0
      %13136 = vmatprep.mubr.bf16.mxu0 0
      %13137 = vmatmul.mubr.bf16.gmra.mrb[0].mxu0 %v12905
      %v13138 = vpop.f32.mrb[0].mxu0
      %v13139 = vadd.f32 %v12978, %v13138
      %v13140 = vpop.f32.mrb[0].mxu0
      %v13141 = vpop.f32.mrb[0].mxu0
      %v13142 = vadd.f32 %v12981, %v13141
      %v13143 = vpop.f32.mrb[0].mxu0
      %13144 = vmatprep.mubr.bf16.mxu0 0
      %13145 = vmatmul.mubr.bf16.gmra.mrb[0].mxu0 %v12907
      %v13146 = vpop.f32.mrb[0].mxu0
      %v13147 = vadd.f32 %v12986, %v13146
      %v13148 = vpop.f32.mrb[0].mxu0
      %v13149 = vpop.f32.mrb[0].mxu0
      %v13150 = vadd.f32 %v12989, %v13149
      %v13151 = vpop.f32.mrb[0].mxu0
      %13152 = vmatprep.mubr.bf16.mxu0 0
      %13153 = vmatmul.mubr.bf16.gmra.mrb[0].mxu0 %v12909
      %v13154 = vpop.f32.mrb[0].mxu0
      %v13155 = vadd.f32 %v12994, %v13154
      %v13156 = vpop.f32.mrb[0].mxu0
      %v13157 = vpop.f32.mrb[0].mxu0
      %v13158 = vadd.f32 %v12997, %v13157
      %v13159 = vpop.f32.mrb[0].mxu0
      %13160 = vmatprep.mubr.bf16.mxu0 0
      %13161 = vmatmul.mubr.bf16.gmra.mrb[0].mxu0 %v12911
      %v13162 = vpop.f32.mrb[0].mxu0
      %v13163 = vadd.f32 %v13002, %v13162
      %v13164 = vpop.f32.mrb[0].mxu0
      %v13165 = vpop.f32.mrb[0].mxu0
      %v13166 = vadd.f32 %v13005, %v13165
      %v13167 = vpop.f32.mrb[0].mxu0
      %13168 = vmatprep.mubr.bf16.mxu0 0
      %13169 = vmatmul.mubr.bf16.gmra.mrb[0].mxu0 %v12913
      %v13170 = vpop.f32.mrb[0].mxu0
      %v13171 = vadd.f32 %v13010, %v13170
      %v13172 = vpop.f32.mrb[0].mxu0
      %v13173 = vpop.f32.mrb[0].mxu0
      %v13174 = vadd.f32 %v13013, %v13173
      %v13175 = vpop.f32.mrb[0].mxu0
      %13176 = vmatprep.mubr.bf16.mxu0 0
      %13177 = vmatmul.mubr.bf16.gmra.mrb[0].mxu0 %v12915
      %v13178 = vpop.f32.mrb[0].mxu0
      %v13179 = vadd.f32 %v13018, %v13178
      %v13180 = vpop.f32.mrb[0].mxu0
      %v13181 = vpop.f32.mrb[0].mxu0
      %v13182 = vadd.f32 %v13021, %v13181
      %v13183 = vpop.f32.mrb[0].mxu0
      %13184 = vmatprep.mubr.bf16.mxu0 0
      %13185 = vmatmul.mubr.bf16.gmra.mrb[0].mxu0 %v12917
      %v13186 = vpop.f32.mrb[0].mxu0
      %v13187 = vadd.f32 %v13026, %v13186
      %v13188 = vpop.f32.mrb[0].mxu0
      %v13189 = vpop.f32.mrb[0].mxu0
      %v13190 = vadd.f32 %v13029, %v13189
      %v13191 = vpop.f32.mrb[0].mxu0
      %13192 = vmatprep.mubr.bf16.mxu0 0
      %13193 = vmatmul.mubr.bf16.gmra.mrb[0].mxu0 %v12919
      %v13194 = vpop.f32.mrb[0].mxu0
      %v13195 = vadd.f32 %v13034, %v13194
      %v13196 = vpop.f32.mrb[0].mxu0
      %v13197 = vpop.f32.mrb[0].mxu0
      %v13198 = vadd.f32 %v13037, %v13197
      %v13199 = vpop.f32.mrb[0].mxu0
      %13200 = vmatprep.mubr.bf16.mxu0 0
      %13201 = vmatmul.mubr.bf16.gmra.mrb[0].mxu0 %v12921
      %v13202 = vpop.f32.mrb[0].mxu0
      %v13203 = vadd.f32 %v13042, %v13202
      %v13204 = vpop.f32.mrb[0].mxu0
      %v13205 = vpop.f32.mrb[0].mxu0
      %v13206 = vadd.f32 %v13045, %v13205
      %v13207 = vpop.f32.mrb[0].mxu0
      %13208 = vmatprep.mubr.bf16.mxu0 0
      %13209 = vmatmul.mubr.bf16.gmra.mrb[0].mxu0 %v12923
      %v13210 = vpop.f32.mrb[0].mxu0
      %v13211 = vadd.f32 %v13050, %v13210
      %v13212 = vpop.f32.mrb[0].mxu0
      %v13213 = vpop.f32.mrb[0].mxu0
      %v13214 = vadd.f32 %v13053, %v13213
      %v13215 = vpop.f32.mrb[0].mxu0
      %13216 = vmatprep.mubr.bf16.mxu0 0
      %13217 = vmatmul.mubr.bf16.gmra.mrb[0].mxu0 %v12925
      %v13218 = vpop.f32.mrb[0].mxu0
      %v13219 = vadd.f32 %v13058, %v13218
      %v13220 = vpop.f32.mrb[0].mxu0
      %v13221 = vpop.f32.mrb[0].mxu0
      %v13222 = vadd.f32 %v13061, %v13221
      %v13223 = vpop.f32.mrb[0].mxu0
      %13224 = vmatprep.mubr.bf16.mxu0 0
      %13225 = vmatmul.mubr.bf16.gmra.mrb[0].mxu0 %v12927
      %v13226 = vpop.f32.mrb[0].mxu0
      %v13227 = vadd.f32 %v13066, %v13226
      %v13228 = vpop.f32.mrb[0].mxu0
      %v13229 = vpop.f32.mrb[0].mxu0
      %v13230 = vadd.f32 %v13069, %v13229
      %v13231 = vpop.f32.mrb[0].mxu0
      %13232 = vmatprep.mubr.bf16.mxu0 0
      %13233 = vmatmul.mubr.bf16.gmra.mrb[0].mxu0 %v12929
      %v13234 = vpop.f32.mrb[0].mxu0
      %v13235 = vadd.f32 %v13074, %v13234
      %v13236 = vpop.f32.mrb[0].mxu0
      %v13237 = vpop.f32.mrb[0].mxu0
      %v13238 = vadd.f32 %v13077, %v13237
      %v13239 = vpop.f32.mrb[0].mxu0
      %13240 = vmatprep.mubr.bf16.mxu0 0
      %13241 = vmatmul.mubr.bf16.gmra.mrb[0].mxu0 %v12931
      %v13242 = vpop.f32.mrb[0].mxu0
      %v13243 = vadd.f32 %v13082, %v13242
      %v13244 = vpop.f32.mrb[0].mxu0
      %v13245 = vpop.f32.mrb[0].mxu0
      %v13246 = vadd.f32 %v13085, %v13245
      %v13247 = vpop.f32.mrb[0].mxu0
      %13248 = vmatprep.mubr.bf16.mxu0 0
      %13249 = vmatmul.mubr.bf16.gmra.mrb[0].mxu0 %v12933
      %v13250 = vpop.f32.mrb[0].mxu0
      %v13251 = vadd.f32 %v13090, %v13250
      %v13252 = vpop.f32.mrb[0].mxu0
      %v13253 = vpop.f32.mrb[0].mxu0
      %v13254 = vadd.f32 %v13093, %v13253
      %v13255 = vpop.f32.mrb[0].mxu0
      %13256 = vdwg.mxu0
      %v13257 = vadd.f32 %v11991, %v13131
      %v13258 = vadd.f32 %v11994, %v13134
      %v13259 = vadd.f32 %v11999, %v13139
      %v13260 = vadd.f32 %v12002, %v13142
      %v13261 = vadd.f32 %v12007, %v13147
      %v13262 = vadd.f32 %v12010, %v13150
      %v13263 = vadd.f32 %v12015, %v13155
      %v13264 = vadd.f32 %v12018, %v13158
      %v13265 = vadd.f32 %v12023, %v13163
      %v13266 = vadd.f32 %v12026, %v13166
      %v13267 = vadd.f32 %v12031, %v13171
      %v13268 = vadd.f32 %v12034, %v13174
      %v13269 = vadd.f32 %v12039, %v13179
      %v13270 = vadd.f32 %v12042, %v13182
      %v13271 = vadd.f32 %v12047, %v13187
      %v13272 = vadd.f32 %v12050, %v13190
      %v13273 = vadd.f32 %v12055, %v13195
      %v13274 = vadd.f32 %v12058, %v13198
      %v13275 = vadd.f32 %v12063, %v13203
      %v13276 = vadd.f32 %v12066, %v13206
      %v13277 = vadd.f32 %v12071, %v13211
      %v13278 = vadd.f32 %v12074, %v13214
      %v13279 = vadd.f32 %v12079, %v13219
      %v13280 = vadd.f32 %v12082, %v13222
      %v13281 = vadd.f32 %v12087, %v13227
      %v13282 = vadd.f32 %v12090, %v13230
      %v13283 = vadd.f32 %v12095, %v13235
      %v13284 = vadd.f32 %v12098, %v13238
      %v13285 = vadd.f32 %v12103, %v13243
      %v13286 = vadd.f32 %v12106, %v13246
      %v13287 = vadd.f32 %v12111, %v13251
      %v13288 = vadd.f32 %v12114, %v13254
      %13321 = vrot.lane.b32.xlu0 %v6389, 96
      %v13322 = vpop.permute.xlu0 %13321
      %13323 = vrot.lane.b32.xlu0 %v6392, 96
      %v13324 = vpop.permute.xlu0 %13323
      %13325 = vrot.lane.b32.xlu0 %v6397, 96
      %v13326 = vpop.permute.xlu0 %13325
      %13327 = vrot.lane.b32.xlu0 %v6400, 96
      %v13328 = vpop.permute.xlu0 %13327
      %13329 = vrot.lane.b32.xlu0 %v6405, 96
      %v13330 = vpop.permute.xlu0 %13329
      %13331 = vrot.lane.b32.xlu0 %v6408, 96
      %v13332 = vpop.permute.xlu0 %13331
      %13333 = vrot.lane.b32.xlu0 %v6413, 96
      %v13334 = vpop.permute.xlu0 %13333
      %13335 = vrot.lane.b32.xlu0 %v6416, 96
      %v13336 = vpop.permute.xlu0 %13335
      %13337 = vrot.lane.b32.xlu0 %v6421, 96
      %v13338 = vpop.permute.xlu0 %13337
      %13339 = vrot.lane.b32.xlu0 %v6424, 96
      %v13340 = vpop.permute.xlu0 %13339
      %13341 = vrot.lane.b32.xlu0 %v6429, 96
      %v13342 = vpop.permute.xlu0 %13341
      %13343 = vrot.lane.b32.xlu0 %v6432, 96
      %v13344 = vpop.permute.xlu0 %13343
      %13345 = vrot.lane.b32.xlu0 %v6437, 96
      %v13346 = vpop.permute.xlu0 %13345
      %13347 = vrot.lane.b32.xlu0 %v6440, 96
      %v13348 = vpop.permute.xlu0 %13347
      %13349 = vrot.lane.b32.xlu0 %v6445, 96
      %v13350 = vpop.permute.xlu0 %13349
      %13351 = vrot.lane.b32.xlu0 %v6448, 96
      %v13352 = vpop.permute.xlu0 %13351
      %13353 = vrot.lane.b32.xlu0 %v6453, 96
      %v13354 = vpop.permute.xlu0 %13353
      %13355 = vrot.lane.b32.xlu0 %v6456, 96
      %v13356 = vpop.permute.xlu0 %13355
      %13357 = vrot.lane.b32.xlu0 %v6461, 96
      %v13358 = vpop.permute.xlu0 %13357
      %13359 = vrot.lane.b32.xlu0 %v6464, 96
      %v13360 = vpop.permute.xlu0 %13359
      %13361 = vrot.lane.b32.xlu0 %v6469, 96
      %v13362 = vpop.permute.xlu0 %13361
      %13363 = vrot.lane.b32.xlu0 %v6472, 96
      %v13364 = vpop.permute.xlu0 %13363
      %13365 = vrot.lane.b32.xlu0 %v6477, 96
      %v13366 = vpop.permute.xlu0 %13365
      %13367 = vrot.lane.b32.xlu0 %v6480, 96
      %v13368 = vpop.permute.xlu0 %13367
      %13369 = vrot.lane.b32.xlu0 %v6485, 96
      %v13370 = vpop.permute.xlu0 %13369
      %13371 = vrot.lane.b32.xlu0 %v6488, 96
      %v13372 = vpop.permute.xlu0 %13371
      %13373 = vrot.lane.b32.xlu0 %v6493, 96
      %v13374 = vpop.permute.xlu0 %13373
      %13375 = vrot.lane.b32.xlu0 %v6496, 96
      %v13376 = vpop.permute.xlu0 %13375
      %13377 = vrot.lane.b32.xlu0 %v6501, 96
      %v13378 = vpop.permute.xlu0 %13377
      %13379 = vrot.lane.b32.xlu0 %v6504, 96
      %v13380 = vpop.permute.xlu0 %13379
      %13381 = vrot.lane.b32.xlu0 %v6509, 96
      %v13382 = vpop.permute.xlu0 %13381
      %13383 = vrot.lane.b32.xlu0 %v6512, 96
      %v13384 = vpop.permute.xlu0 %13383
      %v13417 = vsel %vm2311, %v13257, %v13322
      %v13418 = vsel %vm2311, %v13258, %v13324
      %v13419 = vsel %vm2311, %v13259, %v13326
      %v13420 = vsel %vm2311, %v13260, %v13328
      %v13421 = vsel %vm2311, %v13261, %v13330
      %v13422 = vsel %vm2311, %v13262, %v13332
      %v13423 = vsel %vm2311, %v13263, %v13334
      %v13424 = vsel %vm2311, %v13264, %v13336
      %v13425 = vsel %vm2311, %v13265, %v13338
      %v13426 = vsel %vm2311, %v13266, %v13340
      %v13427 = vsel %vm2311, %v13267, %v13342
      %v13428 = vsel %vm2311, %v13268, %v13344
      %v13429 = vsel %vm2311, %v13269, %v13346
      %v13430 = vsel %vm2311, %v13270, %v13348
      %v13431 = vsel %vm2311, %v13271, %v13350
      %v13432 = vsel %vm2311, %v13272, %v13352
      %v13433 = vsel %vm2311, %v13273, %v13354
      %v13434 = vsel %vm2311, %v13274, %v13356
      %v13435 = vsel %vm2311, %v13275, %v13358
      %v13436 = vsel %vm2311, %v13276, %v13360
      %v13437 = vsel %vm2311, %v13277, %v13362
      %v13438 = vsel %vm2311, %v13278, %v13364
      %v13439 = vsel %vm2311, %v13279, %v13366
      %v13440 = vsel %vm2311, %v13280, %v13368
      %v13441 = vsel %vm2311, %v13281, %v13370
      %v13442 = vsel %vm2311, %v13282, %v13372
      %v13443 = vsel %vm2311, %v13283, %v13374
      %v13444 = vsel %vm2311, %v13284, %v13376
      %v13445 = vsel %vm2311, %v13285, %v13378
      %v13446 = vsel %vm2311, %v13286, %v13380
      %v13447 = vsel %vm2311, %v13287, %v13382
      %v13448 = vsel %vm2311, %v13288, %v13384
      %v13449 = vpack.c.bf16 %v13418, %v13417
      %v13450 = vpack.c.bf16 %v13420, %v13419
      %v13451 = vpack.c.bf16 %v13422, %v13421
      %v13452 = vpack.c.bf16 %v13424, %v13423
      %v13453 = vpack.c.bf16 %v13426, %v13425
      %v13454 = vpack.c.bf16 %v13428, %v13427
      %v13455 = vpack.c.bf16 %v13430, %v13429
      %v13456 = vpack.c.bf16 %v13432, %v13431
      %v13457 = vpack.c.bf16 %v13434, %v13433
      %v13458 = vpack.c.bf16 %v13436, %v13435
      %v13459 = vpack.c.bf16 %v13438, %v13437
      %v13460 = vpack.c.bf16 %v13440, %v13439
      %v13461 = vpack.c.bf16 %v13442, %v13441
      %v13462 = vpack.c.bf16 %v13444, %v13443
      %v13463 = vpack.c.bf16 %v13446, %v13445
      %v13464 = vpack.c.bf16 %v13448, %v13447
      %v13481 = vunpack.c.l.b16 %v13449
      %v13482 = vunpack.c.h.b16 %v13449
      %v13483 = vunpack.c.l.b16 %v13450
      %v13484 = vunpack.c.h.b16 %v13450
      %v13485 = vunpack.c.l.b16 %v13451
      %v13486 = vunpack.c.h.b16 %v13451
      %v13487 = vunpack.c.l.b16 %v13452
      %v13488 = vunpack.c.h.b16 %v13452
      %v13489 = vunpack.c.l.b16 %v13453
      %v13490 = vunpack.c.h.b16 %v13453
      %v13491 = vunpack.c.l.b16 %v13454
      %v13492 = vunpack.c.h.b16 %v13454
      %v13493 = vunpack.c.l.b16 %v13455
      %v13494 = vunpack.c.h.b16 %v13455
      %v13495 = vunpack.c.l.b16 %v13456
      %v13496 = vunpack.c.h.b16 %v13456
      %v13497 = vunpack.c.l.b16 %v13457
      %v13498 = vunpack.c.h.b16 %v13457
      %v13499 = vunpack.c.l.b16 %v13458
      %v13500 = vunpack.c.h.b16 %v13458
      %v13501 = vunpack.c.l.b16 %v13459
      %v13502 = vunpack.c.h.b16 %v13459
      %v13503 = vunpack.c.l.b16 %v13460
      %v13504 = vunpack.c.h.b16 %v13460
      %v13505 = vunpack.c.l.b16 %v13461
      %v13506 = vunpack.c.h.b16 %v13461
      %v13507 = vunpack.c.l.b16 %v13462
      %v13508 = vunpack.c.h.b16 %v13462
      %v13509 = vunpack.c.l.b16 %v13463
      %v13510 = vunpack.c.h.b16 %v13463
      %v13511 = vunpack.c.l.b16 %v13464
      %v13512 = vunpack.c.h.b16 %v13464
      %v13513 = vpack.c.b16 %v13481, %v13481
      %v13514 = vpack.c.b16 %v13482, %v13482
      %v13515 = vpack.c.b16 %v13483, %v13483
      %v13516 = vpack.c.b16 %v13484, %v13484
      %v13517 = vpack.c.b16 %v13485, %v13485
      %v13518 = vpack.c.b16 %v13486, %v13486
      %v13519 = vpack.c.b16 %v13487, %v13487
      %v13520 = vpack.c.b16 %v13488, %v13488
      %v13521 = vpack.c.b16 %v13489, %v13489
      %v13522 = vpack.c.b16 %v13490, %v13490
      %v13523 = vpack.c.b16 %v13491, %v13491
      %v13524 = vpack.c.b16 %v13492, %v13492
      %v13525 = vpack.c.b16 %v13493, %v13493
      %v13526 = vpack.c.b16 %v13494, %v13494
      %v13527 = vpack.c.b16 %v13495, %v13495
      %v13528 = vpack.c.b16 %v13496, %v13496
      %v13529 = vpack.c.b16 %v13497, %v13497
      %v13530 = vpack.c.b16 %v13498, %v13498
      %v13531 = vpack.c.b16 %v13499, %v13499
      %v13532 = vpack.c.b16 %v13500, %v13500
      %v13533 = vpack.c.b16 %v13501, %v13501
      %v13534 = vpack.c.b16 %v13502, %v13502
      %v13535 = vpack.c.b16 %v13503, %v13503
      %v13536 = vpack.c.b16 %v13504, %v13504
      %v13537 = vpack.c.b16 %v13505, %v13505
      %v13538 = vpack.c.b16 %v13506, %v13506
      %v13539 = vpack.c.b16 %v13507, %v13507
      %v13540 = vpack.c.b16 %v13508, %v13508
      %v13541 = vpack.c.b16 %v13509, %v13509
      %v13542 = vpack.c.b16 %v13510, %v13510
      %v13543 = vpack.c.b16 %v13511, %v13511
      %v13544 = vpack.c.b16 %v13512, %v13512
      %13577 = vst [vmem:[%s251] sm:$0xf] %v13513
      %13578 = vst [vmem:[%s251 + $0x8] sm:$0xf] %v13514
      %13579 = vst [vmem:[%s251 + $0x10] sm:$0xf] %v13515
      %13580 = vst [vmem:[%s251 + $0x18] sm:$0xf] %v13516
      %13581 = vst [vmem:[%s251 + $0x20] sm:$0xf] %v13517
      %13582 = vst [vmem:[%s251 + $0x28] sm:$0xf] %v13518
      %13583 = vst [vmem:[%s251 + $0x30] sm:$0xf] %v13519
      %13584 = vst [vmem:[%s251 + $0x38] sm:$0xf] %v13520
      %13585 = vst [vmem:[%s251 + $0x40] sm:$0xf] %v13521
      %13586 = vst [vmem:[%s251 + $0x48] sm:$0xf] %v13522
      %13587 = vst [vmem:[%s251 + $0x50] sm:$0xf] %v13523
      %13588 = vst [vmem:[%s251 + $0x58] sm:$0xf] %v13524
      %13589 = vst [vmem:[%s251 + $0x60] sm:$0xf] %v13525
      %13590 = vst [vmem:[%s251 + $0x68] sm:$0xf] %v13526
      %13591 = vst [vmem:[%s251 + $0x70] sm:$0xf] %v13527
      %13592 = vst [vmem:[%s251 + $0x78] sm:$0xf] %v13528
      %13593 = vst [vmem:[%s251 + $0x80] sm:$0xf] %v13529
      %13594 = vst [vmem:[%s251 + $0x88] sm:$0xf] %v13530
      %13595 = vst [vmem:[%s251 + $0x90] sm:$0xf] %v13531
      %13596 = vst [vmem:[%s251 + $0x98] sm:$0xf] %v13532
      %13597 = vst [vmem:[%s251 + $0xa0] sm:$0xf] %v13533
      %13598 = vst [vmem:[%s251 + $0xa8] sm:$0xf] %v13534
      %13599 = vst [vmem:[%s251 + $0xb0] sm:$0xf] %v13535
      %13600 = vst [vmem:[%s251 + $0xb8] sm:$0xf] %v13536
      %13601 = vst [vmem:[%s251 + $0xc0] sm:$0xf] %v13537
      %13602 = vst [vmem:[%s251 + $0xc8] sm:$0xf] %v13538
      %13603 = vst [vmem:[%s251 + $0xd0] sm:$0xf] %v13539
      %13604 = vst [vmem:[%s251 + $0xd8] sm:$0xf] %v13540
      %13605 = vst [vmem:[%s251 + $0xe0] sm:$0xf] %v13541
      %13606 = vst [vmem:[%s251 + $0xe8] sm:$0xf] %v13542
      %13607 = vst [vmem:[%s251 + $0xf0] sm:$0xf] %v13543
      %13608 = vst [vmem:[%s251 + $0xf8] sm:$0xf] %v13544
      %p13609 = scmp.lt.s32.totalorder %s17, 1
      %s13610 = scalar_select %p13609, %s17, 1
      %s13611 = smul.addr %s13610, 64
      %s13612 = smul.addr %s13611, 4
      %s13613 = scalar_lea.vmem %s6, %s13612
      // Predicated region
      $region45: #{inception_block_v1.1} parent=43 // pred_check
        %p13614 = pneg %p166
      $region46: #{inception_block_v1.1} parent=43 // pred_check_branch
        %13616 = sbr.rel (%p13614) target = $region48
      $region47: #{inception_block_v1.1} parent=43 // pred_region
        _
      $region48: #{inception_block_v1.1} parent=43 // pred_fallthru
        _
    $region44: #{inception_block_v1.1} parent=5 // pred_fallthru
      _
    %p13617 = scmp.le.s32.totalorder 2, %s12
    // Predicated region
    $region49: #{inception_block_v1.1} parent=5 // pred_check
      %p13618 = pneg %p13617
    $region50: #{inception_block_v1.1} parent=5 // pred_check_branch
      %13620 = sbr.rel (%p13618) target = $region52
    $region51: #{inception_block_v1.1} parent=5 // pred_region
      %s13621 = ssub.s32 %s12, 2
      // Predicated region
      $region53: #{inception_block_v1.1} parent=51 // pred_check
        %p13622 = pneg %p172
      $region54: #{inception_block_v1.1} parent=51 // pred_check_branch
        %13624 = sbr.rel (%p13622) target = $region56
      $region55: #{inception_block_v1.1} parent=51 // pred_region
        %p13625 = scmp.lt.s32.totalorder %s18, 1
        %s13626 = scalar_select %p13625, %s18, 1
        %s13627 = smul.addr %s13626, 64
        %s13628 = smul.addr %s13627, 4
        %s13629 = scalar_lea.vmem %s6, %s13628
      $region56: #{inception_block_v1.1} parent=51 // pred_fallthru
        _
    $region52: #{inception_block_v1.1} parent=5 // pred_fallthru
      _
  $region6: #{inception_block_v1.1} parent=0 // loop_footer
    %s16 = sadd.s32 1, %s12
  $region7: #{inception_block_v1.1} parent=0 // loop_footer_branch
    %11 = sbr.rel target = $region3
  $region8: #{inception_block_v1.1} parent=0 // loop_exit
    _

</llo_original>
